<compile_context>
chip_gen: v7x
topology: tpu7x:2x2x1
jax: 0.10.0
libtpu: 0.0.40
codegen_flags: <defaults>
</compile_context>

<pallas_src>
import jax
import jax.numpy as jnp
from jax import lax
from jax.experimental import pallas as pl
from jax.experimental.pallas import tpu as pltpu

_EPS = 1e-5  # nn.InstanceNorm2d default (affine=False, biased variance)


# ----------------------------------------------------------------------------
# In-kernel helpers
# ----------------------------------------------------------------------------
def _conv3x3_accum(src_ref, w_ref, H, W):
    """3x3 'same' conv as 9 shifted-slice matmuls, f32 accumulation.

    src_ref: (H+2, W+2, Cin) zero-padded activations (f32, VMEM)
    w_ref:   (9, Cin, Cout) weights, tap order t = kh*3 + kw
    returns: (H*W, Cout) f32
    """
    HW = H * W
    Cin = src_ref.shape[-1]
    Cout = w_ref.shape[-1]
    acc = None
    for t in range(9):
        kh, kw = t // 3, t % 3
        xs = src_ref[pl.ds(kh, H), pl.ds(kw, W), :].reshape(HW, Cin)
        w_t = w_ref[t]                                        # (Cin, Cout)
        if Cin < 8:
            # Tiny-K first layer (Cin=1): VPU broadcast-multiply in f32 (avoid K=1 MXU matmul).
            part = jnp.zeros((HW, Cout), jnp.float32)
            for c in range(Cin):
                part = part + (xs[:, c:c + 1].astype(jnp.float32)
                               * w_t[c:c + 1, :].astype(jnp.float32))
        else:
            # MXU path: bf16 operands, f32 accumulation.
            part = jnp.dot(xs.astype(jnp.bfloat16), w_t,
                           preferred_element_type=jnp.float32)
        acc = part if acc is None else acc + part
    return acc


def _instance_norm_relu(y):
    """InstanceNorm2d(affine=False, eps=1e-5) over HW (sublane axis) + ReLU."""
    mean = jnp.mean(y, axis=0, keepdims=True)
    yc = y - mean                                              # reused for var + normalize
    var = jnp.mean(yc * yc, axis=0, keepdims=True)
    return jnp.maximum(yc * lax.rsqrt(var + _EPS), 0.0)


# ----------------------------------------------------------------------------
# Fused forward kernel (one image per grid step, everything resident in VMEM)
# ----------------------------------------------------------------------------
def _catalyst_kernel(xp_ref, w1_ref, w2_ref, w3_ref, w4_ref, b4_ref,
                     feat_ref, mask_ref, pad1_ref, pad2_ref):
    Hp, Wp, _ = xp_ref.shape
    H, W = Hp - 2, Wp - 2
    C1 = w1_ref.shape[-1]        # 64
    C2 = w2_ref.shape[-1]        # 128

    # --- encoder conv1 (Cin->64) + IN + ReLU (conv bias exactly cancelled by IN) ---
    h1 = _instance_norm_relu(_conv3x3_accum(xp_ref, w1_ref, H, W))        # (HW, 64)

    # re-pad h1 in VMEM scratch for the next 3x3 conv
    pad1_ref[...] = jnp.zeros(pad1_ref.shape, pad1_ref.dtype)
    pad1_ref[pl.ds(1, H), pl.ds(1, W), :] = h1.reshape(H, W, C1)

    # --- encoder conv2 (64->128) + IN + ReLU -> features output ---
    feat = _instance_norm_relu(_conv3x3_accum(pad1_ref, w2_ref, H, W))    # (HW, 128)
    feat_ref[...] = feat

    pad2_ref[...] = jnp.zeros(pad2_ref.shape, pad2_ref.dtype)
    pad2_ref[pl.ds(1, H), pl.ds(1, W), :] = feat.reshape(H, W, C2)

    # --- decoder conv1 (128->64) + IN + ReLU ---
    h3 = _instance_norm_relu(_conv3x3_accum(pad2_ref, w3_ref, H, W))      # (HW, 64)

    # --- decoder conv2: 1x1 (64->1) + bias + sigmoid, lane-dense (1, HW) output ---
    # w4_ref is the 64-weight row replicated over 8 sublanes (aligned M for the MXU);
    # contraction ((1,),(1,)) == w4 @ h3^T without any in-kernel transpose.
    logits8 = lax.dot_general(w4_ref[...], h3,
                              dimension_numbers=(((1,), (1,)), ((), ())),
                              preferred_element_type=jnp.float32)          # (8, HW)
    mask_ref[...] = jax.nn.sigmoid(logits8[0:1, :] + b4_ref[0])


# ----------------------------------------------------------------------------
# pallas_call wrapper + jitted forward
# ----------------------------------------------------------------------------
def _forward_pallas(packed, xp):
    B, Hp, Wp, Cin = xp.shape
    H, W = Hp - 2, Wp - 2
    HW = H * W
    C1 = packed["w1"].shape[-1]
    C2 = packed["w2"].shape[-1]

    feat_flat, mask_row = pl.pallas_call(
        _catalyst_kernel,
        out_shape=(jax.ShapeDtypeStruct((B, HW, C2), jnp.float32),   # features (flat HW)
                   jax.ShapeDtypeStruct((B, 1, HW), jnp.float32)),   # mask (lane-dense)
        grid=(B,),
        in_specs=[
            pl.BlockSpec((None, Hp, Wp, Cin), lambda i: (i, 0, 0, 0)),
            pl.BlockSpec(packed["w1"].shape, lambda i: (0, 0, 0)),
            pl.BlockSpec(packed["w2"].shape, lambda i: (0, 0, 0)),
            pl.BlockSpec(packed["w3"].shape, lambda i: (0, 0, 0)),
            pl.BlockSpec(packed["w4"].shape, lambda i: (0, 0)),
            pl.BlockSpec(memory_space=pltpu.MemorySpace.SMEM),       # scalar 1x1 bias
        ],
        out_specs=(pl.BlockSpec((None, HW, C2), lambda i: (i, 0, 0)),
                   pl.BlockSpec((None, 1, HW), lambda i: (i, 0, 0))),
        scratch_shapes=[pltpu.VMEM((Hp, Wp, C1), jnp.float32),       # padded h1
                        pltpu.VMEM((Hp, Wp, C2), jnp.float32)],      # padded features
        compiler_params=pltpu.CompilerParams(
            dimension_semantics=("parallel",)),
    )(xp, packed["w1"], packed["w2"], packed["w3"], packed["w4"], packed["b4"])
    return feat_flat, mask_row


@jax.jit
def catalyst_segmentation(packed, x):
    """x: (B, Cin, H, W) f32 NCHW -> (mask (B,1,H,W), features (B,128,H,W))."""
    B, Cin, H, W = x.shape
    x_nhwc = jnp.transpose(x, (0, 2, 3, 1))
    xp = jnp.pad(x_nhwc, ((0, 0), (1, 1), (1, 1), (0, 0)))           # only XLA glue left
    feat_flat, mask_row = _forward_pallas(packed, xp)
    features = jnp.transpose(feat_flat.reshape(B, H, W, -1), (0, 3, 1, 2))
    mask = mask_row.reshape(B, 1, H, W)                              # free reshape (lane-dense)
    return mask, features


# ----------------------------------------------------------------------------
# Parameters: PyTorch layout at init, one-time repack for the kernel
# ----------------------------------------------------------------------------
def init_params(key, in_channels=1):
    def conv_p(k, cout, cin, ksz, scale=0.05):
        k1, k2 = jax.random.split(k)
        w = scale * jax.random.normal(k1, (cout, cin, ksz, ksz), jnp.float32)
        b = scale * jax.random.normal(k2, (cout,), jnp.float32)
        return w, b

    ks = jax.random.split(key, 4)
    p = {}
    p["e1_w"], p["e1_b"] = conv_p(ks[0], 64, in_channels, 3)
    p["e2_w"], p["e2_b"] = conv_p(ks[1], 128, 64, 3)
    p["d1_w"], p["d1_b"] = conv_p(ks[2], 64, 128, 3)
    p["d2_w"], p["d2_b"] = conv_p(ks[3], 1, 64, 1)
    return p


def pack_params(params):
    """One-time (outside jit) repack of PyTorch-layout conv weights for the kernel."""
    def pack3x3(w, dtype):  # (Cout, Cin, 3, 3) -> (9, Cin, Cout), tap t = kh*3 + kw
        cout, cin = w.shape[0], w.shape[1]
        return jnp.transpose(w, (2, 3, 1, 0)).reshape(9, cin, cout).astype(dtype)

    w4 = params["d2_w"].reshape(1, -1).astype(jnp.float32)           # (1, 64)
    return {
        # NOTE: e1/e2/d1 biases are intentionally dropped — they are cancelled exactly
        # by the following InstanceNorm (per-channel constants over H*W).
        "w1": pack3x3(params["e1_w"], jnp.float32),   # tiny-K layer, stays on VPU in f32
        "w2": pack3x3(params["e2_w"], jnp.bfloat16),
        "w3": pack3x3(params["d1_w"], jnp.bfloat16),
        "w4": jnp.tile(w4, (8, 1)),                   # replicate row -> aligned M=8 tile
        "b4": params["d2_b"].astype(jnp.float32),     # (1,) scalar, lives in SMEM
    }


# ----------------------------------------------------------------------------
# Plain-JAX f32 reference (matches the PyTorch module) for correctness check
# ----------------------------------------------------------------------------
def _reference_forward(params, x):
    dn = ("NCHW", "OIHW", "NCHW")

    def conv(h, w, b):
        y = lax.conv_general_dilated(h, w, (1, 1), "SAME", dimension_numbers=dn,
                                     precision=lax.Precision.HIGHEST)
        return y + b[None, :, None, None]

    def in_relu(h):
        m = jnp.mean(h, axis=(2, 3), keepdims=True)
        v = jnp.mean(jnp.square(h - m), axis=(2, 3), keepdims=True)
        return jnp.maximum((h - m) * lax.rsqrt(v + _EPS), 0.0)

    h = in_relu(conv(x, params["e1_w"], params["e1_b"]))
    feat = in_relu(conv(h, params["e2_w"], params["e2_b"]))
    h = in_relu(conv(feat, params["d1_w"], params["d1_b"]))
    mask = jax.nn.sigmoid(conv(h, params["d2_w"], params["d2_b"]))
    return mask, feat


if __name__ == "__main__":
    key = jax.random.PRNGKey(0)
    params = init_params(key, in_channels=1)
    packed = pack_params(params)

    x = jax.random.normal(jax.random.PRNGKey(0), (2, 1, 16, 16), jnp.float32)

    mask, features = catalyst_segmentation(packed, x)
    jax.block_until_ready((mask, features))

    assert mask.shape == (2, 1, 16, 16)
    assert features.shape == (2, 128, 16, 16)
    assert bool(jnp.all(jnp.isfinite(mask))) and bool(jnp.all(jnp.isfinite(features)))
    assert bool(jnp.all((mask >= 0.0) & (mask <= 1.0)))     # sigmoid range
    assert bool(jnp.all(features >= 0.0))                   # ReLU output

    # Cross-check against the plain-JAX f32 reference (bf16 matmul operands in the
    # kernel -> loose tolerances; structural errors would be O(1)).
    mask_r, feat_r = jax.jit(_reference_forward)(params, x)
    assert bool(jnp.allclose(features, feat_r, atol=1e-1)), \
        float(jnp.max(jnp.abs(features - feat_r)))
    assert bool(jnp.allclose(mask, mask_r, atol=3e-2)), \
        float(jnp.max(jnp.abs(mask - mask_r)))

    print("KERNEL_OK")
</pallas_src>

<mosaic_0001>
module attributes {stable_mosaic.version = 11 : i64} {
  func.func @_catalyst_kernel(%arg0: i32, %arg1: memref<1x18x18x1xf32, #tpu.memory_space<vmem>>, %arg2: memref<9x1x64xf32, #tpu.memory_space<vmem>>, %arg3: memref<9x64x128xbf16, #tpu.memory_space<vmem>>, %arg4: memref<9x128x64xbf16, #tpu.memory_space<vmem>>, %arg5: memref<8x64xf32, #tpu.memory_space<vmem>>, %arg6: memref<1xf32, #tpu.memory_space<smem>>, %arg7: memref<1x256x128xf32, #tpu.memory_space<vmem>>, %arg8: memref<1x1x256xf32, #tpu.memory_space<vmem>>, %arg9: memref<18x18x64xf32, #tpu.memory_space<vmem>>, %arg10: memref<18x18x128xf32, #tpu.memory_space<vmem>>) attributes {dimension_semantics = [#tpu.dimension_semantics<parallel>], iteration_bounds = array<i64: 2>, scalar_prefetch = 0 : i64, scratch_operands = 2 : i64, tpu.core_type = #tpu.core_type<tc>, window_params = [{transform_indices = @transform_0, window_bounds = array<i64: 1, 18, 18, 1>}, {pipeline_mode = #tpu.pipeline_mode<synchronous>, transform_indices = @transform_1, window_bounds = array<i64: 9, 1, 64>}, {pipeline_mode = #tpu.pipeline_mode<synchronous>, transform_indices = @transform_2, window_bounds = array<i64: 9, 64, 128>}, {pipeline_mode = #tpu.pipeline_mode<synchronous>, transform_indices = @transform_3, window_bounds = array<i64: 9, 128, 64>}, {pipeline_mode = #tpu.pipeline_mode<synchronous>, transform_indices = @transform_4, window_bounds = array<i64: 8, 64>}, {transform_indices = @transform_5, window_bounds = array<i64: 1>}, {transform_indices = @transform_6, window_bounds = array<i64: 1, 256, 128>}, {transform_indices = @transform_7, window_bounds = array<i64: 1, 1, 256>}]} {
    %c0 = arith.constant 0 : index
    %c0_0 = arith.constant 0 : index
    %c0_1 = arith.constant 0 : index
    %c0_2 = arith.constant 0 : index
    %0 = vector.load %arg1[%c0, %c0_0, %c0_1, %c0_2] : memref<1x18x18x1xf32, #tpu.memory_space<vmem>>, vector<1x16x16x1xf32>
    %1 = vector.shape_cast %0 : vector<1x16x16x1xf32> to vector<16x16x1xf32>
    %2 = vector.shape_cast %1 : vector<16x16x1xf32> to vector<256x1xf32>
    %c0_3 = arith.constant 0 : index
    %c0_4 = arith.constant 0 : index
    %c0_5 = arith.constant 0 : index
    %3 = vector.load %arg2[%c0_3, %c0_4, %c0_5] : memref<9x1x64xf32, #tpu.memory_space<vmem>>, vector<1x1x64xf32>
    %4 = vector.shape_cast %3 : vector<1x1x64xf32> to vector<1x64xf32>
    %cst = arith.constant 0.000000e+00 : f32
    %5 = vector.broadcast %cst : f32 to vector<256x64xf32>
    %6 = vector.broadcast %2 : vector<256x1xf32> to vector<256x64xf32>
    %7 = vector.broadcast %4 : vector<1x64xf32> to vector<256x64xf32>
    %8 = arith.mulf %6, %7 : vector<256x64xf32>
    %9 = arith.addf %5, %8 : vector<256x64xf32>
    %c0_6 = arith.constant 0 : index
    %c0_7 = arith.constant 0 : index
    %c1 = arith.constant 1 : index
    %c0_8 = arith.constant 0 : index
    %10 = vector.load %arg1[%c0_6, %c0_7, %c1, %c0_8] : memref<1x18x18x1xf32, #tpu.memory_space<vmem>>, vector<1x16x16x1xf32>
    %11 = vector.shape_cast %10 : vector<1x16x16x1xf32> to vector<16x16x1xf32>
    %12 = vector.shape_cast %11 : vector<16x16x1xf32> to vector<256x1xf32>
    %c1_9 = arith.constant 1 : index
    %c0_10 = arith.constant 0 : index
    %c0_11 = arith.constant 0 : index
    %13 = vector.load %arg2[%c1_9, %c0_10, %c0_11] : memref<9x1x64xf32, #tpu.memory_space<vmem>>, vector<1x1x64xf32>
    %14 = vector.shape_cast %13 : vector<1x1x64xf32> to vector<1x64xf32>
    %cst_12 = arith.constant 0.000000e+00 : f32
    %15 = vector.broadcast %cst_12 : f32 to vector<256x64xf32>
    %16 = vector.broadcast %12 : vector<256x1xf32> to vector<256x64xf32>
    %17 = vector.broadcast %14 : vector<1x64xf32> to vector<256x64xf32>
    %18 = arith.mulf %16, %17 : vector<256x64xf32>
    %19 = arith.addf %15, %18 : vector<256x64xf32>
    %20 = arith.addf %9, %19 : vector<256x64xf32>
    %c0_13 = arith.constant 0 : index
    %c0_14 = arith.constant 0 : index
    %c2 = arith.constant 2 : index
    %c0_15 = arith.constant 0 : index
    %21 = vector.load %arg1[%c0_13, %c0_14, %c2, %c0_15] : memref<1x18x18x1xf32, #tpu.memory_space<vmem>>, vector<1x16x16x1xf32>
    %22 = vector.shape_cast %21 : vector<1x16x16x1xf32> to vector<16x16x1xf32>
    %23 = vector.shape_cast %22 : vector<16x16x1xf32> to vector<256x1xf32>
    %c2_16 = arith.constant 2 : index
    %c0_17 = arith.constant 0 : index
    %c0_18 = arith.constant 0 : index
    %24 = vector.load %arg2[%c2_16, %c0_17, %c0_18] : memref<9x1x64xf32, #tpu.memory_space<vmem>>, vector<1x1x64xf32>
    %25 = vector.shape_cast %24 : vector<1x1x64xf32> to vector<1x64xf32>
    %cst_19 = arith.constant 0.000000e+00 : f32
    %26 = vector.broadcast %cst_19 : f32 to vector<256x64xf32>
    %27 = vector.broadcast %23 : vector<256x1xf32> to vector<256x64xf32>
    %28 = vector.broadcast %25 : vector<1x64xf32> to vector<256x64xf32>
    %29 = arith.mulf %27, %28 : vector<256x64xf32>
    %30 = arith.addf %26, %29 : vector<256x64xf32>
    %31 = arith.addf %20, %30 : vector<256x64xf32>
    %c0_20 = arith.constant 0 : index
    %c1_21 = arith.constant 1 : index
    %c0_22 = arith.constant 0 : index
    %c0_23 = arith.constant 0 : index
    %32 = vector.load %arg1[%c0_20, %c1_21, %c0_22, %c0_23] : memref<1x18x18x1xf32, #tpu.memory_space<vmem>>, vector<1x16x16x1xf32>
    %33 = vector.shape_cast %32 : vector<1x16x16x1xf32> to vector<16x16x1xf32>
    %34 = vector.shape_cast %33 : vector<16x16x1xf32> to vector<256x1xf32>
    %c3 = arith.constant 3 : index
    %c0_24 = arith.constant 0 : index
    %c0_25 = arith.constant 0 : index
    %35 = vector.load %arg2[%c3, %c0_24, %c0_25] : memref<9x1x64xf32, #tpu.memory_space<vmem>>, vector<1x1x64xf32>
    %36 = vector.shape_cast %35 : vector<1x1x64xf32> to vector<1x64xf32>
    %cst_26 = arith.constant 0.000000e+00 : f32
    %37 = vector.broadcast %cst_26 : f32 to vector<256x64xf32>
    %38 = vector.broadcast %34 : vector<256x1xf32> to vector<256x64xf32>
    %39 = vector.broadcast %36 : vector<1x64xf32> to vector<256x64xf32>
    %40 = arith.mulf %38, %39 : vector<256x64xf32>
    %41 = arith.addf %37, %40 : vector<256x64xf32>
    %42 = arith.addf %31, %41 : vector<256x64xf32>
    %c0_27 = arith.constant 0 : index
    %c1_28 = arith.constant 1 : index
    %c1_29 = arith.constant 1 : index
    %c0_30 = arith.constant 0 : index
    %43 = vector.load %arg1[%c0_27, %c1_28, %c1_29, %c0_30] : memref<1x18x18x1xf32, #tpu.memory_space<vmem>>, vector<1x16x16x1xf32>
    %44 = vector.shape_cast %43 : vector<1x16x16x1xf32> to vector<16x16x1xf32>
    %45 = vector.shape_cast %44 : vector<16x16x1xf32> to vector<256x1xf32>
    %c4 = arith.constant 4 : index
    %c0_31 = arith.constant 0 : index
    %c0_32 = arith.constant 0 : index
    %46 = vector.load %arg2[%c4, %c0_31, %c0_32] : memref<9x1x64xf32, #tpu.memory_space<vmem>>, vector<1x1x64xf32>
    %47 = vector.shape_cast %46 : vector<1x1x64xf32> to vector<1x64xf32>
    %cst_33 = arith.constant 0.000000e+00 : f32
    %48 = vector.broadcast %cst_33 : f32 to vector<256x64xf32>
    %49 = vector.broadcast %45 : vector<256x1xf32> to vector<256x64xf32>
    %50 = vector.broadcast %47 : vector<1x64xf32> to vector<256x64xf32>
    %51 = arith.mulf %49, %50 : vector<256x64xf32>
    %52 = arith.addf %48, %51 : vector<256x64xf32>
    %53 = arith.addf %42, %52 : vector<256x64xf32>
    %c0_34 = arith.constant 0 : index
    %c1_35 = arith.constant 1 : index
    %c2_36 = arith.constant 2 : index
    %c0_37 = arith.constant 0 : index
    %54 = vector.load %arg1[%c0_34, %c1_35, %c2_36, %c0_37] : memref<1x18x18x1xf32, #tpu.memory_space<vmem>>, vector<1x16x16x1xf32>
    %55 = vector.shape_cast %54 : vector<1x16x16x1xf32> to vector<16x16x1xf32>
    %56 = vector.shape_cast %55 : vector<16x16x1xf32> to vector<256x1xf32>
    %c5 = arith.constant 5 : index
    %c0_38 = arith.constant 0 : index
    %c0_39 = arith.constant 0 : index
    %57 = vector.load %arg2[%c5, %c0_38, %c0_39] : memref<9x1x64xf32, #tpu.memory_space<vmem>>, vector<1x1x64xf32>
    %58 = vector.shape_cast %57 : vector<1x1x64xf32> to vector<1x64xf32>
    %cst_40 = arith.constant 0.000000e+00 : f32
    %59 = vector.broadcast %cst_40 : f32 to vector<256x64xf32>
    %60 = vector.broadcast %56 : vector<256x1xf32> to vector<256x64xf32>
    %61 = vector.broadcast %58 : vector<1x64xf32> to vector<256x64xf32>
    %62 = arith.mulf %60, %61 : vector<256x64xf32>
    %63 = arith.addf %59, %62 : vector<256x64xf32>
    %64 = arith.addf %53, %63 : vector<256x64xf32>
    %c0_41 = arith.constant 0 : index
    %c2_42 = arith.constant 2 : index
    %c0_43 = arith.constant 0 : index
    %c0_44 = arith.constant 0 : index
    %65 = vector.load %arg1[%c0_41, %c2_42, %c0_43, %c0_44] : memref<1x18x18x1xf32, #tpu.memory_space<vmem>>, vector<1x16x16x1xf32>
    %66 = vector.shape_cast %65 : vector<1x16x16x1xf32> to vector<16x16x1xf32>
    %67 = vector.shape_cast %66 : vector<16x16x1xf32> to vector<256x1xf32>
    %c6 = arith.constant 6 : index
    %c0_45 = arith.constant 0 : index
    %c0_46 = arith.constant 0 : index
    %68 = vector.load %arg2[%c6, %c0_45, %c0_46] : memref<9x1x64xf32, #tpu.memory_space<vmem>>, vector<1x1x64xf32>
    %69 = vector.shape_cast %68 : vector<1x1x64xf32> to vector<1x64xf32>
    %cst_47 = arith.constant 0.000000e+00 : f32
    %70 = vector.broadcast %cst_47 : f32 to vector<256x64xf32>
    %71 = vector.broadcast %67 : vector<256x1xf32> to vector<256x64xf32>
    %72 = vector.broadcast %69 : vector<1x64xf32> to vector<256x64xf32>
    %73 = arith.mulf %71, %72 : vector<256x64xf32>
    %74 = arith.addf %70, %73 : vector<256x64xf32>
    %75 = arith.addf %64, %74 : vector<256x64xf32>
    %c0_48 = arith.constant 0 : index
    %c2_49 = arith.constant 2 : index
    %c1_50 = arith.constant 1 : index
    %c0_51 = arith.constant 0 : index
    %76 = vector.load %arg1[%c0_48, %c2_49, %c1_50, %c0_51] : memref<1x18x18x1xf32, #tpu.memory_space<vmem>>, vector<1x16x16x1xf32>
    %77 = vector.shape_cast %76 : vector<1x16x16x1xf32> to vector<16x16x1xf32>
    %78 = vector.shape_cast %77 : vector<16x16x1xf32> to vector<256x1xf32>
    %c7 = arith.constant 7 : index
    %c0_52 = arith.constant 0 : index
    %c0_53 = arith.constant 0 : index
    %79 = vector.load %arg2[%c7, %c0_52, %c0_53] : memref<9x1x64xf32, #tpu.memory_space<vmem>>, vector<1x1x64xf32>
    %80 = vector.shape_cast %79 : vector<1x1x64xf32> to vector<1x64xf32>
    %cst_54 = arith.constant 0.000000e+00 : f32
    %81 = vector.broadcast %cst_54 : f32 to vector<256x64xf32>
    %82 = vector.broadcast %78 : vector<256x1xf32> to vector<256x64xf32>
    %83 = vector.broadcast %80 : vector<1x64xf32> to vector<256x64xf32>
    %84 = arith.mulf %82, %83 : vector<256x64xf32>
    %85 = arith.addf %81, %84 : vector<256x64xf32>
    %86 = arith.addf %75, %85 : vector<256x64xf32>
    %c0_55 = arith.constant 0 : index
    %c2_56 = arith.constant 2 : index
    %c2_57 = arith.constant 2 : index
    %c0_58 = arith.constant 0 : index
    %87 = vector.load %arg1[%c0_55, %c2_56, %c2_57, %c0_58] : memref<1x18x18x1xf32, #tpu.memory_space<vmem>>, vector<1x16x16x1xf32>
    %88 = vector.shape_cast %87 : vector<1x16x16x1xf32> to vector<16x16x1xf32>
    %89 = vector.shape_cast %88 : vector<16x16x1xf32> to vector<256x1xf32>
    %c8 = arith.constant 8 : index
    %c0_59 = arith.constant 0 : index
    %c0_60 = arith.constant 0 : index
    %90 = vector.load %arg2[%c8, %c0_59, %c0_60] : memref<9x1x64xf32, #tpu.memory_space<vmem>>, vector<1x1x64xf32>
    %91 = vector.shape_cast %90 : vector<1x1x64xf32> to vector<1x64xf32>
    %cst_61 = arith.constant 0.000000e+00 : f32
    %92 = vector.broadcast %cst_61 : f32 to vector<256x64xf32>
    %93 = vector.broadcast %89 : vector<256x1xf32> to vector<256x64xf32>
    %94 = vector.broadcast %91 : vector<1x64xf32> to vector<256x64xf32>
    %95 = arith.mulf %93, %94 : vector<256x64xf32>
    %96 = arith.addf %92, %95 : vector<256x64xf32>
    %97 = arith.addf %86, %96 : vector<256x64xf32>
    %cst_62 = arith.constant dense<0.000000e+00> : vector<64xf32>
    %98 = vector.multi_reduction <add>, %97, %cst_62 [0] : vector<256x64xf32> to vector<64xf32>
    %99 = vector.shape_cast %98 : vector<64xf32> to vector<1x64xf32>
    %cst_63 = arith.constant 2.560000e+02 : f32
    %100 = vector.broadcast %cst_63 : f32 to vector<1x64xf32>
    %101 = arith.divf %99, %100 : vector<1x64xf32>
    %102 = vector.broadcast %101 : vector<1x64xf32> to vector<256x64xf32>
    %103 = arith.subf %97, %102 : vector<256x64xf32>
    %104 = arith.mulf %103, %103 : vector<256x64xf32>
    %cst_64 = arith.constant dense<0.000000e+00> : vector<64xf32>
    %105 = vector.multi_reduction <add>, %104, %cst_64 [0] : vector<256x64xf32> to vector<64xf32>
    %106 = vector.shape_cast %105 : vector<64xf32> to vector<1x64xf32>
    %cst_65 = arith.constant 2.560000e+02 : f32
    %107 = vector.broadcast %cst_65 : f32 to vector<1x64xf32>
    %108 = arith.divf %106, %107 : vector<1x64xf32>
    %cst_66 = arith.constant 9.99999974E-6 : f32
    %109 = vector.broadcast %cst_66 : f32 to vector<1x64xf32>
    %110 = arith.addf %108, %109 : vector<1x64xf32>
    %111 = math.rsqrt %110 : vector<1x64xf32>
    %112 = vector.broadcast %111 : vector<1x64xf32> to vector<256x64xf32>
    %113 = arith.mulf %103, %112 : vector<256x64xf32>
    %cst_67 = arith.constant 0.000000e+00 : f32
    %114 = vector.broadcast %cst_67 : f32 to vector<256x64xf32>
    %115 = arith.maximumf %113, %114 : vector<256x64xf32>
    %cst_68 = arith.constant 0.000000e+00 : f32
    %116 = vector.broadcast %cst_68 : f32 to vector<18x18x64xf32>
    %c0_69 = arith.constant 0 : index
    %c0_70 = arith.constant 0 : index
    %c0_71 = arith.constant 0 : index
    %117 = vector.load %arg9[%c0_69, %c0_70, %c0_71] : memref<18x18x64xf32, #tpu.memory_space<vmem>>, vector<18x18x64xf32>
    tpu.vector_store %arg9[%c0_69, %c0_70, %c0_71], %116 {strides = array<i32>} : memref<18x18x64xf32, #tpu.memory_space<vmem>>, vector<18x18x64xf32>,
    %118 = vector.shape_cast %115 : vector<256x64xf32> to vector<16x16x64xf32>
    %c1_72 = arith.constant 1 : index
    %c1_73 = arith.constant 1 : index
    %c0_74 = arith.constant 0 : index
    %119 = vector.load %arg9[%c1_72, %c1_73, %c0_74] : memref<18x18x64xf32, #tpu.memory_space<vmem>>, vector<16x16x64xf32>
    tpu.vector_store %arg9[%c1_72, %c1_73, %c0_74], %118 {strides = array<i32>} : memref<18x18x64xf32, #tpu.memory_space<vmem>>, vector<16x16x64xf32>,
    %c0_75 = arith.constant 0 : index
    %c0_76 = arith.constant 0 : index
    %c0_77 = arith.constant 0 : index
    %120 = vector.load %arg9[%c0_75, %c0_76, %c0_77] : memref<18x18x64xf32, #tpu.memory_space<vmem>>, vector<16x16x64xf32>
    %121 = vector.shape_cast %120 : vector<16x16x64xf32> to vector<256x64xf32>
    %c0_78 = arith.constant 0 : index
    %c0_79 = arith.constant 0 : index
    %c0_80 = arith.constant 0 : index
    %122 = vector.load %arg3[%c0_78, %c0_79, %c0_80] : memref<9x64x128xbf16, #tpu.memory_space<vmem>>, vector<1x64x128xbf16>
    %123 = vector.shape_cast %122 : vector<1x64x128xbf16> to vector<64x128xbf16>
    %124 = arith.truncf %121 : vector<256x64xf32> to vector<256x64xbf16>
    %cst_81 = arith.constant dense<0.000000e+00> : vector<256x128xf32>
    %125 = tpu.matmul %124, %123, %cst_81 {dimension_numbers = #tpu.dot_dimension_numbers<[1], [0], [0], [1], [0, 0, 1, 1], [], []>} : vector<256x64xbf16>, vector<64x128xbf16>, vector<256x128xf32> -> vector<256x128xf32>
    %c0_82 = arith.constant 0 : index
    %c1_83 = arith.constant 1 : index
    %c0_84 = arith.constant 0 : index
    %126 = vector.load %arg9[%c0_82, %c1_83, %c0_84] : memref<18x18x64xf32, #tpu.memory_space<vmem>>, vector<16x16x64xf32>
    %127 = vector.shape_cast %126 : vector<16x16x64xf32> to vector<256x64xf32>
    %c1_85 = arith.constant 1 : index
    %c0_86 = arith.constant 0 : index
    %c0_87 = arith.constant 0 : index
    %128 = vector.load %arg3[%c1_85, %c0_86, %c0_87] : memref<9x64x128xbf16, #tpu.memory_space<vmem>>, vector<1x64x128xbf16>
    %129 = vector.shape_cast %128 : vector<1x64x128xbf16> to vector<64x128xbf16>
    %130 = arith.truncf %127 : vector<256x64xf32> to vector<256x64xbf16>
    %cst_88 = arith.constant dense<0.000000e+00> : vector<256x128xf32>
    %131 = tpu.matmul %130, %129, %cst_88 {dimension_numbers = #tpu.dot_dimension_numbers<[1], [0], [0], [1], [0, 0, 1, 1], [], []>} : vector<256x64xbf16>, vector<64x128xbf16>, vector<256x128xf32> -> vector<256x128xf32>
    %132 = arith.addf %125, %131 : vector<256x128xf32>
    %c0_89 = arith.constant 0 : index
    %c2_90 = arith.constant 2 : index
    %c0_91 = arith.constant 0 : index
    %133 = vector.load %arg9[%c0_89, %c2_90, %c0_91] : memref<18x18x64xf32, #tpu.memory_space<vmem>>, vector<16x16x64xf32>
    %134 = vector.shape_cast %133 : vector<16x16x64xf32> to vector<256x64xf32>
    %c2_92 = arith.constant 2 : index
    %c0_93 = arith.constant 0 : index
    %c0_94 = arith.constant 0 : index
    %135 = vector.load %arg3[%c2_92, %c0_93, %c0_94] : memref<9x64x128xbf16, #tpu.memory_space<vmem>>, vector<1x64x128xbf16>
    %136 = vector.shape_cast %135 : vector<1x64x128xbf16> to vector<64x128xbf16>
    %137 = arith.truncf %134 : vector<256x64xf32> to vector<256x64xbf16>
    %cst_95 = arith.constant dense<0.000000e+00> : vector<256x128xf32>
    %138 = tpu.matmul %137, %136, %cst_95 {dimension_numbers = #tpu.dot_dimension_numbers<[1], [0], [0], [1], [0, 0, 1, 1], [], []>} : vector<256x64xbf16>, vector<64x128xbf16>, vector<256x128xf32> -> vector<256x128xf32>
    %139 = arith.addf %132, %138 : vector<256x128xf32>
    %c1_96 = arith.constant 1 : index
    %c0_97 = arith.constant 0 : index
    %c0_98 = arith.constant 0 : index
    %140 = vector.load %arg9[%c1_96, %c0_97, %c0_98] : memref<18x18x64xf32, #tpu.memory_space<vmem>>, vector<16x16x64xf32>
    %141 = vector.shape_cast %140 : vector<16x16x64xf32> to vector<256x64xf32>
    %c3_99 = arith.constant 3 : index
    %c0_100 = arith.constant 0 : index
    %c0_101 = arith.constant 0 : index
    %142 = vector.load %arg3[%c3_99, %c0_100, %c0_101] : memref<9x64x128xbf16, #tpu.memory_space<vmem>>, vector<1x64x128xbf16>
    %143 = vector.shape_cast %142 : vector<1x64x128xbf16> to vector<64x128xbf16>
    %144 = arith.truncf %141 : vector<256x64xf32> to vector<256x64xbf16>
    %cst_102 = arith.constant dense<0.000000e+00> : vector<256x128xf32>
    %145 = tpu.matmul %144, %143, %cst_102 {dimension_numbers = #tpu.dot_dimension_numbers<[1], [0], [0], [1], [0, 0, 1, 1], [], []>} : vector<256x64xbf16>, vector<64x128xbf16>, vector<256x128xf32> -> vector<256x128xf32>
    %146 = arith.addf %139, %145 : vector<256x128xf32>
    %c1_103 = arith.constant 1 : index
    %c1_104 = arith.constant 1 : index
    %c0_105 = arith.constant 0 : index
    %147 = vector.load %arg9[%c1_103, %c1_104, %c0_105] : memref<18x18x64xf32, #tpu.memory_space<vmem>>, vector<16x16x64xf32>
    %148 = vector.shape_cast %147 : vector<16x16x64xf32> to vector<256x64xf32>
    %c4_106 = arith.constant 4 : index
    %c0_107 = arith.constant 0 : index
    %c0_108 = arith.constant 0 : index
    %149 = vector.load %arg3[%c4_106, %c0_107, %c0_108] : memref<9x64x128xbf16, #tpu.memory_space<vmem>>, vector<1x64x128xbf16>
    %150 = vector.shape_cast %149 : vector<1x64x128xbf16> to vector<64x128xbf16>
    %151 = arith.truncf %148 : vector<256x64xf32> to vector<256x64xbf16>
    %cst_109 = arith.constant dense<0.000000e+00> : vector<256x128xf32>
    %152 = tpu.matmul %151, %150, %cst_109 {dimension_numbers = #tpu.dot_dimension_numbers<[1], [0], [0], [1], [0, 0, 1, 1], [], []>} : vector<256x64xbf16>, vector<64x128xbf16>, vector<256x128xf32> -> vector<256x128xf32>
    %153 = arith.addf %146, %152 : vector<256x128xf32>
    %c1_110 = arith.constant 1 : index
    %c2_111 = arith.constant 2 : index
    %c0_112 = arith.constant 0 : index
    %154 = vector.load %arg9[%c1_110, %c2_111, %c0_112] : memref<18x18x64xf32, #tpu.memory_space<vmem>>, vector<16x16x64xf32>
    %155 = vector.shape_cast %154 : vector<16x16x64xf32> to vector<256x64xf32>
    %c5_113 = arith.constant 5 : index
    %c0_114 = arith.constant 0 : index
    %c0_115 = arith.constant 0 : index
    %156 = vector.load %arg3[%c5_113, %c0_114, %c0_115] : memref<9x64x128xbf16, #tpu.memory_space<vmem>>, vector<1x64x128xbf16>
    %157 = vector.shape_cast %156 : vector<1x64x128xbf16> to vector<64x128xbf16>
    %158 = arith.truncf %155 : vector<256x64xf32> to vector<256x64xbf16>
    %cst_116 = arith.constant dense<0.000000e+00> : vector<256x128xf32>
    %159 = tpu.matmul %158, %157, %cst_116 {dimension_numbers = #tpu.dot_dimension_numbers<[1], [0], [0], [1], [0, 0, 1, 1], [], []>} : vector<256x64xbf16>, vector<64x128xbf16>, vector<256x128xf32> -> vector<256x128xf32>
    %160 = arith.addf %153, %159 : vector<256x128xf32>
    %c2_117 = arith.constant 2 : index
    %c0_118 = arith.constant 0 : index
    %c0_119 = arith.constant 0 : index
    %161 = vector.load %arg9[%c2_117, %c0_118, %c0_119] : memref<18x18x64xf32, #tpu.memory_space<vmem>>, vector<16x16x64xf32>
    %162 = vector.shape_cast %161 : vector<16x16x64xf32> to vector<256x64xf32>
    %c6_120 = arith.constant 6 : index
    %c0_121 = arith.constant 0 : index
    %c0_122 = arith.constant 0 : index
    %163 = vector.load %arg3[%c6_120, %c0_121, %c0_122] : memref<9x64x128xbf16, #tpu.memory_space<vmem>>, vector<1x64x128xbf16>
    %164 = vector.shape_cast %163 : vector<1x64x128xbf16> to vector<64x128xbf16>
    %165 = arith.truncf %162 : vector<256x64xf32> to vector<256x64xbf16>
    %cst_123 = arith.constant dense<0.000000e+00> : vector<256x128xf32>
    %166 = tpu.matmul %165, %164, %cst_123 {dimension_numbers = #tpu.dot_dimension_numbers<[1], [0], [0], [1], [0, 0, 1, 1], [], []>} : vector<256x64xbf16>, vector<64x128xbf16>, vector<256x128xf32> -> vector<256x128xf32>
    %167 = arith.addf %160, %166 : vector<256x128xf32>
    %c2_124 = arith.constant 2 : index
    %c1_125 = arith.constant 1 : index
    %c0_126 = arith.constant 0 : index
    %168 = vector.load %arg9[%c2_124, %c1_125, %c0_126] : memref<18x18x64xf32, #tpu.memory_space<vmem>>, vector<16x16x64xf32>
    %169 = vector.shape_cast %168 : vector<16x16x64xf32> to vector<256x64xf32>
    %c7_127 = arith.constant 7 : index
    %c0_128 = arith.constant 0 : index
    %c0_129 = arith.constant 0 : index
    %170 = vector.load %arg3[%c7_127, %c0_128, %c0_129] : memref<9x64x128xbf16, #tpu.memory_space<vmem>>, vector<1x64x128xbf16>
    %171 = vector.shape_cast %170 : vector<1x64x128xbf16> to vector<64x128xbf16>
    %172 = arith.truncf %169 : vector<256x64xf32> to vector<256x64xbf16>
    %cst_130 = arith.constant dense<0.000000e+00> : vector<256x128xf32>
    %173 = tpu.matmul %172, %171, %cst_130 {dimension_numbers = #tpu.dot_dimension_numbers<[1], [0], [0], [1], [0, 0, 1, 1], [], []>} : vector<256x64xbf16>, vector<64x128xbf16>, vector<256x128xf32> -> vector<256x128xf32>
    %174 = arith.addf %167, %173 : vector<256x128xf32>
    %c2_131 = arith.constant 2 : index
    %c2_132 = arith.constant 2 : index
    %c0_133 = arith.constant 0 : index
    %175 = vector.load %arg9[%c2_131, %c2_132, %c0_133] : memref<18x18x64xf32, #tpu.memory_space<vmem>>, vector<16x16x64xf32>
    %176 = vector.shape_cast %175 : vector<16x16x64xf32> to vector<256x64xf32>
    %c8_134 = arith.constant 8 : index
    %c0_135 = arith.constant 0 : index
    %c0_136 = arith.constant 0 : index
    %177 = vector.load %arg3[%c8_134, %c0_135, %c0_136] : memref<9x64x128xbf16, #tpu.memory_space<vmem>>, vector<1x64x128xbf16>
    %178 = vector.shape_cast %177 : vector<1x64x128xbf16> to vector<64x128xbf16>
    %179 = arith.truncf %176 : vector<256x64xf32> to vector<256x64xbf16>
    %cst_137 = arith.constant dense<0.000000e+00> : vector<256x128xf32>
    %180 = tpu.matmul %179, %178, %cst_137 {dimension_numbers = #tpu.dot_dimension_numbers<[1], [0], [0], [1], [0, 0, 1, 1], [], []>} : vector<256x64xbf16>, vector<64x128xbf16>, vector<256x128xf32> -> vector<256x128xf32>
    %181 = arith.addf %174, %180 : vector<256x128xf32>
    %cst_138 = arith.constant dense<0.000000e+00> : vector<128xf32>
    %182 = vector.multi_reduction <add>, %181, %cst_138 [0] : vector<256x128xf32> to vector<128xf32>
    %183 = vector.shape_cast %182 : vector<128xf32> to vector<1x128xf32>
    %cst_139 = arith.constant 2.560000e+02 : f32
    %184 = vector.broadcast %cst_139 : f32 to vector<1x128xf32>
    %185 = arith.divf %183, %184 : vector<1x128xf32>
    %186 = vector.broadcast %185 : vector<1x128xf32> to vector<256x128xf32>
    %187 = arith.subf %181, %186 : vector<256x128xf32>
    %188 = arith.mulf %187, %187 : vector<256x128xf32>
    %cst_140 = arith.constant dense<0.000000e+00> : vector<128xf32>
    %189 = vector.multi_reduction <add>, %188, %cst_140 [0] : vector<256x128xf32> to vector<128xf32>
    %190 = vector.shape_cast %189 : vector<128xf32> to vector<1x128xf32>
    %cst_141 = arith.constant 2.560000e+02 : f32
    %191 = vector.broadcast %cst_141 : f32 to vector<1x128xf32>
    %192 = arith.divf %190, %191 : vector<1x128xf32>
    %cst_142 = arith.constant 9.99999974E-6 : f32
    %193 = vector.broadcast %cst_142 : f32 to vector<1x128xf32>
    %194 = arith.addf %192, %193 : vector<1x128xf32>
    %195 = math.rsqrt %194 : vector<1x128xf32>
    %196 = vector.broadcast %195 : vector<1x128xf32> to vector<256x128xf32>
    %197 = arith.mulf %187, %196 : vector<256x128xf32>
    %cst_143 = arith.constant 0.000000e+00 : f32
    %198 = vector.broadcast %cst_143 : f32 to vector<256x128xf32>
    %199 = arith.maximumf %197, %198 : vector<256x128xf32>
    %c0_144 = arith.constant 0 : index
    %c0_145 = arith.constant 0 : index
    %c0_146 = arith.constant 0 : index
    %200 = vector.load %arg7[%c0_144, %c0_145, %c0_146] : memref<1x256x128xf32, #tpu.memory_space<vmem>>, vector<1x256x128xf32>
    %201 = vector.shape_cast %200 : vector<1x256x128xf32> to vector<256x128xf32>
    %202 = vector.shape_cast %199 : vector<256x128xf32> to vector<1x256x128xf32>
    tpu.vector_store %arg7[%c0_144, %c0_145, %c0_146], %202 {strides = array<i32>} : memref<1x256x128xf32, #tpu.memory_space<vmem>>, vector<1x256x128xf32>,
    %cst_147 = arith.constant 0.000000e+00 : f32
    %203 = vector.broadcast %cst_147 : f32 to vector<18x18x128xf32>
    %c0_148 = arith.constant 0 : index
    %c0_149 = arith.constant 0 : index
    %c0_150 = arith.constant 0 : index
    %204 = vector.load %arg10[%c0_148, %c0_149, %c0_150] : memref<18x18x128xf32, #tpu.memory_space<vmem>>, vector<18x18x128xf32>
    tpu.vector_store %arg10[%c0_148, %c0_149, %c0_150], %203 {strides = array<i32>} : memref<18x18x128xf32, #tpu.memory_space<vmem>>, vector<18x18x128xf32>,
    %205 = vector.shape_cast %199 : vector<256x128xf32> to vector<16x16x128xf32>
    %c1_151 = arith.constant 1 : index
    %c1_152 = arith.constant 1 : index
    %c0_153 = arith.constant 0 : index
    %206 = vector.load %arg10[%c1_151, %c1_152, %c0_153] : memref<18x18x128xf32, #tpu.memory_space<vmem>>, vector<16x16x128xf32>
    tpu.vector_store %arg10[%c1_151, %c1_152, %c0_153], %205 {strides = array<i32>} : memref<18x18x128xf32, #tpu.memory_space<vmem>>, vector<16x16x128xf32>,
    %c0_154 = arith.constant 0 : index
    %c0_155 = arith.constant 0 : index
    %c0_156 = arith.constant 0 : index
    %207 = vector.load %arg10[%c0_154, %c0_155, %c0_156] : memref<18x18x128xf32, #tpu.memory_space<vmem>>, vector<16x16x128xf32>
    %208 = vector.shape_cast %207 : vector<16x16x128xf32> to vector<256x128xf32>
    %c0_157 = arith.constant 0 : index
    %c0_158 = arith.constant 0 : index
    %c0_159 = arith.constant 0 : index
    %209 = vector.load %arg4[%c0_157, %c0_158, %c0_159] : memref<9x128x64xbf16, #tpu.memory_space<vmem>>, vector<1x128x64xbf16>
    %210 = vector.shape_cast %209 : vector<1x128x64xbf16> to vector<128x64xbf16>
    %211 = arith.truncf %208 : vector<256x128xf32> to vector<256x128xbf16>
    %cst_160 = arith.constant dense<0.000000e+00> : vector<256x64xf32>
    %212 = tpu.matmul %211, %210, %cst_160 {dimension_numbers = #tpu.dot_dimension_numbers<[1], [0], [0], [1], [0, 0, 1, 1], [], []>} : vector<256x128xbf16>, vector<128x64xbf16>, vector<256x64xf32> -> vector<256x64xf32>
    %c0_161 = arith.constant 0 : index
    %c1_162 = arith.constant 1 : index
    %c0_163 = arith.constant 0 : index
    %213 = vector.load %arg10[%c0_161, %c1_162, %c0_163] : memref<18x18x128xf32, #tpu.memory_space<vmem>>, vector<16x16x128xf32>
    %214 = vector.shape_cast %213 : vector<16x16x128xf32> to vector<256x128xf32>
    %c1_164 = arith.constant 1 : index
    %c0_165 = arith.constant 0 : index
    %c0_166 = arith.constant 0 : index
    %215 = vector.load %arg4[%c1_164, %c0_165, %c0_166] : memref<9x128x64xbf16, #tpu.memory_space<vmem>>, vector<1x128x64xbf16>
    %216 = vector.shape_cast %215 : vector<1x128x64xbf16> to vector<128x64xbf16>
    %217 = arith.truncf %214 : vector<256x128xf32> to vector<256x128xbf16>
    %cst_167 = arith.constant dense<0.000000e+00> : vector<256x64xf32>
    %218 = tpu.matmul %217, %216, %cst_167 {dimension_numbers = #tpu.dot_dimension_numbers<[1], [0], [0], [1], [0, 0, 1, 1], [], []>} : vector<256x128xbf16>, vector<128x64xbf16>, vector<256x64xf32> -> vector<256x64xf32>
    %219 = arith.addf %212, %218 : vector<256x64xf32>
    %c0_168 = arith.constant 0 : index
    %c2_169 = arith.constant 2 : index
    %c0_170 = arith.constant 0 : index
    %220 = vector.load %arg10[%c0_168, %c2_169, %c0_170] : memref<18x18x128xf32, #tpu.memory_space<vmem>>, vector<16x16x128xf32>
    %221 = vector.shape_cast %220 : vector<16x16x128xf32> to vector<256x128xf32>
    %c2_171 = arith.constant 2 : index
    %c0_172 = arith.constant 0 : index
    %c0_173 = arith.constant 0 : index
    %222 = vector.load %arg4[%c2_171, %c0_172, %c0_173] : memref<9x128x64xbf16, #tpu.memory_space<vmem>>, vector<1x128x64xbf16>
    %223 = vector.shape_cast %222 : vector<1x128x64xbf16> to vector<128x64xbf16>
    %224 = arith.truncf %221 : vector<256x128xf32> to vector<256x128xbf16>
    %cst_174 = arith.constant dense<0.000000e+00> : vector<256x64xf32>
    %225 = tpu.matmul %224, %223, %cst_174 {dimension_numbers = #tpu.dot_dimension_numbers<[1], [0], [0], [1], [0, 0, 1, 1], [], []>} : vector<256x128xbf16>, vector<128x64xbf16>, vector<256x64xf32> -> vector<256x64xf32>
    %226 = arith.addf %219, %225 : vector<256x64xf32>
    %c1_175 = arith.constant 1 : index
    %c0_176 = arith.constant 0 : index
    %c0_177 = arith.constant 0 : index
    %227 = vector.load %arg10[%c1_175, %c0_176, %c0_177] : memref<18x18x128xf32, #tpu.memory_space<vmem>>, vector<16x16x128xf32>
    %228 = vector.shape_cast %227 : vector<16x16x128xf32> to vector<256x128xf32>
    %c3_178 = arith.constant 3 : index
    %c0_179 = arith.constant 0 : index
    %c0_180 = arith.constant 0 : index
    %229 = vector.load %arg4[%c3_178, %c0_179, %c0_180] : memref<9x128x64xbf16, #tpu.memory_space<vmem>>, vector<1x128x64xbf16>
    %230 = vector.shape_cast %229 : vector<1x128x64xbf16> to vector<128x64xbf16>
    %231 = arith.truncf %228 : vector<256x128xf32> to vector<256x128xbf16>
    %cst_181 = arith.constant dense<0.000000e+00> : vector<256x64xf32>
    %232 = tpu.matmul %231, %230, %cst_181 {dimension_numbers = #tpu.dot_dimension_numbers<[1], [0], [0], [1], [0, 0, 1, 1], [], []>} : vector<256x128xbf16>, vector<128x64xbf16>, vector<256x64xf32> -> vector<256x64xf32>
    %233 = arith.addf %226, %232 : vector<256x64xf32>
    %c1_182 = arith.constant 1 : index
    %c1_183 = arith.constant 1 : index
    %c0_184 = arith.constant 0 : index
    %234 = vector.load %arg10[%c1_182, %c1_183, %c0_184] : memref<18x18x128xf32, #tpu.memory_space<vmem>>, vector<16x16x128xf32>
    %235 = vector.shape_cast %234 : vector<16x16x128xf32> to vector<256x128xf32>
    %c4_185 = arith.constant 4 : index
    %c0_186 = arith.constant 0 : index
    %c0_187 = arith.constant 0 : index
    %236 = vector.load %arg4[%c4_185, %c0_186, %c0_187] : memref<9x128x64xbf16, #tpu.memory_space<vmem>>, vector<1x128x64xbf16>
    %237 = vector.shape_cast %236 : vector<1x128x64xbf16> to vector<128x64xbf16>
    %238 = arith.truncf %235 : vector<256x128xf32> to vector<256x128xbf16>
    %cst_188 = arith.constant dense<0.000000e+00> : vector<256x64xf32>
    %239 = tpu.matmul %238, %237, %cst_188 {dimension_numbers = #tpu.dot_dimension_numbers<[1], [0], [0], [1], [0, 0, 1, 1], [], []>} : vector<256x128xbf16>, vector<128x64xbf16>, vector<256x64xf32> -> vector<256x64xf32>
    %240 = arith.addf %233, %239 : vector<256x64xf32>
    %c1_189 = arith.constant 1 : index
    %c2_190 = arith.constant 2 : index
    %c0_191 = arith.constant 0 : index
    %241 = vector.load %arg10[%c1_189, %c2_190, %c0_191] : memref<18x18x128xf32, #tpu.memory_space<vmem>>, vector<16x16x128xf32>
    %242 = vector.shape_cast %241 : vector<16x16x128xf32> to vector<256x128xf32>
    %c5_192 = arith.constant 5 : index
    %c0_193 = arith.constant 0 : index
    %c0_194 = arith.constant 0 : index
    %243 = vector.load %arg4[%c5_192, %c0_193, %c0_194] : memref<9x128x64xbf16, #tpu.memory_space<vmem>>, vector<1x128x64xbf16>
    %244 = vector.shape_cast %243 : vector<1x128x64xbf16> to vector<128x64xbf16>
    %245 = arith.truncf %242 : vector<256x128xf32> to vector<256x128xbf16>
    %cst_195 = arith.constant dense<0.000000e+00> : vector<256x64xf32>
    %246 = tpu.matmul %245, %244, %cst_195 {dimension_numbers = #tpu.dot_dimension_numbers<[1], [0], [0], [1], [0, 0, 1, 1], [], []>} : vector<256x128xbf16>, vector<128x64xbf16>, vector<256x64xf32> -> vector<256x64xf32>
    %247 = arith.addf %240, %246 : vector<256x64xf32>
    %c2_196 = arith.constant 2 : index
    %c0_197 = arith.constant 0 : index
    %c0_198 = arith.constant 0 : index
    %248 = vector.load %arg10[%c2_196, %c0_197, %c0_198] : memref<18x18x128xf32, #tpu.memory_space<vmem>>, vector<16x16x128xf32>
    %249 = vector.shape_cast %248 : vector<16x16x128xf32> to vector<256x128xf32>
    %c6_199 = arith.constant 6 : index
    %c0_200 = arith.constant 0 : index
    %c0_201 = arith.constant 0 : index
    %250 = vector.load %arg4[%c6_199, %c0_200, %c0_201] : memref<9x128x64xbf16, #tpu.memory_space<vmem>>, vector<1x128x64xbf16>
    %251 = vector.shape_cast %250 : vector<1x128x64xbf16> to vector<128x64xbf16>
    %252 = arith.truncf %249 : vector<256x128xf32> to vector<256x128xbf16>
    %cst_202 = arith.constant dense<0.000000e+00> : vector<256x64xf32>
    %253 = tpu.matmul %252, %251, %cst_202 {dimension_numbers = #tpu.dot_dimension_numbers<[1], [0], [0], [1], [0, 0, 1, 1], [], []>} : vector<256x128xbf16>, vector<128x64xbf16>, vector<256x64xf32> -> vector<256x64xf32>
    %254 = arith.addf %247, %253 : vector<256x64xf32>
    %c2_203 = arith.constant 2 : index
    %c1_204 = arith.constant 1 : index
    %c0_205 = arith.constant 0 : index
    %255 = vector.load %arg10[%c2_203, %c1_204, %c0_205] : memref<18x18x128xf32, #tpu.memory_space<vmem>>, vector<16x16x128xf32>
    %256 = vector.shape_cast %255 : vector<16x16x128xf32> to vector<256x128xf32>
    %c7_206 = arith.constant 7 : index
    %c0_207 = arith.constant 0 : index
    %c0_208 = arith.constant 0 : index
    %257 = vector.load %arg4[%c7_206, %c0_207, %c0_208] : memref<9x128x64xbf16, #tpu.memory_space<vmem>>, vector<1x128x64xbf16>
    %258 = vector.shape_cast %257 : vector<1x128x64xbf16> to vector<128x64xbf16>
    %259 = arith.truncf %256 : vector<256x128xf32> to vector<256x128xbf16>
    %cst_209 = arith.constant dense<0.000000e+00> : vector<256x64xf32>
    %260 = tpu.matmul %259, %258, %cst_209 {dimension_numbers = #tpu.dot_dimension_numbers<[1], [0], [0], [1], [0, 0, 1, 1], [], []>} : vector<256x128xbf16>, vector<128x64xbf16>, vector<256x64xf32> -> vector<256x64xf32>
    %261 = arith.addf %254, %260 : vector<256x64xf32>
    %c2_210 = arith.constant 2 : index
    %c2_211 = arith.constant 2 : index
    %c0_212 = arith.constant 0 : index
    %262 = vector.load %arg10[%c2_210, %c2_211, %c0_212] : memref<18x18x128xf32, #tpu.memory_space<vmem>>, vector<16x16x128xf32>
    %263 = vector.shape_cast %262 : vector<16x16x128xf32> to vector<256x128xf32>
    %c8_213 = arith.constant 8 : index
    %c0_214 = arith.constant 0 : index
    %c0_215 = arith.constant 0 : index
    %264 = vector.load %arg4[%c8_213, %c0_214, %c0_215] : memref<9x128x64xbf16, #tpu.memory_space<vmem>>, vector<1x128x64xbf16>
    %265 = vector.shape_cast %264 : vector<1x128x64xbf16> to vector<128x64xbf16>
    %266 = arith.truncf %263 : vector<256x128xf32> to vector<256x128xbf16>
    %cst_216 = arith.constant dense<0.000000e+00> : vector<256x64xf32>
    %267 = tpu.matmul %266, %265, %cst_216 {dimension_numbers = #tpu.dot_dimension_numbers<[1], [0], [0], [1], [0, 0, 1, 1], [], []>} : vector<256x128xbf16>, vector<128x64xbf16>, vector<256x64xf32> -> vector<256x64xf32>
    %268 = arith.addf %261, %267 : vector<256x64xf32>
    %cst_217 = arith.constant dense<0.000000e+00> : vector<64xf32>
    %269 = vector.multi_reduction <add>, %268, %cst_217 [0] : vector<256x64xf32> to vector<64xf32>
    %270 = vector.shape_cast %269 : vector<64xf32> to vector<1x64xf32>
    %cst_218 = arith.constant 2.560000e+02 : f32
    %271 = vector.broadcast %cst_218 : f32 to vector<1x64xf32>
    %272 = arith.divf %270, %271 : vector<1x64xf32>
    %273 = vector.broadcast %272 : vector<1x64xf32> to vector<256x64xf32>
    %274 = arith.subf %268, %273 : vector<256x64xf32>
    %275 = arith.mulf %274, %274 : vector<256x64xf32>
    %cst_219 = arith.constant dense<0.000000e+00> : vector<64xf32>
    %276 = vector.multi_reduction <add>, %275, %cst_219 [0] : vector<256x64xf32> to vector<64xf32>
    %277 = vector.shape_cast %276 : vector<64xf32> to vector<1x64xf32>
    %cst_220 = arith.constant 2.560000e+02 : f32
    %278 = vector.broadcast %cst_220 : f32 to vector<1x64xf32>
    %279 = arith.divf %277, %278 : vector<1x64xf32>
    %cst_221 = arith.constant 9.99999974E-6 : f32
    %280 = vector.broadcast %cst_221 : f32 to vector<1x64xf32>
    %281 = arith.addf %279, %280 : vector<1x64xf32>
    %282 = math.rsqrt %281 : vector<1x64xf32>
    %283 = vector.broadcast %282 : vector<1x64xf32> to vector<256x64xf32>
    %284 = arith.mulf %274, %283 : vector<256x64xf32>
    %cst_222 = arith.constant 0.000000e+00 : f32
    %285 = vector.broadcast %cst_222 : f32 to vector<256x64xf32>
    %286 = arith.maximumf %284, %285 : vector<256x64xf32>
    %c0_223 = arith.constant 0 : index
    %c0_224 = arith.constant 0 : index
    %287 = vector.load %arg5[%c0_223, %c0_224] : memref<8x64xf32, #tpu.memory_space<vmem>>, vector<8x64xf32>
    %cst_225 = arith.constant dense<0.000000e+00> : vector<8x256xf32>
    %288 = tpu.matmul %287, %286, %cst_225 {dimension_numbers = #tpu.dot_dimension_numbers<[1], [1], [0], [0], [0, 0, 1, 0], [], []>} : vector<8x64xf32>, vector<256x64xf32>, vector<8x256xf32> -> vector<8x256xf32>
    %289 = vector.extract_strided_slice %288 {offsets = [0, 0], sizes = [1, 256], strides = [1, 1]} : vector<8x256xf32> to vector<1x256xf32>
    %c0_226 = arith.constant 0 : index
    %290 = memref.load %arg6[%c0_226] : memref<1xf32, #tpu.memory_space<smem>>
    %291 = vector.broadcast %290 : f32 to vector<1x256xf32>
    %292 = arith.addf %289, %291 : vector<1x256xf32>
    %293 = arith.negf %292 : vector<1x256xf32>
    %294 = math.exp %293 : vector<1x256xf32>
    %cst_227 = arith.constant 1.000000e+00 : f32
    %295 = vector.broadcast %cst_227 : f32 to vector<1x256xf32>
    %296 = arith.addf %295, %294 : vector<1x256xf32>
    %297 = arith.divf %295, %296 : vector<1x256xf32>
    %c0_228 = arith.constant 0 : index
    %c0_229 = arith.constant 0 : index
    %c0_230 = arith.constant 0 : index
    %298 = vector.load %arg8[%c0_228, %c0_229, %c0_230] : memref<1x1x256xf32, #tpu.memory_space<vmem>>, vector<1x1x256xf32>
    %299 = vector.shape_cast %298 : vector<1x1x256xf32> to vector<1x256xf32>
    %300 = vector.shape_cast %297 : vector<1x256xf32> to vector<1x1x256xf32>
    tpu.vector_store %arg8[%c0_228, %c0_229, %c0_230], %300 {strides = array<i32>} : memref<1x1x256xf32, #tpu.memory_space<vmem>>, vector<1x1x256xf32>,
    return
  }
  func.func @transform_0(%arg0: i32) -> (i32, i32, i32, i32) {
    %c0_i32 = arith.constant 0 : i32
    %c0_i32_0 = arith.constant 0 : i32
    %c0_i32_1 = arith.constant 0 : i32
    %c0_i32_2 = arith.constant 0 : i32
    return %arg0, %c0_i32, %c0_i32_0, %c0_i32_1 : i32, i32, i32, i32
  }
  func.func @transform_1(%arg0: i32) -> (i32, i32, i32) {
    %c0_i32 = arith.constant 0 : i32
    %c0_i32_0 = arith.constant 0 : i32
    %c0_i32_1 = arith.constant 0 : i32
    %c0_i32_2 = arith.constant 0 : i32
    return %c0_i32, %c0_i32_0, %c0_i32_1 : i32, i32, i32
  }
  func.func @transform_2(%arg0: i32) -> (i32, i32, i32) {
    %c0_i32 = arith.constant 0 : i32
    %c0_i32_0 = arith.constant 0 : i32
    %c0_i32_1 = arith.constant 0 : i32
    %c0_i32_2 = arith.constant 0 : i32
    return %c0_i32, %c0_i32_0, %c0_i32_1 : i32, i32, i32
  }
  func.func @transform_3(%arg0: i32) -> (i32, i32, i32) {
    %c0_i32 = arith.constant 0 : i32
    %c0_i32_0 = arith.constant 0 : i32
    %c0_i32_1 = arith.constant 0 : i32
    %c0_i32_2 = arith.constant 0 : i32
    return %c0_i32, %c0_i32_0, %c0_i32_1 : i32, i32, i32
  }
  func.func @transform_4(%arg0: i32) -> (i32, i32) {
    %c0_i32 = arith.constant 0 : i32
    %c0_i32_0 = arith.constant 0 : i32
    %c0_i32_1 = arith.constant 0 : i32
    return %c0_i32, %c0_i32_0 : i32, i32
  }
  func.func @transform_5(%arg0: i32) -> i32 {
    %c0_i32 = arith.constant 0 : i32
    %c0_i32_0 = arith.constant 0 : i32
    return %c0_i32 : i32
  }
  func.func @transform_6(%arg0: i32) -> (i32, i32, i32) {
    %c0_i32 = arith.constant 0 : i32
    %c0_i32_0 = arith.constant 0 : i32
    %c0_i32_1 = arith.constant 0 : i32
    return %arg0, %c0_i32, %c0_i32_0 : i32, i32, i32
  }
  func.func @transform_7(%arg0: i32) -> (i32, i32, i32) {
    %c0_i32 = arith.constant 0 : i32
    %c0_i32_0 = arith.constant 0 : i32
    %c0_i32_1 = arith.constant 0 : i32
    return %arg0, %c0_i32, %c0_i32_0 : i32, i32, i32
  }
}

</mosaic_0001>

<llo_original>
// kernel: catalyst_segmentation.1
$region0: #{catalyst_segmentation.1}
  #allocation0 [shape = 'u32[]', space=smem, size = 0x4, offset = 0x4, fixed_abs, tag = 'smem constant byte address 0x4 - core index']
  #allocation1 [shape = 'u32[144,128]{1,0:T(1,128)}', space=vmem, size = 0x12000, scoped, tag = 'internal scratch']
  #allocation2 [shape = 'f32[18,18,64]{2,1,0:T(8,128)}', space=vmem, size = 0x36000, scoped, tag = 'scratch operand']
  #allocation3 [shape = 'f32[18,18,128]{2,1,0:T(8,128)}', space=vmem, size = 0x36000, scoped, tag = 'scratch operand']
  #allocation4 [shape = 'f32[1]{0:T(128)S(6)}', space=smem, size = 0x200, scoped, tag = 'scoped memory for catalyst_segmentation.1']
  %s0 = inlined_call_operand.vmem [shape: f32[2,18,18,1], index: 0, kind: input, shape index: {}]
  %s1 = inlined_call_operand.vmem [shape: f32[9,1,64], index: 1, kind: input, shape index: {}]
  %s2 = inlined_call_operand.vmem [shape: bf16[9,64,128], index: 2, kind: input, shape index: {}]
  %s3 = inlined_call_operand.vmem [shape: bf16[9,128,64], index: 3, kind: input, shape index: {}]
  %s4 = inlined_call_operand.vmem [shape: f32[8,64], index: 4, kind: input, shape index: {}]
  %s5 = inlined_call_operand.<no memory space> [shape: f32[1], index: 5, kind: input, shape index: {}]
  %s6 = inlined_call_operand.hbm [shape: f32[2,256,128], index: 6, kind: output, shape index: {0}]
  %s7 = inlined_call_operand.vmem [shape: f32[2,1,256], index: 7, kind: output, shape index: {1}]
  %8 = xla_tuple %s6, %s7
  %s9 = sld [smem:[#allocation0]]
  $region65: #{catalyst_segmentation.1} parent=0
    _
  %s11 = ssub.s32 1, %s9
  %s12 = scalar_select 0, %s11, %s9
  %13 = sst [smem:[#allocation4]] %s5
  $region1: #{catalyst_segmentation.1} parent=0
    #allocation5 [shape = 'u8[262144]{0}', space=vmem, size = 0x40000, scoped, tag = 'output window, operand 0']
    #allocation6 [shape = 's32[2]{0}', space=sflag, size = 0x8, scoped, tag = 'scoped memory for catalyst_segmentation.1']
    %14 = vsyncpa [#allocation6], 0
    %s15 = scalar_lea.sflag [#allocation6], 1
    %16 = vsyncpa %s15, 0
    loop: start=0, step=1, limit=4
    $region2: #{catalyst_segmentation.1} parent=1 // loop_pre_header
      _
    $region3: #{catalyst_segmentation.1} parent=1 // loop_header
      %s18 = sphi 0, %s22
      %p19 = scmp.ge.s32.totalorder %s18, 4
      %s28 = sphi 0, %s30
      %s31 = sphi 0, %s28
      %s32 = sphi 0, %s31
      %s48 = sphi 0, %s32
      %s52 = sphi 0, %s52
      %s54 = sphi 0, %s52
      %s55 = sphi 0, %s54
      %s69 = sphi 0, %s55
      %s73 = sphi 0, %s73
      %s75 = sphi 0, %s73
      %s76 = sphi 0, %s75
      %s90 = sphi 0, %s76
      %s94 = sphi 0, %s94
      %s96 = sphi 0, %s94
      %s97 = sphi 0, %s96
      %s111 = sphi 0, %s97
      %s115 = sphi 0, %s115
      %s117 = sphi 0, %s115
      %s118 = sphi 0, %s117
      %s132 = sphi 0, %s118
      %s136 = sphi 0, %s136
      %s138 = sphi 0, %s136
      %s139 = sphi 0, %s138
      %s153 = sphi 0, %s139
      %s159 = sphi 0, %s161
      %s162 = sphi 0, %s159
      %s163 = sphi 0, %s162
      %s179 = sphi 0, %s163
      %s185 = sphi 0, %s187
      %s188 = sphi 0, %s185
      %s189 = sphi 0, %s188
      %s205 = sphi 0, %s189
    $region4: #{catalyst_segmentation.1} parent=1 // loop_header_branch
      %21 = sbr.rel (%p19) target = $region8
    $region5: #{catalyst_segmentation.1} parent=1 // loop_body
      %s23 = ssub.s32 %s18, 1
      %s24 = ssub.s32 %s18, 2
      %s25 = sadd.s32 %s18, 1
      %s26 = ssub.s32 %s18, %s25
      %p27 = scmp.eq.s32.totalorder %s26, 0
      %s29 = sadd.s32 %s28, 1
      %s30 = scalar_select %p27, %s28, %s29
      %p33 = pneg %p27
      %p34 = scmp.eq.s32.totalorder %s18, 1
      %p35 = por %p33, %p34
      %p36 = scmp.ne.s32.totalorder %s28, %s31
      %p37 = scmp.eq.s32.totalorder %s18, 0
      %p38 = por %p36, %p37
      %p39 = scmp.ne.s32.totalorder %s28, %s31
      %p40 = scmp.eq.s32.totalorder %s23, 1
      %p41 = por %p39, %p40
      %p42 = scmp.ne.s32.totalorder %s31, %s32
      %p43 = scmp.eq.s32.totalorder %s23, 0
      %p44 = por %p42, %p43
      %p45 = scmp.ne.s32.totalorder %s31, %s32
      %p46 = scmp.eq.s32.totalorder %s24, 1
      %p47 = por %p45, %p46
      %p49 = scmp.ne.s32.totalorder %s32, %s48
      %p50 = scmp.eq.s32.totalorder %s24, 0
      %p51 = por %p49, %p50
      %s53 = sadd.s32 %s52, 1
      %p56 = scmp.eq.s32.totalorder %s18, 1
      %p57 = scmp.ne.s32.totalorder %s52, %s54
      %p58 = scmp.eq.s32.totalorder %s18, 0
      %p59 = por %p57, %p58
      %p60 = scmp.ne.s32.totalorder %s52, %s54
      %p61 = scmp.eq.s32.totalorder %s23, 1
      %p62 = por %p60, %p61
      %p63 = scmp.ne.s32.totalorder %s54, %s55
      %p64 = scmp.eq.s32.totalorder %s23, 0
      %p65 = por %p63, %p64
      %p66 = scmp.ne.s32.totalorder %s54, %s55
      %p67 = scmp.eq.s32.totalorder %s24, 1
      %p68 = por %p66, %p67
      %p70 = scmp.ne.s32.totalorder %s55, %s69
      %p71 = scmp.eq.s32.totalorder %s24, 0
      %p72 = por %p70, %p71
      %s74 = sadd.s32 %s73, 1
      %p77 = scmp.eq.s32.totalorder %s18, 1
      %p78 = scmp.ne.s32.totalorder %s73, %s75
      %p79 = scmp.eq.s32.totalorder %s18, 0
      %p80 = por %p78, %p79
      %p81 = scmp.ne.s32.totalorder %s73, %s75
      %p82 = scmp.eq.s32.totalorder %s23, 1
      %p83 = por %p81, %p82
      %p84 = scmp.ne.s32.totalorder %s75, %s76
      %p85 = scmp.eq.s32.totalorder %s23, 0
      %p86 = por %p84, %p85
      %p87 = scmp.ne.s32.totalorder %s75, %s76
      %p88 = scmp.eq.s32.totalorder %s24, 1
      %p89 = por %p87, %p88
      %p91 = scmp.ne.s32.totalorder %s76, %s90
      %p92 = scmp.eq.s32.totalorder %s24, 0
      %p93 = por %p91, %p92
      %s95 = sadd.s32 %s94, 1
      %p98 = scmp.eq.s32.totalorder %s18, 1
      %p99 = scmp.ne.s32.totalorder %s94, %s96
      %p100 = scmp.eq.s32.totalorder %s18, 0
      %p101 = por %p99, %p100
      %p102 = scmp.ne.s32.totalorder %s94, %s96
      %p103 = scmp.eq.s32.totalorder %s23, 1
      %p104 = por %p102, %p103
      %p105 = scmp.ne.s32.totalorder %s96, %s97
      %p106 = scmp.eq.s32.totalorder %s23, 0
      %p107 = por %p105, %p106
      %p108 = scmp.ne.s32.totalorder %s96, %s97
      %p109 = scmp.eq.s32.totalorder %s24, 1
      %p110 = por %p108, %p109
      %p112 = scmp.ne.s32.totalorder %s97, %s111
      %p113 = scmp.eq.s32.totalorder %s24, 0
      %p114 = por %p112, %p113
      %s116 = sadd.s32 %s115, 1
      %p119 = scmp.eq.s32.totalorder %s18, 1
      %p120 = scmp.ne.s32.totalorder %s115, %s117
      %p121 = scmp.eq.s32.totalorder %s18, 0
      %p122 = por %p120, %p121
      %p123 = scmp.ne.s32.totalorder %s115, %s117
      %p124 = scmp.eq.s32.totalorder %s23, 1
      %p125 = por %p123, %p124
      %p126 = scmp.ne.s32.totalorder %s117, %s118
      %p127 = scmp.eq.s32.totalorder %s23, 0
      %p128 = por %p126, %p127
      %p129 = scmp.ne.s32.totalorder %s117, %s118
      %p130 = scmp.eq.s32.totalorder %s24, 1
      %p131 = por %p129, %p130
      %p133 = scmp.ne.s32.totalorder %s118, %s132
      %p134 = scmp.eq.s32.totalorder %s24, 0
      %p135 = por %p133, %p134
      %s137 = sadd.s32 %s136, 1
      %p140 = scmp.eq.s32.totalorder %s18, 1
      %p141 = scmp.ne.s32.totalorder %s136, %s138
      %p142 = scmp.eq.s32.totalorder %s18, 0
      %p143 = por %p141, %p142
      %p144 = scmp.ne.s32.totalorder %s136, %s138
      %p145 = scmp.eq.s32.totalorder %s23, 1
      %p146 = por %p144, %p145
      %p147 = scmp.ne.s32.totalorder %s138, %s139
      %p148 = scmp.eq.s32.totalorder %s23, 0
      %p149 = por %p147, %p148
      %p150 = scmp.ne.s32.totalorder %s138, %s139
      %p151 = scmp.eq.s32.totalorder %s24, 1
      %p152 = por %p150, %p151
      %p154 = scmp.ne.s32.totalorder %s139, %s153
      %p155 = scmp.eq.s32.totalorder %s24, 0
      %p156 = por %p154, %p155
      %s157 = ssub.s32 %s18, %s25
      %p158 = scmp.eq.s32.totalorder %s157, 0
      %s160 = sadd.s32 %s159, 1
      %s161 = scalar_select %p158, %s159, %s160
      %p164 = pneg %p158
      %p165 = scmp.eq.s32.totalorder %s18, 1
      %p166 = por %p164, %p165
      %p167 = scmp.ne.s32.totalorder %s159, %s162
      %p168 = scmp.eq.s32.totalorder %s18, 0
      %p169 = por %p167, %p168
      %p170 = scmp.ne.s32.totalorder %s159, %s162
      %p171 = scmp.eq.s32.totalorder %s23, 1
      %p172 = por %p170, %p171
      %p173 = scmp.ne.s32.totalorder %s162, %s163
      %p174 = scmp.eq.s32.totalorder %s23, 0
      %p175 = por %p173, %p174
      %p176 = scmp.ne.s32.totalorder %s162, %s163
      %p177 = scmp.eq.s32.totalorder %s24, 1
      %p178 = por %p176, %p177
      %p180 = scmp.ne.s32.totalorder %s163, %s179
      %p181 = scmp.eq.s32.totalorder %s24, 0
      %p182 = por %p180, %p181
      %s183 = ssub.s32 %s18, %s25
      %p184 = scmp.eq.s32.totalorder %s183, 0
      %s186 = sadd.s32 %s185, 1
      %s187 = scalar_select %p184, %s185, %s186
      %p190 = pneg %p184
      %p191 = scmp.eq.s32.totalorder %s18, 1
      %p192 = por %p190, %p191
      %p193 = scmp.ne.s32.totalorder %s185, %s188
      %p194 = scmp.eq.s32.totalorder %s18, 0
      %p195 = por %p193, %p194
      %p196 = scmp.ne.s32.totalorder %s185, %s188
      %p197 = scmp.eq.s32.totalorder %s23, 1
      %p198 = por %p196, %p197
      %p199 = scmp.ne.s32.totalorder %s188, %s189
      %p200 = scmp.eq.s32.totalorder %s23, 0
      %p201 = por %p199, %p200
      %p202 = scmp.ne.s32.totalorder %s188, %s189
      %p203 = scmp.eq.s32.totalorder %s24, 1
      %p204 = por %p202, %p203
      %p206 = scmp.ne.s32.totalorder %s189, %s205
      %p207 = scmp.eq.s32.totalorder %s24, 0
      %p208 = por %p206, %p207
      %p209 = scmp.le.s32.totalorder 1, %s18
      %p210 = scmp.lt.s32.totalorder %s18, 3
      %p211 = pnand %p209, %p210
      %p212 = pneg %p211
      // Predicated region
      $region9: #{catalyst_segmentation.1} parent=5 // pred_check
        _
      $region10: #{catalyst_segmentation.1} parent=5 // pred_check_branch
        %214 = sbr.rel (%p211) target = $region12
      $region11: #{catalyst_segmentation.1} parent=5 // pred_region
        %s215 = ssub.s32 %s18, 1
        // Predicated region
        $region13: #{catalyst_segmentation.1} parent=11 // pred_check
          %p216 = pneg %p65
        $region14: #{catalyst_segmentation.1} parent=11 // pred_check_branch
          %218 = sbr.rel (%p216) target = $region16
        $region15: #{catalyst_segmentation.1} parent=11 // pred_region
          _
        $region16: #{catalyst_segmentation.1} parent=11 // pred_fallthru
          _
        // Predicated region
        $region17: #{catalyst_segmentation.1} parent=11 // pred_check
          %p219 = pneg %p86
        $region18: #{catalyst_segmentation.1} parent=11 // pred_check_branch
          %221 = sbr.rel (%p219) target = $region20
        $region19: #{catalyst_segmentation.1} parent=11 // pred_region
          _
        $region20: #{catalyst_segmentation.1} parent=11 // pred_fallthru
          _
        // Predicated region
        $region21: #{catalyst_segmentation.1} parent=11 // pred_check
          %p222 = pneg %p107
        $region22: #{catalyst_segmentation.1} parent=11 // pred_check_branch
          %224 = sbr.rel (%p222) target = $region24
        $region23: #{catalyst_segmentation.1} parent=11 // pred_region
          _
        $region24: #{catalyst_segmentation.1} parent=11 // pred_fallthru
          _
        // Predicated region
        $region25: #{catalyst_segmentation.1} parent=11 // pred_check
          %p225 = pneg %p128
        $region26: #{catalyst_segmentation.1} parent=11 // pred_check_branch
          %227 = sbr.rel (%p225) target = $region28
        $region27: #{catalyst_segmentation.1} parent=11 // pred_region
          _
        $region28: #{catalyst_segmentation.1} parent=11 // pred_fallthru
          _
        // Predicated region
        $region29: #{catalyst_segmentation.1} parent=11 // pred_check
          %p228 = pneg %p149
        $region30: #{catalyst_segmentation.1} parent=11 // pred_check_branch
          %230 = sbr.rel (%p228) target = $region32
        $region31: #{catalyst_segmentation.1} parent=11 // pred_region
          _
        $region32: #{catalyst_segmentation.1} parent=11 // pred_fallthru
          _
      $region12: #{catalyst_segmentation.1} parent=5 // pred_fallthru
        _
      %p231 = scmp.lt.s32.totalorder %s18, 2
      // Predicated region
      $region33: #{catalyst_segmentation.1} parent=5 // pred_check
        %p232 = pneg %p231
      $region34: #{catalyst_segmentation.1} parent=5 // pred_check_branch
        %234 = sbr.rel (%p232) target = $region36
      $region35: #{catalyst_segmentation.1} parent=5 // pred_region
        // Predicated region
        $region37: #{catalyst_segmentation.1} parent=35 // pred_check
          %p235 = pneg %p38
        $region38: #{catalyst_segmentation.1} parent=35 // pred_check_branch
          %237 = sbr.rel (%p235) target = $region40
        $region39: #{catalyst_segmentation.1} parent=35 // pred_region
          %p238 = scmp.lt.s32.totalorder %s18, 1
          %s239 = scalar_select %p238, %s18, 1
          %s240 = smul.addr %s239, 54
          %s241 = smul.addr %s240, 8
          %s242 = scalar_lea.vmem %s0, %s241
        $region40: #{catalyst_segmentation.1} parent=35 // pred_fallthru
          _
      $region36: #{catalyst_segmentation.1} parent=5 // pred_fallthru
        _
      %p243 = scmp.le.s32.totalorder 1, %s18
      %p244 = scmp.lt.s32.totalorder %s18, 3
      %p245 = pnand %p243, %p244
      %p246 = pneg %p245
      // Predicated region
      $region41: #{catalyst_segmentation.1} parent=5 // pred_check
        _
      $region42: #{catalyst_segmentation.1} parent=5 // pred_check_branch
        %248 = sbr.rel (%p245) target = $region44
      $region43: #{catalyst_segmentation.1} parent=5 // pred_region
        %s249 = ssub.s32 %s18, 1
        %p250 = scmp.lt.s32.totalorder %s23, 1
        %s251 = scalar_select %p250, %s23, 1
        %s252 = smul.addr %s251, 54
        %s253 = smul.addr %s252, 8
        %s254 = scalar_lea.vmem %s0, %s253
        %p255 = pneg %p44
        %p256 = pneg %p41
        %p257 = pneg %p65
        %p258 = pneg %p62
        %p259 = pneg %p86
        %p260 = pneg %p83
        %p261 = pneg %p107
        %p262 = pneg %p104
        %p263 = pneg %p128
        %p264 = pneg %p125
        %p265 = pneg %p149
        %p266 = pneg %p146
        %p267 = pneg %p175
        %p268 = pneg %p172
        %s269 = sand.u32 %s162, 1
        %s270 = scalar_lea.sflag [#allocation6], %s269
        %s271 = sand.u32 %s162, 1
        %s272 = smul.addr %s271, 256
        %s273 = scalar_lea.vmem [#allocation5], %s272
        %p274 = pneg %p201
        %p275 = pneg %p198
        %p276 = scmp.lt.s32.totalorder %s23, 1
        %s277 = scalar_select %p276, %s23, 1
        %s278 = smul.addr %s277, 2
        %s279 = scalar_lea.vmem %s7, %s278
        %p280 = scmp.lt.s32.totalorder %s23, 1
        %s281 = scalar_select %p280, %s23, 1
        %s282 = smul.addr %s281, 54
        %s283 = smul.addr %s282, 8
        %s284 = scalar_lea.vmem %s0, %s283
        %p285 = scmp.lt.s32.totalorder %s23, 1
        %s286 = scalar_select %p285, %s23, 1
        %s287 = smul.addr %s286, 2
        %s288 = scalar_lea.vmem %s7, %s287
        %v290 = vld [vmem:[%s284] sm:$0xff]
        %v291 = vld [vmem:[%s284 + $0x8] sm:$0xff]
        %v292 = vld [vmem:[%s284 + $0x18] sm:$0xff]
        %v293 = vld [vmem:[%s284 + $0x20] sm:$0xff]
        %v294 = vld [vmem:[%s284 + $0x30] sm:$0xff]
        %v295 = vld [vmem:[%s284 + $0x38] sm:$0xff]
        %v296 = vld [vmem:[%s284 + $0x48] sm:$0xff]
        %v297 = vld [vmem:[%s284 + $0x50] sm:$0xff]
        %v298 = vld [vmem:[%s284 + $0x60] sm:$0xff]
        %v299 = vld [vmem:[%s284 + $0x68] sm:$0xff]
        %v300 = vld [vmem:[%s284 + $0x78] sm:$0xff]
        %v301 = vld [vmem:[%s284 + $0x80] sm:$0xff]
        %v302 = vld [vmem:[%s284 + $0x90] sm:$0xff]
        %v303 = vld [vmem:[%s284 + $0x98] sm:$0xff]
        %v304 = vld [vmem:[%s284 + $0xa8] sm:$0xff]
        %v305 = vld [vmem:[%s284 + $0xb0] sm:$0xff]
        %v306 = vld [vmem:[%s284 + $0xc0] sm:$0xff]
        %v307 = vld [vmem:[%s284 + $0xc8] sm:$0xff]
        %v308 = vld [vmem:[%s284 + $0xd8] sm:$0xff]
        %v309 = vld [vmem:[%s284 + $0xe0] sm:$0xff]
        %v310 = vld [vmem:[%s284 + $0xf0] sm:$0xff]
        %v311 = vld [vmem:[%s284 + $0xf8] sm:$0xff]
        %v312 = vld [vmem:[%s284 + $0x108] sm:$0xff]
        %v313 = vld [vmem:[%s284 + $0x110] sm:$0xff]
        %v314 = vld [vmem:[%s284 + $0x120] sm:$0xff]
        %v315 = vld [vmem:[%s284 + $0x128] sm:$0xff]
        %v316 = vld [vmem:[%s284 + $0x138] sm:$0xff]
        %v317 = vld [vmem:[%s284 + $0x140] sm:$0xff]
        %v318 = vld [vmem:[%s284 + $0x150] sm:$0xff]
        %v319 = vld [vmem:[%s284 + $0x158] sm:$0xff]
        %v320 = vld [vmem:[%s284 + $0x168] sm:$0xff]
        %v321 = vld [vmem:[%s284 + $0x170] sm:$0xff]
        %v322 = vld [vmem:[%s1] sm:$0x1]
        %324 = vset.pattern.permute.xlu0 0
        %325 = vperm.xlu0 %324, %v290
        %v326 = vpop.permute.xlu0 %325
        %329 = vset.pattern.permute.xlu0 0
        %330 = vperm.xlu0 %329, %v291
        %v331 = vpop.permute.xlu0 %330
        %334 = vset.pattern.permute.xlu0 0
        %335 = vperm.xlu0 %334, %v292
        %v336 = vpop.permute.xlu0 %335
        %339 = vset.pattern.permute.xlu0 0
        %340 = vperm.xlu0 %339, %v293
        %v341 = vpop.permute.xlu0 %340
        %344 = vset.pattern.permute.xlu0 0
        %345 = vperm.xlu0 %344, %v294
        %v346 = vpop.permute.xlu0 %345
        %349 = vset.pattern.permute.xlu0 0
        %350 = vperm.xlu0 %349, %v295
        %v351 = vpop.permute.xlu0 %350
        %354 = vset.pattern.permute.xlu0 0
        %355 = vperm.xlu0 %354, %v296
        %v356 = vpop.permute.xlu0 %355
        %359 = vset.pattern.permute.xlu0 0
        %360 = vperm.xlu0 %359, %v297
        %v361 = vpop.permute.xlu0 %360
        %364 = vset.pattern.permute.xlu0 0
        %365 = vperm.xlu0 %364, %v298
        %v366 = vpop.permute.xlu0 %365
        %369 = vset.pattern.permute.xlu0 0
        %370 = vperm.xlu0 %369, %v299
        %v371 = vpop.permute.xlu0 %370
        %374 = vset.pattern.permute.xlu0 0
        %375 = vperm.xlu0 %374, %v300
        %v376 = vpop.permute.xlu0 %375
        %379 = vset.pattern.permute.xlu0 0
        %380 = vperm.xlu0 %379, %v301
        %v381 = vpop.permute.xlu0 %380
        %384 = vset.pattern.permute.xlu0 0
        %385 = vperm.xlu0 %384, %v302
        %v386 = vpop.permute.xlu0 %385
        %389 = vset.pattern.permute.xlu0 0
        %390 = vperm.xlu0 %389, %v303
        %v391 = vpop.permute.xlu0 %390
        %394 = vset.pattern.permute.xlu0 0
        %395 = vperm.xlu0 %394, %v304
        %v396 = vpop.permute.xlu0 %395
        %399 = vset.pattern.permute.xlu0 0
        %400 = vperm.xlu0 %399, %v305
        %v401 = vpop.permute.xlu0 %400
        %404 = vset.pattern.permute.xlu0 0
        %405 = vperm.xlu0 %404, %v306
        %v406 = vpop.permute.xlu0 %405
        %409 = vset.pattern.permute.xlu0 0
        %410 = vperm.xlu0 %409, %v307
        %v411 = vpop.permute.xlu0 %410
        %414 = vset.pattern.permute.xlu0 0
        %415 = vperm.xlu0 %414, %v308
        %v416 = vpop.permute.xlu0 %415
        %419 = vset.pattern.permute.xlu0 0
        %420 = vperm.xlu0 %419, %v309
        %v421 = vpop.permute.xlu0 %420
        %424 = vset.pattern.permute.xlu0 0
        %425 = vperm.xlu0 %424, %v310
        %v426 = vpop.permute.xlu0 %425
        %429 = vset.pattern.permute.xlu0 0
        %430 = vperm.xlu0 %429, %v311
        %v431 = vpop.permute.xlu0 %430
        %434 = vset.pattern.permute.xlu0 0
        %435 = vperm.xlu0 %434, %v312
        %v436 = vpop.permute.xlu0 %435
        %439 = vset.pattern.permute.xlu0 0
        %440 = vperm.xlu0 %439, %v313
        %v441 = vpop.permute.xlu0 %440
        %444 = vset.pattern.permute.xlu0 0
        %445 = vperm.xlu0 %444, %v314
        %v446 = vpop.permute.xlu0 %445
        %449 = vset.pattern.permute.xlu0 0
        %450 = vperm.xlu0 %449, %v315
        %v451 = vpop.permute.xlu0 %450
        %454 = vset.pattern.permute.xlu0 0
        %455 = vperm.xlu0 %454, %v316
        %v456 = vpop.permute.xlu0 %455
        %459 = vset.pattern.permute.xlu0 0
        %460 = vperm.xlu0 %459, %v317
        %v461 = vpop.permute.xlu0 %460
        %464 = vset.pattern.permute.xlu0 0
        %465 = vperm.xlu0 %464, %v318
        %v466 = vpop.permute.xlu0 %465
        %469 = vset.pattern.permute.xlu0 0
        %470 = vperm.xlu0 %469, %v319
        %v471 = vpop.permute.xlu0 %470
        %474 = vset.pattern.permute.xlu0 0
        %475 = vperm.xlu0 %474, %v320
        %v476 = vpop.permute.xlu0 %475
        %479 = vset.pattern.permute.xlu0 0
        %480 = vperm.xlu0 %479, %v321
        %v481 = vpop.permute.xlu0 %480
        %v484 = vlaneseq
        %v485 = vshrl.u32 %v484, 7
        %v486 = vsub.s32 0, %v485
        %v487 = vrot.slane %v322, %v486
        %v489 = vmul.f32 %v326, %v487
        %v490 = vmul.f32 %v331, %v487
        %v491 = vmul.f32 %v336, %v487
        %v492 = vmul.f32 %v341, %v487
        %v493 = vmul.f32 %v346, %v487
        %v494 = vmul.f32 %v351, %v487
        %v495 = vmul.f32 %v356, %v487
        %v496 = vmul.f32 %v361, %v487
        %v497 = vmul.f32 %v366, %v487
        %v498 = vmul.f32 %v371, %v487
        %v499 = vmul.f32 %v376, %v487
        %v500 = vmul.f32 %v381, %v487
        %v501 = vmul.f32 %v386, %v487
        %v502 = vmul.f32 %v391, %v487
        %v503 = vmul.f32 %v396, %v487
        %v504 = vmul.f32 %v401, %v487
        %v505 = vmul.f32 %v406, %v487
        %v506 = vmul.f32 %v411, %v487
        %v507 = vmul.f32 %v416, %v487
        %v508 = vmul.f32 %v421, %v487
        %v509 = vmul.f32 %v426, %v487
        %v510 = vmul.f32 %v431, %v487
        %v511 = vmul.f32 %v436, %v487
        %v512 = vmul.f32 %v441, %v487
        %v513 = vmul.f32 %v446, %v487
        %v514 = vmul.f32 %v451, %v487
        %v515 = vmul.f32 %v456, %v487
        %v516 = vmul.f32 %v461, %v487
        %v517 = vmul.f32 %v466, %v487
        %v518 = vmul.f32 %v471, %v487
        %v519 = vmul.f32 %v476, %v487
        %v520 = vmul.f32 %v481, %v487
        %v521 = vadd.f32 %v489, 0.0
        %v522 = vadd.f32 %v490, 0.0
        %v523 = vadd.f32 %v491, 0.0
        %v524 = vadd.f32 %v492, 0.0
        %v525 = vadd.f32 %v493, 0.0
        %v526 = vadd.f32 %v494, 0.0
        %v527 = vadd.f32 %v495, 0.0
        %v528 = vadd.f32 %v496, 0.0
        %v529 = vadd.f32 %v497, 0.0
        %v530 = vadd.f32 %v498, 0.0
        %v531 = vadd.f32 %v499, 0.0
        %v532 = vadd.f32 %v500, 0.0
        %v533 = vadd.f32 %v501, 0.0
        %v534 = vadd.f32 %v502, 0.0
        %v535 = vadd.f32 %v503, 0.0
        %v536 = vadd.f32 %v504, 0.0
        %v537 = vadd.f32 %v505, 0.0
        %v538 = vadd.f32 %v506, 0.0
        %v539 = vadd.f32 %v507, 0.0
        %v540 = vadd.f32 %v508, 0.0
        %v541 = vadd.f32 %v509, 0.0
        %v542 = vadd.f32 %v510, 0.0
        %v543 = vadd.f32 %v511, 0.0
        %v544 = vadd.f32 %v512, 0.0
        %v545 = vadd.f32 %v513, 0.0
        %v546 = vadd.f32 %v514, 0.0
        %v547 = vadd.f32 %v515, 0.0
        %v548 = vadd.f32 %v516, 0.0
        %v549 = vadd.f32 %v517, 0.0
        %v550 = vadd.f32 %v518, 0.0
        %v551 = vadd.f32 %v519, 0.0
        %v552 = vadd.f32 %v520, 0.0
        %v553 = vld [vmem:[%s284 + $0x1] sm:$0xff]
        %v554 = vld [vmem:[%s284 + $0x9] sm:$0xff]
        %v555 = vld [vmem:[%s284 + $0x19] sm:$0xff]
        %v556 = vld [vmem:[%s284 + $0x21] sm:$0xff]
        %v557 = vld [vmem:[%s284 + $0x31] sm:$0xff]
        %v558 = vld [vmem:[%s284 + $0x39] sm:$0xff]
        %v559 = vld [vmem:[%s284 + $0x49] sm:$0xff]
        %v560 = vld [vmem:[%s284 + $0x51] sm:$0xff]
        %v561 = vld [vmem:[%s284 + $0x61] sm:$0xff]
        %v562 = vld [vmem:[%s284 + $0x69] sm:$0xff]
        %v563 = vld [vmem:[%s284 + $0x79] sm:$0xff]
        %v564 = vld [vmem:[%s284 + $0x81] sm:$0xff]
        %v565 = vld [vmem:[%s284 + $0x91] sm:$0xff]
        %v566 = vld [vmem:[%s284 + $0x99] sm:$0xff]
        %v567 = vld [vmem:[%s284 + $0xa9] sm:$0xff]
        %v568 = vld [vmem:[%s284 + $0xb1] sm:$0xff]
        %v569 = vld [vmem:[%s284 + $0xc1] sm:$0xff]
        %v570 = vld [vmem:[%s284 + $0xc9] sm:$0xff]
        %v571 = vld [vmem:[%s284 + $0xd9] sm:$0xff]
        %v572 = vld [vmem:[%s284 + $0xe1] sm:$0xff]
        %v573 = vld [vmem:[%s284 + $0xf1] sm:$0xff]
        %v574 = vld [vmem:[%s284 + $0xf9] sm:$0xff]
        %v575 = vld [vmem:[%s284 + $0x109] sm:$0xff]
        %v576 = vld [vmem:[%s284 + $0x111] sm:$0xff]
        %v577 = vld [vmem:[%s284 + $0x121] sm:$0xff]
        %v578 = vld [vmem:[%s284 + $0x129] sm:$0xff]
        %v579 = vld [vmem:[%s284 + $0x139] sm:$0xff]
        %v580 = vld [vmem:[%s284 + $0x141] sm:$0xff]
        %v581 = vld [vmem:[%s284 + $0x151] sm:$0xff]
        %v582 = vld [vmem:[%s284 + $0x159] sm:$0xff]
        %v583 = vld [vmem:[%s284 + $0x169] sm:$0xff]
        %v584 = vld [vmem:[%s284 + $0x171] sm:$0xff]
        %s585 = scalar_lea.vmem %s1, 1
        %v586 = vld [vmem:[%s585] sm:$0x1]
        %588 = vset.pattern.permute.xlu0 0
        %589 = vperm.xlu0 %588, %v553
        %v590 = vpop.permute.xlu0 %589
        %593 = vset.pattern.permute.xlu0 0
        %594 = vperm.xlu0 %593, %v554
        %v595 = vpop.permute.xlu0 %594
        %598 = vset.pattern.permute.xlu0 0
        %599 = vperm.xlu0 %598, %v555
        %v600 = vpop.permute.xlu0 %599
        %603 = vset.pattern.permute.xlu0 0
        %604 = vperm.xlu0 %603, %v556
        %v605 = vpop.permute.xlu0 %604
        %608 = vset.pattern.permute.xlu0 0
        %609 = vperm.xlu0 %608, %v557
        %v610 = vpop.permute.xlu0 %609
        %613 = vset.pattern.permute.xlu0 0
        %614 = vperm.xlu0 %613, %v558
        %v615 = vpop.permute.xlu0 %614
        %618 = vset.pattern.permute.xlu0 0
        %619 = vperm.xlu0 %618, %v559
        %v620 = vpop.permute.xlu0 %619
        %623 = vset.pattern.permute.xlu0 0
        %624 = vperm.xlu0 %623, %v560
        %v625 = vpop.permute.xlu0 %624
        %628 = vset.pattern.permute.xlu0 0
        %629 = vperm.xlu0 %628, %v561
        %v630 = vpop.permute.xlu0 %629
        %633 = vset.pattern.permute.xlu0 0
        %634 = vperm.xlu0 %633, %v562
        %v635 = vpop.permute.xlu0 %634
        %638 = vset.pattern.permute.xlu0 0
        %639 = vperm.xlu0 %638, %v563
        %v640 = vpop.permute.xlu0 %639
        %643 = vset.pattern.permute.xlu0 0
        %644 = vperm.xlu0 %643, %v564
        %v645 = vpop.permute.xlu0 %644
        %648 = vset.pattern.permute.xlu0 0
        %649 = vperm.xlu0 %648, %v565
        %v650 = vpop.permute.xlu0 %649
        %653 = vset.pattern.permute.xlu0 0
        %654 = vperm.xlu0 %653, %v566
        %v655 = vpop.permute.xlu0 %654
        %658 = vset.pattern.permute.xlu0 0
        %659 = vperm.xlu0 %658, %v567
        %v660 = vpop.permute.xlu0 %659
        %663 = vset.pattern.permute.xlu0 0
        %664 = vperm.xlu0 %663, %v568
        %v665 = vpop.permute.xlu0 %664
        %668 = vset.pattern.permute.xlu0 0
        %669 = vperm.xlu0 %668, %v569
        %v670 = vpop.permute.xlu0 %669
        %673 = vset.pattern.permute.xlu0 0
        %674 = vperm.xlu0 %673, %v570
        %v675 = vpop.permute.xlu0 %674
        %678 = vset.pattern.permute.xlu0 0
        %679 = vperm.xlu0 %678, %v571
        %v680 = vpop.permute.xlu0 %679
        %683 = vset.pattern.permute.xlu0 0
        %684 = vperm.xlu0 %683, %v572
        %v685 = vpop.permute.xlu0 %684
        %688 = vset.pattern.permute.xlu0 0
        %689 = vperm.xlu0 %688, %v573
        %v690 = vpop.permute.xlu0 %689
        %693 = vset.pattern.permute.xlu0 0
        %694 = vperm.xlu0 %693, %v574
        %v695 = vpop.permute.xlu0 %694
        %698 = vset.pattern.permute.xlu0 0
        %699 = vperm.xlu0 %698, %v575
        %v700 = vpop.permute.xlu0 %699
        %703 = vset.pattern.permute.xlu0 0
        %704 = vperm.xlu0 %703, %v576
        %v705 = vpop.permute.xlu0 %704
        %708 = vset.pattern.permute.xlu0 0
        %709 = vperm.xlu0 %708, %v577
        %v710 = vpop.permute.xlu0 %709
        %713 = vset.pattern.permute.xlu0 0
        %714 = vperm.xlu0 %713, %v578
        %v715 = vpop.permute.xlu0 %714
        %718 = vset.pattern.permute.xlu0 0
        %719 = vperm.xlu0 %718, %v579
        %v720 = vpop.permute.xlu0 %719
        %723 = vset.pattern.permute.xlu0 0
        %724 = vperm.xlu0 %723, %v580
        %v725 = vpop.permute.xlu0 %724
        %728 = vset.pattern.permute.xlu0 0
        %729 = vperm.xlu0 %728, %v581
        %v730 = vpop.permute.xlu0 %729
        %733 = vset.pattern.permute.xlu0 0
        %734 = vperm.xlu0 %733, %v582
        %v735 = vpop.permute.xlu0 %734
        %738 = vset.pattern.permute.xlu0 0
        %739 = vperm.xlu0 %738, %v583
        %v740 = vpop.permute.xlu0 %739
        %743 = vset.pattern.permute.xlu0 0
        %744 = vperm.xlu0 %743, %v584
        %v745 = vpop.permute.xlu0 %744
        %v748 = vlaneseq
        %v749 = vshrl.u32 %v748, 7
        %v750 = vsub.s32 0, %v749
        %v751 = vrot.slane %v586, %v750
        %v753 = vmul.f32 %v590, %v751
        %v754 = vmul.f32 %v595, %v751
        %v755 = vmul.f32 %v600, %v751
        %v756 = vmul.f32 %v605, %v751
        %v757 = vmul.f32 %v610, %v751
        %v758 = vmul.f32 %v615, %v751
        %v759 = vmul.f32 %v620, %v751
        %v760 = vmul.f32 %v625, %v751
        %v761 = vmul.f32 %v630, %v751
        %v762 = vmul.f32 %v635, %v751
        %v763 = vmul.f32 %v640, %v751
        %v764 = vmul.f32 %v645, %v751
        %v765 = vmul.f32 %v650, %v751
        %v766 = vmul.f32 %v655, %v751
        %v767 = vmul.f32 %v660, %v751
        %v768 = vmul.f32 %v665, %v751
        %v769 = vmul.f32 %v670, %v751
        %v770 = vmul.f32 %v675, %v751
        %v771 = vmul.f32 %v680, %v751
        %v772 = vmul.f32 %v685, %v751
        %v773 = vmul.f32 %v690, %v751
        %v774 = vmul.f32 %v695, %v751
        %v775 = vmul.f32 %v700, %v751
        %v776 = vmul.f32 %v705, %v751
        %v777 = vmul.f32 %v710, %v751
        %v778 = vmul.f32 %v715, %v751
        %v779 = vmul.f32 %v720, %v751
        %v780 = vmul.f32 %v725, %v751
        %v781 = vmul.f32 %v730, %v751
        %v782 = vmul.f32 %v735, %v751
        %v783 = vmul.f32 %v740, %v751
        %v784 = vmul.f32 %v745, %v751
        %v785 = vadd.f32 %v753, 0.0
        %v786 = vadd.f32 %v754, 0.0
        %v787 = vadd.f32 %v755, 0.0
        %v788 = vadd.f32 %v756, 0.0
        %v789 = vadd.f32 %v757, 0.0
        %v790 = vadd.f32 %v758, 0.0
        %v791 = vadd.f32 %v759, 0.0
        %v792 = vadd.f32 %v760, 0.0
        %v793 = vadd.f32 %v761, 0.0
        %v794 = vadd.f32 %v762, 0.0
        %v795 = vadd.f32 %v763, 0.0
        %v796 = vadd.f32 %v764, 0.0
        %v797 = vadd.f32 %v765, 0.0
        %v798 = vadd.f32 %v766, 0.0
        %v799 = vadd.f32 %v767, 0.0
        %v800 = vadd.f32 %v768, 0.0
        %v801 = vadd.f32 %v769, 0.0
        %v802 = vadd.f32 %v770, 0.0
        %v803 = vadd.f32 %v771, 0.0
        %v804 = vadd.f32 %v772, 0.0
        %v805 = vadd.f32 %v773, 0.0
        %v806 = vadd.f32 %v774, 0.0
        %v807 = vadd.f32 %v775, 0.0
        %v808 = vadd.f32 %v776, 0.0
        %v809 = vadd.f32 %v777, 0.0
        %v810 = vadd.f32 %v778, 0.0
        %v811 = vadd.f32 %v779, 0.0
        %v812 = vadd.f32 %v780, 0.0
        %v813 = vadd.f32 %v781, 0.0
        %v814 = vadd.f32 %v782, 0.0
        %v815 = vadd.f32 %v783, 0.0
        %v816 = vadd.f32 %v784, 0.0
        %v817 = vadd.f32 %v521, %v785
        %v818 = vadd.f32 %v522, %v786
        %v819 = vadd.f32 %v523, %v787
        %v820 = vadd.f32 %v524, %v788
        %v821 = vadd.f32 %v525, %v789
        %v822 = vadd.f32 %v526, %v790
        %v823 = vadd.f32 %v527, %v791
        %v824 = vadd.f32 %v528, %v792
        %v825 = vadd.f32 %v529, %v793
        %v826 = vadd.f32 %v530, %v794
        %v827 = vadd.f32 %v531, %v795
        %v828 = vadd.f32 %v532, %v796
        %v829 = vadd.f32 %v533, %v797
        %v830 = vadd.f32 %v534, %v798
        %v831 = vadd.f32 %v535, %v799
        %v832 = vadd.f32 %v536, %v800
        %v833 = vadd.f32 %v537, %v801
        %v834 = vadd.f32 %v538, %v802
        %v835 = vadd.f32 %v539, %v803
        %v836 = vadd.f32 %v540, %v804
        %v837 = vadd.f32 %v541, %v805
        %v838 = vadd.f32 %v542, %v806
        %v839 = vadd.f32 %v543, %v807
        %v840 = vadd.f32 %v544, %v808
        %v841 = vadd.f32 %v545, %v809
        %v842 = vadd.f32 %v546, %v810
        %v843 = vadd.f32 %v547, %v811
        %v844 = vadd.f32 %v548, %v812
        %v845 = vadd.f32 %v549, %v813
        %v846 = vadd.f32 %v550, %v814
        %v847 = vadd.f32 %v551, %v815
        %v848 = vadd.f32 %v552, %v816
        %v849 = vld [vmem:[%s284 + $0x2] sm:$0xff]
        %v850 = vld [vmem:[%s284 + $0xa] sm:$0xff]
        %v851 = vld [vmem:[%s284 + $0x1a] sm:$0xff]
        %v852 = vld [vmem:[%s284 + $0x22] sm:$0xff]
        %v853 = vld [vmem:[%s284 + $0x32] sm:$0xff]
        %v854 = vld [vmem:[%s284 + $0x3a] sm:$0xff]
        %v855 = vld [vmem:[%s284 + $0x4a] sm:$0xff]
        %v856 = vld [vmem:[%s284 + $0x52] sm:$0xff]
        %v857 = vld [vmem:[%s284 + $0x62] sm:$0xff]
        %v858 = vld [vmem:[%s284 + $0x6a] sm:$0xff]
        %v859 = vld [vmem:[%s284 + $0x7a] sm:$0xff]
        %v860 = vld [vmem:[%s284 + $0x82] sm:$0xff]
        %v861 = vld [vmem:[%s284 + $0x92] sm:$0xff]
        %v862 = vld [vmem:[%s284 + $0x9a] sm:$0xff]
        %v863 = vld [vmem:[%s284 + $0xaa] sm:$0xff]
        %v864 = vld [vmem:[%s284 + $0xb2] sm:$0xff]
        %v865 = vld [vmem:[%s284 + $0xc2] sm:$0xff]
        %v866 = vld [vmem:[%s284 + $0xca] sm:$0xff]
        %v867 = vld [vmem:[%s284 + $0xda] sm:$0xff]
        %v868 = vld [vmem:[%s284 + $0xe2] sm:$0xff]
        %v869 = vld [vmem:[%s284 + $0xf2] sm:$0xff]
        %v870 = vld [vmem:[%s284 + $0xfa] sm:$0xff]
        %v871 = vld [vmem:[%s284 + $0x10a] sm:$0xff]
        %v872 = vld [vmem:[%s284 + $0x112] sm:$0xff]
        %v873 = vld [vmem:[%s284 + $0x122] sm:$0xff]
        %v874 = vld [vmem:[%s284 + $0x12a] sm:$0xff]
        %v875 = vld [vmem:[%s284 + $0x13a] sm:$0xff]
        %v876 = vld [vmem:[%s284 + $0x142] sm:$0xff]
        %v877 = vld [vmem:[%s284 + $0x152] sm:$0xff]
        %v878 = vld [vmem:[%s284 + $0x15a] sm:$0xff]
        %v879 = vld [vmem:[%s284 + $0x16a] sm:$0xff]
        %v880 = vld [vmem:[%s284 + $0x172] sm:$0xff]
        %s881 = scalar_lea.vmem %s1, 2
        %v882 = vld [vmem:[%s881] sm:$0x1]
        %884 = vset.pattern.permute.xlu0 0
        %885 = vperm.xlu0 %884, %v849
        %v886 = vpop.permute.xlu0 %885
        %889 = vset.pattern.permute.xlu0 0
        %890 = vperm.xlu0 %889, %v850
        %v891 = vpop.permute.xlu0 %890
        %894 = vset.pattern.permute.xlu0 0
        %895 = vperm.xlu0 %894, %v851
        %v896 = vpop.permute.xlu0 %895
        %899 = vset.pattern.permute.xlu0 0
        %900 = vperm.xlu0 %899, %v852
        %v901 = vpop.permute.xlu0 %900
        %904 = vset.pattern.permute.xlu0 0
        %905 = vperm.xlu0 %904, %v853
        %v906 = vpop.permute.xlu0 %905
        %909 = vset.pattern.permute.xlu0 0
        %910 = vperm.xlu0 %909, %v854
        %v911 = vpop.permute.xlu0 %910
        %914 = vset.pattern.permute.xlu0 0
        %915 = vperm.xlu0 %914, %v855
        %v916 = vpop.permute.xlu0 %915
        %919 = vset.pattern.permute.xlu0 0
        %920 = vperm.xlu0 %919, %v856
        %v921 = vpop.permute.xlu0 %920
        %924 = vset.pattern.permute.xlu0 0
        %925 = vperm.xlu0 %924, %v857
        %v926 = vpop.permute.xlu0 %925
        %929 = vset.pattern.permute.xlu0 0
        %930 = vperm.xlu0 %929, %v858
        %v931 = vpop.permute.xlu0 %930
        %934 = vset.pattern.permute.xlu0 0
        %935 = vperm.xlu0 %934, %v859
        %v936 = vpop.permute.xlu0 %935
        %939 = vset.pattern.permute.xlu0 0
        %940 = vperm.xlu0 %939, %v860
        %v941 = vpop.permute.xlu0 %940
        %944 = vset.pattern.permute.xlu0 0
        %945 = vperm.xlu0 %944, %v861
        %v946 = vpop.permute.xlu0 %945
        %949 = vset.pattern.permute.xlu0 0
        %950 = vperm.xlu0 %949, %v862
        %v951 = vpop.permute.xlu0 %950
        %954 = vset.pattern.permute.xlu0 0
        %955 = vperm.xlu0 %954, %v863
        %v956 = vpop.permute.xlu0 %955
        %959 = vset.pattern.permute.xlu0 0
        %960 = vperm.xlu0 %959, %v864
        %v961 = vpop.permute.xlu0 %960
        %964 = vset.pattern.permute.xlu0 0
        %965 = vperm.xlu0 %964, %v865
        %v966 = vpop.permute.xlu0 %965
        %969 = vset.pattern.permute.xlu0 0
        %970 = vperm.xlu0 %969, %v866
        %v971 = vpop.permute.xlu0 %970
        %974 = vset.pattern.permute.xlu0 0
        %975 = vperm.xlu0 %974, %v867
        %v976 = vpop.permute.xlu0 %975
        %979 = vset.pattern.permute.xlu0 0
        %980 = vperm.xlu0 %979, %v868
        %v981 = vpop.permute.xlu0 %980
        %984 = vset.pattern.permute.xlu0 0
        %985 = vperm.xlu0 %984, %v869
        %v986 = vpop.permute.xlu0 %985
        %989 = vset.pattern.permute.xlu0 0
        %990 = vperm.xlu0 %989, %v870
        %v991 = vpop.permute.xlu0 %990
        %994 = vset.pattern.permute.xlu0 0
        %995 = vperm.xlu0 %994, %v871
        %v996 = vpop.permute.xlu0 %995
        %999 = vset.pattern.permute.xlu0 0
        %1000 = vperm.xlu0 %999, %v872
        %v1001 = vpop.permute.xlu0 %1000
        %1004 = vset.pattern.permute.xlu0 0
        %1005 = vperm.xlu0 %1004, %v873
        %v1006 = vpop.permute.xlu0 %1005
        %1009 = vset.pattern.permute.xlu0 0
        %1010 = vperm.xlu0 %1009, %v874
        %v1011 = vpop.permute.xlu0 %1010
        %1014 = vset.pattern.permute.xlu0 0
        %1015 = vperm.xlu0 %1014, %v875
        %v1016 = vpop.permute.xlu0 %1015
        %1019 = vset.pattern.permute.xlu0 0
        %1020 = vperm.xlu0 %1019, %v876
        %v1021 = vpop.permute.xlu0 %1020
        %1024 = vset.pattern.permute.xlu0 0
        %1025 = vperm.xlu0 %1024, %v877
        %v1026 = vpop.permute.xlu0 %1025
        %1029 = vset.pattern.permute.xlu0 0
        %1030 = vperm.xlu0 %1029, %v878
        %v1031 = vpop.permute.xlu0 %1030
        %1034 = vset.pattern.permute.xlu0 0
        %1035 = vperm.xlu0 %1034, %v879
        %v1036 = vpop.permute.xlu0 %1035
        %1039 = vset.pattern.permute.xlu0 0
        %1040 = vperm.xlu0 %1039, %v880
        %v1041 = vpop.permute.xlu0 %1040
        %v1044 = vlaneseq
        %v1045 = vshrl.u32 %v1044, 7
        %v1046 = vsub.s32 0, %v1045
        %v1047 = vrot.slane %v882, %v1046
        %v1049 = vmul.f32 %v886, %v1047
        %v1050 = vmul.f32 %v891, %v1047
        %v1051 = vmul.f32 %v896, %v1047
        %v1052 = vmul.f32 %v901, %v1047
        %v1053 = vmul.f32 %v906, %v1047
        %v1054 = vmul.f32 %v911, %v1047
        %v1055 = vmul.f32 %v916, %v1047
        %v1056 = vmul.f32 %v921, %v1047
        %v1057 = vmul.f32 %v926, %v1047
        %v1058 = vmul.f32 %v931, %v1047
        %v1059 = vmul.f32 %v936, %v1047
        %v1060 = vmul.f32 %v941, %v1047
        %v1061 = vmul.f32 %v946, %v1047
        %v1062 = vmul.f32 %v951, %v1047
        %v1063 = vmul.f32 %v956, %v1047
        %v1064 = vmul.f32 %v961, %v1047
        %v1065 = vmul.f32 %v966, %v1047
        %v1066 = vmul.f32 %v971, %v1047
        %v1067 = vmul.f32 %v976, %v1047
        %v1068 = vmul.f32 %v981, %v1047
        %v1069 = vmul.f32 %v986, %v1047
        %v1070 = vmul.f32 %v991, %v1047
        %v1071 = vmul.f32 %v996, %v1047
        %v1072 = vmul.f32 %v1001, %v1047
        %v1073 = vmul.f32 %v1006, %v1047
        %v1074 = vmul.f32 %v1011, %v1047
        %v1075 = vmul.f32 %v1016, %v1047
        %v1076 = vmul.f32 %v1021, %v1047
        %v1077 = vmul.f32 %v1026, %v1047
        %v1078 = vmul.f32 %v1031, %v1047
        %v1079 = vmul.f32 %v1036, %v1047
        %v1080 = vmul.f32 %v1041, %v1047
        %v1081 = vadd.f32 %v1049, 0.0
        %v1082 = vadd.f32 %v1050, 0.0
        %v1083 = vadd.f32 %v1051, 0.0
        %v1084 = vadd.f32 %v1052, 0.0
        %v1085 = vadd.f32 %v1053, 0.0
        %v1086 = vadd.f32 %v1054, 0.0
        %v1087 = vadd.f32 %v1055, 0.0
        %v1088 = vadd.f32 %v1056, 0.0
        %v1089 = vadd.f32 %v1057, 0.0
        %v1090 = vadd.f32 %v1058, 0.0
        %v1091 = vadd.f32 %v1059, 0.0
        %v1092 = vadd.f32 %v1060, 0.0
        %v1093 = vadd.f32 %v1061, 0.0
        %v1094 = vadd.f32 %v1062, 0.0
        %v1095 = vadd.f32 %v1063, 0.0
        %v1096 = vadd.f32 %v1064, 0.0
        %v1097 = vadd.f32 %v1065, 0.0
        %v1098 = vadd.f32 %v1066, 0.0
        %v1099 = vadd.f32 %v1067, 0.0
        %v1100 = vadd.f32 %v1068, 0.0
        %v1101 = vadd.f32 %v1069, 0.0
        %v1102 = vadd.f32 %v1070, 0.0
        %v1103 = vadd.f32 %v1071, 0.0
        %v1104 = vadd.f32 %v1072, 0.0
        %v1105 = vadd.f32 %v1073, 0.0
        %v1106 = vadd.f32 %v1074, 0.0
        %v1107 = vadd.f32 %v1075, 0.0
        %v1108 = vadd.f32 %v1076, 0.0
        %v1109 = vadd.f32 %v1077, 0.0
        %v1110 = vadd.f32 %v1078, 0.0
        %v1111 = vadd.f32 %v1079, 0.0
        %v1112 = vadd.f32 %v1080, 0.0
        %v1113 = vadd.f32 %v817, %v1081
        %v1114 = vadd.f32 %v818, %v1082
        %v1115 = vadd.f32 %v819, %v1083
        %v1116 = vadd.f32 %v820, %v1084
        %v1117 = vadd.f32 %v821, %v1085
        %v1118 = vadd.f32 %v822, %v1086
        %v1119 = vadd.f32 %v823, %v1087
        %v1120 = vadd.f32 %v824, %v1088
        %v1121 = vadd.f32 %v825, %v1089
        %v1122 = vadd.f32 %v826, %v1090
        %v1123 = vadd.f32 %v827, %v1091
        %v1124 = vadd.f32 %v828, %v1092
        %v1125 = vadd.f32 %v829, %v1093
        %v1126 = vadd.f32 %v830, %v1094
        %v1127 = vadd.f32 %v831, %v1095
        %v1128 = vadd.f32 %v832, %v1096
        %v1129 = vadd.f32 %v833, %v1097
        %v1130 = vadd.f32 %v834, %v1098
        %v1131 = vadd.f32 %v835, %v1099
        %v1132 = vadd.f32 %v836, %v1100
        %v1133 = vadd.f32 %v837, %v1101
        %v1134 = vadd.f32 %v838, %v1102
        %v1135 = vadd.f32 %v839, %v1103
        %v1136 = vadd.f32 %v840, %v1104
        %v1137 = vadd.f32 %v841, %v1105
        %v1138 = vadd.f32 %v842, %v1106
        %v1139 = vadd.f32 %v843, %v1107
        %v1140 = vadd.f32 %v844, %v1108
        %v1141 = vadd.f32 %v845, %v1109
        %v1142 = vadd.f32 %v846, %v1110
        %v1143 = vadd.f32 %v847, %v1111
        %v1144 = vadd.f32 %v848, %v1112
        %s1145 = scalar_lea.vmem %s284, 24
        %v1146 = vld [vmem:[%s1145] sm:$0xff]
        %v1147 = vld [vmem:[%s1145 + $0x8] sm:$0xff]
        %v1148 = vld [vmem:[%s1145 + $0x18] sm:$0xff]
        %v1149 = vld [vmem:[%s1145 + $0x20] sm:$0xff]
        %v1150 = vld [vmem:[%s1145 + $0x30] sm:$0xff]
        %v1151 = vld [vmem:[%s1145 + $0x38] sm:$0xff]
        %v1152 = vld [vmem:[%s1145 + $0x48] sm:$0xff]
        %v1153 = vld [vmem:[%s1145 + $0x50] sm:$0xff]
        %v1154 = vld [vmem:[%s1145 + $0x60] sm:$0xff]
        %v1155 = vld [vmem:[%s1145 + $0x68] sm:$0xff]
        %v1156 = vld [vmem:[%s1145 + $0x78] sm:$0xff]
        %v1157 = vld [vmem:[%s1145 + $0x80] sm:$0xff]
        %v1158 = vld [vmem:[%s1145 + $0x90] sm:$0xff]
        %v1159 = vld [vmem:[%s1145 + $0x98] sm:$0xff]
        %v1160 = vld [vmem:[%s1145 + $0xa8] sm:$0xff]
        %v1161 = vld [vmem:[%s1145 + $0xb0] sm:$0xff]
        %v1162 = vld [vmem:[%s1145 + $0xc0] sm:$0xff]
        %v1163 = vld [vmem:[%s1145 + $0xc8] sm:$0xff]
        %v1164 = vld [vmem:[%s1145 + $0xd8] sm:$0xff]
        %v1165 = vld [vmem:[%s1145 + $0xe0] sm:$0xff]
        %v1166 = vld [vmem:[%s1145 + $0xf0] sm:$0xff]
        %v1167 = vld [vmem:[%s1145 + $0xf8] sm:$0xff]
        %v1168 = vld [vmem:[%s1145 + $0x108] sm:$0xff]
        %v1169 = vld [vmem:[%s1145 + $0x110] sm:$0xff]
        %v1170 = vld [vmem:[%s1145 + $0x120] sm:$0xff]
        %v1171 = vld [vmem:[%s1145 + $0x128] sm:$0xff]
        %v1172 = vld [vmem:[%s1145 + $0x138] sm:$0xff]
        %v1173 = vld [vmem:[%s1145 + $0x140] sm:$0xff]
        %v1174 = vld [vmem:[%s1145 + $0x150] sm:$0xff]
        %v1175 = vld [vmem:[%s1145 + $0x158] sm:$0xff]
        %v1176 = vld [vmem:[%s1145 + $0x168] sm:$0xff]
        %v1177 = vld [vmem:[%s1145 + $0x170] sm:$0xff]
        %s1178 = scalar_lea.vmem %s1, 3
        %v1179 = vld [vmem:[%s1178] sm:$0x1]
        %1181 = vset.pattern.permute.xlu0 0
        %1182 = vperm.xlu0 %1181, %v1146
        %v1183 = vpop.permute.xlu0 %1182
        %1186 = vset.pattern.permute.xlu0 0
        %1187 = vperm.xlu0 %1186, %v1147
        %v1188 = vpop.permute.xlu0 %1187
        %1191 = vset.pattern.permute.xlu0 0
        %1192 = vperm.xlu0 %1191, %v1148
        %v1193 = vpop.permute.xlu0 %1192
        %1196 = vset.pattern.permute.xlu0 0
        %1197 = vperm.xlu0 %1196, %v1149
        %v1198 = vpop.permute.xlu0 %1197
        %1201 = vset.pattern.permute.xlu0 0
        %1202 = vperm.xlu0 %1201, %v1150
        %v1203 = vpop.permute.xlu0 %1202
        %1206 = vset.pattern.permute.xlu0 0
        %1207 = vperm.xlu0 %1206, %v1151
        %v1208 = vpop.permute.xlu0 %1207
        %1211 = vset.pattern.permute.xlu0 0
        %1212 = vperm.xlu0 %1211, %v1152
        %v1213 = vpop.permute.xlu0 %1212
        %1216 = vset.pattern.permute.xlu0 0
        %1217 = vperm.xlu0 %1216, %v1153
        %v1218 = vpop.permute.xlu0 %1217
        %1221 = vset.pattern.permute.xlu0 0
        %1222 = vperm.xlu0 %1221, %v1154
        %v1223 = vpop.permute.xlu0 %1222
        %1226 = vset.pattern.permute.xlu0 0
        %1227 = vperm.xlu0 %1226, %v1155
        %v1228 = vpop.permute.xlu0 %1227
        %1231 = vset.pattern.permute.xlu0 0
        %1232 = vperm.xlu0 %1231, %v1156
        %v1233 = vpop.permute.xlu0 %1232
        %1236 = vset.pattern.permute.xlu0 0
        %1237 = vperm.xlu0 %1236, %v1157
        %v1238 = vpop.permute.xlu0 %1237
        %1241 = vset.pattern.permute.xlu0 0
        %1242 = vperm.xlu0 %1241, %v1158
        %v1243 = vpop.permute.xlu0 %1242
        %1246 = vset.pattern.permute.xlu0 0
        %1247 = vperm.xlu0 %1246, %v1159
        %v1248 = vpop.permute.xlu0 %1247
        %1251 = vset.pattern.permute.xlu0 0
        %1252 = vperm.xlu0 %1251, %v1160
        %v1253 = vpop.permute.xlu0 %1252
        %1256 = vset.pattern.permute.xlu0 0
        %1257 = vperm.xlu0 %1256, %v1161
        %v1258 = vpop.permute.xlu0 %1257
        %1261 = vset.pattern.permute.xlu0 0
        %1262 = vperm.xlu0 %1261, %v1162
        %v1263 = vpop.permute.xlu0 %1262
        %1266 = vset.pattern.permute.xlu0 0
        %1267 = vperm.xlu0 %1266, %v1163
        %v1268 = vpop.permute.xlu0 %1267
        %1271 = vset.pattern.permute.xlu0 0
        %1272 = vperm.xlu0 %1271, %v1164
        %v1273 = vpop.permute.xlu0 %1272
        %1276 = vset.pattern.permute.xlu0 0
        %1277 = vperm.xlu0 %1276, %v1165
        %v1278 = vpop.permute.xlu0 %1277
        %1281 = vset.pattern.permute.xlu0 0
        %1282 = vperm.xlu0 %1281, %v1166
        %v1283 = vpop.permute.xlu0 %1282
        %1286 = vset.pattern.permute.xlu0 0
        %1287 = vperm.xlu0 %1286, %v1167
        %v1288 = vpop.permute.xlu0 %1287
        %1291 = vset.pattern.permute.xlu0 0
        %1292 = vperm.xlu0 %1291, %v1168
        %v1293 = vpop.permute.xlu0 %1292
        %1296 = vset.pattern.permute.xlu0 0
        %1297 = vperm.xlu0 %1296, %v1169
        %v1298 = vpop.permute.xlu0 %1297
        %1301 = vset.pattern.permute.xlu0 0
        %1302 = vperm.xlu0 %1301, %v1170
        %v1303 = vpop.permute.xlu0 %1302
        %1306 = vset.pattern.permute.xlu0 0
        %1307 = vperm.xlu0 %1306, %v1171
        %v1308 = vpop.permute.xlu0 %1307
        %1311 = vset.pattern.permute.xlu0 0
        %1312 = vperm.xlu0 %1311, %v1172
        %v1313 = vpop.permute.xlu0 %1312
        %1316 = vset.pattern.permute.xlu0 0
        %1317 = vperm.xlu0 %1316, %v1173
        %v1318 = vpop.permute.xlu0 %1317
        %1321 = vset.pattern.permute.xlu0 0
        %1322 = vperm.xlu0 %1321, %v1174
        %v1323 = vpop.permute.xlu0 %1322
        %1326 = vset.pattern.permute.xlu0 0
        %1327 = vperm.xlu0 %1326, %v1175
        %v1328 = vpop.permute.xlu0 %1327
        %1331 = vset.pattern.permute.xlu0 0
        %1332 = vperm.xlu0 %1331, %v1176
        %v1333 = vpop.permute.xlu0 %1332
        %1336 = vset.pattern.permute.xlu0 0
        %1337 = vperm.xlu0 %1336, %v1177
        %v1338 = vpop.permute.xlu0 %1337
        %v1341 = vlaneseq
        %v1342 = vshrl.u32 %v1341, 7
        %v1343 = vsub.s32 0, %v1342
        %v1344 = vrot.slane %v1179, %v1343
        %v1346 = vmul.f32 %v1183, %v1344
        %v1347 = vmul.f32 %v1188, %v1344
        %v1348 = vmul.f32 %v1193, %v1344
        %v1349 = vmul.f32 %v1198, %v1344
        %v1350 = vmul.f32 %v1203, %v1344
        %v1351 = vmul.f32 %v1208, %v1344
        %v1352 = vmul.f32 %v1213, %v1344
        %v1353 = vmul.f32 %v1218, %v1344
        %v1354 = vmul.f32 %v1223, %v1344
        %v1355 = vmul.f32 %v1228, %v1344
        %v1356 = vmul.f32 %v1233, %v1344
        %v1357 = vmul.f32 %v1238, %v1344
        %v1358 = vmul.f32 %v1243, %v1344
        %v1359 = vmul.f32 %v1248, %v1344
        %v1360 = vmul.f32 %v1253, %v1344
        %v1361 = vmul.f32 %v1258, %v1344
        %v1362 = vmul.f32 %v1263, %v1344
        %v1363 = vmul.f32 %v1268, %v1344
        %v1364 = vmul.f32 %v1273, %v1344
        %v1365 = vmul.f32 %v1278, %v1344
        %v1366 = vmul.f32 %v1283, %v1344
        %v1367 = vmul.f32 %v1288, %v1344
        %v1368 = vmul.f32 %v1293, %v1344
        %v1369 = vmul.f32 %v1298, %v1344
        %v1370 = vmul.f32 %v1303, %v1344
        %v1371 = vmul.f32 %v1308, %v1344
        %v1372 = vmul.f32 %v1313, %v1344
        %v1373 = vmul.f32 %v1318, %v1344
        %v1374 = vmul.f32 %v1323, %v1344
        %v1375 = vmul.f32 %v1328, %v1344
        %v1376 = vmul.f32 %v1333, %v1344
        %v1377 = vmul.f32 %v1338, %v1344
        %v1378 = vadd.f32 %v1346, 0.0
        %v1379 = vadd.f32 %v1347, 0.0
        %v1380 = vadd.f32 %v1348, 0.0
        %v1381 = vadd.f32 %v1349, 0.0
        %v1382 = vadd.f32 %v1350, 0.0
        %v1383 = vadd.f32 %v1351, 0.0
        %v1384 = vadd.f32 %v1352, 0.0
        %v1385 = vadd.f32 %v1353, 0.0
        %v1386 = vadd.f32 %v1354, 0.0
        %v1387 = vadd.f32 %v1355, 0.0
        %v1388 = vadd.f32 %v1356, 0.0
        %v1389 = vadd.f32 %v1357, 0.0
        %v1390 = vadd.f32 %v1358, 0.0
        %v1391 = vadd.f32 %v1359, 0.0
        %v1392 = vadd.f32 %v1360, 0.0
        %v1393 = vadd.f32 %v1361, 0.0
        %v1394 = vadd.f32 %v1362, 0.0
        %v1395 = vadd.f32 %v1363, 0.0
        %v1396 = vadd.f32 %v1364, 0.0
        %v1397 = vadd.f32 %v1365, 0.0
        %v1398 = vadd.f32 %v1366, 0.0
        %v1399 = vadd.f32 %v1367, 0.0
        %v1400 = vadd.f32 %v1368, 0.0
        %v1401 = vadd.f32 %v1369, 0.0
        %v1402 = vadd.f32 %v1370, 0.0
        %v1403 = vadd.f32 %v1371, 0.0
        %v1404 = vadd.f32 %v1372, 0.0
        %v1405 = vadd.f32 %v1373, 0.0
        %v1406 = vadd.f32 %v1374, 0.0
        %v1407 = vadd.f32 %v1375, 0.0
        %v1408 = vadd.f32 %v1376, 0.0
        %v1409 = vadd.f32 %v1377, 0.0
        %v1410 = vadd.f32 %v1113, %v1378
        %v1411 = vadd.f32 %v1114, %v1379
        %v1412 = vadd.f32 %v1115, %v1380
        %v1413 = vadd.f32 %v1116, %v1381
        %v1414 = vadd.f32 %v1117, %v1382
        %v1415 = vadd.f32 %v1118, %v1383
        %v1416 = vadd.f32 %v1119, %v1384
        %v1417 = vadd.f32 %v1120, %v1385
        %v1418 = vadd.f32 %v1121, %v1386
        %v1419 = vadd.f32 %v1122, %v1387
        %v1420 = vadd.f32 %v1123, %v1388
        %v1421 = vadd.f32 %v1124, %v1389
        %v1422 = vadd.f32 %v1125, %v1390
        %v1423 = vadd.f32 %v1126, %v1391
        %v1424 = vadd.f32 %v1127, %v1392
        %v1425 = vadd.f32 %v1128, %v1393
        %v1426 = vadd.f32 %v1129, %v1394
        %v1427 = vadd.f32 %v1130, %v1395
        %v1428 = vadd.f32 %v1131, %v1396
        %v1429 = vadd.f32 %v1132, %v1397
        %v1430 = vadd.f32 %v1133, %v1398
        %v1431 = vadd.f32 %v1134, %v1399
        %v1432 = vadd.f32 %v1135, %v1400
        %v1433 = vadd.f32 %v1136, %v1401
        %v1434 = vadd.f32 %v1137, %v1402
        %v1435 = vadd.f32 %v1138, %v1403
        %v1436 = vadd.f32 %v1139, %v1404
        %v1437 = vadd.f32 %v1140, %v1405
        %v1438 = vadd.f32 %v1141, %v1406
        %v1439 = vadd.f32 %v1142, %v1407
        %v1440 = vadd.f32 %v1143, %v1408
        %v1441 = vadd.f32 %v1144, %v1409
        %v1442 = vld [vmem:[%s1145 + $0x1] sm:$0xff]
        %v1443 = vld [vmem:[%s1145 + $0x9] sm:$0xff]
        %v1444 = vld [vmem:[%s1145 + $0x19] sm:$0xff]
        %v1445 = vld [vmem:[%s1145 + $0x21] sm:$0xff]
        %v1446 = vld [vmem:[%s1145 + $0x31] sm:$0xff]
        %v1447 = vld [vmem:[%s1145 + $0x39] sm:$0xff]
        %v1448 = vld [vmem:[%s1145 + $0x49] sm:$0xff]
        %v1449 = vld [vmem:[%s1145 + $0x51] sm:$0xff]
        %v1450 = vld [vmem:[%s1145 + $0x61] sm:$0xff]
        %v1451 = vld [vmem:[%s1145 + $0x69] sm:$0xff]
        %v1452 = vld [vmem:[%s1145 + $0x79] sm:$0xff]
        %v1453 = vld [vmem:[%s1145 + $0x81] sm:$0xff]
        %v1454 = vld [vmem:[%s1145 + $0x91] sm:$0xff]
        %v1455 = vld [vmem:[%s1145 + $0x99] sm:$0xff]
        %v1456 = vld [vmem:[%s1145 + $0xa9] sm:$0xff]
        %v1457 = vld [vmem:[%s1145 + $0xb1] sm:$0xff]
        %v1458 = vld [vmem:[%s1145 + $0xc1] sm:$0xff]
        %v1459 = vld [vmem:[%s1145 + $0xc9] sm:$0xff]
        %v1460 = vld [vmem:[%s1145 + $0xd9] sm:$0xff]
        %v1461 = vld [vmem:[%s1145 + $0xe1] sm:$0xff]
        %v1462 = vld [vmem:[%s1145 + $0xf1] sm:$0xff]
        %v1463 = vld [vmem:[%s1145 + $0xf9] sm:$0xff]
        %v1464 = vld [vmem:[%s1145 + $0x109] sm:$0xff]
        %v1465 = vld [vmem:[%s1145 + $0x111] sm:$0xff]
        %v1466 = vld [vmem:[%s1145 + $0x121] sm:$0xff]
        %v1467 = vld [vmem:[%s1145 + $0x129] sm:$0xff]
        %v1468 = vld [vmem:[%s1145 + $0x139] sm:$0xff]
        %v1469 = vld [vmem:[%s1145 + $0x141] sm:$0xff]
        %v1470 = vld [vmem:[%s1145 + $0x151] sm:$0xff]
        %v1471 = vld [vmem:[%s1145 + $0x159] sm:$0xff]
        %v1472 = vld [vmem:[%s1145 + $0x169] sm:$0xff]
        %v1473 = vld [vmem:[%s1145 + $0x171] sm:$0xff]
        %s1474 = scalar_lea.vmem %s1, 4
        %v1475 = vld [vmem:[%s1474] sm:$0x1]
        %1477 = vset.pattern.permute.xlu0 0
        %1478 = vperm.xlu0 %1477, %v1442
        %v1479 = vpop.permute.xlu0 %1478
        %1482 = vset.pattern.permute.xlu0 0
        %1483 = vperm.xlu0 %1482, %v1443
        %v1484 = vpop.permute.xlu0 %1483
        %1487 = vset.pattern.permute.xlu0 0
        %1488 = vperm.xlu0 %1487, %v1444
        %v1489 = vpop.permute.xlu0 %1488
        %1492 = vset.pattern.permute.xlu0 0
        %1493 = vperm.xlu0 %1492, %v1445
        %v1494 = vpop.permute.xlu0 %1493
        %1497 = vset.pattern.permute.xlu0 0
        %1498 = vperm.xlu0 %1497, %v1446
        %v1499 = vpop.permute.xlu0 %1498
        %1502 = vset.pattern.permute.xlu0 0
        %1503 = vperm.xlu0 %1502, %v1447
        %v1504 = vpop.permute.xlu0 %1503
        %1507 = vset.pattern.permute.xlu0 0
        %1508 = vperm.xlu0 %1507, %v1448
        %v1509 = vpop.permute.xlu0 %1508
        %1512 = vset.pattern.permute.xlu0 0
        %1513 = vperm.xlu0 %1512, %v1449
        %v1514 = vpop.permute.xlu0 %1513
        %1517 = vset.pattern.permute.xlu0 0
        %1518 = vperm.xlu0 %1517, %v1450
        %v1519 = vpop.permute.xlu0 %1518
        %1522 = vset.pattern.permute.xlu0 0
        %1523 = vperm.xlu0 %1522, %v1451
        %v1524 = vpop.permute.xlu0 %1523
        %1527 = vset.pattern.permute.xlu0 0
        %1528 = vperm.xlu0 %1527, %v1452
        %v1529 = vpop.permute.xlu0 %1528
        %1532 = vset.pattern.permute.xlu0 0
        %1533 = vperm.xlu0 %1532, %v1453
        %v1534 = vpop.permute.xlu0 %1533
        %1537 = vset.pattern.permute.xlu0 0
        %1538 = vperm.xlu0 %1537, %v1454
        %v1539 = vpop.permute.xlu0 %1538
        %1542 = vset.pattern.permute.xlu0 0
        %1543 = vperm.xlu0 %1542, %v1455
        %v1544 = vpop.permute.xlu0 %1543
        %1547 = vset.pattern.permute.xlu0 0
        %1548 = vperm.xlu0 %1547, %v1456
        %v1549 = vpop.permute.xlu0 %1548
        %1552 = vset.pattern.permute.xlu0 0
        %1553 = vperm.xlu0 %1552, %v1457
        %v1554 = vpop.permute.xlu0 %1553
        %1557 = vset.pattern.permute.xlu0 0
        %1558 = vperm.xlu0 %1557, %v1458
        %v1559 = vpop.permute.xlu0 %1558
        %1562 = vset.pattern.permute.xlu0 0
        %1563 = vperm.xlu0 %1562, %v1459
        %v1564 = vpop.permute.xlu0 %1563
        %1567 = vset.pattern.permute.xlu0 0
        %1568 = vperm.xlu0 %1567, %v1460
        %v1569 = vpop.permute.xlu0 %1568
        %1572 = vset.pattern.permute.xlu0 0
        %1573 = vperm.xlu0 %1572, %v1461
        %v1574 = vpop.permute.xlu0 %1573
        %1577 = vset.pattern.permute.xlu0 0
        %1578 = vperm.xlu0 %1577, %v1462
        %v1579 = vpop.permute.xlu0 %1578
        %1582 = vset.pattern.permute.xlu0 0
        %1583 = vperm.xlu0 %1582, %v1463
        %v1584 = vpop.permute.xlu0 %1583
        %1587 = vset.pattern.permute.xlu0 0
        %1588 = vperm.xlu0 %1587, %v1464
        %v1589 = vpop.permute.xlu0 %1588
        %1592 = vset.pattern.permute.xlu0 0
        %1593 = vperm.xlu0 %1592, %v1465
        %v1594 = vpop.permute.xlu0 %1593
        %1597 = vset.pattern.permute.xlu0 0
        %1598 = vperm.xlu0 %1597, %v1466
        %v1599 = vpop.permute.xlu0 %1598
        %1602 = vset.pattern.permute.xlu0 0
        %1603 = vperm.xlu0 %1602, %v1467
        %v1604 = vpop.permute.xlu0 %1603
        %1607 = vset.pattern.permute.xlu0 0
        %1608 = vperm.xlu0 %1607, %v1468
        %v1609 = vpop.permute.xlu0 %1608
        %1612 = vset.pattern.permute.xlu0 0
        %1613 = vperm.xlu0 %1612, %v1469
        %v1614 = vpop.permute.xlu0 %1613
        %1617 = vset.pattern.permute.xlu0 0
        %1618 = vperm.xlu0 %1617, %v1470
        %v1619 = vpop.permute.xlu0 %1618
        %1622 = vset.pattern.permute.xlu0 0
        %1623 = vperm.xlu0 %1622, %v1471
        %v1624 = vpop.permute.xlu0 %1623
        %1627 = vset.pattern.permute.xlu0 0
        %1628 = vperm.xlu0 %1627, %v1472
        %v1629 = vpop.permute.xlu0 %1628
        %1632 = vset.pattern.permute.xlu0 0
        %1633 = vperm.xlu0 %1632, %v1473
        %v1634 = vpop.permute.xlu0 %1633
        %v1637 = vlaneseq
        %v1638 = vshrl.u32 %v1637, 7
        %v1639 = vsub.s32 0, %v1638
        %v1640 = vrot.slane %v1475, %v1639
        %v1642 = vmul.f32 %v1479, %v1640
        %v1643 = vmul.f32 %v1484, %v1640
        %v1644 = vmul.f32 %v1489, %v1640
        %v1645 = vmul.f32 %v1494, %v1640
        %v1646 = vmul.f32 %v1499, %v1640
        %v1647 = vmul.f32 %v1504, %v1640
        %v1648 = vmul.f32 %v1509, %v1640
        %v1649 = vmul.f32 %v1514, %v1640
        %v1650 = vmul.f32 %v1519, %v1640
        %v1651 = vmul.f32 %v1524, %v1640
        %v1652 = vmul.f32 %v1529, %v1640
        %v1653 = vmul.f32 %v1534, %v1640
        %v1654 = vmul.f32 %v1539, %v1640
        %v1655 = vmul.f32 %v1544, %v1640
        %v1656 = vmul.f32 %v1549, %v1640
        %v1657 = vmul.f32 %v1554, %v1640
        %v1658 = vmul.f32 %v1559, %v1640
        %v1659 = vmul.f32 %v1564, %v1640
        %v1660 = vmul.f32 %v1569, %v1640
        %v1661 = vmul.f32 %v1574, %v1640
        %v1662 = vmul.f32 %v1579, %v1640
        %v1663 = vmul.f32 %v1584, %v1640
        %v1664 = vmul.f32 %v1589, %v1640
        %v1665 = vmul.f32 %v1594, %v1640
        %v1666 = vmul.f32 %v1599, %v1640
        %v1667 = vmul.f32 %v1604, %v1640
        %v1668 = vmul.f32 %v1609, %v1640
        %v1669 = vmul.f32 %v1614, %v1640
        %v1670 = vmul.f32 %v1619, %v1640
        %v1671 = vmul.f32 %v1624, %v1640
        %v1672 = vmul.f32 %v1629, %v1640
        %v1673 = vmul.f32 %v1634, %v1640
        %v1674 = vadd.f32 %v1642, 0.0
        %v1675 = vadd.f32 %v1643, 0.0
        %v1676 = vadd.f32 %v1644, 0.0
        %v1677 = vadd.f32 %v1645, 0.0
        %v1678 = vadd.f32 %v1646, 0.0
        %v1679 = vadd.f32 %v1647, 0.0
        %v1680 = vadd.f32 %v1648, 0.0
        %v1681 = vadd.f32 %v1649, 0.0
        %v1682 = vadd.f32 %v1650, 0.0
        %v1683 = vadd.f32 %v1651, 0.0
        %v1684 = vadd.f32 %v1652, 0.0
        %v1685 = vadd.f32 %v1653, 0.0
        %v1686 = vadd.f32 %v1654, 0.0
        %v1687 = vadd.f32 %v1655, 0.0
        %v1688 = vadd.f32 %v1656, 0.0
        %v1689 = vadd.f32 %v1657, 0.0
        %v1690 = vadd.f32 %v1658, 0.0
        %v1691 = vadd.f32 %v1659, 0.0
        %v1692 = vadd.f32 %v1660, 0.0
        %v1693 = vadd.f32 %v1661, 0.0
        %v1694 = vadd.f32 %v1662, 0.0
        %v1695 = vadd.f32 %v1663, 0.0
        %v1696 = vadd.f32 %v1664, 0.0
        %v1697 = vadd.f32 %v1665, 0.0
        %v1698 = vadd.f32 %v1666, 0.0
        %v1699 = vadd.f32 %v1667, 0.0
        %v1700 = vadd.f32 %v1668, 0.0
        %v1701 = vadd.f32 %v1669, 0.0
        %v1702 = vadd.f32 %v1670, 0.0
        %v1703 = vadd.f32 %v1671, 0.0
        %v1704 = vadd.f32 %v1672, 0.0
        %v1705 = vadd.f32 %v1673, 0.0
        %v1706 = vadd.f32 %v1410, %v1674
        %v1707 = vadd.f32 %v1411, %v1675
        %v1708 = vadd.f32 %v1412, %v1676
        %v1709 = vadd.f32 %v1413, %v1677
        %v1710 = vadd.f32 %v1414, %v1678
        %v1711 = vadd.f32 %v1415, %v1679
        %v1712 = vadd.f32 %v1416, %v1680
        %v1713 = vadd.f32 %v1417, %v1681
        %v1714 = vadd.f32 %v1418, %v1682
        %v1715 = vadd.f32 %v1419, %v1683
        %v1716 = vadd.f32 %v1420, %v1684
        %v1717 = vadd.f32 %v1421, %v1685
        %v1718 = vadd.f32 %v1422, %v1686
        %v1719 = vadd.f32 %v1423, %v1687
        %v1720 = vadd.f32 %v1424, %v1688
        %v1721 = vadd.f32 %v1425, %v1689
        %v1722 = vadd.f32 %v1426, %v1690
        %v1723 = vadd.f32 %v1427, %v1691
        %v1724 = vadd.f32 %v1428, %v1692
        %v1725 = vadd.f32 %v1429, %v1693
        %v1726 = vadd.f32 %v1430, %v1694
        %v1727 = vadd.f32 %v1431, %v1695
        %v1728 = vadd.f32 %v1432, %v1696
        %v1729 = vadd.f32 %v1433, %v1697
        %v1730 = vadd.f32 %v1434, %v1698
        %v1731 = vadd.f32 %v1435, %v1699
        %v1732 = vadd.f32 %v1436, %v1700
        %v1733 = vadd.f32 %v1437, %v1701
        %v1734 = vadd.f32 %v1438, %v1702
        %v1735 = vadd.f32 %v1439, %v1703
        %v1736 = vadd.f32 %v1440, %v1704
        %v1737 = vadd.f32 %v1441, %v1705
        %v1738 = vld [vmem:[%s1145 + $0x2] sm:$0xff]
        %v1739 = vld [vmem:[%s1145 + $0xa] sm:$0xff]
        %v1740 = vld [vmem:[%s1145 + $0x1a] sm:$0xff]
        %v1741 = vld [vmem:[%s1145 + $0x22] sm:$0xff]
        %v1742 = vld [vmem:[%s1145 + $0x32] sm:$0xff]
        %v1743 = vld [vmem:[%s1145 + $0x3a] sm:$0xff]
        %v1744 = vld [vmem:[%s1145 + $0x4a] sm:$0xff]
        %v1745 = vld [vmem:[%s1145 + $0x52] sm:$0xff]
        %v1746 = vld [vmem:[%s1145 + $0x62] sm:$0xff]
        %v1747 = vld [vmem:[%s1145 + $0x6a] sm:$0xff]
        %v1748 = vld [vmem:[%s1145 + $0x7a] sm:$0xff]
        %v1749 = vld [vmem:[%s1145 + $0x82] sm:$0xff]
        %v1750 = vld [vmem:[%s1145 + $0x92] sm:$0xff]
        %v1751 = vld [vmem:[%s1145 + $0x9a] sm:$0xff]
        %v1752 = vld [vmem:[%s1145 + $0xaa] sm:$0xff]
        %v1753 = vld [vmem:[%s1145 + $0xb2] sm:$0xff]
        %v1754 = vld [vmem:[%s1145 + $0xc2] sm:$0xff]
        %v1755 = vld [vmem:[%s1145 + $0xca] sm:$0xff]
        %v1756 = vld [vmem:[%s1145 + $0xda] sm:$0xff]
        %v1757 = vld [vmem:[%s1145 + $0xe2] sm:$0xff]
        %v1758 = vld [vmem:[%s1145 + $0xf2] sm:$0xff]
        %v1759 = vld [vmem:[%s1145 + $0xfa] sm:$0xff]
        %v1760 = vld [vmem:[%s1145 + $0x10a] sm:$0xff]
        %v1761 = vld [vmem:[%s1145 + $0x112] sm:$0xff]
        %v1762 = vld [vmem:[%s1145 + $0x122] sm:$0xff]
        %v1763 = vld [vmem:[%s1145 + $0x12a] sm:$0xff]
        %v1764 = vld [vmem:[%s1145 + $0x13a] sm:$0xff]
        %v1765 = vld [vmem:[%s1145 + $0x142] sm:$0xff]
        %v1766 = vld [vmem:[%s1145 + $0x152] sm:$0xff]
        %v1767 = vld [vmem:[%s1145 + $0x15a] sm:$0xff]
        %v1768 = vld [vmem:[%s1145 + $0x16a] sm:$0xff]
        %v1769 = vld [vmem:[%s1145 + $0x172] sm:$0xff]
        %s1770 = scalar_lea.vmem %s1, 5
        %v1771 = vld [vmem:[%s1770] sm:$0x1]
        %1773 = vset.pattern.permute.xlu0 0
        %1774 = vperm.xlu0 %1773, %v1738
        %v1775 = vpop.permute.xlu0 %1774
        %1778 = vset.pattern.permute.xlu0 0
        %1779 = vperm.xlu0 %1778, %v1739
        %v1780 = vpop.permute.xlu0 %1779
        %1783 = vset.pattern.permute.xlu0 0
        %1784 = vperm.xlu0 %1783, %v1740
        %v1785 = vpop.permute.xlu0 %1784
        %1788 = vset.pattern.permute.xlu0 0
        %1789 = vperm.xlu0 %1788, %v1741
        %v1790 = vpop.permute.xlu0 %1789
        %1793 = vset.pattern.permute.xlu0 0
        %1794 = vperm.xlu0 %1793, %v1742
        %v1795 = vpop.permute.xlu0 %1794
        %1798 = vset.pattern.permute.xlu0 0
        %1799 = vperm.xlu0 %1798, %v1743
        %v1800 = vpop.permute.xlu0 %1799
        %1803 = vset.pattern.permute.xlu0 0
        %1804 = vperm.xlu0 %1803, %v1744
        %v1805 = vpop.permute.xlu0 %1804
        %1808 = vset.pattern.permute.xlu0 0
        %1809 = vperm.xlu0 %1808, %v1745
        %v1810 = vpop.permute.xlu0 %1809
        %1813 = vset.pattern.permute.xlu0 0
        %1814 = vperm.xlu0 %1813, %v1746
        %v1815 = vpop.permute.xlu0 %1814
        %1818 = vset.pattern.permute.xlu0 0
        %1819 = vperm.xlu0 %1818, %v1747
        %v1820 = vpop.permute.xlu0 %1819
        %1823 = vset.pattern.permute.xlu0 0
        %1824 = vperm.xlu0 %1823, %v1748
        %v1825 = vpop.permute.xlu0 %1824
        %1828 = vset.pattern.permute.xlu0 0
        %1829 = vperm.xlu0 %1828, %v1749
        %v1830 = vpop.permute.xlu0 %1829
        %1833 = vset.pattern.permute.xlu0 0
        %1834 = vperm.xlu0 %1833, %v1750
        %v1835 = vpop.permute.xlu0 %1834
        %1838 = vset.pattern.permute.xlu0 0
        %1839 = vperm.xlu0 %1838, %v1751
        %v1840 = vpop.permute.xlu0 %1839
        %1843 = vset.pattern.permute.xlu0 0
        %1844 = vperm.xlu0 %1843, %v1752
        %v1845 = vpop.permute.xlu0 %1844
        %1848 = vset.pattern.permute.xlu0 0
        %1849 = vperm.xlu0 %1848, %v1753
        %v1850 = vpop.permute.xlu0 %1849
        %1853 = vset.pattern.permute.xlu0 0
        %1854 = vperm.xlu0 %1853, %v1754
        %v1855 = vpop.permute.xlu0 %1854
        %1858 = vset.pattern.permute.xlu0 0
        %1859 = vperm.xlu0 %1858, %v1755
        %v1860 = vpop.permute.xlu0 %1859
        %1863 = vset.pattern.permute.xlu0 0
        %1864 = vperm.xlu0 %1863, %v1756
        %v1865 = vpop.permute.xlu0 %1864
        %1868 = vset.pattern.permute.xlu0 0
        %1869 = vperm.xlu0 %1868, %v1757
        %v1870 = vpop.permute.xlu0 %1869
        %1873 = vset.pattern.permute.xlu0 0
        %1874 = vperm.xlu0 %1873, %v1758
        %v1875 = vpop.permute.xlu0 %1874
        %1878 = vset.pattern.permute.xlu0 0
        %1879 = vperm.xlu0 %1878, %v1759
        %v1880 = vpop.permute.xlu0 %1879
        %1883 = vset.pattern.permute.xlu0 0
        %1884 = vperm.xlu0 %1883, %v1760
        %v1885 = vpop.permute.xlu0 %1884
        %1888 = vset.pattern.permute.xlu0 0
        %1889 = vperm.xlu0 %1888, %v1761
        %v1890 = vpop.permute.xlu0 %1889
        %1893 = vset.pattern.permute.xlu0 0
        %1894 = vperm.xlu0 %1893, %v1762
        %v1895 = vpop.permute.xlu0 %1894
        %1898 = vset.pattern.permute.xlu0 0
        %1899 = vperm.xlu0 %1898, %v1763
        %v1900 = vpop.permute.xlu0 %1899
        %1903 = vset.pattern.permute.xlu0 0
        %1904 = vperm.xlu0 %1903, %v1764
        %v1905 = vpop.permute.xlu0 %1904
        %1908 = vset.pattern.permute.xlu0 0
        %1909 = vperm.xlu0 %1908, %v1765
        %v1910 = vpop.permute.xlu0 %1909
        %1913 = vset.pattern.permute.xlu0 0
        %1914 = vperm.xlu0 %1913, %v1766
        %v1915 = vpop.permute.xlu0 %1914
        %1918 = vset.pattern.permute.xlu0 0
        %1919 = vperm.xlu0 %1918, %v1767
        %v1920 = vpop.permute.xlu0 %1919
        %1923 = vset.pattern.permute.xlu0 0
        %1924 = vperm.xlu0 %1923, %v1768
        %v1925 = vpop.permute.xlu0 %1924
        %1928 = vset.pattern.permute.xlu0 0
        %1929 = vperm.xlu0 %1928, %v1769
        %v1930 = vpop.permute.xlu0 %1929
        %v1933 = vlaneseq
        %v1934 = vshrl.u32 %v1933, 7
        %v1935 = vsub.s32 0, %v1934
        %v1936 = vrot.slane %v1771, %v1935
        %v1938 = vmul.f32 %v1775, %v1936
        %v1939 = vmul.f32 %v1780, %v1936
        %v1940 = vmul.f32 %v1785, %v1936
        %v1941 = vmul.f32 %v1790, %v1936
        %v1942 = vmul.f32 %v1795, %v1936
        %v1943 = vmul.f32 %v1800, %v1936
        %v1944 = vmul.f32 %v1805, %v1936
        %v1945 = vmul.f32 %v1810, %v1936
        %v1946 = vmul.f32 %v1815, %v1936
        %v1947 = vmul.f32 %v1820, %v1936
        %v1948 = vmul.f32 %v1825, %v1936
        %v1949 = vmul.f32 %v1830, %v1936
        %v1950 = vmul.f32 %v1835, %v1936
        %v1951 = vmul.f32 %v1840, %v1936
        %v1952 = vmul.f32 %v1845, %v1936
        %v1953 = vmul.f32 %v1850, %v1936
        %v1954 = vmul.f32 %v1855, %v1936
        %v1955 = vmul.f32 %v1860, %v1936
        %v1956 = vmul.f32 %v1865, %v1936
        %v1957 = vmul.f32 %v1870, %v1936
        %v1958 = vmul.f32 %v1875, %v1936
        %v1959 = vmul.f32 %v1880, %v1936
        %v1960 = vmul.f32 %v1885, %v1936
        %v1961 = vmul.f32 %v1890, %v1936
        %v1962 = vmul.f32 %v1895, %v1936
        %v1963 = vmul.f32 %v1900, %v1936
        %v1964 = vmul.f32 %v1905, %v1936
        %v1965 = vmul.f32 %v1910, %v1936
        %v1966 = vmul.f32 %v1915, %v1936
        %v1967 = vmul.f32 %v1920, %v1936
        %v1968 = vmul.f32 %v1925, %v1936
        %v1969 = vmul.f32 %v1930, %v1936
        %v1970 = vadd.f32 %v1938, 0.0
        %v1971 = vadd.f32 %v1939, 0.0
        %v1972 = vadd.f32 %v1940, 0.0
        %v1973 = vadd.f32 %v1941, 0.0
        %v1974 = vadd.f32 %v1942, 0.0
        %v1975 = vadd.f32 %v1943, 0.0
        %v1976 = vadd.f32 %v1944, 0.0
        %v1977 = vadd.f32 %v1945, 0.0
        %v1978 = vadd.f32 %v1946, 0.0
        %v1979 = vadd.f32 %v1947, 0.0
        %v1980 = vadd.f32 %v1948, 0.0
        %v1981 = vadd.f32 %v1949, 0.0
        %v1982 = vadd.f32 %v1950, 0.0
        %v1983 = vadd.f32 %v1951, 0.0
        %v1984 = vadd.f32 %v1952, 0.0
        %v1985 = vadd.f32 %v1953, 0.0
        %v1986 = vadd.f32 %v1954, 0.0
        %v1987 = vadd.f32 %v1955, 0.0
        %v1988 = vadd.f32 %v1956, 0.0
        %v1989 = vadd.f32 %v1957, 0.0
        %v1990 = vadd.f32 %v1958, 0.0
        %v1991 = vadd.f32 %v1959, 0.0
        %v1992 = vadd.f32 %v1960, 0.0
        %v1993 = vadd.f32 %v1961, 0.0
        %v1994 = vadd.f32 %v1962, 0.0
        %v1995 = vadd.f32 %v1963, 0.0
        %v1996 = vadd.f32 %v1964, 0.0
        %v1997 = vadd.f32 %v1965, 0.0
        %v1998 = vadd.f32 %v1966, 0.0
        %v1999 = vadd.f32 %v1967, 0.0
        %v2000 = vadd.f32 %v1968, 0.0
        %v2001 = vadd.f32 %v1969, 0.0
        %v2002 = vadd.f32 %v1706, %v1970
        %v2003 = vadd.f32 %v1707, %v1971
        %v2004 = vadd.f32 %v1708, %v1972
        %v2005 = vadd.f32 %v1709, %v1973
        %v2006 = vadd.f32 %v1710, %v1974
        %v2007 = vadd.f32 %v1711, %v1975
        %v2008 = vadd.f32 %v1712, %v1976
        %v2009 = vadd.f32 %v1713, %v1977
        %v2010 = vadd.f32 %v1714, %v1978
        %v2011 = vadd.f32 %v1715, %v1979
        %v2012 = vadd.f32 %v1716, %v1980
        %v2013 = vadd.f32 %v1717, %v1981
        %v2014 = vadd.f32 %v1718, %v1982
        %v2015 = vadd.f32 %v1719, %v1983
        %v2016 = vadd.f32 %v1720, %v1984
        %v2017 = vadd.f32 %v1721, %v1985
        %v2018 = vadd.f32 %v1722, %v1986
        %v2019 = vadd.f32 %v1723, %v1987
        %v2020 = vadd.f32 %v1724, %v1988
        %v2021 = vadd.f32 %v1725, %v1989
        %v2022 = vadd.f32 %v1726, %v1990
        %v2023 = vadd.f32 %v1727, %v1991
        %v2024 = vadd.f32 %v1728, %v1992
        %v2025 = vadd.f32 %v1729, %v1993
        %v2026 = vadd.f32 %v1730, %v1994
        %v2027 = vadd.f32 %v1731, %v1995
        %v2028 = vadd.f32 %v1732, %v1996
        %v2029 = vadd.f32 %v1733, %v1997
        %v2030 = vadd.f32 %v1734, %v1998
        %v2031 = vadd.f32 %v1735, %v1999
        %v2032 = vadd.f32 %v1736, %v2000
        %v2033 = vadd.f32 %v1737, %v2001
        %s2034 = scalar_lea.vmem %s284, 48
        %v2035 = vld [vmem:[%s2034] sm:$0xff]
        %v2036 = vld [vmem:[%s2034 + $0x8] sm:$0xff]
        %v2037 = vld [vmem:[%s2034 + $0x18] sm:$0xff]
        %v2038 = vld [vmem:[%s2034 + $0x20] sm:$0xff]
        %v2039 = vld [vmem:[%s2034 + $0x30] sm:$0xff]
        %v2040 = vld [vmem:[%s2034 + $0x38] sm:$0xff]
        %v2041 = vld [vmem:[%s2034 + $0x48] sm:$0xff]
        %v2042 = vld [vmem:[%s2034 + $0x50] sm:$0xff]
        %v2043 = vld [vmem:[%s2034 + $0x60] sm:$0xff]
        %v2044 = vld [vmem:[%s2034 + $0x68] sm:$0xff]
        %v2045 = vld [vmem:[%s2034 + $0x78] sm:$0xff]
        %v2046 = vld [vmem:[%s2034 + $0x80] sm:$0xff]
        %v2047 = vld [vmem:[%s2034 + $0x90] sm:$0xff]
        %v2048 = vld [vmem:[%s2034 + $0x98] sm:$0xff]
        %v2049 = vld [vmem:[%s2034 + $0xa8] sm:$0xff]
        %v2050 = vld [vmem:[%s2034 + $0xb0] sm:$0xff]
        %v2051 = vld [vmem:[%s2034 + $0xc0] sm:$0xff]
        %v2052 = vld [vmem:[%s2034 + $0xc8] sm:$0xff]
        %v2053 = vld [vmem:[%s2034 + $0xd8] sm:$0xff]
        %v2054 = vld [vmem:[%s2034 + $0xe0] sm:$0xff]
        %v2055 = vld [vmem:[%s2034 + $0xf0] sm:$0xff]
        %v2056 = vld [vmem:[%s2034 + $0xf8] sm:$0xff]
        %v2057 = vld [vmem:[%s2034 + $0x108] sm:$0xff]
        %v2058 = vld [vmem:[%s2034 + $0x110] sm:$0xff]
        %v2059 = vld [vmem:[%s2034 + $0x120] sm:$0xff]
        %v2060 = vld [vmem:[%s2034 + $0x128] sm:$0xff]
        %v2061 = vld [vmem:[%s2034 + $0x138] sm:$0xff]
        %v2062 = vld [vmem:[%s2034 + $0x140] sm:$0xff]
        %v2063 = vld [vmem:[%s2034 + $0x150] sm:$0xff]
        %v2064 = vld [vmem:[%s2034 + $0x158] sm:$0xff]
        %v2065 = vld [vmem:[%s2034 + $0x168] sm:$0xff]
        %v2066 = vld [vmem:[%s2034 + $0x170] sm:$0xff]
        %s2067 = scalar_lea.vmem %s1, 6
        %v2068 = vld [vmem:[%s2067] sm:$0x1]
        %2070 = vset.pattern.permute.xlu0 0
        %2071 = vperm.xlu0 %2070, %v2035
        %v2072 = vpop.permute.xlu0 %2071
        %2075 = vset.pattern.permute.xlu0 0
        %2076 = vperm.xlu0 %2075, %v2036
        %v2077 = vpop.permute.xlu0 %2076
        %2080 = vset.pattern.permute.xlu0 0
        %2081 = vperm.xlu0 %2080, %v2037
        %v2082 = vpop.permute.xlu0 %2081
        %2085 = vset.pattern.permute.xlu0 0
        %2086 = vperm.xlu0 %2085, %v2038
        %v2087 = vpop.permute.xlu0 %2086
        %2090 = vset.pattern.permute.xlu0 0
        %2091 = vperm.xlu0 %2090, %v2039
        %v2092 = vpop.permute.xlu0 %2091
        %2095 = vset.pattern.permute.xlu0 0
        %2096 = vperm.xlu0 %2095, %v2040
        %v2097 = vpop.permute.xlu0 %2096
        %2100 = vset.pattern.permute.xlu0 0
        %2101 = vperm.xlu0 %2100, %v2041
        %v2102 = vpop.permute.xlu0 %2101
        %2105 = vset.pattern.permute.xlu0 0
        %2106 = vperm.xlu0 %2105, %v2042
        %v2107 = vpop.permute.xlu0 %2106
        %2110 = vset.pattern.permute.xlu0 0
        %2111 = vperm.xlu0 %2110, %v2043
        %v2112 = vpop.permute.xlu0 %2111
        %2115 = vset.pattern.permute.xlu0 0
        %2116 = vperm.xlu0 %2115, %v2044
        %v2117 = vpop.permute.xlu0 %2116
        %2120 = vset.pattern.permute.xlu0 0
        %2121 = vperm.xlu0 %2120, %v2045
        %v2122 = vpop.permute.xlu0 %2121
        %2125 = vset.pattern.permute.xlu0 0
        %2126 = vperm.xlu0 %2125, %v2046
        %v2127 = vpop.permute.xlu0 %2126
        %2130 = vset.pattern.permute.xlu0 0
        %2131 = vperm.xlu0 %2130, %v2047
        %v2132 = vpop.permute.xlu0 %2131
        %2135 = vset.pattern.permute.xlu0 0
        %2136 = vperm.xlu0 %2135, %v2048
        %v2137 = vpop.permute.xlu0 %2136
        %2140 = vset.pattern.permute.xlu0 0
        %2141 = vperm.xlu0 %2140, %v2049
        %v2142 = vpop.permute.xlu0 %2141
        %2145 = vset.pattern.permute.xlu0 0
        %2146 = vperm.xlu0 %2145, %v2050
        %v2147 = vpop.permute.xlu0 %2146
        %2150 = vset.pattern.permute.xlu0 0
        %2151 = vperm.xlu0 %2150, %v2051
        %v2152 = vpop.permute.xlu0 %2151
        %2155 = vset.pattern.permute.xlu0 0
        %2156 = vperm.xlu0 %2155, %v2052
        %v2157 = vpop.permute.xlu0 %2156
        %2160 = vset.pattern.permute.xlu0 0
        %2161 = vperm.xlu0 %2160, %v2053
        %v2162 = vpop.permute.xlu0 %2161
        %2165 = vset.pattern.permute.xlu0 0
        %2166 = vperm.xlu0 %2165, %v2054
        %v2167 = vpop.permute.xlu0 %2166
        %2170 = vset.pattern.permute.xlu0 0
        %2171 = vperm.xlu0 %2170, %v2055
        %v2172 = vpop.permute.xlu0 %2171
        %2175 = vset.pattern.permute.xlu0 0
        %2176 = vperm.xlu0 %2175, %v2056
        %v2177 = vpop.permute.xlu0 %2176
        %2180 = vset.pattern.permute.xlu0 0
        %2181 = vperm.xlu0 %2180, %v2057
        %v2182 = vpop.permute.xlu0 %2181
        %2185 = vset.pattern.permute.xlu0 0
        %2186 = vperm.xlu0 %2185, %v2058
        %v2187 = vpop.permute.xlu0 %2186
        %2190 = vset.pattern.permute.xlu0 0
        %2191 = vperm.xlu0 %2190, %v2059
        %v2192 = vpop.permute.xlu0 %2191
        %2195 = vset.pattern.permute.xlu0 0
        %2196 = vperm.xlu0 %2195, %v2060
        %v2197 = vpop.permute.xlu0 %2196
        %2200 = vset.pattern.permute.xlu0 0
        %2201 = vperm.xlu0 %2200, %v2061
        %v2202 = vpop.permute.xlu0 %2201
        %2205 = vset.pattern.permute.xlu0 0
        %2206 = vperm.xlu0 %2205, %v2062
        %v2207 = vpop.permute.xlu0 %2206
        %2210 = vset.pattern.permute.xlu0 0
        %2211 = vperm.xlu0 %2210, %v2063
        %v2212 = vpop.permute.xlu0 %2211
        %2215 = vset.pattern.permute.xlu0 0
        %2216 = vperm.xlu0 %2215, %v2064
        %v2217 = vpop.permute.xlu0 %2216
        %2220 = vset.pattern.permute.xlu0 0
        %2221 = vperm.xlu0 %2220, %v2065
        %v2222 = vpop.permute.xlu0 %2221
        %2225 = vset.pattern.permute.xlu0 0
        %2226 = vperm.xlu0 %2225, %v2066
        %v2227 = vpop.permute.xlu0 %2226
        %v2230 = vlaneseq
        %v2231 = vshrl.u32 %v2230, 7
        %v2232 = vsub.s32 0, %v2231
        %v2233 = vrot.slane %v2068, %v2232
        %v2235 = vmul.f32 %v2072, %v2233
        %v2236 = vmul.f32 %v2077, %v2233
        %v2237 = vmul.f32 %v2082, %v2233
        %v2238 = vmul.f32 %v2087, %v2233
        %v2239 = vmul.f32 %v2092, %v2233
        %v2240 = vmul.f32 %v2097, %v2233
        %v2241 = vmul.f32 %v2102, %v2233
        %v2242 = vmul.f32 %v2107, %v2233
        %v2243 = vmul.f32 %v2112, %v2233
        %v2244 = vmul.f32 %v2117, %v2233
        %v2245 = vmul.f32 %v2122, %v2233
        %v2246 = vmul.f32 %v2127, %v2233
        %v2247 = vmul.f32 %v2132, %v2233
        %v2248 = vmul.f32 %v2137, %v2233
        %v2249 = vmul.f32 %v2142, %v2233
        %v2250 = vmul.f32 %v2147, %v2233
        %v2251 = vmul.f32 %v2152, %v2233
        %v2252 = vmul.f32 %v2157, %v2233
        %v2253 = vmul.f32 %v2162, %v2233
        %v2254 = vmul.f32 %v2167, %v2233
        %v2255 = vmul.f32 %v2172, %v2233
        %v2256 = vmul.f32 %v2177, %v2233
        %v2257 = vmul.f32 %v2182, %v2233
        %v2258 = vmul.f32 %v2187, %v2233
        %v2259 = vmul.f32 %v2192, %v2233
        %v2260 = vmul.f32 %v2197, %v2233
        %v2261 = vmul.f32 %v2202, %v2233
        %v2262 = vmul.f32 %v2207, %v2233
        %v2263 = vmul.f32 %v2212, %v2233
        %v2264 = vmul.f32 %v2217, %v2233
        %v2265 = vmul.f32 %v2222, %v2233
        %v2266 = vmul.f32 %v2227, %v2233
        %v2267 = vadd.f32 %v2235, 0.0
        %v2268 = vadd.f32 %v2236, 0.0
        %v2269 = vadd.f32 %v2237, 0.0
        %v2270 = vadd.f32 %v2238, 0.0
        %v2271 = vadd.f32 %v2239, 0.0
        %v2272 = vadd.f32 %v2240, 0.0
        %v2273 = vadd.f32 %v2241, 0.0
        %v2274 = vadd.f32 %v2242, 0.0
        %v2275 = vadd.f32 %v2243, 0.0
        %v2276 = vadd.f32 %v2244, 0.0
        %v2277 = vadd.f32 %v2245, 0.0
        %v2278 = vadd.f32 %v2246, 0.0
        %v2279 = vadd.f32 %v2247, 0.0
        %v2280 = vadd.f32 %v2248, 0.0
        %v2281 = vadd.f32 %v2249, 0.0
        %v2282 = vadd.f32 %v2250, 0.0
        %v2283 = vadd.f32 %v2251, 0.0
        %v2284 = vadd.f32 %v2252, 0.0
        %v2285 = vadd.f32 %v2253, 0.0
        %v2286 = vadd.f32 %v2254, 0.0
        %v2287 = vadd.f32 %v2255, 0.0
        %v2288 = vadd.f32 %v2256, 0.0
        %v2289 = vadd.f32 %v2257, 0.0
        %v2290 = vadd.f32 %v2258, 0.0
        %v2291 = vadd.f32 %v2259, 0.0
        %v2292 = vadd.f32 %v2260, 0.0
        %v2293 = vadd.f32 %v2261, 0.0
        %v2294 = vadd.f32 %v2262, 0.0
        %v2295 = vadd.f32 %v2263, 0.0
        %v2296 = vadd.f32 %v2264, 0.0
        %v2297 = vadd.f32 %v2265, 0.0
        %v2298 = vadd.f32 %v2266, 0.0
        %v2299 = vadd.f32 %v2002, %v2267
        %v2300 = vadd.f32 %v2003, %v2268
        %v2301 = vadd.f32 %v2004, %v2269
        %v2302 = vadd.f32 %v2005, %v2270
        %v2303 = vadd.f32 %v2006, %v2271
        %v2304 = vadd.f32 %v2007, %v2272
        %v2305 = vadd.f32 %v2008, %v2273
        %v2306 = vadd.f32 %v2009, %v2274
        %v2307 = vadd.f32 %v2010, %v2275
        %v2308 = vadd.f32 %v2011, %v2276
        %v2309 = vadd.f32 %v2012, %v2277
        %v2310 = vadd.f32 %v2013, %v2278
        %v2311 = vadd.f32 %v2014, %v2279
        %v2312 = vadd.f32 %v2015, %v2280
        %v2313 = vadd.f32 %v2016, %v2281
        %v2314 = vadd.f32 %v2017, %v2282
        %v2315 = vadd.f32 %v2018, %v2283
        %v2316 = vadd.f32 %v2019, %v2284
        %v2317 = vadd.f32 %v2020, %v2285
        %v2318 = vadd.f32 %v2021, %v2286
        %v2319 = vadd.f32 %v2022, %v2287
        %v2320 = vadd.f32 %v2023, %v2288
        %v2321 = vadd.f32 %v2024, %v2289
        %v2322 = vadd.f32 %v2025, %v2290
        %v2323 = vadd.f32 %v2026, %v2291
        %v2324 = vadd.f32 %v2027, %v2292
        %v2325 = vadd.f32 %v2028, %v2293
        %v2326 = vadd.f32 %v2029, %v2294
        %v2327 = vadd.f32 %v2030, %v2295
        %v2328 = vadd.f32 %v2031, %v2296
        %v2329 = vadd.f32 %v2032, %v2297
        %v2330 = vadd.f32 %v2033, %v2298
        %v2331 = vld [vmem:[%s2034 + $0x1] sm:$0xff]
        %v2332 = vld [vmem:[%s2034 + $0x9] sm:$0xff]
        %v2333 = vld [vmem:[%s2034 + $0x19] sm:$0xff]
        %v2334 = vld [vmem:[%s2034 + $0x21] sm:$0xff]
        %v2335 = vld [vmem:[%s2034 + $0x31] sm:$0xff]
        %v2336 = vld [vmem:[%s2034 + $0x39] sm:$0xff]
        %v2337 = vld [vmem:[%s2034 + $0x49] sm:$0xff]
        %v2338 = vld [vmem:[%s2034 + $0x51] sm:$0xff]
        %v2339 = vld [vmem:[%s2034 + $0x61] sm:$0xff]
        %v2340 = vld [vmem:[%s2034 + $0x69] sm:$0xff]
        %v2341 = vld [vmem:[%s2034 + $0x79] sm:$0xff]
        %v2342 = vld [vmem:[%s2034 + $0x81] sm:$0xff]
        %v2343 = vld [vmem:[%s2034 + $0x91] sm:$0xff]
        %v2344 = vld [vmem:[%s2034 + $0x99] sm:$0xff]
        %v2345 = vld [vmem:[%s2034 + $0xa9] sm:$0xff]
        %v2346 = vld [vmem:[%s2034 + $0xb1] sm:$0xff]
        %v2347 = vld [vmem:[%s2034 + $0xc1] sm:$0xff]
        %v2348 = vld [vmem:[%s2034 + $0xc9] sm:$0xff]
        %v2349 = vld [vmem:[%s2034 + $0xd9] sm:$0xff]
        %v2350 = vld [vmem:[%s2034 + $0xe1] sm:$0xff]
        %v2351 = vld [vmem:[%s2034 + $0xf1] sm:$0xff]
        %v2352 = vld [vmem:[%s2034 + $0xf9] sm:$0xff]
        %v2353 = vld [vmem:[%s2034 + $0x109] sm:$0xff]
        %v2354 = vld [vmem:[%s2034 + $0x111] sm:$0xff]
        %v2355 = vld [vmem:[%s2034 + $0x121] sm:$0xff]
        %v2356 = vld [vmem:[%s2034 + $0x129] sm:$0xff]
        %v2357 = vld [vmem:[%s2034 + $0x139] sm:$0xff]
        %v2358 = vld [vmem:[%s2034 + $0x141] sm:$0xff]
        %v2359 = vld [vmem:[%s2034 + $0x151] sm:$0xff]
        %v2360 = vld [vmem:[%s2034 + $0x159] sm:$0xff]
        %v2361 = vld [vmem:[%s2034 + $0x169] sm:$0xff]
        %v2362 = vld [vmem:[%s2034 + $0x171] sm:$0xff]
        %s2363 = scalar_lea.vmem %s1, 7
        %v2364 = vld [vmem:[%s2363] sm:$0x1]
        %2366 = vset.pattern.permute.xlu0 0
        %2367 = vperm.xlu0 %2366, %v2331
        %v2368 = vpop.permute.xlu0 %2367
        %2371 = vset.pattern.permute.xlu0 0
        %2372 = vperm.xlu0 %2371, %v2332
        %v2373 = vpop.permute.xlu0 %2372
        %2376 = vset.pattern.permute.xlu0 0
        %2377 = vperm.xlu0 %2376, %v2333
        %v2378 = vpop.permute.xlu0 %2377
        %2381 = vset.pattern.permute.xlu0 0
        %2382 = vperm.xlu0 %2381, %v2334
        %v2383 = vpop.permute.xlu0 %2382
        %2386 = vset.pattern.permute.xlu0 0
        %2387 = vperm.xlu0 %2386, %v2335
        %v2388 = vpop.permute.xlu0 %2387
        %2391 = vset.pattern.permute.xlu0 0
        %2392 = vperm.xlu0 %2391, %v2336
        %v2393 = vpop.permute.xlu0 %2392
        %2396 = vset.pattern.permute.xlu0 0
        %2397 = vperm.xlu0 %2396, %v2337
        %v2398 = vpop.permute.xlu0 %2397
        %2401 = vset.pattern.permute.xlu0 0
        %2402 = vperm.xlu0 %2401, %v2338
        %v2403 = vpop.permute.xlu0 %2402
        %2406 = vset.pattern.permute.xlu0 0
        %2407 = vperm.xlu0 %2406, %v2339
        %v2408 = vpop.permute.xlu0 %2407
        %2411 = vset.pattern.permute.xlu0 0
        %2412 = vperm.xlu0 %2411, %v2340
        %v2413 = vpop.permute.xlu0 %2412
        %2416 = vset.pattern.permute.xlu0 0
        %2417 = vperm.xlu0 %2416, %v2341
        %v2418 = vpop.permute.xlu0 %2417
        %2421 = vset.pattern.permute.xlu0 0
        %2422 = vperm.xlu0 %2421, %v2342
        %v2423 = vpop.permute.xlu0 %2422
        %2426 = vset.pattern.permute.xlu0 0
        %2427 = vperm.xlu0 %2426, %v2343
        %v2428 = vpop.permute.xlu0 %2427
        %2431 = vset.pattern.permute.xlu0 0
        %2432 = vperm.xlu0 %2431, %v2344
        %v2433 = vpop.permute.xlu0 %2432
        %2436 = vset.pattern.permute.xlu0 0
        %2437 = vperm.xlu0 %2436, %v2345
        %v2438 = vpop.permute.xlu0 %2437
        %2441 = vset.pattern.permute.xlu0 0
        %2442 = vperm.xlu0 %2441, %v2346
        %v2443 = vpop.permute.xlu0 %2442
        %2446 = vset.pattern.permute.xlu0 0
        %2447 = vperm.xlu0 %2446, %v2347
        %v2448 = vpop.permute.xlu0 %2447
        %2451 = vset.pattern.permute.xlu0 0
        %2452 = vperm.xlu0 %2451, %v2348
        %v2453 = vpop.permute.xlu0 %2452
        %2456 = vset.pattern.permute.xlu0 0
        %2457 = vperm.xlu0 %2456, %v2349
        %v2458 = vpop.permute.xlu0 %2457
        %2461 = vset.pattern.permute.xlu0 0
        %2462 = vperm.xlu0 %2461, %v2350
        %v2463 = vpop.permute.xlu0 %2462
        %2466 = vset.pattern.permute.xlu0 0
        %2467 = vperm.xlu0 %2466, %v2351
        %v2468 = vpop.permute.xlu0 %2467
        %2471 = vset.pattern.permute.xlu0 0
        %2472 = vperm.xlu0 %2471, %v2352
        %v2473 = vpop.permute.xlu0 %2472
        %2476 = vset.pattern.permute.xlu0 0
        %2477 = vperm.xlu0 %2476, %v2353
        %v2478 = vpop.permute.xlu0 %2477
        %2481 = vset.pattern.permute.xlu0 0
        %2482 = vperm.xlu0 %2481, %v2354
        %v2483 = vpop.permute.xlu0 %2482
        %2486 = vset.pattern.permute.xlu0 0
        %2487 = vperm.xlu0 %2486, %v2355
        %v2488 = vpop.permute.xlu0 %2487
        %2491 = vset.pattern.permute.xlu0 0
        %2492 = vperm.xlu0 %2491, %v2356
        %v2493 = vpop.permute.xlu0 %2492
        %2496 = vset.pattern.permute.xlu0 0
        %2497 = vperm.xlu0 %2496, %v2357
        %v2498 = vpop.permute.xlu0 %2497
        %2501 = vset.pattern.permute.xlu0 0
        %2502 = vperm.xlu0 %2501, %v2358
        %v2503 = vpop.permute.xlu0 %2502
        %2506 = vset.pattern.permute.xlu0 0
        %2507 = vperm.xlu0 %2506, %v2359
        %v2508 = vpop.permute.xlu0 %2507
        %2511 = vset.pattern.permute.xlu0 0
        %2512 = vperm.xlu0 %2511, %v2360
        %v2513 = vpop.permute.xlu0 %2512
        %2516 = vset.pattern.permute.xlu0 0
        %2517 = vperm.xlu0 %2516, %v2361
        %v2518 = vpop.permute.xlu0 %2517
        %2521 = vset.pattern.permute.xlu0 0
        %2522 = vperm.xlu0 %2521, %v2362
        %v2523 = vpop.permute.xlu0 %2522
        %v2526 = vlaneseq
        %v2527 = vshrl.u32 %v2526, 7
        %v2528 = vsub.s32 0, %v2527
        %v2529 = vrot.slane %v2364, %v2528
        %v2531 = vmul.f32 %v2368, %v2529
        %v2532 = vmul.f32 %v2373, %v2529
        %v2533 = vmul.f32 %v2378, %v2529
        %v2534 = vmul.f32 %v2383, %v2529
        %v2535 = vmul.f32 %v2388, %v2529
        %v2536 = vmul.f32 %v2393, %v2529
        %v2537 = vmul.f32 %v2398, %v2529
        %v2538 = vmul.f32 %v2403, %v2529
        %v2539 = vmul.f32 %v2408, %v2529
        %v2540 = vmul.f32 %v2413, %v2529
        %v2541 = vmul.f32 %v2418, %v2529
        %v2542 = vmul.f32 %v2423, %v2529
        %v2543 = vmul.f32 %v2428, %v2529
        %v2544 = vmul.f32 %v2433, %v2529
        %v2545 = vmul.f32 %v2438, %v2529
        %v2546 = vmul.f32 %v2443, %v2529
        %v2547 = vmul.f32 %v2448, %v2529
        %v2548 = vmul.f32 %v2453, %v2529
        %v2549 = vmul.f32 %v2458, %v2529
        %v2550 = vmul.f32 %v2463, %v2529
        %v2551 = vmul.f32 %v2468, %v2529
        %v2552 = vmul.f32 %v2473, %v2529
        %v2553 = vmul.f32 %v2478, %v2529
        %v2554 = vmul.f32 %v2483, %v2529
        %v2555 = vmul.f32 %v2488, %v2529
        %v2556 = vmul.f32 %v2493, %v2529
        %v2557 = vmul.f32 %v2498, %v2529
        %v2558 = vmul.f32 %v2503, %v2529
        %v2559 = vmul.f32 %v2508, %v2529
        %v2560 = vmul.f32 %v2513, %v2529
        %v2561 = vmul.f32 %v2518, %v2529
        %v2562 = vmul.f32 %v2523, %v2529
        %v2563 = vadd.f32 %v2531, 0.0
        %v2564 = vadd.f32 %v2532, 0.0
        %v2565 = vadd.f32 %v2533, 0.0
        %v2566 = vadd.f32 %v2534, 0.0
        %v2567 = vadd.f32 %v2535, 0.0
        %v2568 = vadd.f32 %v2536, 0.0
        %v2569 = vadd.f32 %v2537, 0.0
        %v2570 = vadd.f32 %v2538, 0.0
        %v2571 = vadd.f32 %v2539, 0.0
        %v2572 = vadd.f32 %v2540, 0.0
        %v2573 = vadd.f32 %v2541, 0.0
        %v2574 = vadd.f32 %v2542, 0.0
        %v2575 = vadd.f32 %v2543, 0.0
        %v2576 = vadd.f32 %v2544, 0.0
        %v2577 = vadd.f32 %v2545, 0.0
        %v2578 = vadd.f32 %v2546, 0.0
        %v2579 = vadd.f32 %v2547, 0.0
        %v2580 = vadd.f32 %v2548, 0.0
        %v2581 = vadd.f32 %v2549, 0.0
        %v2582 = vadd.f32 %v2550, 0.0
        %v2583 = vadd.f32 %v2551, 0.0
        %v2584 = vadd.f32 %v2552, 0.0
        %v2585 = vadd.f32 %v2553, 0.0
        %v2586 = vadd.f32 %v2554, 0.0
        %v2587 = vadd.f32 %v2555, 0.0
        %v2588 = vadd.f32 %v2556, 0.0
        %v2589 = vadd.f32 %v2557, 0.0
        %v2590 = vadd.f32 %v2558, 0.0
        %v2591 = vadd.f32 %v2559, 0.0
        %v2592 = vadd.f32 %v2560, 0.0
        %v2593 = vadd.f32 %v2561, 0.0
        %v2594 = vadd.f32 %v2562, 0.0
        %v2595 = vadd.f32 %v2299, %v2563
        %v2596 = vadd.f32 %v2300, %v2564
        %v2597 = vadd.f32 %v2301, %v2565
        %v2598 = vadd.f32 %v2302, %v2566
        %v2599 = vadd.f32 %v2303, %v2567
        %v2600 = vadd.f32 %v2304, %v2568
        %v2601 = vadd.f32 %v2305, %v2569
        %v2602 = vadd.f32 %v2306, %v2570
        %v2603 = vadd.f32 %v2307, %v2571
        %v2604 = vadd.f32 %v2308, %v2572
        %v2605 = vadd.f32 %v2309, %v2573
        %v2606 = vadd.f32 %v2310, %v2574
        %v2607 = vadd.f32 %v2311, %v2575
        %v2608 = vadd.f32 %v2312, %v2576
        %v2609 = vadd.f32 %v2313, %v2577
        %v2610 = vadd.f32 %v2314, %v2578
        %v2611 = vadd.f32 %v2315, %v2579
        %v2612 = vadd.f32 %v2316, %v2580
        %v2613 = vadd.f32 %v2317, %v2581
        %v2614 = vadd.f32 %v2318, %v2582
        %v2615 = vadd.f32 %v2319, %v2583
        %v2616 = vadd.f32 %v2320, %v2584
        %v2617 = vadd.f32 %v2321, %v2585
        %v2618 = vadd.f32 %v2322, %v2586
        %v2619 = vadd.f32 %v2323, %v2587
        %v2620 = vadd.f32 %v2324, %v2588
        %v2621 = vadd.f32 %v2325, %v2589
        %v2622 = vadd.f32 %v2326, %v2590
        %v2623 = vadd.f32 %v2327, %v2591
        %v2624 = vadd.f32 %v2328, %v2592
        %v2625 = vadd.f32 %v2329, %v2593
        %v2626 = vadd.f32 %v2330, %v2594
        %v2627 = vld [vmem:[%s2034 + $0x2] sm:$0xff]
        %v2628 = vld [vmem:[%s2034 + $0xa] sm:$0xff]
        %v2629 = vld [vmem:[%s2034 + $0x1a] sm:$0xff]
        %v2630 = vld [vmem:[%s2034 + $0x22] sm:$0xff]
        %v2631 = vld [vmem:[%s2034 + $0x32] sm:$0xff]
        %v2632 = vld [vmem:[%s2034 + $0x3a] sm:$0xff]
        %v2633 = vld [vmem:[%s2034 + $0x4a] sm:$0xff]
        %v2634 = vld [vmem:[%s2034 + $0x52] sm:$0xff]
        %v2635 = vld [vmem:[%s2034 + $0x62] sm:$0xff]
        %v2636 = vld [vmem:[%s2034 + $0x6a] sm:$0xff]
        %v2637 = vld [vmem:[%s2034 + $0x7a] sm:$0xff]
        %v2638 = vld [vmem:[%s2034 + $0x82] sm:$0xff]
        %v2639 = vld [vmem:[%s2034 + $0x92] sm:$0xff]
        %v2640 = vld [vmem:[%s2034 + $0x9a] sm:$0xff]
        %v2641 = vld [vmem:[%s2034 + $0xaa] sm:$0xff]
        %v2642 = vld [vmem:[%s2034 + $0xb2] sm:$0xff]
        %v2643 = vld [vmem:[%s2034 + $0xc2] sm:$0xff]
        %v2644 = vld [vmem:[%s2034 + $0xca] sm:$0xff]
        %v2645 = vld [vmem:[%s2034 + $0xda] sm:$0xff]
        %v2646 = vld [vmem:[%s2034 + $0xe2] sm:$0xff]
        %v2647 = vld [vmem:[%s2034 + $0xf2] sm:$0xff]
        %v2648 = vld [vmem:[%s2034 + $0xfa] sm:$0xff]
        %v2649 = vld [vmem:[%s2034 + $0x10a] sm:$0xff]
        %v2650 = vld [vmem:[%s2034 + $0x112] sm:$0xff]
        %v2651 = vld [vmem:[%s2034 + $0x122] sm:$0xff]
        %v2652 = vld [vmem:[%s2034 + $0x12a] sm:$0xff]
        %v2653 = vld [vmem:[%s2034 + $0x13a] sm:$0xff]
        %v2654 = vld [vmem:[%s2034 + $0x142] sm:$0xff]
        %v2655 = vld [vmem:[%s2034 + $0x152] sm:$0xff]
        %v2656 = vld [vmem:[%s2034 + $0x15a] sm:$0xff]
        %v2657 = vld [vmem:[%s2034 + $0x16a] sm:$0xff]
        %v2658 = vld [vmem:[%s2034 + $0x172] sm:$0xff]
        %s2659 = scalar_lea.vmem %s1, 8
        %v2660 = vld [vmem:[%s2659] sm:$0x1]
        %2662 = vset.pattern.permute.xlu0 0
        %2663 = vperm.xlu0 %2662, %v2627
        %v2664 = vpop.permute.xlu0 %2663
        %2667 = vset.pattern.permute.xlu0 0
        %2668 = vperm.xlu0 %2667, %v2628
        %v2669 = vpop.permute.xlu0 %2668
        %2672 = vset.pattern.permute.xlu0 0
        %2673 = vperm.xlu0 %2672, %v2629
        %v2674 = vpop.permute.xlu0 %2673
        %2677 = vset.pattern.permute.xlu0 0
        %2678 = vperm.xlu0 %2677, %v2630
        %v2679 = vpop.permute.xlu0 %2678
        %2682 = vset.pattern.permute.xlu0 0
        %2683 = vperm.xlu0 %2682, %v2631
        %v2684 = vpop.permute.xlu0 %2683
        %2687 = vset.pattern.permute.xlu0 0
        %2688 = vperm.xlu0 %2687, %v2632
        %v2689 = vpop.permute.xlu0 %2688
        %2692 = vset.pattern.permute.xlu0 0
        %2693 = vperm.xlu0 %2692, %v2633
        %v2694 = vpop.permute.xlu0 %2693
        %2697 = vset.pattern.permute.xlu0 0
        %2698 = vperm.xlu0 %2697, %v2634
        %v2699 = vpop.permute.xlu0 %2698
        %2702 = vset.pattern.permute.xlu0 0
        %2703 = vperm.xlu0 %2702, %v2635
        %v2704 = vpop.permute.xlu0 %2703
        %2707 = vset.pattern.permute.xlu0 0
        %2708 = vperm.xlu0 %2707, %v2636
        %v2709 = vpop.permute.xlu0 %2708
        %2712 = vset.pattern.permute.xlu0 0
        %2713 = vperm.xlu0 %2712, %v2637
        %v2714 = vpop.permute.xlu0 %2713
        %2717 = vset.pattern.permute.xlu0 0
        %2718 = vperm.xlu0 %2717, %v2638
        %v2719 = vpop.permute.xlu0 %2718
        %2722 = vset.pattern.permute.xlu0 0
        %2723 = vperm.xlu0 %2722, %v2639
        %v2724 = vpop.permute.xlu0 %2723
        %2727 = vset.pattern.permute.xlu0 0
        %2728 = vperm.xlu0 %2727, %v2640
        %v2729 = vpop.permute.xlu0 %2728
        %2732 = vset.pattern.permute.xlu0 0
        %2733 = vperm.xlu0 %2732, %v2641
        %v2734 = vpop.permute.xlu0 %2733
        %2737 = vset.pattern.permute.xlu0 0
        %2738 = vperm.xlu0 %2737, %v2642
        %v2739 = vpop.permute.xlu0 %2738
        %2742 = vset.pattern.permute.xlu0 0
        %2743 = vperm.xlu0 %2742, %v2643
        %v2744 = vpop.permute.xlu0 %2743
        %2747 = vset.pattern.permute.xlu0 0
        %2748 = vperm.xlu0 %2747, %v2644
        %v2749 = vpop.permute.xlu0 %2748
        %2752 = vset.pattern.permute.xlu0 0
        %2753 = vperm.xlu0 %2752, %v2645
        %v2754 = vpop.permute.xlu0 %2753
        %2757 = vset.pattern.permute.xlu0 0
        %2758 = vperm.xlu0 %2757, %v2646
        %v2759 = vpop.permute.xlu0 %2758
        %2762 = vset.pattern.permute.xlu0 0
        %2763 = vperm.xlu0 %2762, %v2647
        %v2764 = vpop.permute.xlu0 %2763
        %2767 = vset.pattern.permute.xlu0 0
        %2768 = vperm.xlu0 %2767, %v2648
        %v2769 = vpop.permute.xlu0 %2768
        %2772 = vset.pattern.permute.xlu0 0
        %2773 = vperm.xlu0 %2772, %v2649
        %v2774 = vpop.permute.xlu0 %2773
        %2777 = vset.pattern.permute.xlu0 0
        %2778 = vperm.xlu0 %2777, %v2650
        %v2779 = vpop.permute.xlu0 %2778
        %2782 = vset.pattern.permute.xlu0 0
        %2783 = vperm.xlu0 %2782, %v2651
        %v2784 = vpop.permute.xlu0 %2783
        %2787 = vset.pattern.permute.xlu0 0
        %2788 = vperm.xlu0 %2787, %v2652
        %v2789 = vpop.permute.xlu0 %2788
        %2792 = vset.pattern.permute.xlu0 0
        %2793 = vperm.xlu0 %2792, %v2653
        %v2794 = vpop.permute.xlu0 %2793
        %2797 = vset.pattern.permute.xlu0 0
        %2798 = vperm.xlu0 %2797, %v2654
        %v2799 = vpop.permute.xlu0 %2798
        %2802 = vset.pattern.permute.xlu0 0
        %2803 = vperm.xlu0 %2802, %v2655
        %v2804 = vpop.permute.xlu0 %2803
        %2807 = vset.pattern.permute.xlu0 0
        %2808 = vperm.xlu0 %2807, %v2656
        %v2809 = vpop.permute.xlu0 %2808
        %2812 = vset.pattern.permute.xlu0 0
        %2813 = vperm.xlu0 %2812, %v2657
        %v2814 = vpop.permute.xlu0 %2813
        %2817 = vset.pattern.permute.xlu0 0
        %2818 = vperm.xlu0 %2817, %v2658
        %v2819 = vpop.permute.xlu0 %2818
        %v2822 = vlaneseq
        %v2823 = vshrl.u32 %v2822, 7
        %v2824 = vsub.s32 0, %v2823
        %v2825 = vrot.slane %v2660, %v2824
        %v2827 = vmul.f32 %v2664, %v2825
        %v2828 = vmul.f32 %v2669, %v2825
        %v2829 = vmul.f32 %v2674, %v2825
        %v2830 = vmul.f32 %v2679, %v2825
        %v2831 = vmul.f32 %v2684, %v2825
        %v2832 = vmul.f32 %v2689, %v2825
        %v2833 = vmul.f32 %v2694, %v2825
        %v2834 = vmul.f32 %v2699, %v2825
        %v2835 = vmul.f32 %v2704, %v2825
        %v2836 = vmul.f32 %v2709, %v2825
        %v2837 = vmul.f32 %v2714, %v2825
        %v2838 = vmul.f32 %v2719, %v2825
        %v2839 = vmul.f32 %v2724, %v2825
        %v2840 = vmul.f32 %v2729, %v2825
        %v2841 = vmul.f32 %v2734, %v2825
        %v2842 = vmul.f32 %v2739, %v2825
        %v2843 = vmul.f32 %v2744, %v2825
        %v2844 = vmul.f32 %v2749, %v2825
        %v2845 = vmul.f32 %v2754, %v2825
        %v2846 = vmul.f32 %v2759, %v2825
        %v2847 = vmul.f32 %v2764, %v2825
        %v2848 = vmul.f32 %v2769, %v2825
        %v2849 = vmul.f32 %v2774, %v2825
        %v2850 = vmul.f32 %v2779, %v2825
        %v2851 = vmul.f32 %v2784, %v2825
        %v2852 = vmul.f32 %v2789, %v2825
        %v2853 = vmul.f32 %v2794, %v2825
        %v2854 = vmul.f32 %v2799, %v2825
        %v2855 = vmul.f32 %v2804, %v2825
        %v2856 = vmul.f32 %v2809, %v2825
        %v2857 = vmul.f32 %v2814, %v2825
        %v2858 = vmul.f32 %v2819, %v2825
        %v2859 = vadd.f32 %v2827, 0.0
        %v2860 = vadd.f32 %v2828, 0.0
        %v2861 = vadd.f32 %v2829, 0.0
        %v2862 = vadd.f32 %v2830, 0.0
        %v2863 = vadd.f32 %v2831, 0.0
        %v2864 = vadd.f32 %v2832, 0.0
        %v2865 = vadd.f32 %v2833, 0.0
        %v2866 = vadd.f32 %v2834, 0.0
        %v2867 = vadd.f32 %v2835, 0.0
        %v2868 = vadd.f32 %v2836, 0.0
        %v2869 = vadd.f32 %v2837, 0.0
        %v2870 = vadd.f32 %v2838, 0.0
        %v2871 = vadd.f32 %v2839, 0.0
        %v2872 = vadd.f32 %v2840, 0.0
        %v2873 = vadd.f32 %v2841, 0.0
        %v2874 = vadd.f32 %v2842, 0.0
        %v2875 = vadd.f32 %v2843, 0.0
        %v2876 = vadd.f32 %v2844, 0.0
        %v2877 = vadd.f32 %v2845, 0.0
        %v2878 = vadd.f32 %v2846, 0.0
        %v2879 = vadd.f32 %v2847, 0.0
        %v2880 = vadd.f32 %v2848, 0.0
        %v2881 = vadd.f32 %v2849, 0.0
        %v2882 = vadd.f32 %v2850, 0.0
        %v2883 = vadd.f32 %v2851, 0.0
        %v2884 = vadd.f32 %v2852, 0.0
        %v2885 = vadd.f32 %v2853, 0.0
        %v2886 = vadd.f32 %v2854, 0.0
        %v2887 = vadd.f32 %v2855, 0.0
        %v2888 = vadd.f32 %v2856, 0.0
        %v2889 = vadd.f32 %v2857, 0.0
        %v2890 = vadd.f32 %v2858, 0.0
        %v2891 = vadd.f32 %v2595, %v2859
        %v2892 = vadd.f32 %v2596, %v2860
        %v2893 = vadd.f32 %v2597, %v2861
        %v2894 = vadd.f32 %v2598, %v2862
        %v2895 = vadd.f32 %v2599, %v2863
        %v2896 = vadd.f32 %v2600, %v2864
        %v2897 = vadd.f32 %v2601, %v2865
        %v2898 = vadd.f32 %v2602, %v2866
        %v2899 = vadd.f32 %v2603, %v2867
        %v2900 = vadd.f32 %v2604, %v2868
        %v2901 = vadd.f32 %v2605, %v2869
        %v2902 = vadd.f32 %v2606, %v2870
        %v2903 = vadd.f32 %v2607, %v2871
        %v2904 = vadd.f32 %v2608, %v2872
        %v2905 = vadd.f32 %v2609, %v2873
        %v2906 = vadd.f32 %v2610, %v2874
        %v2907 = vadd.f32 %v2611, %v2875
        %v2908 = vadd.f32 %v2612, %v2876
        %v2909 = vadd.f32 %v2613, %v2877
        %v2910 = vadd.f32 %v2614, %v2878
        %v2911 = vadd.f32 %v2615, %v2879
        %v2912 = vadd.f32 %v2616, %v2880
        %v2913 = vadd.f32 %v2617, %v2881
        %v2914 = vadd.f32 %v2618, %v2882
        %v2915 = vadd.f32 %v2619, %v2883
        %v2916 = vadd.f32 %v2620, %v2884
        %v2917 = vadd.f32 %v2621, %v2885
        %v2918 = vadd.f32 %v2622, %v2886
        %v2919 = vadd.f32 %v2623, %v2887
        %v2920 = vadd.f32 %v2624, %v2888
        %v2921 = vadd.f32 %v2625, %v2889
        %v2922 = vadd.f32 %v2626, %v2890
        %vm2923 = vcmask 523264
        %v2924 = vsel %vm2923, %v2891, 0.0
        %v2925 = vsel %vm2923, %v2892, 0.0
        %v2926 = vadd.f32 %v2924, %v2925
        %v2927 = vsel %vm2923, %v2893, 0.0
        %v2928 = vadd.f32 %v2926, %v2927
        %v2929 = vsel %vm2923, %v2894, 0.0
        %v2930 = vadd.f32 %v2928, %v2929
        %v2931 = vsel %vm2923, %v2895, 0.0
        %v2932 = vadd.f32 %v2930, %v2931
        %v2933 = vsel %vm2923, %v2896, 0.0
        %v2934 = vadd.f32 %v2932, %v2933
        %v2935 = vsel %vm2923, %v2897, 0.0
        %v2936 = vadd.f32 %v2934, %v2935
        %v2937 = vsel %vm2923, %v2898, 0.0
        %v2938 = vadd.f32 %v2936, %v2937
        %v2939 = vsel %vm2923, %v2899, 0.0
        %v2940 = vadd.f32 %v2938, %v2939
        %v2941 = vsel %vm2923, %v2900, 0.0
        %v2942 = vadd.f32 %v2940, %v2941
        %v2943 = vsel %vm2923, %v2901, 0.0
        %v2944 = vadd.f32 %v2942, %v2943
        %v2945 = vsel %vm2923, %v2902, 0.0
        %v2946 = vadd.f32 %v2944, %v2945
        %v2947 = vsel %vm2923, %v2903, 0.0
        %v2948 = vadd.f32 %v2946, %v2947
        %v2949 = vsel %vm2923, %v2904, 0.0
        %v2950 = vadd.f32 %v2948, %v2949
        %v2951 = vsel %vm2923, %v2905, 0.0
        %v2952 = vadd.f32 %v2950, %v2951
        %v2953 = vsel %vm2923, %v2906, 0.0
        %v2954 = vadd.f32 %v2952, %v2953
        %v2955 = vsel %vm2923, %v2907, 0.0
        %v2956 = vadd.f32 %v2954, %v2955
        %v2957 = vsel %vm2923, %v2908, 0.0
        %v2958 = vadd.f32 %v2956, %v2957
        %v2959 = vsel %vm2923, %v2909, 0.0
        %v2960 = vadd.f32 %v2958, %v2959
        %v2961 = vsel %vm2923, %v2910, 0.0
        %v2962 = vadd.f32 %v2960, %v2961
        %v2963 = vsel %vm2923, %v2911, 0.0
        %v2964 = vadd.f32 %v2962, %v2963
        %v2965 = vsel %vm2923, %v2912, 0.0
        %v2966 = vadd.f32 %v2964, %v2965
        %v2967 = vsel %vm2923, %v2913, 0.0
        %v2968 = vadd.f32 %v2966, %v2967
        %v2969 = vsel %vm2923, %v2914, 0.0
        %v2970 = vadd.f32 %v2968, %v2969
        %v2971 = vsel %vm2923, %v2915, 0.0
        %v2972 = vadd.f32 %v2970, %v2971
        %v2973 = vsel %vm2923, %v2916, 0.0
        %v2974 = vadd.f32 %v2972, %v2973
        %v2975 = vsel %vm2923, %v2917, 0.0
        %v2976 = vadd.f32 %v2974, %v2975
        %v2977 = vsel %vm2923, %v2918, 0.0
        %v2978 = vadd.f32 %v2976, %v2977
        %v2979 = vsel %vm2923, %v2919, 0.0
        %v2980 = vadd.f32 %v2978, %v2979
        %v2981 = vsel %vm2923, %v2920, 0.0
        %v2982 = vadd.f32 %v2980, %v2981
        %v2983 = vsel %vm2923, %v2921, 0.0
        %v2984 = vadd.f32 %v2982, %v2983
        %v2985 = vsel %vm2923, %v2922, 0.0
        %v2986 = vadd.f32 %v2984, %v2985
        %v2987 = vrot.slane %v2986, 4
        %v2988 = vadd.f32 %v2986, %v2987
        %v2989 = vrot.slane %v2988, 2
        %v2990 = vadd.f32 %v2988, %v2989
        %v2991 = vrot.slane %v2990, 1
        %v2992 = vadd.f32 %v2990, %v2991
        %v2993 = vrcp.pop 256.0
        %v2994 = vmul.f32 %v2992, %v2993
        %v2995 = vsub.f32 %v2891, %v2994
        %v2996 = vsub.f32 %v2892, %v2994
        %v2997 = vsub.f32 %v2893, %v2994
        %v2998 = vsub.f32 %v2894, %v2994
        %v2999 = vsub.f32 %v2895, %v2994
        %v3000 = vsub.f32 %v2896, %v2994
        %v3001 = vsub.f32 %v2897, %v2994
        %v3002 = vsub.f32 %v2898, %v2994
        %v3003 = vsub.f32 %v2899, %v2994
        %v3004 = vsub.f32 %v2900, %v2994
        %v3005 = vsub.f32 %v2901, %v2994
        %v3006 = vsub.f32 %v2902, %v2994
        %v3007 = vsub.f32 %v2903, %v2994
        %v3008 = vsub.f32 %v2904, %v2994
        %v3009 = vsub.f32 %v2905, %v2994
        %v3010 = vsub.f32 %v2906, %v2994
        %v3011 = vsub.f32 %v2907, %v2994
        %v3012 = vsub.f32 %v2908, %v2994
        %v3013 = vsub.f32 %v2909, %v2994
        %v3014 = vsub.f32 %v2910, %v2994
        %v3015 = vsub.f32 %v2911, %v2994
        %v3016 = vsub.f32 %v2912, %v2994
        %v3017 = vsub.f32 %v2913, %v2994
        %v3018 = vsub.f32 %v2914, %v2994
        %v3019 = vsub.f32 %v2915, %v2994
        %v3020 = vsub.f32 %v2916, %v2994
        %v3021 = vsub.f32 %v2917, %v2994
        %v3022 = vsub.f32 %v2918, %v2994
        %v3023 = vsub.f32 %v2919, %v2994
        %v3024 = vsub.f32 %v2920, %v2994
        %v3025 = vsub.f32 %v2921, %v2994
        %v3026 = vsub.f32 %v2922, %v2994
        %v3027 = vmul.f32 %v2995, %v2995
        %v3028 = vmul.f32 %v2996, %v2996
        %v3029 = vmul.f32 %v2997, %v2997
        %v3030 = vmul.f32 %v2998, %v2998
        %v3031 = vmul.f32 %v2999, %v2999
        %v3032 = vmul.f32 %v3000, %v3000
        %v3033 = vmul.f32 %v3001, %v3001
        %v3034 = vmul.f32 %v3002, %v3002
        %v3035 = vmul.f32 %v3003, %v3003
        %v3036 = vmul.f32 %v3004, %v3004
        %v3037 = vmul.f32 %v3005, %v3005
        %v3038 = vmul.f32 %v3006, %v3006
        %v3039 = vmul.f32 %v3007, %v3007
        %v3040 = vmul.f32 %v3008, %v3008
        %v3041 = vmul.f32 %v3009, %v3009
        %v3042 = vmul.f32 %v3010, %v3010
        %v3043 = vmul.f32 %v3011, %v3011
        %v3044 = vmul.f32 %v3012, %v3012
        %v3045 = vmul.f32 %v3013, %v3013
        %v3046 = vmul.f32 %v3014, %v3014
        %v3047 = vmul.f32 %v3015, %v3015
        %v3048 = vmul.f32 %v3016, %v3016
        %v3049 = vmul.f32 %v3017, %v3017
        %v3050 = vmul.f32 %v3018, %v3018
        %v3051 = vmul.f32 %v3019, %v3019
        %v3052 = vmul.f32 %v3020, %v3020
        %v3053 = vmul.f32 %v3021, %v3021
        %v3054 = vmul.f32 %v3022, %v3022
        %v3055 = vmul.f32 %v3023, %v3023
        %v3056 = vmul.f32 %v3024, %v3024
        %v3057 = vmul.f32 %v3025, %v3025
        %v3058 = vmul.f32 %v3026, %v3026
        %v3059 = vsel %vm2923, %v3027, 0.0
        %v3060 = vsel %vm2923, %v3028, 0.0
        %v3061 = vadd.f32 %v3059, %v3060
        %v3062 = vsel %vm2923, %v3029, 0.0
        %v3063 = vadd.f32 %v3061, %v3062
        %v3064 = vsel %vm2923, %v3030, 0.0
        %v3065 = vadd.f32 %v3063, %v3064
        %v3066 = vsel %vm2923, %v3031, 0.0
        %v3067 = vadd.f32 %v3065, %v3066
        %v3068 = vsel %vm2923, %v3032, 0.0
        %v3069 = vadd.f32 %v3067, %v3068
        %v3070 = vsel %vm2923, %v3033, 0.0
        %v3071 = vadd.f32 %v3069, %v3070
        %v3072 = vsel %vm2923, %v3034, 0.0
        %v3073 = vadd.f32 %v3071, %v3072
        %v3074 = vsel %vm2923, %v3035, 0.0
        %v3075 = vadd.f32 %v3073, %v3074
        %v3076 = vsel %vm2923, %v3036, 0.0
        %v3077 = vadd.f32 %v3075, %v3076
        %v3078 = vsel %vm2923, %v3037, 0.0
        %v3079 = vadd.f32 %v3077, %v3078
        %v3080 = vsel %vm2923, %v3038, 0.0
        %v3081 = vadd.f32 %v3079, %v3080
        %v3082 = vsel %vm2923, %v3039, 0.0
        %v3083 = vadd.f32 %v3081, %v3082
        %v3084 = vsel %vm2923, %v3040, 0.0
        %v3085 = vadd.f32 %v3083, %v3084
        %v3086 = vsel %vm2923, %v3041, 0.0
        %v3087 = vadd.f32 %v3085, %v3086
        %v3088 = vsel %vm2923, %v3042, 0.0
        %v3089 = vadd.f32 %v3087, %v3088
        %v3090 = vsel %vm2923, %v3043, 0.0
        %v3091 = vadd.f32 %v3089, %v3090
        %v3092 = vsel %vm2923, %v3044, 0.0
        %v3093 = vadd.f32 %v3091, %v3092
        %v3094 = vsel %vm2923, %v3045, 0.0
        %v3095 = vadd.f32 %v3093, %v3094
        %v3096 = vsel %vm2923, %v3046, 0.0
        %v3097 = vadd.f32 %v3095, %v3096
        %v3098 = vsel %vm2923, %v3047, 0.0
        %v3099 = vadd.f32 %v3097, %v3098
        %v3100 = vsel %vm2923, %v3048, 0.0
        %v3101 = vadd.f32 %v3099, %v3100
        %v3102 = vsel %vm2923, %v3049, 0.0
        %v3103 = vadd.f32 %v3101, %v3102
        %v3104 = vsel %vm2923, %v3050, 0.0
        %v3105 = vadd.f32 %v3103, %v3104
        %v3106 = vsel %vm2923, %v3051, 0.0
        %v3107 = vadd.f32 %v3105, %v3106
        %v3108 = vsel %vm2923, %v3052, 0.0
        %v3109 = vadd.f32 %v3107, %v3108
        %v3110 = vsel %vm2923, %v3053, 0.0
        %v3111 = vadd.f32 %v3109, %v3110
        %v3112 = vsel %vm2923, %v3054, 0.0
        %v3113 = vadd.f32 %v3111, %v3112
        %v3114 = vsel %vm2923, %v3055, 0.0
        %v3115 = vadd.f32 %v3113, %v3114
        %v3116 = vsel %vm2923, %v3056, 0.0
        %v3117 = vadd.f32 %v3115, %v3116
        %v3118 = vsel %vm2923, %v3057, 0.0
        %v3119 = vadd.f32 %v3117, %v3118
        %v3120 = vsel %vm2923, %v3058, 0.0
        %v3121 = vadd.f32 %v3119, %v3120
        %v3122 = vrot.slane %v3121, 4
        %v3123 = vadd.f32 %v3121, %v3122
        %v3124 = vrot.slane %v3123, 2
        %v3125 = vadd.f32 %v3123, %v3124
        %v3126 = vrot.slane %v3125, 1
        %v3127 = vadd.f32 %v3125, %v3126
        %v3128 = vmul.f32 %v3127, %v2993
        %v3129 = vadd.f32 %v3128, 1e-05
        %v3130 = vrsqrt.pop %v3129
        %v3131 = vmul.f32 %v2995, %v3130
        %v3132 = vmul.f32 %v2996, %v3130
        %v3133 = vmul.f32 %v2997, %v3130
        %v3134 = vmul.f32 %v2998, %v3130
        %v3135 = vmul.f32 %v2999, %v3130
        %v3136 = vmul.f32 %v3000, %v3130
        %v3137 = vmul.f32 %v3001, %v3130
        %v3138 = vmul.f32 %v3002, %v3130
        %v3139 = vmul.f32 %v3003, %v3130
        %v3140 = vmul.f32 %v3004, %v3130
        %v3141 = vmul.f32 %v3005, %v3130
        %v3142 = vmul.f32 %v3006, %v3130
        %v3143 = vmul.f32 %v3007, %v3130
        %v3144 = vmul.f32 %v3008, %v3130
        %v3145 = vmul.f32 %v3009, %v3130
        %v3146 = vmul.f32 %v3010, %v3130
        %v3147 = vmul.f32 %v3011, %v3130
        %v3148 = vmul.f32 %v3012, %v3130
        %v3149 = vmul.f32 %v3013, %v3130
        %v3150 = vmul.f32 %v3014, %v3130
        %v3151 = vmul.f32 %v3015, %v3130
        %v3152 = vmul.f32 %v3016, %v3130
        %v3153 = vmul.f32 %v3017, %v3130
        %v3154 = vmul.f32 %v3018, %v3130
        %v3155 = vmul.f32 %v3019, %v3130
        %v3156 = vmul.f32 %v3020, %v3130
        %v3157 = vmul.f32 %v3021, %v3130
        %v3158 = vmul.f32 %v3022, %v3130
        %v3159 = vmul.f32 %v3023, %v3130
        %v3160 = vmul.f32 %v3024, %v3130
        %v3161 = vmul.f32 %v3025, %v3130
        %v3162 = vmul.f32 %v3026, %v3130
        %v3163 = vmax.f32 %v3131, 0.0
        %v3164 = vmax.f32 %v3132, 0.0
        %v3165 = vmax.f32 %v3133, 0.0
        %v3166 = vmax.f32 %v3134, 0.0
        %v3167 = vmax.f32 %v3135, 0.0
        %v3168 = vmax.f32 %v3136, 0.0
        %v3169 = vmax.f32 %v3137, 0.0
        %v3170 = vmax.f32 %v3138, 0.0
        %v3171 = vmax.f32 %v3139, 0.0
        %v3172 = vmax.f32 %v3140, 0.0
        %v3173 = vmax.f32 %v3141, 0.0
        %v3174 = vmax.f32 %v3142, 0.0
        %v3175 = vmax.f32 %v3143, 0.0
        %v3176 = vmax.f32 %v3144, 0.0
        %v3177 = vmax.f32 %v3145, 0.0
        %v3178 = vmax.f32 %v3146, 0.0
        %v3179 = vmax.f32 %v3147, 0.0
        %v3180 = vmax.f32 %v3148, 0.0
        %v3181 = vmax.f32 %v3149, 0.0
        %v3182 = vmax.f32 %v3150, 0.0
        %v3183 = vmax.f32 %v3151, 0.0
        %v3184 = vmax.f32 %v3152, 0.0
        %v3185 = vmax.f32 %v3153, 0.0
        %v3186 = vmax.f32 %v3154, 0.0
        %v3187 = vmax.f32 %v3155, 0.0
        %v3188 = vmax.f32 %v3156, 0.0
        %v3189 = vmax.f32 %v3157, 0.0
        %v3190 = vmax.f32 %v3158, 0.0
        %v3191 = vmax.f32 %v3159, 0.0
        %v3192 = vmax.f32 %v3160, 0.0
        %v3193 = vmax.f32 %v3161, 0.0
        %v3194 = vmax.f32 %v3162, 0.0
        %3195 = vst.msk [vmem:[#allocation2] sm:$0xff] %vm2923, 0.0
        %3196 = vst.msk [vmem:[#allocation2 + $0x8] sm:$0xff] %vm2923, 0.0
        %vm3197 = vcmask 517120
        %3198 = vst.msk [vmem:[#allocation2 + $0x10] sm:$0x3] %vm3197, 0.0
        %3199 = vst.msk [vmem:[#allocation2 + $0x18] sm:$0xff] %vm2923, 0.0
        %3200 = vst.msk [vmem:[#allocation2 + $0x20] sm:$0xff] %vm2923, 0.0
        %3201 = vst.msk [vmem:[#allocation2 + $0x28] sm:$0x3] %vm3197, 0.0
        %3202 = vst.msk [vmem:[#allocation2 + $0x30] sm:$0xff] %vm2923, 0.0
        %3203 = vst.msk [vmem:[#allocation2 + $0x38] sm:$0xff] %vm2923, 0.0
        %3204 = vst.msk [vmem:[#allocation2 + $0x40] sm:$0x3] %vm3197, 0.0
        %3205 = vst.msk [vmem:[#allocation2 + $0x48] sm:$0xff] %vm2923, 0.0
        %3206 = vst.msk [vmem:[#allocation2 + $0x50] sm:$0xff] %vm2923, 0.0
        %3207 = vst.msk [vmem:[#allocation2 + $0x58] sm:$0x3] %vm3197, 0.0
        %3208 = vst.msk [vmem:[#allocation2 + $0x60] sm:$0xff] %vm2923, 0.0
        %3209 = vst.msk [vmem:[#allocation2 + $0x68] sm:$0xff] %vm2923, 0.0
        %3210 = vst.msk [vmem:[#allocation2 + $0x70] sm:$0x3] %vm3197, 0.0
        %3211 = vst.msk [vmem:[#allocation2 + $0x78] sm:$0xff] %vm2923, 0.0
        %3212 = vst.msk [vmem:[#allocation2 + $0x80] sm:$0xff] %vm2923, 0.0
        %3213 = vst.msk [vmem:[#allocation2 + $0x88] sm:$0x3] %vm3197, 0.0
        %3214 = vst.msk [vmem:[#allocation2 + $0x90] sm:$0xff] %vm2923, 0.0
        %3215 = vst.msk [vmem:[#allocation2 + $0x98] sm:$0xff] %vm2923, 0.0
        %3216 = vst.msk [vmem:[#allocation2 + $0xa0] sm:$0x3] %vm3197, 0.0
        %3217 = vst.msk [vmem:[#allocation2 + $0xa8] sm:$0xff] %vm2923, 0.0
        %3218 = vst.msk [vmem:[#allocation2 + $0xb0] sm:$0xff] %vm2923, 0.0
        %3219 = vst.msk [vmem:[#allocation2 + $0xb8] sm:$0x3] %vm3197, 0.0
        %3220 = vst.msk [vmem:[#allocation2 + $0xc0] sm:$0xff] %vm2923, 0.0
        %3221 = vst.msk [vmem:[#allocation2 + $0xc8] sm:$0xff] %vm2923, 0.0
        %3222 = vst.msk [vmem:[#allocation2 + $0xd0] sm:$0x3] %vm3197, 0.0
        %3223 = vst.msk [vmem:[#allocation2 + $0xd8] sm:$0xff] %vm2923, 0.0
        %3224 = vst.msk [vmem:[#allocation2 + $0xe0] sm:$0xff] %vm2923, 0.0
        %3225 = vst.msk [vmem:[#allocation2 + $0xe8] sm:$0x3] %vm3197, 0.0
        %3226 = vst.msk [vmem:[#allocation2 + $0xf0] sm:$0xff] %vm2923, 0.0
        %3227 = vst.msk [vmem:[#allocation2 + $0xf8] sm:$0xff] %vm2923, 0.0
        %3228 = vst.msk [vmem:[#allocation2 + $0x100] sm:$0x3] %vm3197, 0.0
        %3229 = vst.msk [vmem:[#allocation2 + $0x108] sm:$0xff] %vm2923, 0.0
        %3230 = vst.msk [vmem:[#allocation2 + $0x110] sm:$0xff] %vm2923, 0.0
        %3231 = vst.msk [vmem:[#allocation2 + $0x118] sm:$0x3] %vm3197, 0.0
        %3232 = vst.msk [vmem:[#allocation2 + $0x120] sm:$0xff] %vm2923, 0.0
        %3233 = vst.msk [vmem:[#allocation2 + $0x128] sm:$0xff] %vm2923, 0.0
        %3234 = vst.msk [vmem:[#allocation2 + $0x130] sm:$0x3] %vm3197, 0.0
        %3235 = vst.msk [vmem:[#allocation2 + $0x138] sm:$0xff] %vm2923, 0.0
        %3236 = vst.msk [vmem:[#allocation2 + $0x140] sm:$0xff] %vm2923, 0.0
        %3237 = vst.msk [vmem:[#allocation2 + $0x148] sm:$0x3] %vm3197, 0.0
        %3238 = vst.msk [vmem:[#allocation2 + $0x150] sm:$0xff] %vm2923, 0.0
        %3239 = vst.msk [vmem:[#allocation2 + $0x158] sm:$0xff] %vm2923, 0.0
        %3240 = vst.msk [vmem:[#allocation2 + $0x160] sm:$0x3] %vm3197, 0.0
        %3241 = vst.msk [vmem:[#allocation2 + $0x168] sm:$0xff] %vm2923, 0.0
        %3242 = vst.msk [vmem:[#allocation2 + $0x170] sm:$0xff] %vm2923, 0.0
        %3243 = vst.msk [vmem:[#allocation2 + $0x178] sm:$0x3] %vm3197, 0.0
        %3244 = vst.msk [vmem:[#allocation2 + $0x180] sm:$0xff] %vm2923, 0.0
        %3245 = vst.msk [vmem:[#allocation2 + $0x188] sm:$0xff] %vm2923, 0.0
        %3246 = vst.msk [vmem:[#allocation2 + $0x190] sm:$0x3] %vm3197, 0.0
        %3247 = vst.msk [vmem:[#allocation2 + $0x198] sm:$0xff] %vm2923, 0.0
        %3248 = vst.msk [vmem:[#allocation2 + $0x1a0] sm:$0xff] %vm2923, 0.0
        %3249 = vst.msk [vmem:[#allocation2 + $0x1a8] sm:$0x3] %vm3197, 0.0
        %s3250 = scalar_lea.vmem [#allocation2], 24
        %3251 = vst.msk [vmem:[%s3250 + $0x1] sm:$0xff] %vm2923, %v3163
        %3252 = vst.msk [vmem:[%s3250 + $0x9] sm:$0xff] %vm2923, %v3164
        %3253 = vst.msk [vmem:[%s3250 + $0x19] sm:$0xff] %vm2923, %v3165
        %3254 = vst.msk [vmem:[%s3250 + $0x21] sm:$0xff] %vm2923, %v3166
        %3255 = vst.msk [vmem:[%s3250 + $0x31] sm:$0xff] %vm2923, %v3167
        %3256 = vst.msk [vmem:[%s3250 + $0x39] sm:$0xff] %vm2923, %v3168
        %3257 = vst.msk [vmem:[%s3250 + $0x49] sm:$0xff] %vm2923, %v3169
        %3258 = vst.msk [vmem:[%s3250 + $0x51] sm:$0xff] %vm2923, %v3170
        %3259 = vst.msk [vmem:[%s3250 + $0x61] sm:$0xff] %vm2923, %v3171
        %3260 = vst.msk [vmem:[%s3250 + $0x69] sm:$0xff] %vm2923, %v3172
        %3261 = vst.msk [vmem:[%s3250 + $0x79] sm:$0xff] %vm2923, %v3173
        %3262 = vst.msk [vmem:[%s3250 + $0x81] sm:$0xff] %vm2923, %v3174
        %3263 = vst.msk [vmem:[%s3250 + $0x91] sm:$0xff] %vm2923, %v3175
        %3264 = vst.msk [vmem:[%s3250 + $0x99] sm:$0xff] %vm2923, %v3176
        %3265 = vst.msk [vmem:[%s3250 + $0xa9] sm:$0xff] %vm2923, %v3177
        %3266 = vst.msk [vmem:[%s3250 + $0xb1] sm:$0xff] %vm2923, %v3178
        %3267 = vst.msk [vmem:[%s3250 + $0xc1] sm:$0xff] %vm2923, %v3179
        %3268 = vst.msk [vmem:[%s3250 + $0xc9] sm:$0xff] %vm2923, %v3180
        %3269 = vst.msk [vmem:[%s3250 + $0xd9] sm:$0xff] %vm2923, %v3181
        %3270 = vst.msk [vmem:[%s3250 + $0xe1] sm:$0xff] %vm2923, %v3182
        %3271 = vst.msk [vmem:[%s3250 + $0xf1] sm:$0xff] %vm2923, %v3183
        %3272 = vst.msk [vmem:[%s3250 + $0xf9] sm:$0xff] %vm2923, %v3184
        %3273 = vst.msk [vmem:[%s3250 + $0x109] sm:$0xff] %vm2923, %v3185
        %3274 = vst.msk [vmem:[%s3250 + $0x111] sm:$0xff] %vm2923, %v3186
        %3275 = vst.msk [vmem:[%s3250 + $0x121] sm:$0xff] %vm2923, %v3187
        %3276 = vst.msk [vmem:[%s3250 + $0x129] sm:$0xff] %vm2923, %v3188
        %3277 = vst.msk [vmem:[%s3250 + $0x139] sm:$0xff] %vm2923, %v3189
        %3278 = vst.msk [vmem:[%s3250 + $0x141] sm:$0xff] %vm2923, %v3190
        %3279 = vst.msk [vmem:[%s3250 + $0x151] sm:$0xff] %vm2923, %v3191
        %3280 = vst.msk [vmem:[%s3250 + $0x159] sm:$0xff] %vm2923, %v3192
        %3281 = vst.msk [vmem:[%s3250 + $0x169] sm:$0xff] %vm2923, %v3193
        %3282 = vst.msk [vmem:[%s3250 + $0x171] sm:$0xff] %vm2923, %v3194
        %v3283 = vld [vmem:[#allocation2] sm:$0xff]
        %v3284 = vld [vmem:[#allocation2 + $0x8] sm:$0xff]
        %v3285 = vld [vmem:[#allocation2 + $0x18] sm:$0xff]
        %v3286 = vld [vmem:[#allocation2 + $0x20] sm:$0xff]
        %v3287 = vld [vmem:[#allocation2 + $0x30] sm:$0xff]
        %v3288 = vld [vmem:[#allocation2 + $0x38] sm:$0xff]
        %v3289 = vld [vmem:[#allocation2 + $0x48] sm:$0xff]
        %v3290 = vld [vmem:[#allocation2 + $0x50] sm:$0xff]
        %v3291 = vld [vmem:[#allocation2 + $0x60] sm:$0xff]
        %v3292 = vld [vmem:[#allocation2 + $0x68] sm:$0xff]
        %v3293 = vld [vmem:[#allocation2 + $0x78] sm:$0xff]
        %v3294 = vld [vmem:[#allocation2 + $0x80] sm:$0xff]
        %v3295 = vld [vmem:[#allocation2 + $0x90] sm:$0xff]
        %v3296 = vld [vmem:[#allocation2 + $0x98] sm:$0xff]
        %v3297 = vld [vmem:[#allocation2 + $0xa8] sm:$0xff]
        %v3298 = vld [vmem:[#allocation2 + $0xb0] sm:$0xff]
        %v3299 = vld [vmem:[#allocation2 + $0xc0] sm:$0xff]
        %v3300 = vld [vmem:[#allocation2 + $0xc8] sm:$0xff]
        %v3301 = vld [vmem:[#allocation2 + $0xd8] sm:$0xff]
        %v3302 = vld [vmem:[#allocation2 + $0xe0] sm:$0xff]
        %v3303 = vld [vmem:[#allocation2 + $0xf0] sm:$0xff]
        %v3304 = vld [vmem:[#allocation2 + $0xf8] sm:$0xff]
        %v3305 = vld [vmem:[#allocation2 + $0x108] sm:$0xff]
        %v3306 = vld [vmem:[#allocation2 + $0x110] sm:$0xff]
        %v3307 = vld [vmem:[#allocation2 + $0x120] sm:$0xff]
        %v3308 = vld [vmem:[#allocation2 + $0x128] sm:$0xff]
        %v3309 = vld [vmem:[#allocation2 + $0x138] sm:$0xff]
        %v3310 = vld [vmem:[#allocation2 + $0x140] sm:$0xff]
        %v3311 = vld [vmem:[#allocation2 + $0x150] sm:$0xff]
        %v3312 = vld [vmem:[#allocation2 + $0x158] sm:$0xff]
        %v3313 = vld [vmem:[#allocation2 + $0x168] sm:$0xff]
        %v3314 = vld [vmem:[#allocation2 + $0x170] sm:$0xff]
        %v3315 = vld [vmem:[%s2] sm:$0xf]
        %v3316 = vld [vmem:[%s2 + $0x4] sm:$0xf]
        %v3317 = vld [vmem:[%s2 + $0x8] sm:$0xf]
        %v3318 = vld [vmem:[%s2 + $0xc] sm:$0xf]
        %v3319 = vld [vmem:[%s2 + $0x10] sm:$0xf]
        %v3320 = vld [vmem:[%s2 + $0x14] sm:$0xf]
        %v3321 = vld [vmem:[%s2 + $0x18] sm:$0xf]
        %v3322 = vld [vmem:[%s2 + $0x1c] sm:$0xf]
        %v3323 = vpack.c.bf16 %v3284, %v3283
        %v3324 = vpack.c.bf16 %v3286, %v3285
        %v3325 = vpack.c.bf16 %v3288, %v3287
        %v3326 = vpack.c.bf16 %v3290, %v3289
        %v3327 = vpack.c.bf16 %v3292, %v3291
        %v3328 = vpack.c.bf16 %v3294, %v3293
        %v3329 = vpack.c.bf16 %v3296, %v3295
        %v3330 = vpack.c.bf16 %v3298, %v3297
        %v3331 = vpack.c.bf16 %v3300, %v3299
        %v3332 = vpack.c.bf16 %v3302, %v3301
        %v3333 = vpack.c.bf16 %v3304, %v3303
        %v3334 = vpack.c.bf16 %v3306, %v3305
        %v3335 = vpack.c.bf16 %v3308, %v3307
        %v3336 = vpack.c.bf16 %v3310, %v3309
        %v3337 = vpack.c.bf16 %v3312, %v3311
        %v3338 = vpack.c.bf16 %v3314, %v3313
        %v3339 = vld [vmem:[#allocation2 + $0x1] sm:$0xff]
        %v3340 = vld [vmem:[#allocation2 + $0x9] sm:$0xff]
        %v3341 = vld [vmem:[#allocation2 + $0x19] sm:$0xff]
        %v3342 = vld [vmem:[#allocation2 + $0x21] sm:$0xff]
        %v3343 = vld [vmem:[#allocation2 + $0x31] sm:$0xff]
        %v3344 = vld [vmem:[#allocation2 + $0x39] sm:$0xff]
        %v3345 = vld [vmem:[#allocation2 + $0x49] sm:$0xff]
        %v3346 = vld [vmem:[#allocation2 + $0x51] sm:$0xff]
        %v3347 = vld [vmem:[#allocation2 + $0x61] sm:$0xff]
        %v3348 = vld [vmem:[#allocation2 + $0x69] sm:$0xff]
        %v3349 = vld [vmem:[#allocation2 + $0x79] sm:$0xff]
        %v3350 = vld [vmem:[#allocation2 + $0x81] sm:$0xff]
        %v3351 = vld [vmem:[#allocation2 + $0x91] sm:$0xff]
        %v3352 = vld [vmem:[#allocation2 + $0x99] sm:$0xff]
        %v3353 = vld [vmem:[#allocation2 + $0xa9] sm:$0xff]
        %v3354 = vld [vmem:[#allocation2 + $0xb1] sm:$0xff]
        %v3355 = vld [vmem:[#allocation2 + $0xc1] sm:$0xff]
        %v3356 = vld [vmem:[#allocation2 + $0xc9] sm:$0xff]
        %v3357 = vld [vmem:[#allocation2 + $0xd9] sm:$0xff]
        %v3358 = vld [vmem:[#allocation2 + $0xe1] sm:$0xff]
        %v3359 = vld [vmem:[#allocation2 + $0xf1] sm:$0xff]
        %v3360 = vld [vmem:[#allocation2 + $0xf9] sm:$0xff]
        %v3361 = vld [vmem:[#allocation2 + $0x109] sm:$0xff]
        %v3362 = vld [vmem:[#allocation2 + $0x111] sm:$0xff]
        %v3363 = vld [vmem:[#allocation2 + $0x121] sm:$0xff]
        %v3364 = vld [vmem:[#allocation2 + $0x129] sm:$0xff]
        %v3365 = vld [vmem:[#allocation2 + $0x139] sm:$0xff]
        %v3366 = vld [vmem:[#allocation2 + $0x141] sm:$0xff]
        %v3367 = vld [vmem:[#allocation2 + $0x151] sm:$0xff]
        %v3368 = vld [vmem:[#allocation2 + $0x159] sm:$0xff]
        %v3369 = vld [vmem:[#allocation2 + $0x169] sm:$0xff]
        %v3370 = vld [vmem:[#allocation2 + $0x171] sm:$0xff]
        %s3371 = scalar_lea.vmem %s2, 32
        %v3372 = vld [vmem:[%s3371] sm:$0xf]
        %v3373 = vld [vmem:[%s3371 + $0x4] sm:$0xf]
        %v3374 = vld [vmem:[%s3371 + $0x8] sm:$0xf]
        %v3375 = vld [vmem:[%s3371 + $0xc] sm:$0xf]
        %v3376 = vld [vmem:[%s3371 + $0x10] sm:$0xf]
        %v3377 = vld [vmem:[%s3371 + $0x14] sm:$0xf]
        %v3378 = vld [vmem:[%s3371 + $0x18] sm:$0xf]
        %v3379 = vld [vmem:[%s3371 + $0x1c] sm:$0xf]
        %v3380 = vpack.c.bf16 %v3340, %v3339
        %v3381 = vpack.c.bf16 %v3342, %v3341
        %v3382 = vpack.c.bf16 %v3344, %v3343
        %v3383 = vpack.c.bf16 %v3346, %v3345
        %v3384 = vpack.c.bf16 %v3348, %v3347
        %v3385 = vpack.c.bf16 %v3350, %v3349
        %v3386 = vpack.c.bf16 %v3352, %v3351
        %v3387 = vpack.c.bf16 %v3354, %v3353
        %v3388 = vpack.c.bf16 %v3356, %v3355
        %v3389 = vpack.c.bf16 %v3358, %v3357
        %v3390 = vpack.c.bf16 %v3360, %v3359
        %v3391 = vpack.c.bf16 %v3362, %v3361
        %v3392 = vpack.c.bf16 %v3364, %v3363
        %v3393 = vpack.c.bf16 %v3366, %v3365
        %v3394 = vpack.c.bf16 %v3368, %v3367
        %v3395 = vpack.c.bf16 %v3370, %v3369
        %v3404 = vunpack.c.l.b16 %v3372
        %v3405 = vunpack.c.l.b16 %v3373
        %v3406 = vunpack.c.l.b16 %v3374
        %v3407 = vunpack.c.l.b16 %v3375
        %v3408 = vunpack.c.l.b16 %v3376
        %v3409 = vunpack.c.l.b16 %v3377
        %v3410 = vunpack.c.l.b16 %v3378
        %v3411 = vunpack.c.l.b16 %v3379
        %v3412 = vpack.c.b16 %v3405, %v3404
        %v3413 = vpack.c.b16 %v3407, %v3406
        %v3414 = vpack.c.b16 %v3409, %v3408
        %v3415 = vpack.c.b16 %v3411, %v3410
        %v3421 = vsel %vm2923, %v3380, 0
        %v3424 = vsel %vm2923, %v3381, 0
        %v3427 = vsel %vm2923, %v3382, 0
        %v3430 = vsel %vm2923, %v3383, 0
        %v3433 = vsel %vm2923, %v3384, 0
        %v3436 = vsel %vm2923, %v3385, 0
        %v3439 = vsel %vm2923, %v3386, 0
        %v3442 = vsel %vm2923, %v3387, 0
        %v3445 = vsel %vm2923, %v3388, 0
        %v3448 = vsel %vm2923, %v3389, 0
        %v3451 = vsel %vm2923, %v3390, 0
        %v3454 = vsel %vm2923, %v3391, 0
        %v3457 = vsel %vm2923, %v3392, 0
        %v3460 = vsel %vm2923, %v3393, 0
        %v3463 = vsel %vm2923, %v3394, 0
        %v3466 = vsel %vm2923, %v3395, 0
        %3468 = vmatprep.subr.bf16.mxu0 0
        %3469 = vmatpush1.bf16.msra.mxu0 %v3412
        %3470 = vmatprep.subr.bf16.mxu0 0
        %3471 = vmatpush1.bf16.msra.mxu0 %v3413
        %3472 = vmatprep.subr.bf16.mxu0 0
        %3473 = vmatpush1.bf16.msra.mxu0 %v3414
        %3474 = vmatprep.subr.bf16.mxu0 0
        %3475 = vmatpush1.bf16.msra.mxu0 %v3415
        %3476 = vmatprep.subr.bf16.mxu0 0
        %3477 = vmatpush1.bf16.msra.mxu0 0
        %3478 = vmatprep.subr.bf16.mxu0 0
        %3479 = vmatpush1.bf16.msra.mxu0 0
        %3480 = vmatprep.subr.bf16.mxu0 0
        %3481 = vmatpush1.bf16.msra.mxu0 0
        %3482 = vmatprep.subr.bf16.mxu0 0
        %3483 = vmatpush1.bf16.msra.mxu0 0
        %3484 = vmatprep.subr.bf16.mxu0 0
        %3485 = vmatpush1.bf16.msra.mxu0 0
        %3486 = vmatprep.subr.bf16.mxu0 0
        %3487 = vmatpush1.bf16.msra.mxu0 0
        %3488 = vmatprep.subr.bf16.mxu0 0
        %3489 = vmatpush1.bf16.msra.mxu0 0
        %3490 = vmatprep.subr.bf16.mxu0 0
        %3491 = vmatpush1.bf16.msra.mxu0 0
        %3492 = vmatprep.subr.bf16.mxu0 0
        %3493 = vmatpush1.bf16.msra.mxu0 0
        %3494 = vmatprep.subr.bf16.mxu0 0
        %3495 = vmatpush1.bf16.msra.mxu0 0
        %3496 = vmatprep.subr.bf16.mxu0 0
        %3497 = vmatpush1.bf16.msra.mxu0 0
        %3498 = vmatprep.subr.bf16.mxu0 0
        %3499 = vmatpush1.bf16.msra.mxu0 0
        %3500 = vmatprep.mubr.bf16.mxu0 0
        %3501 = vmatmul.mubr.bf16.gmra.mrb[0].mxu0 %v3421
        %v3502 = vpop.f32.mrb[0].mxu0
        %v3503 = vadd.f32 0.0, %v3502
        %v3504 = vpop.f32.mrb[0].mxu0
        %v3505 = vpop.f32.mrb[0].mxu0
        %v3506 = vadd.f32 0.0, %v3505
        %v3507 = vpop.f32.mrb[0].mxu0
        %3508 = vmatprep.mubr.bf16.mxu0 0
        %3509 = vmatmul.mubr.bf16.gmra.mrb[0].mxu0 %v3424
        %v3510 = vpop.f32.mrb[0].mxu0
        %v3511 = vadd.f32 0.0, %v3510
        %v3512 = vpop.f32.mrb[0].mxu0
        %v3513 = vpop.f32.mrb[0].mxu0
        %v3514 = vadd.f32 0.0, %v3513
        %v3515 = vpop.f32.mrb[0].mxu0
        %3516 = vmatprep.mubr.bf16.mxu0 0
        %3517 = vmatmul.mubr.bf16.gmra.mrb[0].mxu0 %v3427
        %v3518 = vpop.f32.mrb[0].mxu0
        %v3519 = vadd.f32 0.0, %v3518
        %v3520 = vpop.f32.mrb[0].mxu0
        %v3521 = vpop.f32.mrb[0].mxu0
        %v3522 = vadd.f32 0.0, %v3521
        %v3523 = vpop.f32.mrb[0].mxu0
        %3524 = vmatprep.mubr.bf16.mxu0 0
        %3525 = vmatmul.mubr.bf16.gmra.mrb[0].mxu0 %v3430
        %v3526 = vpop.f32.mrb[0].mxu0
        %v3527 = vadd.f32 0.0, %v3526
        %v3528 = vpop.f32.mrb[0].mxu0
        %v3529 = vpop.f32.mrb[0].mxu0
        %v3530 = vadd.f32 0.0, %v3529
        %v3531 = vpop.f32.mrb[0].mxu0
        %3532 = vmatprep.mubr.bf16.mxu0 0
        %3533 = vmatmul.mubr.bf16.gmra.mrb[0].mxu0 %v3433
        %v3534 = vpop.f32.mrb[0].mxu0
        %v3535 = vadd.f32 0.0, %v3534
        %v3536 = vpop.f32.mrb[0].mxu0
        %v3537 = vpop.f32.mrb[0].mxu0
        %v3538 = vadd.f32 0.0, %v3537
        %v3539 = vpop.f32.mrb[0].mxu0
        %3540 = vmatprep.mubr.bf16.mxu0 0
        %3541 = vmatmul.mubr.bf16.gmra.mrb[0].mxu0 %v3436
        %v3542 = vpop.f32.mrb[0].mxu0
        %v3543 = vadd.f32 0.0, %v3542
        %v3544 = vpop.f32.mrb[0].mxu0
        %v3545 = vpop.f32.mrb[0].mxu0
        %v3546 = vadd.f32 0.0, %v3545
        %v3547 = vpop.f32.mrb[0].mxu0
        %3548 = vmatprep.mubr.bf16.mxu0 0
        %3549 = vmatmul.mubr.bf16.gmra.mrb[0].mxu0 %v3439
        %v3550 = vpop.f32.mrb[0].mxu0
        %v3551 = vadd.f32 0.0, %v3550
        %v3552 = vpop.f32.mrb[0].mxu0
        %v3553 = vpop.f32.mrb[0].mxu0
        %v3554 = vadd.f32 0.0, %v3553
        %v3555 = vpop.f32.mrb[0].mxu0
        %3556 = vmatprep.mubr.bf16.mxu0 0
        %3557 = vmatmul.mubr.bf16.gmra.mrb[0].mxu0 %v3442
        %v3558 = vpop.f32.mrb[0].mxu0
        %v3559 = vadd.f32 0.0, %v3558
        %v3560 = vpop.f32.mrb[0].mxu0
        %v3561 = vpop.f32.mrb[0].mxu0
        %v3562 = vadd.f32 0.0, %v3561
        %v3563 = vpop.f32.mrb[0].mxu0
        %3564 = vmatprep.mubr.bf16.mxu0 0
        %3565 = vmatmul.mubr.bf16.gmra.mrb[0].mxu0 %v3445
        %v3566 = vpop.f32.mrb[0].mxu0
        %v3567 = vadd.f32 0.0, %v3566
        %v3568 = vpop.f32.mrb[0].mxu0
        %v3569 = vpop.f32.mrb[0].mxu0
        %v3570 = vadd.f32 0.0, %v3569
        %v3571 = vpop.f32.mrb[0].mxu0
        %3572 = vmatprep.mubr.bf16.mxu0 0
        %3573 = vmatmul.mubr.bf16.gmra.mrb[0].mxu0 %v3448
        %v3574 = vpop.f32.mrb[0].mxu0
        %v3575 = vadd.f32 0.0, %v3574
        %v3576 = vpop.f32.mrb[0].mxu0
        %v3577 = vpop.f32.mrb[0].mxu0
        %v3578 = vadd.f32 0.0, %v3577
        %v3579 = vpop.f32.mrb[0].mxu0
        %3580 = vmatprep.mubr.bf16.mxu0 0
        %3581 = vmatmul.mubr.bf16.gmra.mrb[0].mxu0 %v3451
        %v3582 = vpop.f32.mrb[0].mxu0
        %v3583 = vadd.f32 0.0, %v3582
        %v3584 = vpop.f32.mrb[0].mxu0
        %v3585 = vpop.f32.mrb[0].mxu0
        %v3586 = vadd.f32 0.0, %v3585
        %v3587 = vpop.f32.mrb[0].mxu0
        %3588 = vmatprep.mubr.bf16.mxu0 0
        %3589 = vmatmul.mubr.bf16.gmra.mrb[0].mxu0 %v3454
        %v3590 = vpop.f32.mrb[0].mxu0
        %v3591 = vadd.f32 0.0, %v3590
        %v3592 = vpop.f32.mrb[0].mxu0
        %v3593 = vpop.f32.mrb[0].mxu0
        %v3594 = vadd.f32 0.0, %v3593
        %v3595 = vpop.f32.mrb[0].mxu0
        %3596 = vmatprep.mubr.bf16.mxu0 0
        %3597 = vmatmul.mubr.bf16.gmra.mrb[0].mxu0 %v3457
        %v3598 = vpop.f32.mrb[0].mxu0
        %v3599 = vadd.f32 0.0, %v3598
        %v3600 = vpop.f32.mrb[0].mxu0
        %v3601 = vpop.f32.mrb[0].mxu0
        %v3602 = vadd.f32 0.0, %v3601
        %v3603 = vpop.f32.mrb[0].mxu0
        %3604 = vmatprep.mubr.bf16.mxu0 0
        %3605 = vmatmul.mubr.bf16.gmra.mrb[0].mxu0 %v3460
        %v3606 = vpop.f32.mrb[0].mxu0
        %v3607 = vadd.f32 0.0, %v3606
        %v3608 = vpop.f32.mrb[0].mxu0
        %v3609 = vpop.f32.mrb[0].mxu0
        %v3610 = vadd.f32 0.0, %v3609
        %v3611 = vpop.f32.mrb[0].mxu0
        %3612 = vmatprep.mubr.bf16.mxu0 0
        %3613 = vmatmul.mubr.bf16.gmra.mrb[0].mxu0 %v3463
        %v3614 = vpop.f32.mrb[0].mxu0
        %v3615 = vadd.f32 0.0, %v3614
        %v3616 = vpop.f32.mrb[0].mxu0
        %v3617 = vpop.f32.mrb[0].mxu0
        %v3618 = vadd.f32 0.0, %v3617
        %v3619 = vpop.f32.mrb[0].mxu0
        %3620 = vmatprep.mubr.bf16.mxu0 0
        %3621 = vmatmul.mubr.bf16.gmra.mrb[0].mxu0 %v3466
        %v3622 = vpop.f32.mrb[0].mxu0
        %v3623 = vadd.f32 0.0, %v3622
        %v3624 = vpop.f32.mrb[0].mxu0
        %v3625 = vpop.f32.mrb[0].mxu0
        %v3626 = vadd.f32 0.0, %v3625
        %v3627 = vpop.f32.mrb[0].mxu0
        %3628 = vdwg.mxu0
        %v3637 = vunpack.c.l.b16 %v3315
        %v3638 = vunpack.c.l.b16 %v3316
        %v3639 = vunpack.c.l.b16 %v3317
        %v3640 = vunpack.c.l.b16 %v3318
        %v3641 = vunpack.c.l.b16 %v3319
        %v3642 = vunpack.c.l.b16 %v3320
        %v3643 = vunpack.c.l.b16 %v3321
        %v3644 = vunpack.c.l.b16 %v3322
        %v3645 = vpack.c.b16 %v3638, %v3637
        %v3646 = vpack.c.b16 %v3640, %v3639
        %v3647 = vpack.c.b16 %v3642, %v3641
        %v3648 = vpack.c.b16 %v3644, %v3643
        %v3654 = vsel %vm2923, %v3323, 0
        %v3657 = vsel %vm2923, %v3324, 0
        %v3660 = vsel %vm2923, %v3325, 0
        %v3663 = vsel %vm2923, %v3326, 0
        %v3666 = vsel %vm2923, %v3327, 0
        %v3669 = vsel %vm2923, %v3328, 0
        %v3672 = vsel %vm2923, %v3329, 0
        %v3675 = vsel %vm2923, %v3330, 0
        %v3678 = vsel %vm2923, %v3331, 0
        %v3681 = vsel %vm2923, %v3332, 0
        %v3684 = vsel %vm2923, %v3333, 0
        %v3687 = vsel %vm2923, %v3334, 0
        %v3690 = vsel %vm2923, %v3335, 0
        %v3693 = vsel %vm2923, %v3336, 0
        %v3696 = vsel %vm2923, %v3337, 0
        %v3699 = vsel %vm2923, %v3338, 0
        %3701 = vmatprep.subr.bf16.mxu0 0
        %3702 = vmatpush1.bf16.msra.mxu0 %v3645
        %3703 = vmatprep.subr.bf16.mxu0 0
        %3704 = vmatpush1.bf16.msra.mxu0 %v3646
        %3705 = vmatprep.subr.bf16.mxu0 0
        %3706 = vmatpush1.bf16.msra.mxu0 %v3647
        %3707 = vmatprep.subr.bf16.mxu0 0
        %3708 = vmatpush1.bf16.msra.mxu0 %v3648
        %3709 = vmatprep.subr.bf16.mxu0 0
        %3710 = vmatpush1.bf16.msra.mxu0 0
        %3711 = vmatprep.subr.bf16.mxu0 0
        %3712 = vmatpush1.bf16.msra.mxu0 0
        %3713 = vmatprep.subr.bf16.mxu0 0
        %3714 = vmatpush1.bf16.msra.mxu0 0
        %3715 = vmatprep.subr.bf16.mxu0 0
        %3716 = vmatpush1.bf16.msra.mxu0 0
        %3717 = vmatprep.subr.bf16.mxu0 0
        %3718 = vmatpush1.bf16.msra.mxu0 0
        %3719 = vmatprep.subr.bf16.mxu0 0
        %3720 = vmatpush1.bf16.msra.mxu0 0
        %3721 = vmatprep.subr.bf16.mxu0 0
        %3722 = vmatpush1.bf16.msra.mxu0 0
        %3723 = vmatprep.subr.bf16.mxu0 0
        %3724 = vmatpush1.bf16.msra.mxu0 0
        %3725 = vmatprep.subr.bf16.mxu0 0
        %3726 = vmatpush1.bf16.msra.mxu0 0
        %3727 = vmatprep.subr.bf16.mxu0 0
        %3728 = vmatpush1.bf16.msra.mxu0 0
        %3729 = vmatprep.subr.bf16.mxu0 0
        %3730 = vmatpush1.bf16.msra.mxu0 0
        %3731 = vmatprep.subr.bf16.mxu0 0
        %3732 = vmatpush1.bf16.msra.mxu0 0
        %3733 = vmatprep.mubr.bf16.mxu0 0
        %3734 = vmatmul.mubr.bf16.gmra.mrb[0].mxu0 %v3654
        %v3735 = vpop.f32.mrb[0].mxu0
        %v3736 = vadd.f32 %v3503, %v3735
        %v3737 = vpop.f32.mrb[0].mxu0
        %v3738 = vpop.f32.mrb[0].mxu0
        %v3739 = vadd.f32 %v3506, %v3738
        %v3740 = vpop.f32.mrb[0].mxu0
        %3741 = vmatprep.mubr.bf16.mxu0 0
        %3742 = vmatmul.mubr.bf16.gmra.mrb[0].mxu0 %v3657
        %v3743 = vpop.f32.mrb[0].mxu0
        %v3744 = vadd.f32 %v3511, %v3743
        %v3745 = vpop.f32.mrb[0].mxu0
        %v3746 = vpop.f32.mrb[0].mxu0
        %v3747 = vadd.f32 %v3514, %v3746
        %v3748 = vpop.f32.mrb[0].mxu0
        %3749 = vmatprep.mubr.bf16.mxu0 0
        %3750 = vmatmul.mubr.bf16.gmra.mrb[0].mxu0 %v3660
        %v3751 = vpop.f32.mrb[0].mxu0
        %v3752 = vadd.f32 %v3519, %v3751
        %v3753 = vpop.f32.mrb[0].mxu0
        %v3754 = vpop.f32.mrb[0].mxu0
        %v3755 = vadd.f32 %v3522, %v3754
        %v3756 = vpop.f32.mrb[0].mxu0
        %3757 = vmatprep.mubr.bf16.mxu0 0
        %3758 = vmatmul.mubr.bf16.gmra.mrb[0].mxu0 %v3663
        %v3759 = vpop.f32.mrb[0].mxu0
        %v3760 = vadd.f32 %v3527, %v3759
        %v3761 = vpop.f32.mrb[0].mxu0
        %v3762 = vpop.f32.mrb[0].mxu0
        %v3763 = vadd.f32 %v3530, %v3762
        %v3764 = vpop.f32.mrb[0].mxu0
        %3765 = vmatprep.mubr.bf16.mxu0 0
        %3766 = vmatmul.mubr.bf16.gmra.mrb[0].mxu0 %v3666
        %v3767 = vpop.f32.mrb[0].mxu0
        %v3768 = vadd.f32 %v3535, %v3767
        %v3769 = vpop.f32.mrb[0].mxu0
        %v3770 = vpop.f32.mrb[0].mxu0
        %v3771 = vadd.f32 %v3538, %v3770
        %v3772 = vpop.f32.mrb[0].mxu0
        %3773 = vmatprep.mubr.bf16.mxu0 0
        %3774 = vmatmul.mubr.bf16.gmra.mrb[0].mxu0 %v3669
        %v3775 = vpop.f32.mrb[0].mxu0
        %v3776 = vadd.f32 %v3543, %v3775
        %v3777 = vpop.f32.mrb[0].mxu0
        %v3778 = vpop.f32.mrb[0].mxu0
        %v3779 = vadd.f32 %v3546, %v3778
        %v3780 = vpop.f32.mrb[0].mxu0
        %3781 = vmatprep.mubr.bf16.mxu0 0
        %3782 = vmatmul.mubr.bf16.gmra.mrb[0].mxu0 %v3672
        %v3783 = vpop.f32.mrb[0].mxu0
        %v3784 = vadd.f32 %v3551, %v3783
        %v3785 = vpop.f32.mrb[0].mxu0
        %v3786 = vpop.f32.mrb[0].mxu0
        %v3787 = vadd.f32 %v3554, %v3786
        %v3788 = vpop.f32.mrb[0].mxu0
        %3789 = vmatprep.mubr.bf16.mxu0 0
        %3790 = vmatmul.mubr.bf16.gmra.mrb[0].mxu0 %v3675
        %v3791 = vpop.f32.mrb[0].mxu0
        %v3792 = vadd.f32 %v3559, %v3791
        %v3793 = vpop.f32.mrb[0].mxu0
        %v3794 = vpop.f32.mrb[0].mxu0
        %v3795 = vadd.f32 %v3562, %v3794
        %v3796 = vpop.f32.mrb[0].mxu0
        %3797 = vmatprep.mubr.bf16.mxu0 0
        %3798 = vmatmul.mubr.bf16.gmra.mrb[0].mxu0 %v3678
        %v3799 = vpop.f32.mrb[0].mxu0
        %v3800 = vadd.f32 %v3567, %v3799
        %v3801 = vpop.f32.mrb[0].mxu0
        %v3802 = vpop.f32.mrb[0].mxu0
        %v3803 = vadd.f32 %v3570, %v3802
        %v3804 = vpop.f32.mrb[0].mxu0
        %3805 = vmatprep.mubr.bf16.mxu0 0
        %3806 = vmatmul.mubr.bf16.gmra.mrb[0].mxu0 %v3681
        %v3807 = vpop.f32.mrb[0].mxu0
        %v3808 = vadd.f32 %v3575, %v3807
        %v3809 = vpop.f32.mrb[0].mxu0
        %v3810 = vpop.f32.mrb[0].mxu0
        %v3811 = vadd.f32 %v3578, %v3810
        %v3812 = vpop.f32.mrb[0].mxu0
        %3813 = vmatprep.mubr.bf16.mxu0 0
        %3814 = vmatmul.mubr.bf16.gmra.mrb[0].mxu0 %v3684
        %v3815 = vpop.f32.mrb[0].mxu0
        %v3816 = vadd.f32 %v3583, %v3815
        %v3817 = vpop.f32.mrb[0].mxu0
        %v3818 = vpop.f32.mrb[0].mxu0
        %v3819 = vadd.f32 %v3586, %v3818
        %v3820 = vpop.f32.mrb[0].mxu0
        %3821 = vmatprep.mubr.bf16.mxu0 0
        %3822 = vmatmul.mubr.bf16.gmra.mrb[0].mxu0 %v3687
        %v3823 = vpop.f32.mrb[0].mxu0
        %v3824 = vadd.f32 %v3591, %v3823
        %v3825 = vpop.f32.mrb[0].mxu0
        %v3826 = vpop.f32.mrb[0].mxu0
        %v3827 = vadd.f32 %v3594, %v3826
        %v3828 = vpop.f32.mrb[0].mxu0
        %3829 = vmatprep.mubr.bf16.mxu0 0
        %3830 = vmatmul.mubr.bf16.gmra.mrb[0].mxu0 %v3690
        %v3831 = vpop.f32.mrb[0].mxu0
        %v3832 = vadd.f32 %v3599, %v3831
        %v3833 = vpop.f32.mrb[0].mxu0
        %v3834 = vpop.f32.mrb[0].mxu0
        %v3835 = vadd.f32 %v3602, %v3834
        %v3836 = vpop.f32.mrb[0].mxu0
        %3837 = vmatprep.mubr.bf16.mxu0 0
        %3838 = vmatmul.mubr.bf16.gmra.mrb[0].mxu0 %v3693
        %v3839 = vpop.f32.mrb[0].mxu0
        %v3840 = vadd.f32 %v3607, %v3839
        %v3841 = vpop.f32.mrb[0].mxu0
        %v3842 = vpop.f32.mrb[0].mxu0
        %v3843 = vadd.f32 %v3610, %v3842
        %v3844 = vpop.f32.mrb[0].mxu0
        %3845 = vmatprep.mubr.bf16.mxu0 0
        %3846 = vmatmul.mubr.bf16.gmra.mrb[0].mxu0 %v3696
        %v3847 = vpop.f32.mrb[0].mxu0
        %v3848 = vadd.f32 %v3615, %v3847
        %v3849 = vpop.f32.mrb[0].mxu0
        %v3850 = vpop.f32.mrb[0].mxu0
        %v3851 = vadd.f32 %v3618, %v3850
        %v3852 = vpop.f32.mrb[0].mxu0
        %3853 = vmatprep.mubr.bf16.mxu0 0
        %3854 = vmatmul.mubr.bf16.gmra.mrb[0].mxu0 %v3699
        %v3855 = vpop.f32.mrb[0].mxu0
        %v3856 = vadd.f32 %v3623, %v3855
        %v3857 = vpop.f32.mrb[0].mxu0
        %v3858 = vpop.f32.mrb[0].mxu0
        %v3859 = vadd.f32 %v3626, %v3858
        %v3860 = vpop.f32.mrb[0].mxu0
        %3861 = vdwg.mxu0
        %v3862 = vld [vmem:[#allocation2 + $0x2] sm:$0xff]
        %v3863 = vld [vmem:[#allocation2 + $0xa] sm:$0xff]
        %v3864 = vld [vmem:[#allocation2 + $0x1a] sm:$0xff]
        %v3865 = vld [vmem:[#allocation2 + $0x22] sm:$0xff]
        %v3866 = vld [vmem:[#allocation2 + $0x32] sm:$0xff]
        %v3867 = vld [vmem:[#allocation2 + $0x3a] sm:$0xff]
        %v3868 = vld [vmem:[#allocation2 + $0x4a] sm:$0xff]
        %v3869 = vld [vmem:[#allocation2 + $0x52] sm:$0xff]
        %v3870 = vld [vmem:[#allocation2 + $0x62] sm:$0xff]
        %v3871 = vld [vmem:[#allocation2 + $0x6a] sm:$0xff]
        %v3872 = vld [vmem:[#allocation2 + $0x7a] sm:$0xff]
        %v3873 = vld [vmem:[#allocation2 + $0x82] sm:$0xff]
        %v3874 = vld [vmem:[#allocation2 + $0x92] sm:$0xff]
        %v3875 = vld [vmem:[#allocation2 + $0x9a] sm:$0xff]
        %v3876 = vld [vmem:[#allocation2 + $0xaa] sm:$0xff]
        %v3877 = vld [vmem:[#allocation2 + $0xb2] sm:$0xff]
        %v3878 = vld [vmem:[#allocation2 + $0xc2] sm:$0xff]
        %v3879 = vld [vmem:[#allocation2 + $0xca] sm:$0xff]
        %v3880 = vld [vmem:[#allocation2 + $0xda] sm:$0xff]
        %v3881 = vld [vmem:[#allocation2 + $0xe2] sm:$0xff]
        %v3882 = vld [vmem:[#allocation2 + $0xf2] sm:$0xff]
        %v3883 = vld [vmem:[#allocation2 + $0xfa] sm:$0xff]
        %v3884 = vld [vmem:[#allocation2 + $0x10a] sm:$0xff]
        %v3885 = vld [vmem:[#allocation2 + $0x112] sm:$0xff]
        %v3886 = vld [vmem:[#allocation2 + $0x122] sm:$0xff]
        %v3887 = vld [vmem:[#allocation2 + $0x12a] sm:$0xff]
        %v3888 = vld [vmem:[#allocation2 + $0x13a] sm:$0xff]
        %v3889 = vld [vmem:[#allocation2 + $0x142] sm:$0xff]
        %v3890 = vld [vmem:[#allocation2 + $0x152] sm:$0xff]
        %v3891 = vld [vmem:[#allocation2 + $0x15a] sm:$0xff]
        %v3892 = vld [vmem:[#allocation2 + $0x16a] sm:$0xff]
        %v3893 = vld [vmem:[#allocation2 + $0x172] sm:$0xff]
        %s3894 = scalar_lea.vmem %s2, 64
        %v3895 = vld [vmem:[%s3894] sm:$0xf]
        %v3896 = vld [vmem:[%s3894 + $0x4] sm:$0xf]
        %v3897 = vld [vmem:[%s3894 + $0x8] sm:$0xf]
        %v3898 = vld [vmem:[%s3894 + $0xc] sm:$0xf]
        %v3899 = vld [vmem:[%s3894 + $0x10] sm:$0xf]
        %v3900 = vld [vmem:[%s3894 + $0x14] sm:$0xf]
        %v3901 = vld [vmem:[%s3894 + $0x18] sm:$0xf]
        %v3902 = vld [vmem:[%s3894 + $0x1c] sm:$0xf]
        %v3903 = vpack.c.bf16 %v3863, %v3862
        %v3904 = vpack.c.bf16 %v3865, %v3864
        %v3905 = vpack.c.bf16 %v3867, %v3866
        %v3906 = vpack.c.bf16 %v3869, %v3868
        %v3907 = vpack.c.bf16 %v3871, %v3870
        %v3908 = vpack.c.bf16 %v3873, %v3872
        %v3909 = vpack.c.bf16 %v3875, %v3874
        %v3910 = vpack.c.bf16 %v3877, %v3876
        %v3911 = vpack.c.bf16 %v3879, %v3878
        %v3912 = vpack.c.bf16 %v3881, %v3880
        %v3913 = vpack.c.bf16 %v3883, %v3882
        %v3914 = vpack.c.bf16 %v3885, %v3884
        %v3915 = vpack.c.bf16 %v3887, %v3886
        %v3916 = vpack.c.bf16 %v3889, %v3888
        %v3917 = vpack.c.bf16 %v3891, %v3890
        %v3918 = vpack.c.bf16 %v3893, %v3892
        %v3927 = vunpack.c.l.b16 %v3895
        %v3928 = vunpack.c.l.b16 %v3896
        %v3929 = vunpack.c.l.b16 %v3897
        %v3930 = vunpack.c.l.b16 %v3898
        %v3931 = vunpack.c.l.b16 %v3899
        %v3932 = vunpack.c.l.b16 %v3900
        %v3933 = vunpack.c.l.b16 %v3901
        %v3934 = vunpack.c.l.b16 %v3902
        %v3935 = vpack.c.b16 %v3928, %v3927
        %v3936 = vpack.c.b16 %v3930, %v3929
        %v3937 = vpack.c.b16 %v3932, %v3931
        %v3938 = vpack.c.b16 %v3934, %v3933
        %v3944 = vsel %vm2923, %v3903, 0
        %v3947 = vsel %vm2923, %v3904, 0
        %v3950 = vsel %vm2923, %v3905, 0
        %v3953 = vsel %vm2923, %v3906, 0
        %v3956 = vsel %vm2923, %v3907, 0
        %v3959 = vsel %vm2923, %v3908, 0
        %v3962 = vsel %vm2923, %v3909, 0
        %v3965 = vsel %vm2923, %v3910, 0
        %v3968 = vsel %vm2923, %v3911, 0
        %v3971 = vsel %vm2923, %v3912, 0
        %v3974 = vsel %vm2923, %v3913, 0
        %v3977 = vsel %vm2923, %v3914, 0
        %v3980 = vsel %vm2923, %v3915, 0
        %v3983 = vsel %vm2923, %v3916, 0
        %v3986 = vsel %vm2923, %v3917, 0
        %v3989 = vsel %vm2923, %v3918, 0
        %3991 = vmatprep.subr.bf16.mxu0 0
        %3992 = vmatpush1.bf16.msra.mxu0 %v3935
        %3993 = vmatprep.subr.bf16.mxu0 0
        %3994 = vmatpush1.bf16.msra.mxu0 %v3936
        %3995 = vmatprep.subr.bf16.mxu0 0
        %3996 = vmatpush1.bf16.msra.mxu0 %v3937
        %3997 = vmatprep.subr.bf16.mxu0 0
        %3998 = vmatpush1.bf16.msra.mxu0 %v3938
        %3999 = vmatprep.subr.bf16.mxu0 0
        %4000 = vmatpush1.bf16.msra.mxu0 0
        %4001 = vmatprep.subr.bf16.mxu0 0
        %4002 = vmatpush1.bf16.msra.mxu0 0
        %4003 = vmatprep.subr.bf16.mxu0 0
        %4004 = vmatpush1.bf16.msra.mxu0 0
        %4005 = vmatprep.subr.bf16.mxu0 0
        %4006 = vmatpush1.bf16.msra.mxu0 0
        %4007 = vmatprep.subr.bf16.mxu0 0
        %4008 = vmatpush1.bf16.msra.mxu0 0
        %4009 = vmatprep.subr.bf16.mxu0 0
        %4010 = vmatpush1.bf16.msra.mxu0 0
        %4011 = vmatprep.subr.bf16.mxu0 0
        %4012 = vmatpush1.bf16.msra.mxu0 0
        %4013 = vmatprep.subr.bf16.mxu0 0
        %4014 = vmatpush1.bf16.msra.mxu0 0
        %4015 = vmatprep.subr.bf16.mxu0 0
        %4016 = vmatpush1.bf16.msra.mxu0 0
        %4017 = vmatprep.subr.bf16.mxu0 0
        %4018 = vmatpush1.bf16.msra.mxu0 0
        %4019 = vmatprep.subr.bf16.mxu0 0
        %4020 = vmatpush1.bf16.msra.mxu0 0
        %4021 = vmatprep.subr.bf16.mxu0 0
        %4022 = vmatpush1.bf16.msra.mxu0 0
        %4023 = vmatprep.mubr.bf16.mxu0 0
        %4024 = vmatmul.mubr.bf16.gmra.mrb[0].mxu0 %v3944
        %v4025 = vpop.f32.mrb[0].mxu0
        %v4026 = vadd.f32 0.0, %v4025
        %v4027 = vpop.f32.mrb[0].mxu0
        %v4028 = vpop.f32.mrb[0].mxu0
        %v4029 = vadd.f32 0.0, %v4028
        %v4030 = vpop.f32.mrb[0].mxu0
        %4031 = vmatprep.mubr.bf16.mxu0 0
        %4032 = vmatmul.mubr.bf16.gmra.mrb[0].mxu0 %v3947
        %v4033 = vpop.f32.mrb[0].mxu0
        %v4034 = vadd.f32 0.0, %v4033
        %v4035 = vpop.f32.mrb[0].mxu0
        %v4036 = vpop.f32.mrb[0].mxu0
        %v4037 = vadd.f32 0.0, %v4036
        %v4038 = vpop.f32.mrb[0].mxu0
        %4039 = vmatprep.mubr.bf16.mxu0 0
        %4040 = vmatmul.mubr.bf16.gmra.mrb[0].mxu0 %v3950
        %v4041 = vpop.f32.mrb[0].mxu0
        %v4042 = vadd.f32 0.0, %v4041
        %v4043 = vpop.f32.mrb[0].mxu0
        %v4044 = vpop.f32.mrb[0].mxu0
        %v4045 = vadd.f32 0.0, %v4044
        %v4046 = vpop.f32.mrb[0].mxu0
        %4047 = vmatprep.mubr.bf16.mxu0 0
        %4048 = vmatmul.mubr.bf16.gmra.mrb[0].mxu0 %v3953
        %v4049 = vpop.f32.mrb[0].mxu0
        %v4050 = vadd.f32 0.0, %v4049
        %v4051 = vpop.f32.mrb[0].mxu0
        %v4052 = vpop.f32.mrb[0].mxu0
        %v4053 = vadd.f32 0.0, %v4052
        %v4054 = vpop.f32.mrb[0].mxu0
        %4055 = vmatprep.mubr.bf16.mxu0 0
        %4056 = vmatmul.mubr.bf16.gmra.mrb[0].mxu0 %v3956
        %v4057 = vpop.f32.mrb[0].mxu0
        %v4058 = vadd.f32 0.0, %v4057
        %v4059 = vpop.f32.mrb[0].mxu0
        %v4060 = vpop.f32.mrb[0].mxu0
        %v4061 = vadd.f32 0.0, %v4060
        %v4062 = vpop.f32.mrb[0].mxu0
        %4063 = vmatprep.mubr.bf16.mxu0 0
        %4064 = vmatmul.mubr.bf16.gmra.mrb[0].mxu0 %v3959
        %v4065 = vpop.f32.mrb[0].mxu0
        %v4066 = vadd.f32 0.0, %v4065
        %v4067 = vpop.f32.mrb[0].mxu0
        %v4068 = vpop.f32.mrb[0].mxu0
        %v4069 = vadd.f32 0.0, %v4068
        %v4070 = vpop.f32.mrb[0].mxu0
        %4071 = vmatprep.mubr.bf16.mxu0 0
        %4072 = vmatmul.mubr.bf16.gmra.mrb[0].mxu0 %v3962
        %v4073 = vpop.f32.mrb[0].mxu0
        %v4074 = vadd.f32 0.0, %v4073
        %v4075 = vpop.f32.mrb[0].mxu0
        %v4076 = vpop.f32.mrb[0].mxu0
        %v4077 = vadd.f32 0.0, %v4076
        %v4078 = vpop.f32.mrb[0].mxu0
        %4079 = vmatprep.mubr.bf16.mxu0 0
        %4080 = vmatmul.mubr.bf16.gmra.mrb[0].mxu0 %v3965
        %v4081 = vpop.f32.mrb[0].mxu0
        %v4082 = vadd.f32 0.0, %v4081
        %v4083 = vpop.f32.mrb[0].mxu0
        %v4084 = vpop.f32.mrb[0].mxu0
        %v4085 = vadd.f32 0.0, %v4084
        %v4086 = vpop.f32.mrb[0].mxu0
        %4087 = vmatprep.mubr.bf16.mxu0 0
        %4088 = vmatmul.mubr.bf16.gmra.mrb[0].mxu0 %v3968
        %v4089 = vpop.f32.mrb[0].mxu0
        %v4090 = vadd.f32 0.0, %v4089
        %v4091 = vpop.f32.mrb[0].mxu0
        %v4092 = vpop.f32.mrb[0].mxu0
        %v4093 = vadd.f32 0.0, %v4092
        %v4094 = vpop.f32.mrb[0].mxu0
        %4095 = vmatprep.mubr.bf16.mxu0 0
        %4096 = vmatmul.mubr.bf16.gmra.mrb[0].mxu0 %v3971
        %v4097 = vpop.f32.mrb[0].mxu0
        %v4098 = vadd.f32 0.0, %v4097
        %v4099 = vpop.f32.mrb[0].mxu0
        %v4100 = vpop.f32.mrb[0].mxu0
        %v4101 = vadd.f32 0.0, %v4100
        %v4102 = vpop.f32.mrb[0].mxu0
        %4103 = vmatprep.mubr.bf16.mxu0 0
        %4104 = vmatmul.mubr.bf16.gmra.mrb[0].mxu0 %v3974
        %v4105 = vpop.f32.mrb[0].mxu0
        %v4106 = vadd.f32 0.0, %v4105
        %v4107 = vpop.f32.mrb[0].mxu0
        %v4108 = vpop.f32.mrb[0].mxu0
        %v4109 = vadd.f32 0.0, %v4108
        %v4110 = vpop.f32.mrb[0].mxu0
        %4111 = vmatprep.mubr.bf16.mxu0 0
        %4112 = vmatmul.mubr.bf16.gmra.mrb[0].mxu0 %v3977
        %v4113 = vpop.f32.mrb[0].mxu0
        %v4114 = vadd.f32 0.0, %v4113
        %v4115 = vpop.f32.mrb[0].mxu0
        %v4116 = vpop.f32.mrb[0].mxu0
        %v4117 = vadd.f32 0.0, %v4116
        %v4118 = vpop.f32.mrb[0].mxu0
        %4119 = vmatprep.mubr.bf16.mxu0 0
        %4120 = vmatmul.mubr.bf16.gmra.mrb[0].mxu0 %v3980
        %v4121 = vpop.f32.mrb[0].mxu0
        %v4122 = vadd.f32 0.0, %v4121
        %v4123 = vpop.f32.mrb[0].mxu0
        %v4124 = vpop.f32.mrb[0].mxu0
        %v4125 = vadd.f32 0.0, %v4124
        %v4126 = vpop.f32.mrb[0].mxu0
        %4127 = vmatprep.mubr.bf16.mxu0 0
        %4128 = vmatmul.mubr.bf16.gmra.mrb[0].mxu0 %v3983
        %v4129 = vpop.f32.mrb[0].mxu0
        %v4130 = vadd.f32 0.0, %v4129
        %v4131 = vpop.f32.mrb[0].mxu0
        %v4132 = vpop.f32.mrb[0].mxu0
        %v4133 = vadd.f32 0.0, %v4132
        %v4134 = vpop.f32.mrb[0].mxu0
        %4135 = vmatprep.mubr.bf16.mxu0 0
        %4136 = vmatmul.mubr.bf16.gmra.mrb[0].mxu0 %v3986
        %v4137 = vpop.f32.mrb[0].mxu0
        %v4138 = vadd.f32 0.0, %v4137
        %v4139 = vpop.f32.mrb[0].mxu0
        %v4140 = vpop.f32.mrb[0].mxu0
        %v4141 = vadd.f32 0.0, %v4140
        %v4142 = vpop.f32.mrb[0].mxu0
        %4143 = vmatprep.mubr.bf16.mxu0 0
        %4144 = vmatmul.mubr.bf16.gmra.mrb[0].mxu0 %v3989
        %v4145 = vpop.f32.mrb[0].mxu0
        %v4146 = vadd.f32 0.0, %v4145
        %v4147 = vpop.f32.mrb[0].mxu0
        %v4148 = vpop.f32.mrb[0].mxu0
        %v4149 = vadd.f32 0.0, %v4148
        %v4150 = vpop.f32.mrb[0].mxu0
        %4151 = vdwg.mxu0
        %v4152 = vadd.f32 %v3736, %v4026
        %v4153 = vadd.f32 %v3739, %v4029
        %v4154 = vadd.f32 %v3744, %v4034
        %v4155 = vadd.f32 %v3747, %v4037
        %v4156 = vadd.f32 %v3752, %v4042
        %v4157 = vadd.f32 %v3755, %v4045
        %v4158 = vadd.f32 %v3760, %v4050
        %v4159 = vadd.f32 %v3763, %v4053
        %v4160 = vadd.f32 %v3768, %v4058
        %v4161 = vadd.f32 %v3771, %v4061
        %v4162 = vadd.f32 %v3776, %v4066
        %v4163 = vadd.f32 %v3779, %v4069
        %v4164 = vadd.f32 %v3784, %v4074
        %v4165 = vadd.f32 %v3787, %v4077
        %v4166 = vadd.f32 %v3792, %v4082
        %v4167 = vadd.f32 %v3795, %v4085
        %v4168 = vadd.f32 %v3800, %v4090
        %v4169 = vadd.f32 %v3803, %v4093
        %v4170 = vadd.f32 %v3808, %v4098
        %v4171 = vadd.f32 %v3811, %v4101
        %v4172 = vadd.f32 %v3816, %v4106
        %v4173 = vadd.f32 %v3819, %v4109
        %v4174 = vadd.f32 %v3824, %v4114
        %v4175 = vadd.f32 %v3827, %v4117
        %v4176 = vadd.f32 %v3832, %v4122
        %v4177 = vadd.f32 %v3835, %v4125
        %v4178 = vadd.f32 %v3840, %v4130
        %v4179 = vadd.f32 %v3843, %v4133
        %v4180 = vadd.f32 %v3848, %v4138
        %v4181 = vadd.f32 %v3851, %v4141
        %v4182 = vadd.f32 %v3856, %v4146
        %v4183 = vadd.f32 %v3859, %v4149
        %v4184 = vld [vmem:[%s3250] sm:$0xff]
        %v4185 = vld [vmem:[%s3250 + $0x8] sm:$0xff]
        %v4186 = vld [vmem:[%s3250 + $0x18] sm:$0xff]
        %v4187 = vld [vmem:[%s3250 + $0x20] sm:$0xff]
        %v4188 = vld [vmem:[%s3250 + $0x30] sm:$0xff]
        %v4189 = vld [vmem:[%s3250 + $0x38] sm:$0xff]
        %v4190 = vld [vmem:[%s3250 + $0x48] sm:$0xff]
        %v4191 = vld [vmem:[%s3250 + $0x50] sm:$0xff]
        %v4192 = vld [vmem:[%s3250 + $0x60] sm:$0xff]
        %v4193 = vld [vmem:[%s3250 + $0x68] sm:$0xff]
        %v4194 = vld [vmem:[%s3250 + $0x78] sm:$0xff]
        %v4195 = vld [vmem:[%s3250 + $0x80] sm:$0xff]
        %v4196 = vld [vmem:[%s3250 + $0x90] sm:$0xff]
        %v4197 = vld [vmem:[%s3250 + $0x98] sm:$0xff]
        %v4198 = vld [vmem:[%s3250 + $0xa8] sm:$0xff]
        %v4199 = vld [vmem:[%s3250 + $0xb0] sm:$0xff]
        %v4200 = vld [vmem:[%s3250 + $0xc0] sm:$0xff]
        %v4201 = vld [vmem:[%s3250 + $0xc8] sm:$0xff]
        %v4202 = vld [vmem:[%s3250 + $0xd8] sm:$0xff]
        %v4203 = vld [vmem:[%s3250 + $0xe0] sm:$0xff]
        %v4204 = vld [vmem:[%s3250 + $0xf0] sm:$0xff]
        %v4205 = vld [vmem:[%s3250 + $0xf8] sm:$0xff]
        %v4206 = vld [vmem:[%s3250 + $0x108] sm:$0xff]
        %v4207 = vld [vmem:[%s3250 + $0x110] sm:$0xff]
        %v4208 = vld [vmem:[%s3250 + $0x120] sm:$0xff]
        %v4209 = vld [vmem:[%s3250 + $0x128] sm:$0xff]
        %v4210 = vld [vmem:[%s3250 + $0x138] sm:$0xff]
        %v4211 = vld [vmem:[%s3250 + $0x140] sm:$0xff]
        %v4212 = vld [vmem:[%s3250 + $0x150] sm:$0xff]
        %v4213 = vld [vmem:[%s3250 + $0x158] sm:$0xff]
        %v4214 = vld [vmem:[%s3250 + $0x168] sm:$0xff]
        %v4215 = vld [vmem:[%s3250 + $0x170] sm:$0xff]
        %s4216 = scalar_lea.vmem %s2, 96
        %v4217 = vld [vmem:[%s4216] sm:$0xf]
        %v4218 = vld [vmem:[%s4216 + $0x4] sm:$0xf]
        %v4219 = vld [vmem:[%s4216 + $0x8] sm:$0xf]
        %v4220 = vld [vmem:[%s4216 + $0xc] sm:$0xf]
        %v4221 = vld [vmem:[%s4216 + $0x10] sm:$0xf]
        %v4222 = vld [vmem:[%s4216 + $0x14] sm:$0xf]
        %v4223 = vld [vmem:[%s4216 + $0x18] sm:$0xf]
        %v4224 = vld [vmem:[%s4216 + $0x1c] sm:$0xf]
        %v4225 = vpack.c.bf16 %v4185, %v4184
        %v4226 = vpack.c.bf16 %v4187, %v4186
        %v4227 = vpack.c.bf16 %v4189, %v4188
        %v4228 = vpack.c.bf16 %v4191, %v4190
        %v4229 = vpack.c.bf16 %v4193, %v4192
        %v4230 = vpack.c.bf16 %v4195, %v4194
        %v4231 = vpack.c.bf16 %v4197, %v4196
        %v4232 = vpack.c.bf16 %v4199, %v4198
        %v4233 = vpack.c.bf16 %v4201, %v4200
        %v4234 = vpack.c.bf16 %v4203, %v4202
        %v4235 = vpack.c.bf16 %v4205, %v4204
        %v4236 = vpack.c.bf16 %v4207, %v4206
        %v4237 = vpack.c.bf16 %v4209, %v4208
        %v4238 = vpack.c.bf16 %v4211, %v4210
        %v4239 = vpack.c.bf16 %v4213, %v4212
        %v4240 = vpack.c.bf16 %v4215, %v4214
        %v4249 = vunpack.c.l.b16 %v4217
        %v4250 = vunpack.c.l.b16 %v4218
        %v4251 = vunpack.c.l.b16 %v4219
        %v4252 = vunpack.c.l.b16 %v4220
        %v4253 = vunpack.c.l.b16 %v4221
        %v4254 = vunpack.c.l.b16 %v4222
        %v4255 = vunpack.c.l.b16 %v4223
        %v4256 = vunpack.c.l.b16 %v4224
        %v4257 = vpack.c.b16 %v4250, %v4249
        %v4258 = vpack.c.b16 %v4252, %v4251
        %v4259 = vpack.c.b16 %v4254, %v4253
        %v4260 = vpack.c.b16 %v4256, %v4255
        %v4266 = vsel %vm2923, %v4225, 0
        %v4269 = vsel %vm2923, %v4226, 0
        %v4272 = vsel %vm2923, %v4227, 0
        %v4275 = vsel %vm2923, %v4228, 0
        %v4278 = vsel %vm2923, %v4229, 0
        %v4281 = vsel %vm2923, %v4230, 0
        %v4284 = vsel %vm2923, %v4231, 0
        %v4287 = vsel %vm2923, %v4232, 0
        %v4290 = vsel %vm2923, %v4233, 0
        %v4293 = vsel %vm2923, %v4234, 0
        %v4296 = vsel %vm2923, %v4235, 0
        %v4299 = vsel %vm2923, %v4236, 0
        %v4302 = vsel %vm2923, %v4237, 0
        %v4305 = vsel %vm2923, %v4238, 0
        %v4308 = vsel %vm2923, %v4239, 0
        %v4311 = vsel %vm2923, %v4240, 0
        %4313 = vmatprep.subr.bf16.mxu0 0
        %4314 = vmatpush1.bf16.msra.mxu0 %v4257
        %4315 = vmatprep.subr.bf16.mxu0 0
        %4316 = vmatpush1.bf16.msra.mxu0 %v4258
        %4317 = vmatprep.subr.bf16.mxu0 0
        %4318 = vmatpush1.bf16.msra.mxu0 %v4259
        %4319 = vmatprep.subr.bf16.mxu0 0
        %4320 = vmatpush1.bf16.msra.mxu0 %v4260
        %4321 = vmatprep.subr.bf16.mxu0 0
        %4322 = vmatpush1.bf16.msra.mxu0 0
        %4323 = vmatprep.subr.bf16.mxu0 0
        %4324 = vmatpush1.bf16.msra.mxu0 0
        %4325 = vmatprep.subr.bf16.mxu0 0
        %4326 = vmatpush1.bf16.msra.mxu0 0
        %4327 = vmatprep.subr.bf16.mxu0 0
        %4328 = vmatpush1.bf16.msra.mxu0 0
        %4329 = vmatprep.subr.bf16.mxu0 0
        %4330 = vmatpush1.bf16.msra.mxu0 0
        %4331 = vmatprep.subr.bf16.mxu0 0
        %4332 = vmatpush1.bf16.msra.mxu0 0
        %4333 = vmatprep.subr.bf16.mxu0 0
        %4334 = vmatpush1.bf16.msra.mxu0 0
        %4335 = vmatprep.subr.bf16.mxu0 0
        %4336 = vmatpush1.bf16.msra.mxu0 0
        %4337 = vmatprep.subr.bf16.mxu0 0
        %4338 = vmatpush1.bf16.msra.mxu0 0
        %4339 = vmatprep.subr.bf16.mxu0 0
        %4340 = vmatpush1.bf16.msra.mxu0 0
        %4341 = vmatprep.subr.bf16.mxu0 0
        %4342 = vmatpush1.bf16.msra.mxu0 0
        %4343 = vmatprep.subr.bf16.mxu0 0
        %4344 = vmatpush1.bf16.msra.mxu0 0
        %4345 = vmatprep.mubr.bf16.mxu0 0
        %4346 = vmatmul.mubr.bf16.gmra.mrb[0].mxu0 %v4266
        %v4347 = vpop.f32.mrb[0].mxu0
        %v4348 = vadd.f32 0.0, %v4347
        %v4349 = vpop.f32.mrb[0].mxu0
        %v4350 = vpop.f32.mrb[0].mxu0
        %v4351 = vadd.f32 0.0, %v4350
        %v4352 = vpop.f32.mrb[0].mxu0
        %4353 = vmatprep.mubr.bf16.mxu0 0
        %4354 = vmatmul.mubr.bf16.gmra.mrb[0].mxu0 %v4269
        %v4355 = vpop.f32.mrb[0].mxu0
        %v4356 = vadd.f32 0.0, %v4355
        %v4357 = vpop.f32.mrb[0].mxu0
        %v4358 = vpop.f32.mrb[0].mxu0
        %v4359 = vadd.f32 0.0, %v4358
        %v4360 = vpop.f32.mrb[0].mxu0
        %4361 = vmatprep.mubr.bf16.mxu0 0
        %4362 = vmatmul.mubr.bf16.gmra.mrb[0].mxu0 %v4272
        %v4363 = vpop.f32.mrb[0].mxu0
        %v4364 = vadd.f32 0.0, %v4363
        %v4365 = vpop.f32.mrb[0].mxu0
        %v4366 = vpop.f32.mrb[0].mxu0
        %v4367 = vadd.f32 0.0, %v4366
        %v4368 = vpop.f32.mrb[0].mxu0
        %4369 = vmatprep.mubr.bf16.mxu0 0
        %4370 = vmatmul.mubr.bf16.gmra.mrb[0].mxu0 %v4275
        %v4371 = vpop.f32.mrb[0].mxu0
        %v4372 = vadd.f32 0.0, %v4371
        %v4373 = vpop.f32.mrb[0].mxu0
        %v4374 = vpop.f32.mrb[0].mxu0
        %v4375 = vadd.f32 0.0, %v4374
        %v4376 = vpop.f32.mrb[0].mxu0
        %4377 = vmatprep.mubr.bf16.mxu0 0
        %4378 = vmatmul.mubr.bf16.gmra.mrb[0].mxu0 %v4278
        %v4379 = vpop.f32.mrb[0].mxu0
        %v4380 = vadd.f32 0.0, %v4379
        %v4381 = vpop.f32.mrb[0].mxu0
        %v4382 = vpop.f32.mrb[0].mxu0
        %v4383 = vadd.f32 0.0, %v4382
        %v4384 = vpop.f32.mrb[0].mxu0
        %4385 = vmatprep.mubr.bf16.mxu0 0
        %4386 = vmatmul.mubr.bf16.gmra.mrb[0].mxu0 %v4281
        %v4387 = vpop.f32.mrb[0].mxu0
        %v4388 = vadd.f32 0.0, %v4387
        %v4389 = vpop.f32.mrb[0].mxu0
        %v4390 = vpop.f32.mrb[0].mxu0
        %v4391 = vadd.f32 0.0, %v4390
        %v4392 = vpop.f32.mrb[0].mxu0
        %4393 = vmatprep.mubr.bf16.mxu0 0
        %4394 = vmatmul.mubr.bf16.gmra.mrb[0].mxu0 %v4284
        %v4395 = vpop.f32.mrb[0].mxu0
        %v4396 = vadd.f32 0.0, %v4395
        %v4397 = vpop.f32.mrb[0].mxu0
        %v4398 = vpop.f32.mrb[0].mxu0
        %v4399 = vadd.f32 0.0, %v4398
        %v4400 = vpop.f32.mrb[0].mxu0
        %4401 = vmatprep.mubr.bf16.mxu0 0
        %4402 = vmatmul.mubr.bf16.gmra.mrb[0].mxu0 %v4287
        %v4403 = vpop.f32.mrb[0].mxu0
        %v4404 = vadd.f32 0.0, %v4403
        %v4405 = vpop.f32.mrb[0].mxu0
        %v4406 = vpop.f32.mrb[0].mxu0
        %v4407 = vadd.f32 0.0, %v4406
        %v4408 = vpop.f32.mrb[0].mxu0
        %4409 = vmatprep.mubr.bf16.mxu0 0
        %4410 = vmatmul.mubr.bf16.gmra.mrb[0].mxu0 %v4290
        %v4411 = vpop.f32.mrb[0].mxu0
        %v4412 = vadd.f32 0.0, %v4411
        %v4413 = vpop.f32.mrb[0].mxu0
        %v4414 = vpop.f32.mrb[0].mxu0
        %v4415 = vadd.f32 0.0, %v4414
        %v4416 = vpop.f32.mrb[0].mxu0
        %4417 = vmatprep.mubr.bf16.mxu0 0
        %4418 = vmatmul.mubr.bf16.gmra.mrb[0].mxu0 %v4293
        %v4419 = vpop.f32.mrb[0].mxu0
        %v4420 = vadd.f32 0.0, %v4419
        %v4421 = vpop.f32.mrb[0].mxu0
        %v4422 = vpop.f32.mrb[0].mxu0
        %v4423 = vadd.f32 0.0, %v4422
        %v4424 = vpop.f32.mrb[0].mxu0
        %4425 = vmatprep.mubr.bf16.mxu0 0
        %4426 = vmatmul.mubr.bf16.gmra.mrb[0].mxu0 %v4296
        %v4427 = vpop.f32.mrb[0].mxu0
        %v4428 = vadd.f32 0.0, %v4427
        %v4429 = vpop.f32.mrb[0].mxu0
        %v4430 = vpop.f32.mrb[0].mxu0
        %v4431 = vadd.f32 0.0, %v4430
        %v4432 = vpop.f32.mrb[0].mxu0
        %4433 = vmatprep.mubr.bf16.mxu0 0
        %4434 = vmatmul.mubr.bf16.gmra.mrb[0].mxu0 %v4299
        %v4435 = vpop.f32.mrb[0].mxu0
        %v4436 = vadd.f32 0.0, %v4435
        %v4437 = vpop.f32.mrb[0].mxu0
        %v4438 = vpop.f32.mrb[0].mxu0
        %v4439 = vadd.f32 0.0, %v4438
        %v4440 = vpop.f32.mrb[0].mxu0
        %4441 = vmatprep.mubr.bf16.mxu0 0
        %4442 = vmatmul.mubr.bf16.gmra.mrb[0].mxu0 %v4302
        %v4443 = vpop.f32.mrb[0].mxu0
        %v4444 = vadd.f32 0.0, %v4443
        %v4445 = vpop.f32.mrb[0].mxu0
        %v4446 = vpop.f32.mrb[0].mxu0
        %v4447 = vadd.f32 0.0, %v4446
        %v4448 = vpop.f32.mrb[0].mxu0
        %4449 = vmatprep.mubr.bf16.mxu0 0
        %4450 = vmatmul.mubr.bf16.gmra.mrb[0].mxu0 %v4305
        %v4451 = vpop.f32.mrb[0].mxu0
        %v4452 = vadd.f32 0.0, %v4451
        %v4453 = vpop.f32.mrb[0].mxu0
        %v4454 = vpop.f32.mrb[0].mxu0
        %v4455 = vadd.f32 0.0, %v4454
        %v4456 = vpop.f32.mrb[0].mxu0
        %4457 = vmatprep.mubr.bf16.mxu0 0
        %4458 = vmatmul.mubr.bf16.gmra.mrb[0].mxu0 %v4308
        %v4459 = vpop.f32.mrb[0].mxu0
        %v4460 = vadd.f32 0.0, %v4459
        %v4461 = vpop.f32.mrb[0].mxu0
        %v4462 = vpop.f32.mrb[0].mxu0
        %v4463 = vadd.f32 0.0, %v4462
        %v4464 = vpop.f32.mrb[0].mxu0
        %4465 = vmatprep.mubr.bf16.mxu0 0
        %4466 = vmatmul.mubr.bf16.gmra.mrb[0].mxu0 %v4311
        %v4467 = vpop.f32.mrb[0].mxu0
        %v4468 = vadd.f32 0.0, %v4467
        %v4469 = vpop.f32.mrb[0].mxu0
        %v4470 = vpop.f32.mrb[0].mxu0
        %v4471 = vadd.f32 0.0, %v4470
        %v4472 = vpop.f32.mrb[0].mxu0
        %4473 = vdwg.mxu0
        %v4474 = vadd.f32 %v4152, %v4348
        %v4475 = vadd.f32 %v4153, %v4351
        %v4476 = vadd.f32 %v4154, %v4356
        %v4477 = vadd.f32 %v4155, %v4359
        %v4478 = vadd.f32 %v4156, %v4364
        %v4479 = vadd.f32 %v4157, %v4367
        %v4480 = vadd.f32 %v4158, %v4372
        %v4481 = vadd.f32 %v4159, %v4375
        %v4482 = vadd.f32 %v4160, %v4380
        %v4483 = vadd.f32 %v4161, %v4383
        %v4484 = vadd.f32 %v4162, %v4388
        %v4485 = vadd.f32 %v4163, %v4391
        %v4486 = vadd.f32 %v4164, %v4396
        %v4487 = vadd.f32 %v4165, %v4399
        %v4488 = vadd.f32 %v4166, %v4404
        %v4489 = vadd.f32 %v4167, %v4407
        %v4490 = vadd.f32 %v4168, %v4412
        %v4491 = vadd.f32 %v4169, %v4415
        %v4492 = vadd.f32 %v4170, %v4420
        %v4493 = vadd.f32 %v4171, %v4423
        %v4494 = vadd.f32 %v4172, %v4428
        %v4495 = vadd.f32 %v4173, %v4431
        %v4496 = vadd.f32 %v4174, %v4436
        %v4497 = vadd.f32 %v4175, %v4439
        %v4498 = vadd.f32 %v4176, %v4444
        %v4499 = vadd.f32 %v4177, %v4447
        %v4500 = vadd.f32 %v4178, %v4452
        %v4501 = vadd.f32 %v4179, %v4455
        %v4502 = vadd.f32 %v4180, %v4460
        %v4503 = vadd.f32 %v4181, %v4463
        %v4504 = vadd.f32 %v4182, %v4468
        %v4505 = vadd.f32 %v4183, %v4471
        %v4506 = vld [vmem:[%s3250 + $0x1] sm:$0xff]
        %v4507 = vld [vmem:[%s3250 + $0x9] sm:$0xff]
        %v4508 = vld [vmem:[%s3250 + $0x19] sm:$0xff]
        %v4509 = vld [vmem:[%s3250 + $0x21] sm:$0xff]
        %v4510 = vld [vmem:[%s3250 + $0x31] sm:$0xff]
        %v4511 = vld [vmem:[%s3250 + $0x39] sm:$0xff]
        %v4512 = vld [vmem:[%s3250 + $0x49] sm:$0xff]
        %v4513 = vld [vmem:[%s3250 + $0x51] sm:$0xff]
        %v4514 = vld [vmem:[%s3250 + $0x61] sm:$0xff]
        %v4515 = vld [vmem:[%s3250 + $0x69] sm:$0xff]
        %v4516 = vld [vmem:[%s3250 + $0x79] sm:$0xff]
        %v4517 = vld [vmem:[%s3250 + $0x81] sm:$0xff]
        %v4518 = vld [vmem:[%s3250 + $0x91] sm:$0xff]
        %v4519 = vld [vmem:[%s3250 + $0x99] sm:$0xff]
        %v4520 = vld [vmem:[%s3250 + $0xa9] sm:$0xff]
        %v4521 = vld [vmem:[%s3250 + $0xb1] sm:$0xff]
        %v4522 = vld [vmem:[%s3250 + $0xc1] sm:$0xff]
        %v4523 = vld [vmem:[%s3250 + $0xc9] sm:$0xff]
        %v4524 = vld [vmem:[%s3250 + $0xd9] sm:$0xff]
        %v4525 = vld [vmem:[%s3250 + $0xe1] sm:$0xff]
        %v4526 = vld [vmem:[%s3250 + $0xf1] sm:$0xff]
        %v4527 = vld [vmem:[%s3250 + $0xf9] sm:$0xff]
        %v4528 = vld [vmem:[%s3250 + $0x109] sm:$0xff]
        %v4529 = vld [vmem:[%s3250 + $0x111] sm:$0xff]
        %v4530 = vld [vmem:[%s3250 + $0x121] sm:$0xff]
        %v4531 = vld [vmem:[%s3250 + $0x129] sm:$0xff]
        %v4532 = vld [vmem:[%s3250 + $0x139] sm:$0xff]
        %v4533 = vld [vmem:[%s3250 + $0x141] sm:$0xff]
        %v4534 = vld [vmem:[%s3250 + $0x151] sm:$0xff]
        %v4535 = vld [vmem:[%s3250 + $0x159] sm:$0xff]
        %v4536 = vld [vmem:[%s3250 + $0x169] sm:$0xff]
        %v4537 = vld [vmem:[%s3250 + $0x171] sm:$0xff]
        %s4538 = scalar_lea.vmem %s2, 128
        %v4539 = vld [vmem:[%s4538] sm:$0xf]
        %v4540 = vld [vmem:[%s4538 + $0x4] sm:$0xf]
        %v4541 = vld [vmem:[%s4538 + $0x8] sm:$0xf]
        %v4542 = vld [vmem:[%s4538 + $0xc] sm:$0xf]
        %v4543 = vld [vmem:[%s4538 + $0x10] sm:$0xf]
        %v4544 = vld [vmem:[%s4538 + $0x14] sm:$0xf]
        %v4545 = vld [vmem:[%s4538 + $0x18] sm:$0xf]
        %v4546 = vld [vmem:[%s4538 + $0x1c] sm:$0xf]
        %v4547 = vpack.c.bf16 %v4507, %v4506
        %v4548 = vpack.c.bf16 %v4509, %v4508
        %v4549 = vpack.c.bf16 %v4511, %v4510
        %v4550 = vpack.c.bf16 %v4513, %v4512
        %v4551 = vpack.c.bf16 %v4515, %v4514
        %v4552 = vpack.c.bf16 %v4517, %v4516
        %v4553 = vpack.c.bf16 %v4519, %v4518
        %v4554 = vpack.c.bf16 %v4521, %v4520
        %v4555 = vpack.c.bf16 %v4523, %v4522
        %v4556 = vpack.c.bf16 %v4525, %v4524
        %v4557 = vpack.c.bf16 %v4527, %v4526
        %v4558 = vpack.c.bf16 %v4529, %v4528
        %v4559 = vpack.c.bf16 %v4531, %v4530
        %v4560 = vpack.c.bf16 %v4533, %v4532
        %v4561 = vpack.c.bf16 %v4535, %v4534
        %v4562 = vpack.c.bf16 %v4537, %v4536
        %v4571 = vunpack.c.l.b16 %v4539
        %v4572 = vunpack.c.l.b16 %v4540
        %v4573 = vunpack.c.l.b16 %v4541
        %v4574 = vunpack.c.l.b16 %v4542
        %v4575 = vunpack.c.l.b16 %v4543
        %v4576 = vunpack.c.l.b16 %v4544
        %v4577 = vunpack.c.l.b16 %v4545
        %v4578 = vunpack.c.l.b16 %v4546
        %v4579 = vpack.c.b16 %v4572, %v4571
        %v4580 = vpack.c.b16 %v4574, %v4573
        %v4581 = vpack.c.b16 %v4576, %v4575
        %v4582 = vpack.c.b16 %v4578, %v4577
        %v4588 = vsel %vm2923, %v4547, 0
        %v4591 = vsel %vm2923, %v4548, 0
        %v4594 = vsel %vm2923, %v4549, 0
        %v4597 = vsel %vm2923, %v4550, 0
        %v4600 = vsel %vm2923, %v4551, 0
        %v4603 = vsel %vm2923, %v4552, 0
        %v4606 = vsel %vm2923, %v4553, 0
        %v4609 = vsel %vm2923, %v4554, 0
        %v4612 = vsel %vm2923, %v4555, 0
        %v4615 = vsel %vm2923, %v4556, 0
        %v4618 = vsel %vm2923, %v4557, 0
        %v4621 = vsel %vm2923, %v4558, 0
        %v4624 = vsel %vm2923, %v4559, 0
        %v4627 = vsel %vm2923, %v4560, 0
        %v4630 = vsel %vm2923, %v4561, 0
        %v4633 = vsel %vm2923, %v4562, 0
        %4635 = vmatprep.subr.bf16.mxu0 0
        %4636 = vmatpush1.bf16.msra.mxu0 %v4579
        %4637 = vmatprep.subr.bf16.mxu0 0
        %4638 = vmatpush1.bf16.msra.mxu0 %v4580
        %4639 = vmatprep.subr.bf16.mxu0 0
        %4640 = vmatpush1.bf16.msra.mxu0 %v4581
        %4641 = vmatprep.subr.bf16.mxu0 0
        %4642 = vmatpush1.bf16.msra.mxu0 %v4582
        %4643 = vmatprep.subr.bf16.mxu0 0
        %4644 = vmatpush1.bf16.msra.mxu0 0
        %4645 = vmatprep.subr.bf16.mxu0 0
        %4646 = vmatpush1.bf16.msra.mxu0 0
        %4647 = vmatprep.subr.bf16.mxu0 0
        %4648 = vmatpush1.bf16.msra.mxu0 0
        %4649 = vmatprep.subr.bf16.mxu0 0
        %4650 = vmatpush1.bf16.msra.mxu0 0
        %4651 = vmatprep.subr.bf16.mxu0 0
        %4652 = vmatpush1.bf16.msra.mxu0 0
        %4653 = vmatprep.subr.bf16.mxu0 0
        %4654 = vmatpush1.bf16.msra.mxu0 0
        %4655 = vmatprep.subr.bf16.mxu0 0
        %4656 = vmatpush1.bf16.msra.mxu0 0
        %4657 = vmatprep.subr.bf16.mxu0 0
        %4658 = vmatpush1.bf16.msra.mxu0 0
        %4659 = vmatprep.subr.bf16.mxu0 0
        %4660 = vmatpush1.bf16.msra.mxu0 0
        %4661 = vmatprep.subr.bf16.mxu0 0
        %4662 = vmatpush1.bf16.msra.mxu0 0
        %4663 = vmatprep.subr.bf16.mxu0 0
        %4664 = vmatpush1.bf16.msra.mxu0 0
        %4665 = vmatprep.subr.bf16.mxu0 0
        %4666 = vmatpush1.bf16.msra.mxu0 0
        %4667 = vmatprep.mubr.bf16.mxu0 0
        %4668 = vmatmul.mubr.bf16.gmra.mrb[0].mxu0 %v4588
        %v4669 = vpop.f32.mrb[0].mxu0
        %v4670 = vadd.f32 0.0, %v4669
        %v4671 = vpop.f32.mrb[0].mxu0
        %v4672 = vpop.f32.mrb[0].mxu0
        %v4673 = vadd.f32 0.0, %v4672
        %v4674 = vpop.f32.mrb[0].mxu0
        %4675 = vmatprep.mubr.bf16.mxu0 0
        %4676 = vmatmul.mubr.bf16.gmra.mrb[0].mxu0 %v4591
        %v4677 = vpop.f32.mrb[0].mxu0
        %v4678 = vadd.f32 0.0, %v4677
        %v4679 = vpop.f32.mrb[0].mxu0
        %v4680 = vpop.f32.mrb[0].mxu0
        %v4681 = vadd.f32 0.0, %v4680
        %v4682 = vpop.f32.mrb[0].mxu0
        %4683 = vmatprep.mubr.bf16.mxu0 0
        %4684 = vmatmul.mubr.bf16.gmra.mrb[0].mxu0 %v4594
        %v4685 = vpop.f32.mrb[0].mxu0
        %v4686 = vadd.f32 0.0, %v4685
        %v4687 = vpop.f32.mrb[0].mxu0
        %v4688 = vpop.f32.mrb[0].mxu0
        %v4689 = vadd.f32 0.0, %v4688
        %v4690 = vpop.f32.mrb[0].mxu0
        %4691 = vmatprep.mubr.bf16.mxu0 0
        %4692 = vmatmul.mubr.bf16.gmra.mrb[0].mxu0 %v4597
        %v4693 = vpop.f32.mrb[0].mxu0
        %v4694 = vadd.f32 0.0, %v4693
        %v4695 = vpop.f32.mrb[0].mxu0
        %v4696 = vpop.f32.mrb[0].mxu0
        %v4697 = vadd.f32 0.0, %v4696
        %v4698 = vpop.f32.mrb[0].mxu0
        %4699 = vmatprep.mubr.bf16.mxu0 0
        %4700 = vmatmul.mubr.bf16.gmra.mrb[0].mxu0 %v4600
        %v4701 = vpop.f32.mrb[0].mxu0
        %v4702 = vadd.f32 0.0, %v4701
        %v4703 = vpop.f32.mrb[0].mxu0
        %v4704 = vpop.f32.mrb[0].mxu0
        %v4705 = vadd.f32 0.0, %v4704
        %v4706 = vpop.f32.mrb[0].mxu0
        %4707 = vmatprep.mubr.bf16.mxu0 0
        %4708 = vmatmul.mubr.bf16.gmra.mrb[0].mxu0 %v4603
        %v4709 = vpop.f32.mrb[0].mxu0
        %v4710 = vadd.f32 0.0, %v4709
        %v4711 = vpop.f32.mrb[0].mxu0
        %v4712 = vpop.f32.mrb[0].mxu0
        %v4713 = vadd.f32 0.0, %v4712
        %v4714 = vpop.f32.mrb[0].mxu0
        %4715 = vmatprep.mubr.bf16.mxu0 0
        %4716 = vmatmul.mubr.bf16.gmra.mrb[0].mxu0 %v4606
        %v4717 = vpop.f32.mrb[0].mxu0
        %v4718 = vadd.f32 0.0, %v4717
        %v4719 = vpop.f32.mrb[0].mxu0
        %v4720 = vpop.f32.mrb[0].mxu0
        %v4721 = vadd.f32 0.0, %v4720
        %v4722 = vpop.f32.mrb[0].mxu0
        %4723 = vmatprep.mubr.bf16.mxu0 0
        %4724 = vmatmul.mubr.bf16.gmra.mrb[0].mxu0 %v4609
        %v4725 = vpop.f32.mrb[0].mxu0
        %v4726 = vadd.f32 0.0, %v4725
        %v4727 = vpop.f32.mrb[0].mxu0
        %v4728 = vpop.f32.mrb[0].mxu0
        %v4729 = vadd.f32 0.0, %v4728
        %v4730 = vpop.f32.mrb[0].mxu0
        %4731 = vmatprep.mubr.bf16.mxu0 0
        %4732 = vmatmul.mubr.bf16.gmra.mrb[0].mxu0 %v4612
        %v4733 = vpop.f32.mrb[0].mxu0
        %v4734 = vadd.f32 0.0, %v4733
        %v4735 = vpop.f32.mrb[0].mxu0
        %v4736 = vpop.f32.mrb[0].mxu0
        %v4737 = vadd.f32 0.0, %v4736
        %v4738 = vpop.f32.mrb[0].mxu0
        %4739 = vmatprep.mubr.bf16.mxu0 0
        %4740 = vmatmul.mubr.bf16.gmra.mrb[0].mxu0 %v4615
        %v4741 = vpop.f32.mrb[0].mxu0
        %v4742 = vadd.f32 0.0, %v4741
        %v4743 = vpop.f32.mrb[0].mxu0
        %v4744 = vpop.f32.mrb[0].mxu0
        %v4745 = vadd.f32 0.0, %v4744
        %v4746 = vpop.f32.mrb[0].mxu0
        %4747 = vmatprep.mubr.bf16.mxu0 0
        %4748 = vmatmul.mubr.bf16.gmra.mrb[0].mxu0 %v4618
        %v4749 = vpop.f32.mrb[0].mxu0
        %v4750 = vadd.f32 0.0, %v4749
        %v4751 = vpop.f32.mrb[0].mxu0
        %v4752 = vpop.f32.mrb[0].mxu0
        %v4753 = vadd.f32 0.0, %v4752
        %v4754 = vpop.f32.mrb[0].mxu0
        %4755 = vmatprep.mubr.bf16.mxu0 0
        %4756 = vmatmul.mubr.bf16.gmra.mrb[0].mxu0 %v4621
        %v4757 = vpop.f32.mrb[0].mxu0
        %v4758 = vadd.f32 0.0, %v4757
        %v4759 = vpop.f32.mrb[0].mxu0
        %v4760 = vpop.f32.mrb[0].mxu0
        %v4761 = vadd.f32 0.0, %v4760
        %v4762 = vpop.f32.mrb[0].mxu0
        %4763 = vmatprep.mubr.bf16.mxu0 0
        %4764 = vmatmul.mubr.bf16.gmra.mrb[0].mxu0 %v4624
        %v4765 = vpop.f32.mrb[0].mxu0
        %v4766 = vadd.f32 0.0, %v4765
        %v4767 = vpop.f32.mrb[0].mxu0
        %v4768 = vpop.f32.mrb[0].mxu0
        %v4769 = vadd.f32 0.0, %v4768
        %v4770 = vpop.f32.mrb[0].mxu0
        %4771 = vmatprep.mubr.bf16.mxu0 0
        %4772 = vmatmul.mubr.bf16.gmra.mrb[0].mxu0 %v4627
        %v4773 = vpop.f32.mrb[0].mxu0
        %v4774 = vadd.f32 0.0, %v4773
        %v4775 = vpop.f32.mrb[0].mxu0
        %v4776 = vpop.f32.mrb[0].mxu0
        %v4777 = vadd.f32 0.0, %v4776
        %v4778 = vpop.f32.mrb[0].mxu0
        %4779 = vmatprep.mubr.bf16.mxu0 0
        %4780 = vmatmul.mubr.bf16.gmra.mrb[0].mxu0 %v4630
        %v4781 = vpop.f32.mrb[0].mxu0
        %v4782 = vadd.f32 0.0, %v4781
        %v4783 = vpop.f32.mrb[0].mxu0
        %v4784 = vpop.f32.mrb[0].mxu0
        %v4785 = vadd.f32 0.0, %v4784
        %v4786 = vpop.f32.mrb[0].mxu0
        %4787 = vmatprep.mubr.bf16.mxu0 0
        %4788 = vmatmul.mubr.bf16.gmra.mrb[0].mxu0 %v4633
        %v4789 = vpop.f32.mrb[0].mxu0
        %v4790 = vadd.f32 0.0, %v4789
        %v4791 = vpop.f32.mrb[0].mxu0
        %v4792 = vpop.f32.mrb[0].mxu0
        %v4793 = vadd.f32 0.0, %v4792
        %v4794 = vpop.f32.mrb[0].mxu0
        %4795 = vdwg.mxu0
        %v4796 = vadd.f32 %v4474, %v4670
        %v4797 = vadd.f32 %v4475, %v4673
        %v4798 = vadd.f32 %v4476, %v4678
        %v4799 = vadd.f32 %v4477, %v4681
        %v4800 = vadd.f32 %v4478, %v4686
        %v4801 = vadd.f32 %v4479, %v4689
        %v4802 = vadd.f32 %v4480, %v4694
        %v4803 = vadd.f32 %v4481, %v4697
        %v4804 = vadd.f32 %v4482, %v4702
        %v4805 = vadd.f32 %v4483, %v4705
        %v4806 = vadd.f32 %v4484, %v4710
        %v4807 = vadd.f32 %v4485, %v4713
        %v4808 = vadd.f32 %v4486, %v4718
        %v4809 = vadd.f32 %v4487, %v4721
        %v4810 = vadd.f32 %v4488, %v4726
        %v4811 = vadd.f32 %v4489, %v4729
        %v4812 = vadd.f32 %v4490, %v4734
        %v4813 = vadd.f32 %v4491, %v4737
        %v4814 = vadd.f32 %v4492, %v4742
        %v4815 = vadd.f32 %v4493, %v4745
        %v4816 = vadd.f32 %v4494, %v4750
        %v4817 = vadd.f32 %v4495, %v4753
        %v4818 = vadd.f32 %v4496, %v4758
        %v4819 = vadd.f32 %v4497, %v4761
        %v4820 = vadd.f32 %v4498, %v4766
        %v4821 = vadd.f32 %v4499, %v4769
        %v4822 = vadd.f32 %v4500, %v4774
        %v4823 = vadd.f32 %v4501, %v4777
        %v4824 = vadd.f32 %v4502, %v4782
        %v4825 = vadd.f32 %v4503, %v4785
        %v4826 = vadd.f32 %v4504, %v4790
        %v4827 = vadd.f32 %v4505, %v4793
        %v4828 = vld [vmem:[%s3250 + $0x2] sm:$0xff]
        %v4829 = vld [vmem:[%s3250 + $0xa] sm:$0xff]
        %v4830 = vld [vmem:[%s3250 + $0x1a] sm:$0xff]
        %v4831 = vld [vmem:[%s3250 + $0x22] sm:$0xff]
        %v4832 = vld [vmem:[%s3250 + $0x32] sm:$0xff]
        %v4833 = vld [vmem:[%s3250 + $0x3a] sm:$0xff]
        %v4834 = vld [vmem:[%s3250 + $0x4a] sm:$0xff]
        %v4835 = vld [vmem:[%s3250 + $0x52] sm:$0xff]
        %v4836 = vld [vmem:[%s3250 + $0x62] sm:$0xff]
        %v4837 = vld [vmem:[%s3250 + $0x6a] sm:$0xff]
        %v4838 = vld [vmem:[%s3250 + $0x7a] sm:$0xff]
        %v4839 = vld [vmem:[%s3250 + $0x82] sm:$0xff]
        %v4840 = vld [vmem:[%s3250 + $0x92] sm:$0xff]
        %v4841 = vld [vmem:[%s3250 + $0x9a] sm:$0xff]
        %v4842 = vld [vmem:[%s3250 + $0xaa] sm:$0xff]
        %v4843 = vld [vmem:[%s3250 + $0xb2] sm:$0xff]
        %v4844 = vld [vmem:[%s3250 + $0xc2] sm:$0xff]
        %v4845 = vld [vmem:[%s3250 + $0xca] sm:$0xff]
        %v4846 = vld [vmem:[%s3250 + $0xda] sm:$0xff]
        %v4847 = vld [vmem:[%s3250 + $0xe2] sm:$0xff]
        %v4848 = vld [vmem:[%s3250 + $0xf2] sm:$0xff]
        %v4849 = vld [vmem:[%s3250 + $0xfa] sm:$0xff]
        %v4850 = vld [vmem:[%s3250 + $0x10a] sm:$0xff]
        %v4851 = vld [vmem:[%s3250 + $0x112] sm:$0xff]
        %v4852 = vld [vmem:[%s3250 + $0x122] sm:$0xff]
        %v4853 = vld [vmem:[%s3250 + $0x12a] sm:$0xff]
        %v4854 = vld [vmem:[%s3250 + $0x13a] sm:$0xff]
        %v4855 = vld [vmem:[%s3250 + $0x142] sm:$0xff]
        %v4856 = vld [vmem:[%s3250 + $0x152] sm:$0xff]
        %v4857 = vld [vmem:[%s3250 + $0x15a] sm:$0xff]
        %v4858 = vld [vmem:[%s3250 + $0x16a] sm:$0xff]
        %v4859 = vld [vmem:[%s3250 + $0x172] sm:$0xff]
        %s4860 = scalar_lea.vmem %s2, 160
        %v4861 = vld [vmem:[%s4860] sm:$0xf]
        %v4862 = vld [vmem:[%s4860 + $0x4] sm:$0xf]
        %v4863 = vld [vmem:[%s4860 + $0x8] sm:$0xf]
        %v4864 = vld [vmem:[%s4860 + $0xc] sm:$0xf]
        %v4865 = vld [vmem:[%s4860 + $0x10] sm:$0xf]
        %v4866 = vld [vmem:[%s4860 + $0x14] sm:$0xf]
        %v4867 = vld [vmem:[%s4860 + $0x18] sm:$0xf]
        %v4868 = vld [vmem:[%s4860 + $0x1c] sm:$0xf]
        %v4869 = vpack.c.bf16 %v4829, %v4828
        %v4870 = vpack.c.bf16 %v4831, %v4830
        %v4871 = vpack.c.bf16 %v4833, %v4832
        %v4872 = vpack.c.bf16 %v4835, %v4834
        %v4873 = vpack.c.bf16 %v4837, %v4836
        %v4874 = vpack.c.bf16 %v4839, %v4838
        %v4875 = vpack.c.bf16 %v4841, %v4840
        %v4876 = vpack.c.bf16 %v4843, %v4842
        %v4877 = vpack.c.bf16 %v4845, %v4844
        %v4878 = vpack.c.bf16 %v4847, %v4846
        %v4879 = vpack.c.bf16 %v4849, %v4848
        %v4880 = vpack.c.bf16 %v4851, %v4850
        %v4881 = vpack.c.bf16 %v4853, %v4852
        %v4882 = vpack.c.bf16 %v4855, %v4854
        %v4883 = vpack.c.bf16 %v4857, %v4856
        %v4884 = vpack.c.bf16 %v4859, %v4858
        %v4893 = vunpack.c.l.b16 %v4861
        %v4894 = vunpack.c.l.b16 %v4862
        %v4895 = vunpack.c.l.b16 %v4863
        %v4896 = vunpack.c.l.b16 %v4864
        %v4897 = vunpack.c.l.b16 %v4865
        %v4898 = vunpack.c.l.b16 %v4866
        %v4899 = vunpack.c.l.b16 %v4867
        %v4900 = vunpack.c.l.b16 %v4868
        %v4901 = vpack.c.b16 %v4894, %v4893
        %v4902 = vpack.c.b16 %v4896, %v4895
        %v4903 = vpack.c.b16 %v4898, %v4897
        %v4904 = vpack.c.b16 %v4900, %v4899
        %v4910 = vsel %vm2923, %v4869, 0
        %v4913 = vsel %vm2923, %v4870, 0
        %v4916 = vsel %vm2923, %v4871, 0
        %v4919 = vsel %vm2923, %v4872, 0
        %v4922 = vsel %vm2923, %v4873, 0
        %v4925 = vsel %vm2923, %v4874, 0
        %v4928 = vsel %vm2923, %v4875, 0
        %v4931 = vsel %vm2923, %v4876, 0
        %v4934 = vsel %vm2923, %v4877, 0
        %v4937 = vsel %vm2923, %v4878, 0
        %v4940 = vsel %vm2923, %v4879, 0
        %v4943 = vsel %vm2923, %v4880, 0
        %v4946 = vsel %vm2923, %v4881, 0
        %v4949 = vsel %vm2923, %v4882, 0
        %v4952 = vsel %vm2923, %v4883, 0
        %v4955 = vsel %vm2923, %v4884, 0
        %4957 = vmatprep.subr.bf16.mxu0 0
        %4958 = vmatpush1.bf16.msra.mxu0 %v4901
        %4959 = vmatprep.subr.bf16.mxu0 0
        %4960 = vmatpush1.bf16.msra.mxu0 %v4902
        %4961 = vmatprep.subr.bf16.mxu0 0
        %4962 = vmatpush1.bf16.msra.mxu0 %v4903
        %4963 = vmatprep.subr.bf16.mxu0 0
        %4964 = vmatpush1.bf16.msra.mxu0 %v4904
        %4965 = vmatprep.subr.bf16.mxu0 0
        %4966 = vmatpush1.bf16.msra.mxu0 0
        %4967 = vmatprep.subr.bf16.mxu0 0
        %4968 = vmatpush1.bf16.msra.mxu0 0
        %4969 = vmatprep.subr.bf16.mxu0 0
        %4970 = vmatpush1.bf16.msra.mxu0 0
        %4971 = vmatprep.subr.bf16.mxu0 0
        %4972 = vmatpush1.bf16.msra.mxu0 0
        %4973 = vmatprep.subr.bf16.mxu0 0
        %4974 = vmatpush1.bf16.msra.mxu0 0
        %4975 = vmatprep.subr.bf16.mxu0 0
        %4976 = vmatpush1.bf16.msra.mxu0 0
        %4977 = vmatprep.subr.bf16.mxu0 0
        %4978 = vmatpush1.bf16.msra.mxu0 0
        %4979 = vmatprep.subr.bf16.mxu0 0
        %4980 = vmatpush1.bf16.msra.mxu0 0
        %4981 = vmatprep.subr.bf16.mxu0 0
        %4982 = vmatpush1.bf16.msra.mxu0 0
        %4983 = vmatprep.subr.bf16.mxu0 0
        %4984 = vmatpush1.bf16.msra.mxu0 0
        %4985 = vmatprep.subr.bf16.mxu0 0
        %4986 = vmatpush1.bf16.msra.mxu0 0
        %4987 = vmatprep.subr.bf16.mxu0 0
        %4988 = vmatpush1.bf16.msra.mxu0 0
        %4989 = vmatprep.mubr.bf16.mxu0 0
        %4990 = vmatmul.mubr.bf16.gmra.mrb[0].mxu0 %v4910
        %v4991 = vpop.f32.mrb[0].mxu0
        %v4992 = vadd.f32 0.0, %v4991
        %v4993 = vpop.f32.mrb[0].mxu0
        %v4994 = vpop.f32.mrb[0].mxu0
        %v4995 = vadd.f32 0.0, %v4994
        %v4996 = vpop.f32.mrb[0].mxu0
        %4997 = vmatprep.mubr.bf16.mxu0 0
        %4998 = vmatmul.mubr.bf16.gmra.mrb[0].mxu0 %v4913
        %v4999 = vpop.f32.mrb[0].mxu0
        %v5000 = vadd.f32 0.0, %v4999
        %v5001 = vpop.f32.mrb[0].mxu0
        %v5002 = vpop.f32.mrb[0].mxu0
        %v5003 = vadd.f32 0.0, %v5002
        %v5004 = vpop.f32.mrb[0].mxu0
        %5005 = vmatprep.mubr.bf16.mxu0 0
        %5006 = vmatmul.mubr.bf16.gmra.mrb[0].mxu0 %v4916
        %v5007 = vpop.f32.mrb[0].mxu0
        %v5008 = vadd.f32 0.0, %v5007
        %v5009 = vpop.f32.mrb[0].mxu0
        %v5010 = vpop.f32.mrb[0].mxu0
        %v5011 = vadd.f32 0.0, %v5010
        %v5012 = vpop.f32.mrb[0].mxu0
        %5013 = vmatprep.mubr.bf16.mxu0 0
        %5014 = vmatmul.mubr.bf16.gmra.mrb[0].mxu0 %v4919
        %v5015 = vpop.f32.mrb[0].mxu0
        %v5016 = vadd.f32 0.0, %v5015
        %v5017 = vpop.f32.mrb[0].mxu0
        %v5018 = vpop.f32.mrb[0].mxu0
        %v5019 = vadd.f32 0.0, %v5018
        %v5020 = vpop.f32.mrb[0].mxu0
        %5021 = vmatprep.mubr.bf16.mxu0 0
        %5022 = vmatmul.mubr.bf16.gmra.mrb[0].mxu0 %v4922
        %v5023 = vpop.f32.mrb[0].mxu0
        %v5024 = vadd.f32 0.0, %v5023
        %v5025 = vpop.f32.mrb[0].mxu0
        %v5026 = vpop.f32.mrb[0].mxu0
        %v5027 = vadd.f32 0.0, %v5026
        %v5028 = vpop.f32.mrb[0].mxu0
        %5029 = vmatprep.mubr.bf16.mxu0 0
        %5030 = vmatmul.mubr.bf16.gmra.mrb[0].mxu0 %v4925
        %v5031 = vpop.f32.mrb[0].mxu0
        %v5032 = vadd.f32 0.0, %v5031
        %v5033 = vpop.f32.mrb[0].mxu0
        %v5034 = vpop.f32.mrb[0].mxu0
        %v5035 = vadd.f32 0.0, %v5034
        %v5036 = vpop.f32.mrb[0].mxu0
        %5037 = vmatprep.mubr.bf16.mxu0 0
        %5038 = vmatmul.mubr.bf16.gmra.mrb[0].mxu0 %v4928
        %v5039 = vpop.f32.mrb[0].mxu0
        %v5040 = vadd.f32 0.0, %v5039
        %v5041 = vpop.f32.mrb[0].mxu0
        %v5042 = vpop.f32.mrb[0].mxu0
        %v5043 = vadd.f32 0.0, %v5042
        %v5044 = vpop.f32.mrb[0].mxu0
        %5045 = vmatprep.mubr.bf16.mxu0 0
        %5046 = vmatmul.mubr.bf16.gmra.mrb[0].mxu0 %v4931
        %v5047 = vpop.f32.mrb[0].mxu0
        %v5048 = vadd.f32 0.0, %v5047
        %v5049 = vpop.f32.mrb[0].mxu0
        %v5050 = vpop.f32.mrb[0].mxu0
        %v5051 = vadd.f32 0.0, %v5050
        %v5052 = vpop.f32.mrb[0].mxu0
        %5053 = vmatprep.mubr.bf16.mxu0 0
        %5054 = vmatmul.mubr.bf16.gmra.mrb[0].mxu0 %v4934
        %v5055 = vpop.f32.mrb[0].mxu0
        %v5056 = vadd.f32 0.0, %v5055
        %v5057 = vpop.f32.mrb[0].mxu0
        %v5058 = vpop.f32.mrb[0].mxu0
        %v5059 = vadd.f32 0.0, %v5058
        %v5060 = vpop.f32.mrb[0].mxu0
        %5061 = vmatprep.mubr.bf16.mxu0 0
        %5062 = vmatmul.mubr.bf16.gmra.mrb[0].mxu0 %v4937
        %v5063 = vpop.f32.mrb[0].mxu0
        %v5064 = vadd.f32 0.0, %v5063
        %v5065 = vpop.f32.mrb[0].mxu0
        %v5066 = vpop.f32.mrb[0].mxu0
        %v5067 = vadd.f32 0.0, %v5066
        %v5068 = vpop.f32.mrb[0].mxu0
        %5069 = vmatprep.mubr.bf16.mxu0 0
        %5070 = vmatmul.mubr.bf16.gmra.mrb[0].mxu0 %v4940
        %v5071 = vpop.f32.mrb[0].mxu0
        %v5072 = vadd.f32 0.0, %v5071
        %v5073 = vpop.f32.mrb[0].mxu0
        %v5074 = vpop.f32.mrb[0].mxu0
        %v5075 = vadd.f32 0.0, %v5074
        %v5076 = vpop.f32.mrb[0].mxu0
        %5077 = vmatprep.mubr.bf16.mxu0 0
        %5078 = vmatmul.mubr.bf16.gmra.mrb[0].mxu0 %v4943
        %v5079 = vpop.f32.mrb[0].mxu0
        %v5080 = vadd.f32 0.0, %v5079
        %v5081 = vpop.f32.mrb[0].mxu0
        %v5082 = vpop.f32.mrb[0].mxu0
        %v5083 = vadd.f32 0.0, %v5082
        %v5084 = vpop.f32.mrb[0].mxu0
        %5085 = vmatprep.mubr.bf16.mxu0 0
        %5086 = vmatmul.mubr.bf16.gmra.mrb[0].mxu0 %v4946
        %v5087 = vpop.f32.mrb[0].mxu0
        %v5088 = vadd.f32 0.0, %v5087
        %v5089 = vpop.f32.mrb[0].mxu0
        %v5090 = vpop.f32.mrb[0].mxu0
        %v5091 = vadd.f32 0.0, %v5090
        %v5092 = vpop.f32.mrb[0].mxu0
        %5093 = vmatprep.mubr.bf16.mxu0 0
        %5094 = vmatmul.mubr.bf16.gmra.mrb[0].mxu0 %v4949
        %v5095 = vpop.f32.mrb[0].mxu0
        %v5096 = vadd.f32 0.0, %v5095
        %v5097 = vpop.f32.mrb[0].mxu0
        %v5098 = vpop.f32.mrb[0].mxu0
        %v5099 = vadd.f32 0.0, %v5098
        %v5100 = vpop.f32.mrb[0].mxu0
        %5101 = vmatprep.mubr.bf16.mxu0 0
        %5102 = vmatmul.mubr.bf16.gmra.mrb[0].mxu0 %v4952
        %v5103 = vpop.f32.mrb[0].mxu0
        %v5104 = vadd.f32 0.0, %v5103
        %v5105 = vpop.f32.mrb[0].mxu0
        %v5106 = vpop.f32.mrb[0].mxu0
        %v5107 = vadd.f32 0.0, %v5106
        %v5108 = vpop.f32.mrb[0].mxu0
        %5109 = vmatprep.mubr.bf16.mxu0 0
        %5110 = vmatmul.mubr.bf16.gmra.mrb[0].mxu0 %v4955
        %v5111 = vpop.f32.mrb[0].mxu0
        %v5112 = vadd.f32 0.0, %v5111
        %v5113 = vpop.f32.mrb[0].mxu0
        %v5114 = vpop.f32.mrb[0].mxu0
        %v5115 = vadd.f32 0.0, %v5114
        %v5116 = vpop.f32.mrb[0].mxu0
        %5117 = vdwg.mxu0
        %v5118 = vadd.f32 %v4796, %v4992
        %v5119 = vadd.f32 %v4797, %v4995
        %v5120 = vadd.f32 %v4798, %v5000
        %v5121 = vadd.f32 %v4799, %v5003
        %v5122 = vadd.f32 %v4800, %v5008
        %v5123 = vadd.f32 %v4801, %v5011
        %v5124 = vadd.f32 %v4802, %v5016
        %v5125 = vadd.f32 %v4803, %v5019
        %v5126 = vadd.f32 %v4804, %v5024
        %v5127 = vadd.f32 %v4805, %v5027
        %v5128 = vadd.f32 %v4806, %v5032
        %v5129 = vadd.f32 %v4807, %v5035
        %v5130 = vadd.f32 %v4808, %v5040
        %v5131 = vadd.f32 %v4809, %v5043
        %v5132 = vadd.f32 %v4810, %v5048
        %v5133 = vadd.f32 %v4811, %v5051
        %v5134 = vadd.f32 %v4812, %v5056
        %v5135 = vadd.f32 %v4813, %v5059
        %v5136 = vadd.f32 %v4814, %v5064
        %v5137 = vadd.f32 %v4815, %v5067
        %v5138 = vadd.f32 %v4816, %v5072
        %v5139 = vadd.f32 %v4817, %v5075
        %v5140 = vadd.f32 %v4818, %v5080
        %v5141 = vadd.f32 %v4819, %v5083
        %v5142 = vadd.f32 %v4820, %v5088
        %v5143 = vadd.f32 %v4821, %v5091
        %v5144 = vadd.f32 %v4822, %v5096
        %v5145 = vadd.f32 %v4823, %v5099
        %v5146 = vadd.f32 %v4824, %v5104
        %v5147 = vadd.f32 %v4825, %v5107
        %v5148 = vadd.f32 %v4826, %v5112
        %v5149 = vadd.f32 %v4827, %v5115
        %s5150 = scalar_lea.vmem [#allocation2], 48
        %v5151 = vld [vmem:[%s5150] sm:$0xff]
        %v5152 = vld [vmem:[%s5150 + $0x8] sm:$0xff]
        %v5153 = vld [vmem:[%s5150 + $0x18] sm:$0xff]
        %v5154 = vld [vmem:[%s5150 + $0x20] sm:$0xff]
        %v5155 = vld [vmem:[%s5150 + $0x30] sm:$0xff]
        %v5156 = vld [vmem:[%s5150 + $0x38] sm:$0xff]
        %v5157 = vld [vmem:[%s5150 + $0x48] sm:$0xff]
        %v5158 = vld [vmem:[%s5150 + $0x50] sm:$0xff]
        %v5159 = vld [vmem:[%s5150 + $0x60] sm:$0xff]
        %v5160 = vld [vmem:[%s5150 + $0x68] sm:$0xff]
        %v5161 = vld [vmem:[%s5150 + $0x78] sm:$0xff]
        %v5162 = vld [vmem:[%s5150 + $0x80] sm:$0xff]
        %v5163 = vld [vmem:[%s5150 + $0x90] sm:$0xff]
        %v5164 = vld [vmem:[%s5150 + $0x98] sm:$0xff]
        %v5165 = vld [vmem:[%s5150 + $0xa8] sm:$0xff]
        %v5166 = vld [vmem:[%s5150 + $0xb0] sm:$0xff]
        %v5167 = vld [vmem:[%s5150 + $0xc0] sm:$0xff]
        %v5168 = vld [vmem:[%s5150 + $0xc8] sm:$0xff]
        %v5169 = vld [vmem:[%s5150 + $0xd8] sm:$0xff]
        %v5170 = vld [vmem:[%s5150 + $0xe0] sm:$0xff]
        %v5171 = vld [vmem:[%s5150 + $0xf0] sm:$0xff]
        %v5172 = vld [vmem:[%s5150 + $0xf8] sm:$0xff]
        %v5173 = vld [vmem:[%s5150 + $0x108] sm:$0xff]
        %v5174 = vld [vmem:[%s5150 + $0x110] sm:$0xff]
        %v5175 = vld [vmem:[%s5150 + $0x120] sm:$0xff]
        %v5176 = vld [vmem:[%s5150 + $0x128] sm:$0xff]
        %v5177 = vld [vmem:[%s5150 + $0x138] sm:$0xff]
        %v5178 = vld [vmem:[%s5150 + $0x140] sm:$0xff]
        %v5179 = vld [vmem:[%s5150 + $0x150] sm:$0xff]
        %v5180 = vld [vmem:[%s5150 + $0x158] sm:$0xff]
        %v5181 = vld [vmem:[%s5150 + $0x168] sm:$0xff]
        %v5182 = vld [vmem:[%s5150 + $0x170] sm:$0xff]
        %s5183 = scalar_lea.vmem %s2, 192
        %v5184 = vld [vmem:[%s5183] sm:$0xf]
        %v5185 = vld [vmem:[%s5183 + $0x4] sm:$0xf]
        %v5186 = vld [vmem:[%s5183 + $0x8] sm:$0xf]
        %v5187 = vld [vmem:[%s5183 + $0xc] sm:$0xf]
        %v5188 = vld [vmem:[%s5183 + $0x10] sm:$0xf]
        %v5189 = vld [vmem:[%s5183 + $0x14] sm:$0xf]
        %v5190 = vld [vmem:[%s5183 + $0x18] sm:$0xf]
        %v5191 = vld [vmem:[%s5183 + $0x1c] sm:$0xf]
        %v5192 = vpack.c.bf16 %v5152, %v5151
        %v5193 = vpack.c.bf16 %v5154, %v5153
        %v5194 = vpack.c.bf16 %v5156, %v5155
        %v5195 = vpack.c.bf16 %v5158, %v5157
        %v5196 = vpack.c.bf16 %v5160, %v5159
        %v5197 = vpack.c.bf16 %v5162, %v5161
        %v5198 = vpack.c.bf16 %v5164, %v5163
        %v5199 = vpack.c.bf16 %v5166, %v5165
        %v5200 = vpack.c.bf16 %v5168, %v5167
        %v5201 = vpack.c.bf16 %v5170, %v5169
        %v5202 = vpack.c.bf16 %v5172, %v5171
        %v5203 = vpack.c.bf16 %v5174, %v5173
        %v5204 = vpack.c.bf16 %v5176, %v5175
        %v5205 = vpack.c.bf16 %v5178, %v5177
        %v5206 = vpack.c.bf16 %v5180, %v5179
        %v5207 = vpack.c.bf16 %v5182, %v5181
        %v5216 = vunpack.c.l.b16 %v5184
        %v5217 = vunpack.c.l.b16 %v5185
        %v5218 = vunpack.c.l.b16 %v5186
        %v5219 = vunpack.c.l.b16 %v5187
        %v5220 = vunpack.c.l.b16 %v5188
        %v5221 = vunpack.c.l.b16 %v5189
        %v5222 = vunpack.c.l.b16 %v5190
        %v5223 = vunpack.c.l.b16 %v5191
        %v5224 = vpack.c.b16 %v5217, %v5216
        %v5225 = vpack.c.b16 %v5219, %v5218
        %v5226 = vpack.c.b16 %v5221, %v5220
        %v5227 = vpack.c.b16 %v5223, %v5222
        %v5233 = vsel %vm2923, %v5192, 0
        %v5236 = vsel %vm2923, %v5193, 0
        %v5239 = vsel %vm2923, %v5194, 0
        %v5242 = vsel %vm2923, %v5195, 0
        %v5245 = vsel %vm2923, %v5196, 0
        %v5248 = vsel %vm2923, %v5197, 0
        %v5251 = vsel %vm2923, %v5198, 0
        %v5254 = vsel %vm2923, %v5199, 0
        %v5257 = vsel %vm2923, %v5200, 0
        %v5260 = vsel %vm2923, %v5201, 0
        %v5263 = vsel %vm2923, %v5202, 0
        %v5266 = vsel %vm2923, %v5203, 0
        %v5269 = vsel %vm2923, %v5204, 0
        %v5272 = vsel %vm2923, %v5205, 0
        %v5275 = vsel %vm2923, %v5206, 0
        %v5278 = vsel %vm2923, %v5207, 0
        %5280 = vmatprep.subr.bf16.mxu0 0
        %5281 = vmatpush1.bf16.msra.mxu0 %v5224
        %5282 = vmatprep.subr.bf16.mxu0 0
        %5283 = vmatpush1.bf16.msra.mxu0 %v5225
        %5284 = vmatprep.subr.bf16.mxu0 0
        %5285 = vmatpush1.bf16.msra.mxu0 %v5226
        %5286 = vmatprep.subr.bf16.mxu0 0
        %5287 = vmatpush1.bf16.msra.mxu0 %v5227
        %5288 = vmatprep.subr.bf16.mxu0 0
        %5289 = vmatpush1.bf16.msra.mxu0 0
        %5290 = vmatprep.subr.bf16.mxu0 0
        %5291 = vmatpush1.bf16.msra.mxu0 0
        %5292 = vmatprep.subr.bf16.mxu0 0
        %5293 = vmatpush1.bf16.msra.mxu0 0
        %5294 = vmatprep.subr.bf16.mxu0 0
        %5295 = vmatpush1.bf16.msra.mxu0 0
        %5296 = vmatprep.subr.bf16.mxu0 0
        %5297 = vmatpush1.bf16.msra.mxu0 0
        %5298 = vmatprep.subr.bf16.mxu0 0
        %5299 = vmatpush1.bf16.msra.mxu0 0
        %5300 = vmatprep.subr.bf16.mxu0 0
        %5301 = vmatpush1.bf16.msra.mxu0 0
        %5302 = vmatprep.subr.bf16.mxu0 0
        %5303 = vmatpush1.bf16.msra.mxu0 0
        %5304 = vmatprep.subr.bf16.mxu0 0
        %5305 = vmatpush1.bf16.msra.mxu0 0
        %5306 = vmatprep.subr.bf16.mxu0 0
        %5307 = vmatpush1.bf16.msra.mxu0 0
        %5308 = vmatprep.subr.bf16.mxu0 0
        %5309 = vmatpush1.bf16.msra.mxu0 0
        %5310 = vmatprep.subr.bf16.mxu0 0
        %5311 = vmatpush1.bf16.msra.mxu0 0
        %5312 = vmatprep.mubr.bf16.mxu0 0
        %5313 = vmatmul.mubr.bf16.gmra.mrb[0].mxu0 %v5233
        %v5314 = vpop.f32.mrb[0].mxu0
        %v5315 = vadd.f32 0.0, %v5314
        %v5316 = vpop.f32.mrb[0].mxu0
        %v5317 = vpop.f32.mrb[0].mxu0
        %v5318 = vadd.f32 0.0, %v5317
        %v5319 = vpop.f32.mrb[0].mxu0
        %5320 = vmatprep.mubr.bf16.mxu0 0
        %5321 = vmatmul.mubr.bf16.gmra.mrb[0].mxu0 %v5236
        %v5322 = vpop.f32.mrb[0].mxu0
        %v5323 = vadd.f32 0.0, %v5322
        %v5324 = vpop.f32.mrb[0].mxu0
        %v5325 = vpop.f32.mrb[0].mxu0
        %v5326 = vadd.f32 0.0, %v5325
        %v5327 = vpop.f32.mrb[0].mxu0
        %5328 = vmatprep.mubr.bf16.mxu0 0
        %5329 = vmatmul.mubr.bf16.gmra.mrb[0].mxu0 %v5239
        %v5330 = vpop.f32.mrb[0].mxu0
        %v5331 = vadd.f32 0.0, %v5330
        %v5332 = vpop.f32.mrb[0].mxu0
        %v5333 = vpop.f32.mrb[0].mxu0
        %v5334 = vadd.f32 0.0, %v5333
        %v5335 = vpop.f32.mrb[0].mxu0
        %5336 = vmatprep.mubr.bf16.mxu0 0
        %5337 = vmatmul.mubr.bf16.gmra.mrb[0].mxu0 %v5242
        %v5338 = vpop.f32.mrb[0].mxu0
        %v5339 = vadd.f32 0.0, %v5338
        %v5340 = vpop.f32.mrb[0].mxu0
        %v5341 = vpop.f32.mrb[0].mxu0
        %v5342 = vadd.f32 0.0, %v5341
        %v5343 = vpop.f32.mrb[0].mxu0
        %5344 = vmatprep.mubr.bf16.mxu0 0
        %5345 = vmatmul.mubr.bf16.gmra.mrb[0].mxu0 %v5245
        %v5346 = vpop.f32.mrb[0].mxu0
        %v5347 = vadd.f32 0.0, %v5346
        %v5348 = vpop.f32.mrb[0].mxu0
        %v5349 = vpop.f32.mrb[0].mxu0
        %v5350 = vadd.f32 0.0, %v5349
        %v5351 = vpop.f32.mrb[0].mxu0
        %5352 = vmatprep.mubr.bf16.mxu0 0
        %5353 = vmatmul.mubr.bf16.gmra.mrb[0].mxu0 %v5248
        %v5354 = vpop.f32.mrb[0].mxu0
        %v5355 = vadd.f32 0.0, %v5354
        %v5356 = vpop.f32.mrb[0].mxu0
        %v5357 = vpop.f32.mrb[0].mxu0
        %v5358 = vadd.f32 0.0, %v5357
        %v5359 = vpop.f32.mrb[0].mxu0
        %5360 = vmatprep.mubr.bf16.mxu0 0
        %5361 = vmatmul.mubr.bf16.gmra.mrb[0].mxu0 %v5251
        %v5362 = vpop.f32.mrb[0].mxu0
        %v5363 = vadd.f32 0.0, %v5362
        %v5364 = vpop.f32.mrb[0].mxu0
        %v5365 = vpop.f32.mrb[0].mxu0
        %v5366 = vadd.f32 0.0, %v5365
        %v5367 = vpop.f32.mrb[0].mxu0
        %5368 = vmatprep.mubr.bf16.mxu0 0
        %5369 = vmatmul.mubr.bf16.gmra.mrb[0].mxu0 %v5254
        %v5370 = vpop.f32.mrb[0].mxu0
        %v5371 = vadd.f32 0.0, %v5370
        %v5372 = vpop.f32.mrb[0].mxu0
        %v5373 = vpop.f32.mrb[0].mxu0
        %v5374 = vadd.f32 0.0, %v5373
        %v5375 = vpop.f32.mrb[0].mxu0
        %5376 = vmatprep.mubr.bf16.mxu0 0
        %5377 = vmatmul.mubr.bf16.gmra.mrb[0].mxu0 %v5257
        %v5378 = vpop.f32.mrb[0].mxu0
        %v5379 = vadd.f32 0.0, %v5378
        %v5380 = vpop.f32.mrb[0].mxu0
        %v5381 = vpop.f32.mrb[0].mxu0
        %v5382 = vadd.f32 0.0, %v5381
        %v5383 = vpop.f32.mrb[0].mxu0
        %5384 = vmatprep.mubr.bf16.mxu0 0
        %5385 = vmatmul.mubr.bf16.gmra.mrb[0].mxu0 %v5260
        %v5386 = vpop.f32.mrb[0].mxu0
        %v5387 = vadd.f32 0.0, %v5386
        %v5388 = vpop.f32.mrb[0].mxu0
        %v5389 = vpop.f32.mrb[0].mxu0
        %v5390 = vadd.f32 0.0, %v5389
        %v5391 = vpop.f32.mrb[0].mxu0
        %5392 = vmatprep.mubr.bf16.mxu0 0
        %5393 = vmatmul.mubr.bf16.gmra.mrb[0].mxu0 %v5263
        %v5394 = vpop.f32.mrb[0].mxu0
        %v5395 = vadd.f32 0.0, %v5394
        %v5396 = vpop.f32.mrb[0].mxu0
        %v5397 = vpop.f32.mrb[0].mxu0
        %v5398 = vadd.f32 0.0, %v5397
        %v5399 = vpop.f32.mrb[0].mxu0
        %5400 = vmatprep.mubr.bf16.mxu0 0
        %5401 = vmatmul.mubr.bf16.gmra.mrb[0].mxu0 %v5266
        %v5402 = vpop.f32.mrb[0].mxu0
        %v5403 = vadd.f32 0.0, %v5402
        %v5404 = vpop.f32.mrb[0].mxu0
        %v5405 = vpop.f32.mrb[0].mxu0
        %v5406 = vadd.f32 0.0, %v5405
        %v5407 = vpop.f32.mrb[0].mxu0
        %5408 = vmatprep.mubr.bf16.mxu0 0
        %5409 = vmatmul.mubr.bf16.gmra.mrb[0].mxu0 %v5269
        %v5410 = vpop.f32.mrb[0].mxu0
        %v5411 = vadd.f32 0.0, %v5410
        %v5412 = vpop.f32.mrb[0].mxu0
        %v5413 = vpop.f32.mrb[0].mxu0
        %v5414 = vadd.f32 0.0, %v5413
        %v5415 = vpop.f32.mrb[0].mxu0
        %5416 = vmatprep.mubr.bf16.mxu0 0
        %5417 = vmatmul.mubr.bf16.gmra.mrb[0].mxu0 %v5272
        %v5418 = vpop.f32.mrb[0].mxu0
        %v5419 = vadd.f32 0.0, %v5418
        %v5420 = vpop.f32.mrb[0].mxu0
        %v5421 = vpop.f32.mrb[0].mxu0
        %v5422 = vadd.f32 0.0, %v5421
        %v5423 = vpop.f32.mrb[0].mxu0
        %5424 = vmatprep.mubr.bf16.mxu0 0
        %5425 = vmatmul.mubr.bf16.gmra.mrb[0].mxu0 %v5275
        %v5426 = vpop.f32.mrb[0].mxu0
        %v5427 = vadd.f32 0.0, %v5426
        %v5428 = vpop.f32.mrb[0].mxu0
        %v5429 = vpop.f32.mrb[0].mxu0
        %v5430 = vadd.f32 0.0, %v5429
        %v5431 = vpop.f32.mrb[0].mxu0
        %5432 = vmatprep.mubr.bf16.mxu0 0
        %5433 = vmatmul.mubr.bf16.gmra.mrb[0].mxu0 %v5278
        %v5434 = vpop.f32.mrb[0].mxu0
        %v5435 = vadd.f32 0.0, %v5434
        %v5436 = vpop.f32.mrb[0].mxu0
        %v5437 = vpop.f32.mrb[0].mxu0
        %v5438 = vadd.f32 0.0, %v5437
        %v5439 = vpop.f32.mrb[0].mxu0
        %5440 = vdwg.mxu0
        %v5441 = vadd.f32 %v5118, %v5315
        %v5442 = vadd.f32 %v5119, %v5318
        %v5443 = vadd.f32 %v5120, %v5323
        %v5444 = vadd.f32 %v5121, %v5326
        %v5445 = vadd.f32 %v5122, %v5331
        %v5446 = vadd.f32 %v5123, %v5334
        %v5447 = vadd.f32 %v5124, %v5339
        %v5448 = vadd.f32 %v5125, %v5342
        %v5449 = vadd.f32 %v5126, %v5347
        %v5450 = vadd.f32 %v5127, %v5350
        %v5451 = vadd.f32 %v5128, %v5355
        %v5452 = vadd.f32 %v5129, %v5358
        %v5453 = vadd.f32 %v5130, %v5363
        %v5454 = vadd.f32 %v5131, %v5366
        %v5455 = vadd.f32 %v5132, %v5371
        %v5456 = vadd.f32 %v5133, %v5374
        %v5457 = vadd.f32 %v5134, %v5379
        %v5458 = vadd.f32 %v5135, %v5382
        %v5459 = vadd.f32 %v5136, %v5387
        %v5460 = vadd.f32 %v5137, %v5390
        %v5461 = vadd.f32 %v5138, %v5395
        %v5462 = vadd.f32 %v5139, %v5398
        %v5463 = vadd.f32 %v5140, %v5403
        %v5464 = vadd.f32 %v5141, %v5406
        %v5465 = vadd.f32 %v5142, %v5411
        %v5466 = vadd.f32 %v5143, %v5414
        %v5467 = vadd.f32 %v5144, %v5419
        %v5468 = vadd.f32 %v5145, %v5422
        %v5469 = vadd.f32 %v5146, %v5427
        %v5470 = vadd.f32 %v5147, %v5430
        %v5471 = vadd.f32 %v5148, %v5435
        %v5472 = vadd.f32 %v5149, %v5438
        %v5473 = vld [vmem:[%s5150 + $0x1] sm:$0xff]
        %v5474 = vld [vmem:[%s5150 + $0x9] sm:$0xff]
        %v5475 = vld [vmem:[%s5150 + $0x19] sm:$0xff]
        %v5476 = vld [vmem:[%s5150 + $0x21] sm:$0xff]
        %v5477 = vld [vmem:[%s5150 + $0x31] sm:$0xff]
        %v5478 = vld [vmem:[%s5150 + $0x39] sm:$0xff]
        %v5479 = vld [vmem:[%s5150 + $0x49] sm:$0xff]
        %v5480 = vld [vmem:[%s5150 + $0x51] sm:$0xff]
        %v5481 = vld [vmem:[%s5150 + $0x61] sm:$0xff]
        %v5482 = vld [vmem:[%s5150 + $0x69] sm:$0xff]
        %v5483 = vld [vmem:[%s5150 + $0x79] sm:$0xff]
        %v5484 = vld [vmem:[%s5150 + $0x81] sm:$0xff]
        %v5485 = vld [vmem:[%s5150 + $0x91] sm:$0xff]
        %v5486 = vld [vmem:[%s5150 + $0x99] sm:$0xff]
        %v5487 = vld [vmem:[%s5150 + $0xa9] sm:$0xff]
        %v5488 = vld [vmem:[%s5150 + $0xb1] sm:$0xff]
        %v5489 = vld [vmem:[%s5150 + $0xc1] sm:$0xff]
        %v5490 = vld [vmem:[%s5150 + $0xc9] sm:$0xff]
        %v5491 = vld [vmem:[%s5150 + $0xd9] sm:$0xff]
        %v5492 = vld [vmem:[%s5150 + $0xe1] sm:$0xff]
        %v5493 = vld [vmem:[%s5150 + $0xf1] sm:$0xff]
        %v5494 = vld [vmem:[%s5150 + $0xf9] sm:$0xff]
        %v5495 = vld [vmem:[%s5150 + $0x109] sm:$0xff]
        %v5496 = vld [vmem:[%s5150 + $0x111] sm:$0xff]
        %v5497 = vld [vmem:[%s5150 + $0x121] sm:$0xff]
        %v5498 = vld [vmem:[%s5150 + $0x129] sm:$0xff]
        %v5499 = vld [vmem:[%s5150 + $0x139] sm:$0xff]
        %v5500 = vld [vmem:[%s5150 + $0x141] sm:$0xff]
        %v5501 = vld [vmem:[%s5150 + $0x151] sm:$0xff]
        %v5502 = vld [vmem:[%s5150 + $0x159] sm:$0xff]
        %v5503 = vld [vmem:[%s5150 + $0x169] sm:$0xff]
        %v5504 = vld [vmem:[%s5150 + $0x171] sm:$0xff]
        %s5505 = scalar_lea.vmem %s2, 224
        %v5506 = vld [vmem:[%s5505] sm:$0xf]
        %v5507 = vld [vmem:[%s5505 + $0x4] sm:$0xf]
        %v5508 = vld [vmem:[%s5505 + $0x8] sm:$0xf]
        %v5509 = vld [vmem:[%s5505 + $0xc] sm:$0xf]
        %v5510 = vld [vmem:[%s5505 + $0x10] sm:$0xf]
        %v5511 = vld [vmem:[%s5505 + $0x14] sm:$0xf]
        %v5512 = vld [vmem:[%s5505 + $0x18] sm:$0xf]
        %v5513 = vld [vmem:[%s5505 + $0x1c] sm:$0xf]
        %v5514 = vpack.c.bf16 %v5474, %v5473
        %v5515 = vpack.c.bf16 %v5476, %v5475
        %v5516 = vpack.c.bf16 %v5478, %v5477
        %v5517 = vpack.c.bf16 %v5480, %v5479
        %v5518 = vpack.c.bf16 %v5482, %v5481
        %v5519 = vpack.c.bf16 %v5484, %v5483
        %v5520 = vpack.c.bf16 %v5486, %v5485
        %v5521 = vpack.c.bf16 %v5488, %v5487
        %v5522 = vpack.c.bf16 %v5490, %v5489
        %v5523 = vpack.c.bf16 %v5492, %v5491
        %v5524 = vpack.c.bf16 %v5494, %v5493
        %v5525 = vpack.c.bf16 %v5496, %v5495
        %v5526 = vpack.c.bf16 %v5498, %v5497
        %v5527 = vpack.c.bf16 %v5500, %v5499
        %v5528 = vpack.c.bf16 %v5502, %v5501
        %v5529 = vpack.c.bf16 %v5504, %v5503
        %v5538 = vunpack.c.l.b16 %v5506
        %v5539 = vunpack.c.l.b16 %v5507
        %v5540 = vunpack.c.l.b16 %v5508
        %v5541 = vunpack.c.l.b16 %v5509
        %v5542 = vunpack.c.l.b16 %v5510
        %v5543 = vunpack.c.l.b16 %v5511
        %v5544 = vunpack.c.l.b16 %v5512
        %v5545 = vunpack.c.l.b16 %v5513
        %v5546 = vpack.c.b16 %v5539, %v5538
        %v5547 = vpack.c.b16 %v5541, %v5540
        %v5548 = vpack.c.b16 %v5543, %v5542
        %v5549 = vpack.c.b16 %v5545, %v5544
        %v5555 = vsel %vm2923, %v5514, 0
        %v5558 = vsel %vm2923, %v5515, 0
        %v5561 = vsel %vm2923, %v5516, 0
        %v5564 = vsel %vm2923, %v5517, 0
        %v5567 = vsel %vm2923, %v5518, 0
        %v5570 = vsel %vm2923, %v5519, 0
        %v5573 = vsel %vm2923, %v5520, 0
        %v5576 = vsel %vm2923, %v5521, 0
        %v5579 = vsel %vm2923, %v5522, 0
        %v5582 = vsel %vm2923, %v5523, 0
        %v5585 = vsel %vm2923, %v5524, 0
        %v5588 = vsel %vm2923, %v5525, 0
        %v5591 = vsel %vm2923, %v5526, 0
        %v5594 = vsel %vm2923, %v5527, 0
        %v5597 = vsel %vm2923, %v5528, 0
        %v5600 = vsel %vm2923, %v5529, 0
        %5602 = vmatprep.subr.bf16.mxu0 0
        %5603 = vmatpush1.bf16.msra.mxu0 %v5546
        %5604 = vmatprep.subr.bf16.mxu0 0
        %5605 = vmatpush1.bf16.msra.mxu0 %v5547
        %5606 = vmatprep.subr.bf16.mxu0 0
        %5607 = vmatpush1.bf16.msra.mxu0 %v5548
        %5608 = vmatprep.subr.bf16.mxu0 0
        %5609 = vmatpush1.bf16.msra.mxu0 %v5549
        %5610 = vmatprep.subr.bf16.mxu0 0
        %5611 = vmatpush1.bf16.msra.mxu0 0
        %5612 = vmatprep.subr.bf16.mxu0 0
        %5613 = vmatpush1.bf16.msra.mxu0 0
        %5614 = vmatprep.subr.bf16.mxu0 0
        %5615 = vmatpush1.bf16.msra.mxu0 0
        %5616 = vmatprep.subr.bf16.mxu0 0
        %5617 = vmatpush1.bf16.msra.mxu0 0
        %5618 = vmatprep.subr.bf16.mxu0 0
        %5619 = vmatpush1.bf16.msra.mxu0 0
        %5620 = vmatprep.subr.bf16.mxu0 0
        %5621 = vmatpush1.bf16.msra.mxu0 0
        %5622 = vmatprep.subr.bf16.mxu0 0
        %5623 = vmatpush1.bf16.msra.mxu0 0
        %5624 = vmatprep.subr.bf16.mxu0 0
        %5625 = vmatpush1.bf16.msra.mxu0 0
        %5626 = vmatprep.subr.bf16.mxu0 0
        %5627 = vmatpush1.bf16.msra.mxu0 0
        %5628 = vmatprep.subr.bf16.mxu0 0
        %5629 = vmatpush1.bf16.msra.mxu0 0
        %5630 = vmatprep.subr.bf16.mxu0 0
        %5631 = vmatpush1.bf16.msra.mxu0 0
        %5632 = vmatprep.subr.bf16.mxu0 0
        %5633 = vmatpush1.bf16.msra.mxu0 0
        %5634 = vmatprep.mubr.bf16.mxu0 0
        %5635 = vmatmul.mubr.bf16.gmra.mrb[0].mxu0 %v5555
        %v5636 = vpop.f32.mrb[0].mxu0
        %v5637 = vadd.f32 0.0, %v5636
        %v5638 = vpop.f32.mrb[0].mxu0
        %v5639 = vpop.f32.mrb[0].mxu0
        %v5640 = vadd.f32 0.0, %v5639
        %v5641 = vpop.f32.mrb[0].mxu0
        %5642 = vmatprep.mubr.bf16.mxu0 0
        %5643 = vmatmul.mubr.bf16.gmra.mrb[0].mxu0 %v5558
        %v5644 = vpop.f32.mrb[0].mxu0
        %v5645 = vadd.f32 0.0, %v5644
        %v5646 = vpop.f32.mrb[0].mxu0
        %v5647 = vpop.f32.mrb[0].mxu0
        %v5648 = vadd.f32 0.0, %v5647
        %v5649 = vpop.f32.mrb[0].mxu0
        %5650 = vmatprep.mubr.bf16.mxu0 0
        %5651 = vmatmul.mubr.bf16.gmra.mrb[0].mxu0 %v5561
        %v5652 = vpop.f32.mrb[0].mxu0
        %v5653 = vadd.f32 0.0, %v5652
        %v5654 = vpop.f32.mrb[0].mxu0
        %v5655 = vpop.f32.mrb[0].mxu0
        %v5656 = vadd.f32 0.0, %v5655
        %v5657 = vpop.f32.mrb[0].mxu0
        %5658 = vmatprep.mubr.bf16.mxu0 0
        %5659 = vmatmul.mubr.bf16.gmra.mrb[0].mxu0 %v5564
        %v5660 = vpop.f32.mrb[0].mxu0
        %v5661 = vadd.f32 0.0, %v5660
        %v5662 = vpop.f32.mrb[0].mxu0
        %v5663 = vpop.f32.mrb[0].mxu0
        %v5664 = vadd.f32 0.0, %v5663
        %v5665 = vpop.f32.mrb[0].mxu0
        %5666 = vmatprep.mubr.bf16.mxu0 0
        %5667 = vmatmul.mubr.bf16.gmra.mrb[0].mxu0 %v5567
        %v5668 = vpop.f32.mrb[0].mxu0
        %v5669 = vadd.f32 0.0, %v5668
        %v5670 = vpop.f32.mrb[0].mxu0
        %v5671 = vpop.f32.mrb[0].mxu0
        %v5672 = vadd.f32 0.0, %v5671
        %v5673 = vpop.f32.mrb[0].mxu0
        %5674 = vmatprep.mubr.bf16.mxu0 0
        %5675 = vmatmul.mubr.bf16.gmra.mrb[0].mxu0 %v5570
        %v5676 = vpop.f32.mrb[0].mxu0
        %v5677 = vadd.f32 0.0, %v5676
        %v5678 = vpop.f32.mrb[0].mxu0
        %v5679 = vpop.f32.mrb[0].mxu0
        %v5680 = vadd.f32 0.0, %v5679
        %v5681 = vpop.f32.mrb[0].mxu0
        %5682 = vmatprep.mubr.bf16.mxu0 0
        %5683 = vmatmul.mubr.bf16.gmra.mrb[0].mxu0 %v5573
        %v5684 = vpop.f32.mrb[0].mxu0
        %v5685 = vadd.f32 0.0, %v5684
        %v5686 = vpop.f32.mrb[0].mxu0
        %v5687 = vpop.f32.mrb[0].mxu0
        %v5688 = vadd.f32 0.0, %v5687
        %v5689 = vpop.f32.mrb[0].mxu0
        %5690 = vmatprep.mubr.bf16.mxu0 0
        %5691 = vmatmul.mubr.bf16.gmra.mrb[0].mxu0 %v5576
        %v5692 = vpop.f32.mrb[0].mxu0
        %v5693 = vadd.f32 0.0, %v5692
        %v5694 = vpop.f32.mrb[0].mxu0
        %v5695 = vpop.f32.mrb[0].mxu0
        %v5696 = vadd.f32 0.0, %v5695
        %v5697 = vpop.f32.mrb[0].mxu0
        %5698 = vmatprep.mubr.bf16.mxu0 0
        %5699 = vmatmul.mubr.bf16.gmra.mrb[0].mxu0 %v5579
        %v5700 = vpop.f32.mrb[0].mxu0
        %v5701 = vadd.f32 0.0, %v5700
        %v5702 = vpop.f32.mrb[0].mxu0
        %v5703 = vpop.f32.mrb[0].mxu0
        %v5704 = vadd.f32 0.0, %v5703
        %v5705 = vpop.f32.mrb[0].mxu0
        %5706 = vmatprep.mubr.bf16.mxu0 0
        %5707 = vmatmul.mubr.bf16.gmra.mrb[0].mxu0 %v5582
        %v5708 = vpop.f32.mrb[0].mxu0
        %v5709 = vadd.f32 0.0, %v5708
        %v5710 = vpop.f32.mrb[0].mxu0
        %v5711 = vpop.f32.mrb[0].mxu0
        %v5712 = vadd.f32 0.0, %v5711
        %v5713 = vpop.f32.mrb[0].mxu0
        %5714 = vmatprep.mubr.bf16.mxu0 0
        %5715 = vmatmul.mubr.bf16.gmra.mrb[0].mxu0 %v5585
        %v5716 = vpop.f32.mrb[0].mxu0
        %v5717 = vadd.f32 0.0, %v5716
        %v5718 = vpop.f32.mrb[0].mxu0
        %v5719 = vpop.f32.mrb[0].mxu0
        %v5720 = vadd.f32 0.0, %v5719
        %v5721 = vpop.f32.mrb[0].mxu0
        %5722 = vmatprep.mubr.bf16.mxu0 0
        %5723 = vmatmul.mubr.bf16.gmra.mrb[0].mxu0 %v5588
        %v5724 = vpop.f32.mrb[0].mxu0
        %v5725 = vadd.f32 0.0, %v5724
        %v5726 = vpop.f32.mrb[0].mxu0
        %v5727 = vpop.f32.mrb[0].mxu0
        %v5728 = vadd.f32 0.0, %v5727
        %v5729 = vpop.f32.mrb[0].mxu0
        %5730 = vmatprep.mubr.bf16.mxu0 0
        %5731 = vmatmul.mubr.bf16.gmra.mrb[0].mxu0 %v5591
        %v5732 = vpop.f32.mrb[0].mxu0
        %v5733 = vadd.f32 0.0, %v5732
        %v5734 = vpop.f32.mrb[0].mxu0
        %v5735 = vpop.f32.mrb[0].mxu0
        %v5736 = vadd.f32 0.0, %v5735
        %v5737 = vpop.f32.mrb[0].mxu0
        %5738 = vmatprep.mubr.bf16.mxu0 0
        %5739 = vmatmul.mubr.bf16.gmra.mrb[0].mxu0 %v5594
        %v5740 = vpop.f32.mrb[0].mxu0
        %v5741 = vadd.f32 0.0, %v5740
        %v5742 = vpop.f32.mrb[0].mxu0
        %v5743 = vpop.f32.mrb[0].mxu0
        %v5744 = vadd.f32 0.0, %v5743
        %v5745 = vpop.f32.mrb[0].mxu0
        %5746 = vmatprep.mubr.bf16.mxu0 0
        %5747 = vmatmul.mubr.bf16.gmra.mrb[0].mxu0 %v5597
        %v5748 = vpop.f32.mrb[0].mxu0
        %v5749 = vadd.f32 0.0, %v5748
        %v5750 = vpop.f32.mrb[0].mxu0
        %v5751 = vpop.f32.mrb[0].mxu0
        %v5752 = vadd.f32 0.0, %v5751
        %v5753 = vpop.f32.mrb[0].mxu0
        %5754 = vmatprep.mubr.bf16.mxu0 0
        %5755 = vmatmul.mubr.bf16.gmra.mrb[0].mxu0 %v5600
        %v5756 = vpop.f32.mrb[0].mxu0
        %v5757 = vadd.f32 0.0, %v5756
        %v5758 = vpop.f32.mrb[0].mxu0
        %v5759 = vpop.f32.mrb[0].mxu0
        %v5760 = vadd.f32 0.0, %v5759
        %v5761 = vpop.f32.mrb[0].mxu0
        %5762 = vdwg.mxu0
        %v5763 = vadd.f32 %v5441, %v5637
        %v5764 = vadd.f32 %v5442, %v5640
        %v5765 = vadd.f32 %v5443, %v5645
        %v5766 = vadd.f32 %v5444, %v5648
        %v5767 = vadd.f32 %v5445, %v5653
        %v5768 = vadd.f32 %v5446, %v5656
        %v5769 = vadd.f32 %v5447, %v5661
        %v5770 = vadd.f32 %v5448, %v5664
        %v5771 = vadd.f32 %v5449, %v5669
        %v5772 = vadd.f32 %v5450, %v5672
        %v5773 = vadd.f32 %v5451, %v5677
        %v5774 = vadd.f32 %v5452, %v5680
        %v5775 = vadd.f32 %v5453, %v5685
        %v5776 = vadd.f32 %v5454, %v5688
        %v5777 = vadd.f32 %v5455, %v5693
        %v5778 = vadd.f32 %v5456, %v5696
        %v5779 = vadd.f32 %v5457, %v5701
        %v5780 = vadd.f32 %v5458, %v5704
        %v5781 = vadd.f32 %v5459, %v5709
        %v5782 = vadd.f32 %v5460, %v5712
        %v5783 = vadd.f32 %v5461, %v5717
        %v5784 = vadd.f32 %v5462, %v5720
        %v5785 = vadd.f32 %v5463, %v5725
        %v5786 = vadd.f32 %v5464, %v5728
        %v5787 = vadd.f32 %v5465, %v5733
        %v5788 = vadd.f32 %v5466, %v5736
        %v5789 = vadd.f32 %v5467, %v5741
        %v5790 = vadd.f32 %v5468, %v5744
        %v5791 = vadd.f32 %v5469, %v5749
        %v5792 = vadd.f32 %v5470, %v5752
        %v5793 = vadd.f32 %v5471, %v5757
        %v5794 = vadd.f32 %v5472, %v5760
        %v5795 = vld [vmem:[%s5150 + $0x2] sm:$0xff]
        %v5796 = vld [vmem:[%s5150 + $0xa] sm:$0xff]
        %v5797 = vld [vmem:[%s5150 + $0x1a] sm:$0xff]
        %v5798 = vld [vmem:[%s5150 + $0x22] sm:$0xff]
        %v5799 = vld [vmem:[%s5150 + $0x32] sm:$0xff]
        %v5800 = vld [vmem:[%s5150 + $0x3a] sm:$0xff]
        %v5801 = vld [vmem:[%s5150 + $0x4a] sm:$0xff]
        %v5802 = vld [vmem:[%s5150 + $0x52] sm:$0xff]
        %v5803 = vld [vmem:[%s5150 + $0x62] sm:$0xff]
        %v5804 = vld [vmem:[%s5150 + $0x6a] sm:$0xff]
        %v5805 = vld [vmem:[%s5150 + $0x7a] sm:$0xff]
        %v5806 = vld [vmem:[%s5150 + $0x82] sm:$0xff]
        %v5807 = vld [vmem:[%s5150 + $0x92] sm:$0xff]
        %v5808 = vld [vmem:[%s5150 + $0x9a] sm:$0xff]
        %v5809 = vld [vmem:[%s5150 + $0xaa] sm:$0xff]
        %v5810 = vld [vmem:[%s5150 + $0xb2] sm:$0xff]
        %v5811 = vld [vmem:[%s5150 + $0xc2] sm:$0xff]
        %v5812 = vld [vmem:[%s5150 + $0xca] sm:$0xff]
        %v5813 = vld [vmem:[%s5150 + $0xda] sm:$0xff]
        %v5814 = vld [vmem:[%s5150 + $0xe2] sm:$0xff]
        %v5815 = vld [vmem:[%s5150 + $0xf2] sm:$0xff]
        %v5816 = vld [vmem:[%s5150 + $0xfa] sm:$0xff]
        %v5817 = vld [vmem:[%s5150 + $0x10a] sm:$0xff]
        %v5818 = vld [vmem:[%s5150 + $0x112] sm:$0xff]
        %v5819 = vld [vmem:[%s5150 + $0x122] sm:$0xff]
        %v5820 = vld [vmem:[%s5150 + $0x12a] sm:$0xff]
        %v5821 = vld [vmem:[%s5150 + $0x13a] sm:$0xff]
        %v5822 = vld [vmem:[%s5150 + $0x142] sm:$0xff]
        %v5823 = vld [vmem:[%s5150 + $0x152] sm:$0xff]
        %v5824 = vld [vmem:[%s5150 + $0x15a] sm:$0xff]
        %v5825 = vld [vmem:[%s5150 + $0x16a] sm:$0xff]
        %v5826 = vld [vmem:[%s5150 + $0x172] sm:$0xff]
        %s5827 = scalar_lea.vmem %s2, 256
        %v5828 = vld [vmem:[%s5827] sm:$0xf]
        %v5829 = vld [vmem:[%s5827 + $0x4] sm:$0xf]
        %v5830 = vld [vmem:[%s5827 + $0x8] sm:$0xf]
        %v5831 = vld [vmem:[%s5827 + $0xc] sm:$0xf]
        %v5832 = vld [vmem:[%s5827 + $0x10] sm:$0xf]
        %v5833 = vld [vmem:[%s5827 + $0x14] sm:$0xf]
        %v5834 = vld [vmem:[%s5827 + $0x18] sm:$0xf]
        %v5835 = vld [vmem:[%s5827 + $0x1c] sm:$0xf]
        %v5836 = vpack.c.bf16 %v5796, %v5795
        %v5837 = vpack.c.bf16 %v5798, %v5797
        %v5838 = vpack.c.bf16 %v5800, %v5799
        %v5839 = vpack.c.bf16 %v5802, %v5801
        %v5840 = vpack.c.bf16 %v5804, %v5803
        %v5841 = vpack.c.bf16 %v5806, %v5805
        %v5842 = vpack.c.bf16 %v5808, %v5807
        %v5843 = vpack.c.bf16 %v5810, %v5809
        %v5844 = vpack.c.bf16 %v5812, %v5811
        %v5845 = vpack.c.bf16 %v5814, %v5813
        %v5846 = vpack.c.bf16 %v5816, %v5815
        %v5847 = vpack.c.bf16 %v5818, %v5817
        %v5848 = vpack.c.bf16 %v5820, %v5819
        %v5849 = vpack.c.bf16 %v5822, %v5821
        %v5850 = vpack.c.bf16 %v5824, %v5823
        %v5851 = vpack.c.bf16 %v5826, %v5825
        %v5860 = vunpack.c.l.b16 %v5828
        %v5861 = vunpack.c.l.b16 %v5829
        %v5862 = vunpack.c.l.b16 %v5830
        %v5863 = vunpack.c.l.b16 %v5831
        %v5864 = vunpack.c.l.b16 %v5832
        %v5865 = vunpack.c.l.b16 %v5833
        %v5866 = vunpack.c.l.b16 %v5834
        %v5867 = vunpack.c.l.b16 %v5835
        %v5868 = vpack.c.b16 %v5861, %v5860
        %v5869 = vpack.c.b16 %v5863, %v5862
        %v5870 = vpack.c.b16 %v5865, %v5864
        %v5871 = vpack.c.b16 %v5867, %v5866
        %v5877 = vsel %vm2923, %v5836, 0
        %v5880 = vsel %vm2923, %v5837, 0
        %v5883 = vsel %vm2923, %v5838, 0
        %v5886 = vsel %vm2923, %v5839, 0
        %v5889 = vsel %vm2923, %v5840, 0
        %v5892 = vsel %vm2923, %v5841, 0
        %v5895 = vsel %vm2923, %v5842, 0
        %v5898 = vsel %vm2923, %v5843, 0
        %v5901 = vsel %vm2923, %v5844, 0
        %v5904 = vsel %vm2923, %v5845, 0
        %v5907 = vsel %vm2923, %v5846, 0
        %v5910 = vsel %vm2923, %v5847, 0
        %v5913 = vsel %vm2923, %v5848, 0
        %v5916 = vsel %vm2923, %v5849, 0
        %v5919 = vsel %vm2923, %v5850, 0
        %v5922 = vsel %vm2923, %v5851, 0
        %5924 = vmatprep.subr.bf16.mxu0 0
        %5925 = vmatpush1.bf16.msra.mxu0 %v5868
        %5926 = vmatprep.subr.bf16.mxu0 0
        %5927 = vmatpush1.bf16.msra.mxu0 %v5869
        %5928 = vmatprep.subr.bf16.mxu0 0
        %5929 = vmatpush1.bf16.msra.mxu0 %v5870
        %5930 = vmatprep.subr.bf16.mxu0 0
        %5931 = vmatpush1.bf16.msra.mxu0 %v5871
        %5932 = vmatprep.subr.bf16.mxu0 0
        %5933 = vmatpush1.bf16.msra.mxu0 0
        %5934 = vmatprep.subr.bf16.mxu0 0
        %5935 = vmatpush1.bf16.msra.mxu0 0
        %5936 = vmatprep.subr.bf16.mxu0 0
        %5937 = vmatpush1.bf16.msra.mxu0 0
        %5938 = vmatprep.subr.bf16.mxu0 0
        %5939 = vmatpush1.bf16.msra.mxu0 0
        %5940 = vmatprep.subr.bf16.mxu0 0
        %5941 = vmatpush1.bf16.msra.mxu0 0
        %5942 = vmatprep.subr.bf16.mxu0 0
        %5943 = vmatpush1.bf16.msra.mxu0 0
        %5944 = vmatprep.subr.bf16.mxu0 0
        %5945 = vmatpush1.bf16.msra.mxu0 0
        %5946 = vmatprep.subr.bf16.mxu0 0
        %5947 = vmatpush1.bf16.msra.mxu0 0
        %5948 = vmatprep.subr.bf16.mxu0 0
        %5949 = vmatpush1.bf16.msra.mxu0 0
        %5950 = vmatprep.subr.bf16.mxu0 0
        %5951 = vmatpush1.bf16.msra.mxu0 0
        %5952 = vmatprep.subr.bf16.mxu0 0
        %5953 = vmatpush1.bf16.msra.mxu0 0
        %5954 = vmatprep.subr.bf16.mxu0 0
        %5955 = vmatpush1.bf16.msra.mxu0 0
        %5956 = vmatprep.mubr.bf16.mxu0 0
        %5957 = vmatmul.mubr.bf16.gmra.mrb[0].mxu0 %v5877
        %v5958 = vpop.f32.mrb[0].mxu0
        %v5959 = vadd.f32 0.0, %v5958
        %v5960 = vpop.f32.mrb[0].mxu0
        %v5961 = vpop.f32.mrb[0].mxu0
        %v5962 = vadd.f32 0.0, %v5961
        %v5963 = vpop.f32.mrb[0].mxu0
        %5964 = vmatprep.mubr.bf16.mxu0 0
        %5965 = vmatmul.mubr.bf16.gmra.mrb[0].mxu0 %v5880
        %v5966 = vpop.f32.mrb[0].mxu0
        %v5967 = vadd.f32 0.0, %v5966
        %v5968 = vpop.f32.mrb[0].mxu0
        %v5969 = vpop.f32.mrb[0].mxu0
        %v5970 = vadd.f32 0.0, %v5969
        %v5971 = vpop.f32.mrb[0].mxu0
        %5972 = vmatprep.mubr.bf16.mxu0 0
        %5973 = vmatmul.mubr.bf16.gmra.mrb[0].mxu0 %v5883
        %v5974 = vpop.f32.mrb[0].mxu0
        %v5975 = vadd.f32 0.0, %v5974
        %v5976 = vpop.f32.mrb[0].mxu0
        %v5977 = vpop.f32.mrb[0].mxu0
        %v5978 = vadd.f32 0.0, %v5977
        %v5979 = vpop.f32.mrb[0].mxu0
        %5980 = vmatprep.mubr.bf16.mxu0 0
        %5981 = vmatmul.mubr.bf16.gmra.mrb[0].mxu0 %v5886
        %v5982 = vpop.f32.mrb[0].mxu0
        %v5983 = vadd.f32 0.0, %v5982
        %v5984 = vpop.f32.mrb[0].mxu0
        %v5985 = vpop.f32.mrb[0].mxu0
        %v5986 = vadd.f32 0.0, %v5985
        %v5987 = vpop.f32.mrb[0].mxu0
        %5988 = vmatprep.mubr.bf16.mxu0 0
        %5989 = vmatmul.mubr.bf16.gmra.mrb[0].mxu0 %v5889
        %v5990 = vpop.f32.mrb[0].mxu0
        %v5991 = vadd.f32 0.0, %v5990
        %v5992 = vpop.f32.mrb[0].mxu0
        %v5993 = vpop.f32.mrb[0].mxu0
        %v5994 = vadd.f32 0.0, %v5993
        %v5995 = vpop.f32.mrb[0].mxu0
        %5996 = vmatprep.mubr.bf16.mxu0 0
        %5997 = vmatmul.mubr.bf16.gmra.mrb[0].mxu0 %v5892
        %v5998 = vpop.f32.mrb[0].mxu0
        %v5999 = vadd.f32 0.0, %v5998
        %v6000 = vpop.f32.mrb[0].mxu0
        %v6001 = vpop.f32.mrb[0].mxu0
        %v6002 = vadd.f32 0.0, %v6001
        %v6003 = vpop.f32.mrb[0].mxu0
        %6004 = vmatprep.mubr.bf16.mxu0 0
        %6005 = vmatmul.mubr.bf16.gmra.mrb[0].mxu0 %v5895
        %v6006 = vpop.f32.mrb[0].mxu0
        %v6007 = vadd.f32 0.0, %v6006
        %v6008 = vpop.f32.mrb[0].mxu0
        %v6009 = vpop.f32.mrb[0].mxu0
        %v6010 = vadd.f32 0.0, %v6009
        %v6011 = vpop.f32.mrb[0].mxu0
        %6012 = vmatprep.mubr.bf16.mxu0 0
        %6013 = vmatmul.mubr.bf16.gmra.mrb[0].mxu0 %v5898
        %v6014 = vpop.f32.mrb[0].mxu0
        %v6015 = vadd.f32 0.0, %v6014
        %v6016 = vpop.f32.mrb[0].mxu0
        %v6017 = vpop.f32.mrb[0].mxu0
        %v6018 = vadd.f32 0.0, %v6017
        %v6019 = vpop.f32.mrb[0].mxu0
        %6020 = vmatprep.mubr.bf16.mxu0 0
        %6021 = vmatmul.mubr.bf16.gmra.mrb[0].mxu0 %v5901
        %v6022 = vpop.f32.mrb[0].mxu0
        %v6023 = vadd.f32 0.0, %v6022
        %v6024 = vpop.f32.mrb[0].mxu0
        %v6025 = vpop.f32.mrb[0].mxu0
        %v6026 = vadd.f32 0.0, %v6025
        %v6027 = vpop.f32.mrb[0].mxu0
        %6028 = vmatprep.mubr.bf16.mxu0 0
        %6029 = vmatmul.mubr.bf16.gmra.mrb[0].mxu0 %v5904
        %v6030 = vpop.f32.mrb[0].mxu0
        %v6031 = vadd.f32 0.0, %v6030
        %v6032 = vpop.f32.mrb[0].mxu0
        %v6033 = vpop.f32.mrb[0].mxu0
        %v6034 = vadd.f32 0.0, %v6033
        %v6035 = vpop.f32.mrb[0].mxu0
        %6036 = vmatprep.mubr.bf16.mxu0 0
        %6037 = vmatmul.mubr.bf16.gmra.mrb[0].mxu0 %v5907
        %v6038 = vpop.f32.mrb[0].mxu0
        %v6039 = vadd.f32 0.0, %v6038
        %v6040 = vpop.f32.mrb[0].mxu0
        %v6041 = vpop.f32.mrb[0].mxu0
        %v6042 = vadd.f32 0.0, %v6041
        %v6043 = vpop.f32.mrb[0].mxu0
        %6044 = vmatprep.mubr.bf16.mxu0 0
        %6045 = vmatmul.mubr.bf16.gmra.mrb[0].mxu0 %v5910
        %v6046 = vpop.f32.mrb[0].mxu0
        %v6047 = vadd.f32 0.0, %v6046
        %v6048 = vpop.f32.mrb[0].mxu0
        %v6049 = vpop.f32.mrb[0].mxu0
        %v6050 = vadd.f32 0.0, %v6049
        %v6051 = vpop.f32.mrb[0].mxu0
        %6052 = vmatprep.mubr.bf16.mxu0 0
        %6053 = vmatmul.mubr.bf16.gmra.mrb[0].mxu0 %v5913
        %v6054 = vpop.f32.mrb[0].mxu0
        %v6055 = vadd.f32 0.0, %v6054
        %v6056 = vpop.f32.mrb[0].mxu0
        %v6057 = vpop.f32.mrb[0].mxu0
        %v6058 = vadd.f32 0.0, %v6057
        %v6059 = vpop.f32.mrb[0].mxu0
        %6060 = vmatprep.mubr.bf16.mxu0 0
        %6061 = vmatmul.mubr.bf16.gmra.mrb[0].mxu0 %v5916
        %v6062 = vpop.f32.mrb[0].mxu0
        %v6063 = vadd.f32 0.0, %v6062
        %v6064 = vpop.f32.mrb[0].mxu0
        %v6065 = vpop.f32.mrb[0].mxu0
        %v6066 = vadd.f32 0.0, %v6065
        %v6067 = vpop.f32.mrb[0].mxu0
        %6068 = vmatprep.mubr.bf16.mxu0 0
        %6069 = vmatmul.mubr.bf16.gmra.mrb[0].mxu0 %v5919
        %v6070 = vpop.f32.mrb[0].mxu0
        %v6071 = vadd.f32 0.0, %v6070
        %v6072 = vpop.f32.mrb[0].mxu0
        %v6073 = vpop.f32.mrb[0].mxu0
        %v6074 = vadd.f32 0.0, %v6073
        %v6075 = vpop.f32.mrb[0].mxu0
        %6076 = vmatprep.mubr.bf16.mxu0 0
        %6077 = vmatmul.mubr.bf16.gmra.mrb[0].mxu0 %v5922
        %v6078 = vpop.f32.mrb[0].mxu0
        %v6079 = vadd.f32 0.0, %v6078
        %v6080 = vpop.f32.mrb[0].mxu0
        %v6081 = vpop.f32.mrb[0].mxu0
        %v6082 = vadd.f32 0.0, %v6081
        %v6083 = vpop.f32.mrb[0].mxu0
        %6084 = vdwg.mxu0
        %v6085 = vadd.f32 %v5763, %v5959
        %v6086 = vadd.f32 %v5764, %v5962
        %v6087 = vadd.f32 %v5765, %v5967
        %v6088 = vadd.f32 %v5766, %v5970
        %v6089 = vadd.f32 %v5767, %v5975
        %v6090 = vadd.f32 %v5768, %v5978
        %v6091 = vadd.f32 %v5769, %v5983
        %v6092 = vadd.f32 %v5770, %v5986
        %v6093 = vadd.f32 %v5771, %v5991
        %v6094 = vadd.f32 %v5772, %v5994
        %v6095 = vadd.f32 %v5773, %v5999
        %v6096 = vadd.f32 %v5774, %v6002
        %v6097 = vadd.f32 %v5775, %v6007
        %v6098 = vadd.f32 %v5776, %v6010
        %v6099 = vadd.f32 %v5777, %v6015
        %v6100 = vadd.f32 %v5778, %v6018
        %v6101 = vadd.f32 %v5779, %v6023
        %v6102 = vadd.f32 %v5780, %v6026
        %v6103 = vadd.f32 %v5781, %v6031
        %v6104 = vadd.f32 %v5782, %v6034
        %v6105 = vadd.f32 %v5783, %v6039
        %v6106 = vadd.f32 %v5784, %v6042
        %v6107 = vadd.f32 %v5785, %v6047
        %v6108 = vadd.f32 %v5786, %v6050
        %v6109 = vadd.f32 %v5787, %v6055
        %v6110 = vadd.f32 %v5788, %v6058
        %v6111 = vadd.f32 %v5789, %v6063
        %v6112 = vadd.f32 %v5790, %v6066
        %v6113 = vadd.f32 %v5791, %v6071
        %v6114 = vadd.f32 %v5792, %v6074
        %v6115 = vadd.f32 %v5793, %v6079
        %v6116 = vadd.f32 %v5794, %v6082
        %v6117 = vadd.f32 %v6085, %v6086
        %v6118 = vadd.f32 %v6117, %v6087
        %v6119 = vadd.f32 %v6118, %v6088
        %v6120 = vadd.f32 %v6119, %v6089
        %v6121 = vadd.f32 %v6120, %v6090
        %v6122 = vadd.f32 %v6121, %v6091
        %v6123 = vadd.f32 %v6122, %v6092
        %v6124 = vadd.f32 %v6123, %v6093
        %v6125 = vadd.f32 %v6124, %v6094
        %v6126 = vadd.f32 %v6125, %v6095
        %v6127 = vadd.f32 %v6126, %v6096
        %v6128 = vadd.f32 %v6127, %v6097
        %v6129 = vadd.f32 %v6128, %v6098
        %v6130 = vadd.f32 %v6129, %v6099
        %v6131 = vadd.f32 %v6130, %v6100
        %v6132 = vadd.f32 %v6131, %v6101
        %v6133 = vadd.f32 %v6132, %v6102
        %v6134 = vadd.f32 %v6133, %v6103
        %v6135 = vadd.f32 %v6134, %v6104
        %v6136 = vadd.f32 %v6135, %v6105
        %v6137 = vadd.f32 %v6136, %v6106
        %v6138 = vadd.f32 %v6137, %v6107
        %v6139 = vadd.f32 %v6138, %v6108
        %v6140 = vadd.f32 %v6139, %v6109
        %v6141 = vadd.f32 %v6140, %v6110
        %v6142 = vadd.f32 %v6141, %v6111
        %v6143 = vadd.f32 %v6142, %v6112
        %v6144 = vadd.f32 %v6143, %v6113
        %v6145 = vadd.f32 %v6144, %v6114
        %v6146 = vadd.f32 %v6145, %v6115
        %v6147 = vadd.f32 %v6146, %v6116
        %v6148 = vrot.slane %v6147, 4
        %v6149 = vadd.f32 %v6147, %v6148
        %v6150 = vrot.slane %v6149, 2
        %v6151 = vadd.f32 %v6149, %v6150
        %v6152 = vrot.slane %v6151, 1
        %v6153 = vadd.f32 %v6151, %v6152
        %v6154 = vmul.f32 %v6153, %v2993
        %v6155 = vsub.f32 %v6085, %v6154
        %v6156 = vsub.f32 %v6086, %v6154
        %v6157 = vsub.f32 %v6087, %v6154
        %v6158 = vsub.f32 %v6088, %v6154
        %v6159 = vsub.f32 %v6089, %v6154
        %v6160 = vsub.f32 %v6090, %v6154
        %v6161 = vsub.f32 %v6091, %v6154
        %v6162 = vsub.f32 %v6092, %v6154
        %v6163 = vsub.f32 %v6093, %v6154
        %v6164 = vsub.f32 %v6094, %v6154
        %v6165 = vsub.f32 %v6095, %v6154
        %v6166 = vsub.f32 %v6096, %v6154
        %v6167 = vsub.f32 %v6097, %v6154
        %v6168 = vsub.f32 %v6098, %v6154
        %v6169 = vsub.f32 %v6099, %v6154
        %v6170 = vsub.f32 %v6100, %v6154
        %v6171 = vsub.f32 %v6101, %v6154
        %v6172 = vsub.f32 %v6102, %v6154
        %v6173 = vsub.f32 %v6103, %v6154
        %v6174 = vsub.f32 %v6104, %v6154
        %v6175 = vsub.f32 %v6105, %v6154
        %v6176 = vsub.f32 %v6106, %v6154
        %v6177 = vsub.f32 %v6107, %v6154
        %v6178 = vsub.f32 %v6108, %v6154
        %v6179 = vsub.f32 %v6109, %v6154
        %v6180 = vsub.f32 %v6110, %v6154
        %v6181 = vsub.f32 %v6111, %v6154
        %v6182 = vsub.f32 %v6112, %v6154
        %v6183 = vsub.f32 %v6113, %v6154
        %v6184 = vsub.f32 %v6114, %v6154
        %v6185 = vsub.f32 %v6115, %v6154
        %v6186 = vsub.f32 %v6116, %v6154
        %v6187 = vmul.f32 %v6155, %v6155
        %v6188 = vmul.f32 %v6156, %v6156
        %v6189 = vmul.f32 %v6157, %v6157
        %v6190 = vmul.f32 %v6158, %v6158
        %v6191 = vmul.f32 %v6159, %v6159
        %v6192 = vmul.f32 %v6160, %v6160
        %v6193 = vmul.f32 %v6161, %v6161
        %v6194 = vmul.f32 %v6162, %v6162
        %v6195 = vmul.f32 %v6163, %v6163
        %v6196 = vmul.f32 %v6164, %v6164
        %v6197 = vmul.f32 %v6165, %v6165
        %v6198 = vmul.f32 %v6166, %v6166
        %v6199 = vmul.f32 %v6167, %v6167
        %v6200 = vmul.f32 %v6168, %v6168
        %v6201 = vmul.f32 %v6169, %v6169
        %v6202 = vmul.f32 %v6170, %v6170
        %v6203 = vmul.f32 %v6171, %v6171
        %v6204 = vmul.f32 %v6172, %v6172
        %v6205 = vmul.f32 %v6173, %v6173
        %v6206 = vmul.f32 %v6174, %v6174
        %v6207 = vmul.f32 %v6175, %v6175
        %v6208 = vmul.f32 %v6176, %v6176
        %v6209 = vmul.f32 %v6177, %v6177
        %v6210 = vmul.f32 %v6178, %v6178
        %v6211 = vmul.f32 %v6179, %v6179
        %v6212 = vmul.f32 %v6180, %v6180
        %v6213 = vmul.f32 %v6181, %v6181
        %v6214 = vmul.f32 %v6182, %v6182
        %v6215 = vmul.f32 %v6183, %v6183
        %v6216 = vmul.f32 %v6184, %v6184
        %v6217 = vmul.f32 %v6185, %v6185
        %v6218 = vmul.f32 %v6186, %v6186
        %v6219 = vadd.f32 %v6187, %v6188
        %v6220 = vadd.f32 %v6219, %v6189
        %v6221 = vadd.f32 %v6220, %v6190
        %v6222 = vadd.f32 %v6221, %v6191
        %v6223 = vadd.f32 %v6222, %v6192
        %v6224 = vadd.f32 %v6223, %v6193
        %v6225 = vadd.f32 %v6224, %v6194
        %v6226 = vadd.f32 %v6225, %v6195
        %v6227 = vadd.f32 %v6226, %v6196
        %v6228 = vadd.f32 %v6227, %v6197
        %v6229 = vadd.f32 %v6228, %v6198
        %v6230 = vadd.f32 %v6229, %v6199
        %v6231 = vadd.f32 %v6230, %v6200
        %v6232 = vadd.f32 %v6231, %v6201
        %v6233 = vadd.f32 %v6232, %v6202
        %v6234 = vadd.f32 %v6233, %v6203
        %v6235 = vadd.f32 %v6234, %v6204
        %v6236 = vadd.f32 %v6235, %v6205
        %v6237 = vadd.f32 %v6236, %v6206
        %v6238 = vadd.f32 %v6237, %v6207
        %v6239 = vadd.f32 %v6238, %v6208
        %v6240 = vadd.f32 %v6239, %v6209
        %v6241 = vadd.f32 %v6240, %v6210
        %v6242 = vadd.f32 %v6241, %v6211
        %v6243 = vadd.f32 %v6242, %v6212
        %v6244 = vadd.f32 %v6243, %v6213
        %v6245 = vadd.f32 %v6244, %v6214
        %v6246 = vadd.f32 %v6245, %v6215
        %v6247 = vadd.f32 %v6246, %v6216
        %v6248 = vadd.f32 %v6247, %v6217
        %v6249 = vadd.f32 %v6248, %v6218
        %v6250 = vrot.slane %v6249, 4
        %v6251 = vadd.f32 %v6249, %v6250
        %v6252 = vrot.slane %v6251, 2
        %v6253 = vadd.f32 %v6251, %v6252
        %v6254 = vrot.slane %v6253, 1
        %v6255 = vadd.f32 %v6253, %v6254
        %v6256 = vmul.f32 %v6255, %v2993
        %v6257 = vadd.f32 %v6256, 1e-05
        %v6258 = vrsqrt.pop %v6257
        %v6259 = vmul.f32 %v6155, %v6258
        %v6260 = vmul.f32 %v6156, %v6258
        %v6261 = vmul.f32 %v6157, %v6258
        %v6262 = vmul.f32 %v6158, %v6258
        %v6263 = vmul.f32 %v6159, %v6258
        %v6264 = vmul.f32 %v6160, %v6258
        %v6265 = vmul.f32 %v6161, %v6258
        %v6266 = vmul.f32 %v6162, %v6258
        %v6267 = vmul.f32 %v6163, %v6258
        %v6268 = vmul.f32 %v6164, %v6258
        %v6269 = vmul.f32 %v6165, %v6258
        %v6270 = vmul.f32 %v6166, %v6258
        %v6271 = vmul.f32 %v6167, %v6258
        %v6272 = vmul.f32 %v6168, %v6258
        %v6273 = vmul.f32 %v6169, %v6258
        %v6274 = vmul.f32 %v6170, %v6258
        %v6275 = vmul.f32 %v6171, %v6258
        %v6276 = vmul.f32 %v6172, %v6258
        %v6277 = vmul.f32 %v6173, %v6258
        %v6278 = vmul.f32 %v6174, %v6258
        %v6279 = vmul.f32 %v6175, %v6258
        %v6280 = vmul.f32 %v6176, %v6258
        %v6281 = vmul.f32 %v6177, %v6258
        %v6282 = vmul.f32 %v6178, %v6258
        %v6283 = vmul.f32 %v6179, %v6258
        %v6284 = vmul.f32 %v6180, %v6258
        %v6285 = vmul.f32 %v6181, %v6258
        %v6286 = vmul.f32 %v6182, %v6258
        %v6287 = vmul.f32 %v6183, %v6258
        %v6288 = vmul.f32 %v6184, %v6258
        %v6289 = vmul.f32 %v6185, %v6258
        %v6290 = vmul.f32 %v6186, %v6258
        %v6291 = vmax.f32 %v6259, 0.0
        %v6292 = vmax.f32 %v6260, 0.0
        %v6293 = vmax.f32 %v6261, 0.0
        %v6294 = vmax.f32 %v6262, 0.0
        %v6295 = vmax.f32 %v6263, 0.0
        %v6296 = vmax.f32 %v6264, 0.0
        %v6297 = vmax.f32 %v6265, 0.0
        %v6298 = vmax.f32 %v6266, 0.0
        %v6299 = vmax.f32 %v6267, 0.0
        %v6300 = vmax.f32 %v6268, 0.0
        %v6301 = vmax.f32 %v6269, 0.0
        %v6302 = vmax.f32 %v6270, 0.0
        %v6303 = vmax.f32 %v6271, 0.0
        %v6304 = vmax.f32 %v6272, 0.0
        %v6305 = vmax.f32 %v6273, 0.0
        %v6306 = vmax.f32 %v6274, 0.0
        %v6307 = vmax.f32 %v6275, 0.0
        %v6308 = vmax.f32 %v6276, 0.0
        %v6309 = vmax.f32 %v6277, 0.0
        %v6310 = vmax.f32 %v6278, 0.0
        %v6311 = vmax.f32 %v6279, 0.0
        %v6312 = vmax.f32 %v6280, 0.0
        %v6313 = vmax.f32 %v6281, 0.0
        %v6314 = vmax.f32 %v6282, 0.0
        %v6315 = vmax.f32 %v6283, 0.0
        %v6316 = vmax.f32 %v6284, 0.0
        %v6317 = vmax.f32 %v6285, 0.0
        %v6318 = vmax.f32 %v6286, 0.0
        %v6319 = vmax.f32 %v6287, 0.0
        %v6320 = vmax.f32 %v6288, 0.0
        %v6321 = vmax.f32 %v6289, 0.0
        %v6322 = vmax.f32 %v6290, 0.0
        %6323 = vst [vmem:[%s273] sm:$0xff] %v6291
        %6324 = vst [vmem:[%s273 + $0x8] sm:$0xff] %v6292
        %6325 = vst [vmem:[%s273 + $0x10] sm:$0xff] %v6293
        %6326 = vst [vmem:[%s273 + $0x18] sm:$0xff] %v6294
        %6327 = vst [vmem:[%s273 + $0x20] sm:$0xff] %v6295
        %6328 = vst [vmem:[%s273 + $0x28] sm:$0xff] %v6296
        %6329 = vst [vmem:[%s273 + $0x30] sm:$0xff] %v6297
        %6330 = vst [vmem:[%s273 + $0x38] sm:$0xff] %v6298
        %6331 = vst [vmem:[%s273 + $0x40] sm:$0xff] %v6299
        %6332 = vst [vmem:[%s273 + $0x48] sm:$0xff] %v6300
        %6333 = vst [vmem:[%s273 + $0x50] sm:$0xff] %v6301
        %6334 = vst [vmem:[%s273 + $0x58] sm:$0xff] %v6302
        %6335 = vst [vmem:[%s273 + $0x60] sm:$0xff] %v6303
        %6336 = vst [vmem:[%s273 + $0x68] sm:$0xff] %v6304
        %6337 = vst [vmem:[%s273 + $0x70] sm:$0xff] %v6305
        %6338 = vst [vmem:[%s273 + $0x78] sm:$0xff] %v6306
        %6339 = vst [vmem:[%s273 + $0x80] sm:$0xff] %v6307
        %6340 = vst [vmem:[%s273 + $0x88] sm:$0xff] %v6308
        %6341 = vst [vmem:[%s273 + $0x90] sm:$0xff] %v6309
        %6342 = vst [vmem:[%s273 + $0x98] sm:$0xff] %v6310
        %6343 = vst [vmem:[%s273 + $0xa0] sm:$0xff] %v6311
        %6344 = vst [vmem:[%s273 + $0xa8] sm:$0xff] %v6312
        %6345 = vst [vmem:[%s273 + $0xb0] sm:$0xff] %v6313
        %6346 = vst [vmem:[%s273 + $0xb8] sm:$0xff] %v6314
        %6347 = vst [vmem:[%s273 + $0xc0] sm:$0xff] %v6315
        %6348 = vst [vmem:[%s273 + $0xc8] sm:$0xff] %v6316
        %6349 = vst [vmem:[%s273 + $0xd0] sm:$0xff] %v6317
        %6350 = vst [vmem:[%s273 + $0xd8] sm:$0xff] %v6318
        %6351 = vst [vmem:[%s273 + $0xe0] sm:$0xff] %v6319
        %6352 = vst [vmem:[%s273 + $0xe8] sm:$0xff] %v6320
        %6353 = vst [vmem:[%s273 + $0xf0] sm:$0xff] %v6321
        %6354 = vst [vmem:[%s273 + $0xf8] sm:$0xff] %v6322
        %6355 = vst [vmem:[#allocation3] sm:$0xff] 0.0
        %6356 = vst [vmem:[#allocation3 + $0x8] sm:$0xff] 0.0
        %6357 = vst [vmem:[#allocation3 + $0x10] sm:$0x3] 0.0
        %6358 = vst [vmem:[#allocation3 + $0x18] sm:$0xff] 0.0
        %6359 = vst [vmem:[#allocation3 + $0x20] sm:$0xff] 0.0
        %6360 = vst [vmem:[#allocation3 + $0x28] sm:$0x3] 0.0
        %6361 = vst [vmem:[#allocation3 + $0x30] sm:$0xff] 0.0
        %6362 = vst [vmem:[#allocation3 + $0x38] sm:$0xff] 0.0
        %6363 = vst [vmem:[#allocation3 + $0x40] sm:$0x3] 0.0
        %6364 = vst [vmem:[#allocation3 + $0x48] sm:$0xff] 0.0
        %6365 = vst [vmem:[#allocation3 + $0x50] sm:$0xff] 0.0
        %6366 = vst [vmem:[#allocation3 + $0x58] sm:$0x3] 0.0
        %6367 = vst [vmem:[#allocation3 + $0x60] sm:$0xff] 0.0
        %6368 = vst [vmem:[#allocation3 + $0x68] sm:$0xff] 0.0
        %6369 = vst [vmem:[#allocation3 + $0x70] sm:$0x3] 0.0
        %6370 = vst [vmem:[#allocation3 + $0x78] sm:$0xff] 0.0
        %6371 = vst [vmem:[#allocation3 + $0x80] sm:$0xff] 0.0
        %6372 = vst [vmem:[#allocation3 + $0x88] sm:$0x3] 0.0
        %6373 = vst [vmem:[#allocation3 + $0x90] sm:$0xff] 0.0
        %6374 = vst [vmem:[#allocation3 + $0x98] sm:$0xff] 0.0
        %6375 = vst [vmem:[#allocation3 + $0xa0] sm:$0x3] 0.0
        %6376 = vst [vmem:[#allocation3 + $0xa8] sm:$0xff] 0.0
        %6377 = vst [vmem:[#allocation3 + $0xb0] sm:$0xff] 0.0
        %6378 = vst [vmem:[#allocation3 + $0xb8] sm:$0x3] 0.0
        %6379 = vst [vmem:[#allocation3 + $0xc0] sm:$0xff] 0.0
        %6380 = vst [vmem:[#allocation3 + $0xc8] sm:$0xff] 0.0
        %6381 = vst [vmem:[#allocation3 + $0xd0] sm:$0x3] 0.0
        %6382 = vst [vmem:[#allocation3 + $0xd8] sm:$0xff] 0.0
        %6383 = vst [vmem:[#allocation3 + $0xe0] sm:$0xff] 0.0
        %6384 = vst [vmem:[#allocation3 + $0xe8] sm:$0x3] 0.0
        %6385 = vst [vmem:[#allocation3 + $0xf0] sm:$0xff] 0.0
        %6386 = vst [vmem:[#allocation3 + $0xf8] sm:$0xff] 0.0
        %6387 = vst [vmem:[#allocation3 + $0x100] sm:$0x3] 0.0
        %6388 = vst [vmem:[#allocation3 + $0x108] sm:$0xff] 0.0
        %6389 = vst [vmem:[#allocation3 + $0x110] sm:$0xff] 0.0
        %6390 = vst [vmem:[#allocation3 + $0x118] sm:$0x3] 0.0
        %6391 = vst [vmem:[#allocation3 + $0x120] sm:$0xff] 0.0
        %6392 = vst [vmem:[#allocation3 + $0x128] sm:$0xff] 0.0
        %6393 = vst [vmem:[#allocation3 + $0x130] sm:$0x3] 0.0
        %6394 = vst [vmem:[#allocation3 + $0x138] sm:$0xff] 0.0
        %6395 = vst [vmem:[#allocation3 + $0x140] sm:$0xff] 0.0
        %6396 = vst [vmem:[#allocation3 + $0x148] sm:$0x3] 0.0
        %6397 = vst [vmem:[#allocation3 + $0x150] sm:$0xff] 0.0
        %6398 = vst [vmem:[#allocation3 + $0x158] sm:$0xff] 0.0
        %6399 = vst [vmem:[#allocation3 + $0x160] sm:$0x3] 0.0
        %6400 = vst [vmem:[#allocation3 + $0x168] sm:$0xff] 0.0
        %6401 = vst [vmem:[#allocation3 + $0x170] sm:$0xff] 0.0
        %6402 = vst [vmem:[#allocation3 + $0x178] sm:$0x3] 0.0
        %6403 = vst [vmem:[#allocation3 + $0x180] sm:$0xff] 0.0
        %6404 = vst [vmem:[#allocation3 + $0x188] sm:$0xff] 0.0
        %6405 = vst [vmem:[#allocation3 + $0x190] sm:$0x3] 0.0
        %6406 = vst [vmem:[#allocation3 + $0x198] sm:$0xff] 0.0
        %6407 = vst [vmem:[#allocation3 + $0x1a0] sm:$0xff] 0.0
        %6408 = vst [vmem:[#allocation3 + $0x1a8] sm:$0x3] 0.0
        %s6409 = scalar_lea.vmem [#allocation3], 24
        %6410 = vst [vmem:[%s6409 + $0x1] sm:$0xff] %v6291
        %6411 = vst [vmem:[%s6409 + $0x9] sm:$0xff] %v6292
        %6412 = vst [vmem:[%s6409 + $0x19] sm:$0xff] %v6293
        %6413 = vst [vmem:[%s6409 + $0x21] sm:$0xff] %v6294
        %6414 = vst [vmem:[%s6409 + $0x31] sm:$0xff] %v6295
        %6415 = vst [vmem:[%s6409 + $0x39] sm:$0xff] %v6296
        %6416 = vst [vmem:[%s6409 + $0x49] sm:$0xff] %v6297
        %6417 = vst [vmem:[%s6409 + $0x51] sm:$0xff] %v6298
        %6418 = vst [vmem:[%s6409 + $0x61] sm:$0xff] %v6299
        %6419 = vst [vmem:[%s6409 + $0x69] sm:$0xff] %v6300
        %6420 = vst [vmem:[%s6409 + $0x79] sm:$0xff] %v6301
        %6421 = vst [vmem:[%s6409 + $0x81] sm:$0xff] %v6302
        %6422 = vst [vmem:[%s6409 + $0x91] sm:$0xff] %v6303
        %6423 = vst [vmem:[%s6409 + $0x99] sm:$0xff] %v6304
        %6424 = vst [vmem:[%s6409 + $0xa9] sm:$0xff] %v6305
        %6425 = vst [vmem:[%s6409 + $0xb1] sm:$0xff] %v6306
        %6426 = vst [vmem:[%s6409 + $0xc1] sm:$0xff] %v6307
        %6427 = vst [vmem:[%s6409 + $0xc9] sm:$0xff] %v6308
        %6428 = vst [vmem:[%s6409 + $0xd9] sm:$0xff] %v6309
        %6429 = vst [vmem:[%s6409 + $0xe1] sm:$0xff] %v6310
        %6430 = vst [vmem:[%s6409 + $0xf1] sm:$0xff] %v6311
        %6431 = vst [vmem:[%s6409 + $0xf9] sm:$0xff] %v6312
        %6432 = vst [vmem:[%s6409 + $0x109] sm:$0xff] %v6313
        %6433 = vst [vmem:[%s6409 + $0x111] sm:$0xff] %v6314
        %6434 = vst [vmem:[%s6409 + $0x121] sm:$0xff] %v6315
        %6435 = vst [vmem:[%s6409 + $0x129] sm:$0xff] %v6316
        %6436 = vst [vmem:[%s6409 + $0x139] sm:$0xff] %v6317
        %6437 = vst [vmem:[%s6409 + $0x141] sm:$0xff] %v6318
        %6438 = vst [vmem:[%s6409 + $0x151] sm:$0xff] %v6319
        %6439 = vst [vmem:[%s6409 + $0x159] sm:$0xff] %v6320
        %6440 = vst [vmem:[%s6409 + $0x169] sm:$0xff] %v6321
        %6441 = vst [vmem:[%s6409 + $0x171] sm:$0xff] %v6322
        %v6442 = vld [vmem:[#allocation3] sm:$0xff]
        %v6443 = vld [vmem:[#allocation3 + $0x8] sm:$0xff]
        %v6444 = vld [vmem:[#allocation3 + $0x18] sm:$0xff]
        %v6445 = vld [vmem:[#allocation3 + $0x20] sm:$0xff]
        %v6446 = vld [vmem:[#allocation3 + $0x30] sm:$0xff]
        %v6447 = vld [vmem:[#allocation3 + $0x38] sm:$0xff]
        %v6448 = vld [vmem:[#allocation3 + $0x48] sm:$0xff]
        %v6449 = vld [vmem:[#allocation3 + $0x50] sm:$0xff]
        %v6450 = vld [vmem:[#allocation3 + $0x60] sm:$0xff]
        %v6451 = vld [vmem:[#allocation3 + $0x68] sm:$0xff]
        %v6452 = vld [vmem:[#allocation3 + $0x78] sm:$0xff]
        %v6453 = vld [vmem:[#allocation3 + $0x80] sm:$0xff]
        %v6454 = vld [vmem:[#allocation3 + $0x90] sm:$0xff]
        %v6455 = vld [vmem:[#allocation3 + $0x98] sm:$0xff]
        %v6456 = vld [vmem:[#allocation3 + $0xa8] sm:$0xff]
        %v6457 = vld [vmem:[#allocation3 + $0xb0] sm:$0xff]
        %v6458 = vld [vmem:[#allocation3 + $0xc0] sm:$0xff]
        %v6459 = vld [vmem:[#allocation3 + $0xc8] sm:$0xff]
        %v6460 = vld [vmem:[#allocation3 + $0xd8] sm:$0xff]
        %v6461 = vld [vmem:[#allocation3 + $0xe0] sm:$0xff]
        %v6462 = vld [vmem:[#allocation3 + $0xf0] sm:$0xff]
        %v6463 = vld [vmem:[#allocation3 + $0xf8] sm:$0xff]
        %v6464 = vld [vmem:[#allocation3 + $0x108] sm:$0xff]
        %v6465 = vld [vmem:[#allocation3 + $0x110] sm:$0xff]
        %v6466 = vld [vmem:[#allocation3 + $0x120] sm:$0xff]
        %v6467 = vld [vmem:[#allocation3 + $0x128] sm:$0xff]
        %v6468 = vld [vmem:[#allocation3 + $0x138] sm:$0xff]
        %v6469 = vld [vmem:[#allocation3 + $0x140] sm:$0xff]
        %v6470 = vld [vmem:[#allocation3 + $0x150] sm:$0xff]
        %v6471 = vld [vmem:[#allocation3 + $0x158] sm:$0xff]
        %v6472 = vld [vmem:[#allocation3 + $0x168] sm:$0xff]
        %v6473 = vld [vmem:[#allocation3 + $0x170] sm:$0xff]
        %v6474 = vld [vmem:[%s3] sm:$0xf]
        %v6475 = vld [vmem:[%s3 + $0x4] sm:$0xf]
        %v6476 = vld [vmem:[%s3 + $0x8] sm:$0xf]
        %v6477 = vld [vmem:[%s3 + $0xc] sm:$0xf]
        %v6478 = vld [vmem:[%s3 + $0x10] sm:$0xf]
        %v6479 = vld [vmem:[%s3 + $0x14] sm:$0xf]
        %v6480 = vld [vmem:[%s3 + $0x18] sm:$0xf]
        %v6481 = vld [vmem:[%s3 + $0x1c] sm:$0xf]
        %v6482 = vld [vmem:[%s3 + $0x20] sm:$0xf]
        %v6483 = vld [vmem:[%s3 + $0x24] sm:$0xf]
        %v6484 = vld [vmem:[%s3 + $0x28] sm:$0xf]
        %v6485 = vld [vmem:[%s3 + $0x2c] sm:$0xf]
        %v6486 = vld [vmem:[%s3 + $0x30] sm:$0xf]
        %v6487 = vld [vmem:[%s3 + $0x34] sm:$0xf]
        %v6488 = vld [vmem:[%s3 + $0x38] sm:$0xf]
        %v6489 = vld [vmem:[%s3 + $0x3c] sm:$0xf]
        %v6490 = vpack.c.bf16 %v6443, %v6442
        %v6491 = vpack.c.bf16 %v6445, %v6444
        %v6492 = vpack.c.bf16 %v6447, %v6446
        %v6493 = vpack.c.bf16 %v6449, %v6448
        %v6494 = vpack.c.bf16 %v6451, %v6450
        %v6495 = vpack.c.bf16 %v6453, %v6452
        %v6496 = vpack.c.bf16 %v6455, %v6454
        %v6497 = vpack.c.bf16 %v6457, %v6456
        %v6498 = vpack.c.bf16 %v6459, %v6458
        %v6499 = vpack.c.bf16 %v6461, %v6460
        %v6500 = vpack.c.bf16 %v6463, %v6462
        %v6501 = vpack.c.bf16 %v6465, %v6464
        %v6502 = vpack.c.bf16 %v6467, %v6466
        %v6503 = vpack.c.bf16 %v6469, %v6468
        %v6504 = vpack.c.bf16 %v6471, %v6470
        %v6505 = vpack.c.bf16 %v6473, %v6472
        %v6506 = vld [vmem:[#allocation3 + $0x1] sm:$0xff]
        %v6507 = vld [vmem:[#allocation3 + $0x9] sm:$0xff]
        %v6508 = vld [vmem:[#allocation3 + $0x19] sm:$0xff]
        %v6509 = vld [vmem:[#allocation3 + $0x21] sm:$0xff]
        %v6510 = vld [vmem:[#allocation3 + $0x31] sm:$0xff]
        %v6511 = vld [vmem:[#allocation3 + $0x39] sm:$0xff]
        %v6512 = vld [vmem:[#allocation3 + $0x49] sm:$0xff]
        %v6513 = vld [vmem:[#allocation3 + $0x51] sm:$0xff]
        %v6514 = vld [vmem:[#allocation3 + $0x61] sm:$0xff]
        %v6515 = vld [vmem:[#allocation3 + $0x69] sm:$0xff]
        %v6516 = vld [vmem:[#allocation3 + $0x79] sm:$0xff]
        %v6517 = vld [vmem:[#allocation3 + $0x81] sm:$0xff]
        %v6518 = vld [vmem:[#allocation3 + $0x91] sm:$0xff]
        %v6519 = vld [vmem:[#allocation3 + $0x99] sm:$0xff]
        %v6520 = vld [vmem:[#allocation3 + $0xa9] sm:$0xff]
        %v6521 = vld [vmem:[#allocation3 + $0xb1] sm:$0xff]
        %v6522 = vld [vmem:[#allocation3 + $0xc1] sm:$0xff]
        %v6523 = vld [vmem:[#allocation3 + $0xc9] sm:$0xff]
        %v6524 = vld [vmem:[#allocation3 + $0xd9] sm:$0xff]
        %v6525 = vld [vmem:[#allocation3 + $0xe1] sm:$0xff]
        %v6526 = vld [vmem:[#allocation3 + $0xf1] sm:$0xff]
        %v6527 = vld [vmem:[#allocation3 + $0xf9] sm:$0xff]
        %v6528 = vld [vmem:[#allocation3 + $0x109] sm:$0xff]
        %v6529 = vld [vmem:[#allocation3 + $0x111] sm:$0xff]
        %v6530 = vld [vmem:[#allocation3 + $0x121] sm:$0xff]
        %v6531 = vld [vmem:[#allocation3 + $0x129] sm:$0xff]
        %v6532 = vld [vmem:[#allocation3 + $0x139] sm:$0xff]
        %v6533 = vld [vmem:[#allocation3 + $0x141] sm:$0xff]
        %v6534 = vld [vmem:[#allocation3 + $0x151] sm:$0xff]
        %v6535 = vld [vmem:[#allocation3 + $0x159] sm:$0xff]
        %v6536 = vld [vmem:[#allocation3 + $0x169] sm:$0xff]
        %v6537 = vld [vmem:[#allocation3 + $0x171] sm:$0xff]
        %s6538 = scalar_lea.vmem %s3, 64
        %v6539 = vld [vmem:[%s6538] sm:$0xf]
        %v6540 = vld [vmem:[%s6538 + $0x4] sm:$0xf]
        %v6541 = vld [vmem:[%s6538 + $0x8] sm:$0xf]
        %v6542 = vld [vmem:[%s6538 + $0xc] sm:$0xf]
        %v6543 = vld [vmem:[%s6538 + $0x10] sm:$0xf]
        %v6544 = vld [vmem:[%s6538 + $0x14] sm:$0xf]
        %v6545 = vld [vmem:[%s6538 + $0x18] sm:$0xf]
        %v6546 = vld [vmem:[%s6538 + $0x1c] sm:$0xf]
        %v6547 = vld [vmem:[%s6538 + $0x20] sm:$0xf]
        %v6548 = vld [vmem:[%s6538 + $0x24] sm:$0xf]
        %v6549 = vld [vmem:[%s6538 + $0x28] sm:$0xf]
        %v6550 = vld [vmem:[%s6538 + $0x2c] sm:$0xf]
        %v6551 = vld [vmem:[%s6538 + $0x30] sm:$0xf]
        %v6552 = vld [vmem:[%s6538 + $0x34] sm:$0xf]
        %v6553 = vld [vmem:[%s6538 + $0x38] sm:$0xf]
        %v6554 = vld [vmem:[%s6538 + $0x3c] sm:$0xf]
        %v6555 = vpack.c.bf16 %v6507, %v6506
        %v6556 = vpack.c.bf16 %v6509, %v6508
        %v6557 = vpack.c.bf16 %v6511, %v6510
        %v6558 = vpack.c.bf16 %v6513, %v6512
        %v6559 = vpack.c.bf16 %v6515, %v6514
        %v6560 = vpack.c.bf16 %v6517, %v6516
        %v6561 = vpack.c.bf16 %v6519, %v6518
        %v6562 = vpack.c.bf16 %v6521, %v6520
        %v6563 = vpack.c.bf16 %v6523, %v6522
        %v6564 = vpack.c.bf16 %v6525, %v6524
        %v6565 = vpack.c.bf16 %v6527, %v6526
        %v6566 = vpack.c.bf16 %v6529, %v6528
        %v6567 = vpack.c.bf16 %v6531, %v6530
        %v6568 = vpack.c.bf16 %v6533, %v6532
        %v6569 = vpack.c.bf16 %v6535, %v6534
        %v6570 = vpack.c.bf16 %v6537, %v6536
        %v6587 = vunpack.c.l.b16 %v6539
        %v6588 = vunpack.c.l.b16 %v6540
        %v6589 = vunpack.c.l.b16 %v6541
        %v6590 = vunpack.c.l.b16 %v6542
        %v6591 = vunpack.c.l.b16 %v6543
        %v6592 = vunpack.c.l.b16 %v6544
        %v6593 = vunpack.c.l.b16 %v6545
        %v6594 = vunpack.c.l.b16 %v6546
        %v6595 = vunpack.c.l.b16 %v6547
        %v6596 = vunpack.c.l.b16 %v6548
        %v6597 = vunpack.c.l.b16 %v6549
        %v6598 = vunpack.c.l.b16 %v6550
        %v6599 = vunpack.c.l.b16 %v6551
        %v6600 = vunpack.c.l.b16 %v6552
        %v6601 = vunpack.c.l.b16 %v6553
        %v6602 = vunpack.c.l.b16 %v6554
        %v6603 = vpack.c.b16 %v6588, %v6587
        %v6604 = vpack.c.b16 %v6590, %v6589
        %v6605 = vpack.c.b16 %v6592, %v6591
        %v6606 = vpack.c.b16 %v6594, %v6593
        %v6607 = vpack.c.b16 %v6596, %v6595
        %v6608 = vpack.c.b16 %v6598, %v6597
        %v6609 = vpack.c.b16 %v6600, %v6599
        %v6610 = vpack.c.b16 %v6602, %v6601
        %6619 = vmatprep.subr.bf16.mxu0 0
        %6620 = vmatpush1.bf16.msra.mxu0 %v6603
        %6621 = vmatprep.subr.bf16.mxu0 0
        %6622 = vmatpush1.bf16.msra.mxu0 %v6604
        %6623 = vmatprep.subr.bf16.mxu0 0
        %6624 = vmatpush1.bf16.msra.mxu0 %v6605
        %6625 = vmatprep.subr.bf16.mxu0 0
        %6626 = vmatpush1.bf16.msra.mxu0 %v6606
        %6627 = vmatprep.subr.bf16.mxu0 0
        %6628 = vmatpush1.bf16.msra.mxu0 %v6607
        %6629 = vmatprep.subr.bf16.mxu0 0
        %6630 = vmatpush1.bf16.msra.mxu0 %v6608
        %6631 = vmatprep.subr.bf16.mxu0 0
        %6632 = vmatpush1.bf16.msra.mxu0 %v6609
        %6633 = vmatprep.subr.bf16.mxu0 0
        %6634 = vmatpush1.bf16.msra.mxu0 %v6610
        %6635 = vmatprep.subr.bf16.mxu0 0
        %6636 = vmatpush1.bf16.msra.mxu0 0
        %6637 = vmatprep.subr.bf16.mxu0 0
        %6638 = vmatpush1.bf16.msra.mxu0 0
        %6639 = vmatprep.subr.bf16.mxu0 0
        %6640 = vmatpush1.bf16.msra.mxu0 0
        %6641 = vmatprep.subr.bf16.mxu0 0
        %6642 = vmatpush1.bf16.msra.mxu0 0
        %6643 = vmatprep.subr.bf16.mxu0 0
        %6644 = vmatpush1.bf16.msra.mxu0 0
        %6645 = vmatprep.subr.bf16.mxu0 0
        %6646 = vmatpush1.bf16.msra.mxu0 0
        %6647 = vmatprep.subr.bf16.mxu0 0
        %6648 = vmatpush1.bf16.msra.mxu0 0
        %6649 = vmatprep.subr.bf16.mxu0 0
        %6650 = vmatpush1.bf16.msra.mxu0 0
        %6651 = vmatprep.mubr.bf16.mxu0 0
        %6652 = vmatmul.mubr.bf16.gmra.mrb[0].mxu0 %v6555
        %v6653 = vpop.f32.mrb[0].mxu0
        %v6654 = vadd.f32 0.0, %v6653
        %v6655 = vpop.f32.mrb[0].mxu0
        %v6656 = vpop.f32.mrb[0].mxu0
        %v6657 = vadd.f32 0.0, %v6656
        %v6658 = vpop.f32.mrb[0].mxu0
        %6659 = vmatprep.mubr.bf16.mxu0 0
        %6660 = vmatmul.mubr.bf16.gmra.mrb[0].mxu0 %v6556
        %v6661 = vpop.f32.mrb[0].mxu0
        %v6662 = vadd.f32 0.0, %v6661
        %v6663 = vpop.f32.mrb[0].mxu0
        %v6664 = vpop.f32.mrb[0].mxu0
        %v6665 = vadd.f32 0.0, %v6664
        %v6666 = vpop.f32.mrb[0].mxu0
        %6667 = vmatprep.mubr.bf16.mxu0 0
        %6668 = vmatmul.mubr.bf16.gmra.mrb[0].mxu0 %v6557
        %v6669 = vpop.f32.mrb[0].mxu0
        %v6670 = vadd.f32 0.0, %v6669
        %v6671 = vpop.f32.mrb[0].mxu0
        %v6672 = vpop.f32.mrb[0].mxu0
        %v6673 = vadd.f32 0.0, %v6672
        %v6674 = vpop.f32.mrb[0].mxu0
        %6675 = vmatprep.mubr.bf16.mxu0 0
        %6676 = vmatmul.mubr.bf16.gmra.mrb[0].mxu0 %v6558
        %v6677 = vpop.f32.mrb[0].mxu0
        %v6678 = vadd.f32 0.0, %v6677
        %v6679 = vpop.f32.mrb[0].mxu0
        %v6680 = vpop.f32.mrb[0].mxu0
        %v6681 = vadd.f32 0.0, %v6680
        %v6682 = vpop.f32.mrb[0].mxu0
        %6683 = vmatprep.mubr.bf16.mxu0 0
        %6684 = vmatmul.mubr.bf16.gmra.mrb[0].mxu0 %v6559
        %v6685 = vpop.f32.mrb[0].mxu0
        %v6686 = vadd.f32 0.0, %v6685
        %v6687 = vpop.f32.mrb[0].mxu0
        %v6688 = vpop.f32.mrb[0].mxu0
        %v6689 = vadd.f32 0.0, %v6688
        %v6690 = vpop.f32.mrb[0].mxu0
        %6691 = vmatprep.mubr.bf16.mxu0 0
        %6692 = vmatmul.mubr.bf16.gmra.mrb[0].mxu0 %v6560
        %v6693 = vpop.f32.mrb[0].mxu0
        %v6694 = vadd.f32 0.0, %v6693
        %v6695 = vpop.f32.mrb[0].mxu0
        %v6696 = vpop.f32.mrb[0].mxu0
        %v6697 = vadd.f32 0.0, %v6696
        %v6698 = vpop.f32.mrb[0].mxu0
        %6699 = vmatprep.mubr.bf16.mxu0 0
        %6700 = vmatmul.mubr.bf16.gmra.mrb[0].mxu0 %v6561
        %v6701 = vpop.f32.mrb[0].mxu0
        %v6702 = vadd.f32 0.0, %v6701
        %v6703 = vpop.f32.mrb[0].mxu0
        %v6704 = vpop.f32.mrb[0].mxu0
        %v6705 = vadd.f32 0.0, %v6704
        %v6706 = vpop.f32.mrb[0].mxu0
        %6707 = vmatprep.mubr.bf16.mxu0 0
        %6708 = vmatmul.mubr.bf16.gmra.mrb[0].mxu0 %v6562
        %v6709 = vpop.f32.mrb[0].mxu0
        %v6710 = vadd.f32 0.0, %v6709
        %v6711 = vpop.f32.mrb[0].mxu0
        %v6712 = vpop.f32.mrb[0].mxu0
        %v6713 = vadd.f32 0.0, %v6712
        %v6714 = vpop.f32.mrb[0].mxu0
        %6715 = vmatprep.mubr.bf16.mxu0 0
        %6716 = vmatmul.mubr.bf16.gmra.mrb[0].mxu0 %v6563
        %v6717 = vpop.f32.mrb[0].mxu0
        %v6718 = vadd.f32 0.0, %v6717
        %v6719 = vpop.f32.mrb[0].mxu0
        %v6720 = vpop.f32.mrb[0].mxu0
        %v6721 = vadd.f32 0.0, %v6720
        %v6722 = vpop.f32.mrb[0].mxu0
        %6723 = vmatprep.mubr.bf16.mxu0 0
        %6724 = vmatmul.mubr.bf16.gmra.mrb[0].mxu0 %v6564
        %v6725 = vpop.f32.mrb[0].mxu0
        %v6726 = vadd.f32 0.0, %v6725
        %v6727 = vpop.f32.mrb[0].mxu0
        %v6728 = vpop.f32.mrb[0].mxu0
        %v6729 = vadd.f32 0.0, %v6728
        %v6730 = vpop.f32.mrb[0].mxu0
        %6731 = vmatprep.mubr.bf16.mxu0 0
        %6732 = vmatmul.mubr.bf16.gmra.mrb[0].mxu0 %v6565
        %v6733 = vpop.f32.mrb[0].mxu0
        %v6734 = vadd.f32 0.0, %v6733
        %v6735 = vpop.f32.mrb[0].mxu0
        %v6736 = vpop.f32.mrb[0].mxu0
        %v6737 = vadd.f32 0.0, %v6736
        %v6738 = vpop.f32.mrb[0].mxu0
        %6739 = vmatprep.mubr.bf16.mxu0 0
        %6740 = vmatmul.mubr.bf16.gmra.mrb[0].mxu0 %v6566
        %v6741 = vpop.f32.mrb[0].mxu0
        %v6742 = vadd.f32 0.0, %v6741
        %v6743 = vpop.f32.mrb[0].mxu0
        %v6744 = vpop.f32.mrb[0].mxu0
        %v6745 = vadd.f32 0.0, %v6744
        %v6746 = vpop.f32.mrb[0].mxu0
        %6747 = vmatprep.mubr.bf16.mxu0 0
        %6748 = vmatmul.mubr.bf16.gmra.mrb[0].mxu0 %v6567
        %v6749 = vpop.f32.mrb[0].mxu0
        %v6750 = vadd.f32 0.0, %v6749
        %v6751 = vpop.f32.mrb[0].mxu0
        %v6752 = vpop.f32.mrb[0].mxu0
        %v6753 = vadd.f32 0.0, %v6752
        %v6754 = vpop.f32.mrb[0].mxu0
        %6755 = vmatprep.mubr.bf16.mxu0 0
        %6756 = vmatmul.mubr.bf16.gmra.mrb[0].mxu0 %v6568
        %v6757 = vpop.f32.mrb[0].mxu0
        %v6758 = vadd.f32 0.0, %v6757
        %v6759 = vpop.f32.mrb[0].mxu0
        %v6760 = vpop.f32.mrb[0].mxu0
        %v6761 = vadd.f32 0.0, %v6760
        %v6762 = vpop.f32.mrb[0].mxu0
        %6763 = vmatprep.mubr.bf16.mxu0 0
        %6764 = vmatmul.mubr.bf16.gmra.mrb[0].mxu0 %v6569
        %v6765 = vpop.f32.mrb[0].mxu0
        %v6766 = vadd.f32 0.0, %v6765
        %v6767 = vpop.f32.mrb[0].mxu0
        %v6768 = vpop.f32.mrb[0].mxu0
        %v6769 = vadd.f32 0.0, %v6768
        %v6770 = vpop.f32.mrb[0].mxu0
        %6771 = vmatprep.mubr.bf16.mxu0 0
        %6772 = vmatmul.mubr.bf16.gmra.mrb[0].mxu0 %v6570
        %v6773 = vpop.f32.mrb[0].mxu0
        %v6774 = vadd.f32 0.0, %v6773
        %v6775 = vpop.f32.mrb[0].mxu0
        %v6776 = vpop.f32.mrb[0].mxu0
        %v6777 = vadd.f32 0.0, %v6776
        %v6778 = vpop.f32.mrb[0].mxu0
        %6779 = vdwg.mxu0
        %v6796 = vunpack.c.l.b16 %v6474
        %v6797 = vunpack.c.l.b16 %v6475
        %v6798 = vunpack.c.l.b16 %v6476
        %v6799 = vunpack.c.l.b16 %v6477
        %v6800 = vunpack.c.l.b16 %v6478
        %v6801 = vunpack.c.l.b16 %v6479
        %v6802 = vunpack.c.l.b16 %v6480
        %v6803 = vunpack.c.l.b16 %v6481
        %v6804 = vunpack.c.l.b16 %v6482
        %v6805 = vunpack.c.l.b16 %v6483
        %v6806 = vunpack.c.l.b16 %v6484
        %v6807 = vunpack.c.l.b16 %v6485
        %v6808 = vunpack.c.l.b16 %v6486
        %v6809 = vunpack.c.l.b16 %v6487
        %v6810 = vunpack.c.l.b16 %v6488
        %v6811 = vunpack.c.l.b16 %v6489
        %v6812 = vpack.c.b16 %v6797, %v6796
        %v6813 = vpack.c.b16 %v6799, %v6798
        %v6814 = vpack.c.b16 %v6801, %v6800
        %v6815 = vpack.c.b16 %v6803, %v6802
        %v6816 = vpack.c.b16 %v6805, %v6804
        %v6817 = vpack.c.b16 %v6807, %v6806
        %v6818 = vpack.c.b16 %v6809, %v6808
        %v6819 = vpack.c.b16 %v6811, %v6810
        %6828 = vmatprep.subr.bf16.mxu0 0
        %6829 = vmatpush1.bf16.msra.mxu0 %v6812
        %6830 = vmatprep.subr.bf16.mxu0 0
        %6831 = vmatpush1.bf16.msra.mxu0 %v6813
        %6832 = vmatprep.subr.bf16.mxu0 0
        %6833 = vmatpush1.bf16.msra.mxu0 %v6814
        %6834 = vmatprep.subr.bf16.mxu0 0
        %6835 = vmatpush1.bf16.msra.mxu0 %v6815
        %6836 = vmatprep.subr.bf16.mxu0 0
        %6837 = vmatpush1.bf16.msra.mxu0 %v6816
        %6838 = vmatprep.subr.bf16.mxu0 0
        %6839 = vmatpush1.bf16.msra.mxu0 %v6817
        %6840 = vmatprep.subr.bf16.mxu0 0
        %6841 = vmatpush1.bf16.msra.mxu0 %v6818
        %6842 = vmatprep.subr.bf16.mxu0 0
        %6843 = vmatpush1.bf16.msra.mxu0 %v6819
        %6844 = vmatprep.subr.bf16.mxu0 0
        %6845 = vmatpush1.bf16.msra.mxu0 0
        %6846 = vmatprep.subr.bf16.mxu0 0
        %6847 = vmatpush1.bf16.msra.mxu0 0
        %6848 = vmatprep.subr.bf16.mxu0 0
        %6849 = vmatpush1.bf16.msra.mxu0 0
        %6850 = vmatprep.subr.bf16.mxu0 0
        %6851 = vmatpush1.bf16.msra.mxu0 0
        %6852 = vmatprep.subr.bf16.mxu0 0
        %6853 = vmatpush1.bf16.msra.mxu0 0
        %6854 = vmatprep.subr.bf16.mxu0 0
        %6855 = vmatpush1.bf16.msra.mxu0 0
        %6856 = vmatprep.subr.bf16.mxu0 0
        %6857 = vmatpush1.bf16.msra.mxu0 0
        %6858 = vmatprep.subr.bf16.mxu0 0
        %6859 = vmatpush1.bf16.msra.mxu0 0
        %6860 = vmatprep.mubr.bf16.mxu0 0
        %6861 = vmatmul.mubr.bf16.gmra.mrb[0].mxu0 %v6490
        %v6862 = vpop.f32.mrb[0].mxu0
        %v6863 = vadd.f32 %v6654, %v6862
        %v6864 = vpop.f32.mrb[0].mxu0
        %v6865 = vpop.f32.mrb[0].mxu0
        %v6866 = vadd.f32 %v6657, %v6865
        %v6867 = vpop.f32.mrb[0].mxu0
        %6868 = vmatprep.mubr.bf16.mxu0 0
        %6869 = vmatmul.mubr.bf16.gmra.mrb[0].mxu0 %v6491
        %v6870 = vpop.f32.mrb[0].mxu0
        %v6871 = vadd.f32 %v6662, %v6870
        %v6872 = vpop.f32.mrb[0].mxu0
        %v6873 = vpop.f32.mrb[0].mxu0
        %v6874 = vadd.f32 %v6665, %v6873
        %v6875 = vpop.f32.mrb[0].mxu0
        %6876 = vmatprep.mubr.bf16.mxu0 0
        %6877 = vmatmul.mubr.bf16.gmra.mrb[0].mxu0 %v6492
        %v6878 = vpop.f32.mrb[0].mxu0
        %v6879 = vadd.f32 %v6670, %v6878
        %v6880 = vpop.f32.mrb[0].mxu0
        %v6881 = vpop.f32.mrb[0].mxu0
        %v6882 = vadd.f32 %v6673, %v6881
        %v6883 = vpop.f32.mrb[0].mxu0
        %6884 = vmatprep.mubr.bf16.mxu0 0
        %6885 = vmatmul.mubr.bf16.gmra.mrb[0].mxu0 %v6493
        %v6886 = vpop.f32.mrb[0].mxu0
        %v6887 = vadd.f32 %v6678, %v6886
        %v6888 = vpop.f32.mrb[0].mxu0
        %v6889 = vpop.f32.mrb[0].mxu0
        %v6890 = vadd.f32 %v6681, %v6889
        %v6891 = vpop.f32.mrb[0].mxu0
        %6892 = vmatprep.mubr.bf16.mxu0 0
        %6893 = vmatmul.mubr.bf16.gmra.mrb[0].mxu0 %v6494
        %v6894 = vpop.f32.mrb[0].mxu0
        %v6895 = vadd.f32 %v6686, %v6894
        %v6896 = vpop.f32.mrb[0].mxu0
        %v6897 = vpop.f32.mrb[0].mxu0
        %v6898 = vadd.f32 %v6689, %v6897
        %v6899 = vpop.f32.mrb[0].mxu0
        %6900 = vmatprep.mubr.bf16.mxu0 0
        %6901 = vmatmul.mubr.bf16.gmra.mrb[0].mxu0 %v6495
        %v6902 = vpop.f32.mrb[0].mxu0
        %v6903 = vadd.f32 %v6694, %v6902
        %v6904 = vpop.f32.mrb[0].mxu0
        %v6905 = vpop.f32.mrb[0].mxu0
        %v6906 = vadd.f32 %v6697, %v6905
        %v6907 = vpop.f32.mrb[0].mxu0
        %6908 = vmatprep.mubr.bf16.mxu0 0
        %6909 = vmatmul.mubr.bf16.gmra.mrb[0].mxu0 %v6496
        %v6910 = vpop.f32.mrb[0].mxu0
        %v6911 = vadd.f32 %v6702, %v6910
        %v6912 = vpop.f32.mrb[0].mxu0
        %v6913 = vpop.f32.mrb[0].mxu0
        %v6914 = vadd.f32 %v6705, %v6913
        %v6915 = vpop.f32.mrb[0].mxu0
        %6916 = vmatprep.mubr.bf16.mxu0 0
        %6917 = vmatmul.mubr.bf16.gmra.mrb[0].mxu0 %v6497
        %v6918 = vpop.f32.mrb[0].mxu0
        %v6919 = vadd.f32 %v6710, %v6918
        %v6920 = vpop.f32.mrb[0].mxu0
        %v6921 = vpop.f32.mrb[0].mxu0
        %v6922 = vadd.f32 %v6713, %v6921
        %v6923 = vpop.f32.mrb[0].mxu0
        %6924 = vmatprep.mubr.bf16.mxu0 0
        %6925 = vmatmul.mubr.bf16.gmra.mrb[0].mxu0 %v6498
        %v6926 = vpop.f32.mrb[0].mxu0
        %v6927 = vadd.f32 %v6718, %v6926
        %v6928 = vpop.f32.mrb[0].mxu0
        %v6929 = vpop.f32.mrb[0].mxu0
        %v6930 = vadd.f32 %v6721, %v6929
        %v6931 = vpop.f32.mrb[0].mxu0
        %6932 = vmatprep.mubr.bf16.mxu0 0
        %6933 = vmatmul.mubr.bf16.gmra.mrb[0].mxu0 %v6499
        %v6934 = vpop.f32.mrb[0].mxu0
        %v6935 = vadd.f32 %v6726, %v6934
        %v6936 = vpop.f32.mrb[0].mxu0
        %v6937 = vpop.f32.mrb[0].mxu0
        %v6938 = vadd.f32 %v6729, %v6937
        %v6939 = vpop.f32.mrb[0].mxu0
        %6940 = vmatprep.mubr.bf16.mxu0 0
        %6941 = vmatmul.mubr.bf16.gmra.mrb[0].mxu0 %v6500
        %v6942 = vpop.f32.mrb[0].mxu0
        %v6943 = vadd.f32 %v6734, %v6942
        %v6944 = vpop.f32.mrb[0].mxu0
        %v6945 = vpop.f32.mrb[0].mxu0
        %v6946 = vadd.f32 %v6737, %v6945
        %v6947 = vpop.f32.mrb[0].mxu0
        %6948 = vmatprep.mubr.bf16.mxu0 0
        %6949 = vmatmul.mubr.bf16.gmra.mrb[0].mxu0 %v6501
        %v6950 = vpop.f32.mrb[0].mxu0
        %v6951 = vadd.f32 %v6742, %v6950
        %v6952 = vpop.f32.mrb[0].mxu0
        %v6953 = vpop.f32.mrb[0].mxu0
        %v6954 = vadd.f32 %v6745, %v6953
        %v6955 = vpop.f32.mrb[0].mxu0
        %6956 = vmatprep.mubr.bf16.mxu0 0
        %6957 = vmatmul.mubr.bf16.gmra.mrb[0].mxu0 %v6502
        %v6958 = vpop.f32.mrb[0].mxu0
        %v6959 = vadd.f32 %v6750, %v6958
        %v6960 = vpop.f32.mrb[0].mxu0
        %v6961 = vpop.f32.mrb[0].mxu0
        %v6962 = vadd.f32 %v6753, %v6961
        %v6963 = vpop.f32.mrb[0].mxu0
        %6964 = vmatprep.mubr.bf16.mxu0 0
        %6965 = vmatmul.mubr.bf16.gmra.mrb[0].mxu0 %v6503
        %v6966 = vpop.f32.mrb[0].mxu0
        %v6967 = vadd.f32 %v6758, %v6966
        %v6968 = vpop.f32.mrb[0].mxu0
        %v6969 = vpop.f32.mrb[0].mxu0
        %v6970 = vadd.f32 %v6761, %v6969
        %v6971 = vpop.f32.mrb[0].mxu0
        %6972 = vmatprep.mubr.bf16.mxu0 0
        %6973 = vmatmul.mubr.bf16.gmra.mrb[0].mxu0 %v6504
        %v6974 = vpop.f32.mrb[0].mxu0
        %v6975 = vadd.f32 %v6766, %v6974
        %v6976 = vpop.f32.mrb[0].mxu0
        %v6977 = vpop.f32.mrb[0].mxu0
        %v6978 = vadd.f32 %v6769, %v6977
        %v6979 = vpop.f32.mrb[0].mxu0
        %6980 = vmatprep.mubr.bf16.mxu0 0
        %6981 = vmatmul.mubr.bf16.gmra.mrb[0].mxu0 %v6505
        %v6982 = vpop.f32.mrb[0].mxu0
        %v6983 = vadd.f32 %v6774, %v6982
        %v6984 = vpop.f32.mrb[0].mxu0
        %v6985 = vpop.f32.mrb[0].mxu0
        %v6986 = vadd.f32 %v6777, %v6985
        %v6987 = vpop.f32.mrb[0].mxu0
        %6988 = vdwg.mxu0
        %v6989 = vld [vmem:[#allocation3 + $0x2] sm:$0xff]
        %v6990 = vld [vmem:[#allocation3 + $0xa] sm:$0xff]
        %v6991 = vld [vmem:[#allocation3 + $0x1a] sm:$0xff]
        %v6992 = vld [vmem:[#allocation3 + $0x22] sm:$0xff]
        %v6993 = vld [vmem:[#allocation3 + $0x32] sm:$0xff]
        %v6994 = vld [vmem:[#allocation3 + $0x3a] sm:$0xff]
        %v6995 = vld [vmem:[#allocation3 + $0x4a] sm:$0xff]
        %v6996 = vld [vmem:[#allocation3 + $0x52] sm:$0xff]
        %v6997 = vld [vmem:[#allocation3 + $0x62] sm:$0xff]
        %v6998 = vld [vmem:[#allocation3 + $0x6a] sm:$0xff]
        %v6999 = vld [vmem:[#allocation3 + $0x7a] sm:$0xff]
        %v7000 = vld [vmem:[#allocation3 + $0x82] sm:$0xff]
        %v7001 = vld [vmem:[#allocation3 + $0x92] sm:$0xff]
        %v7002 = vld [vmem:[#allocation3 + $0x9a] sm:$0xff]
        %v7003 = vld [vmem:[#allocation3 + $0xaa] sm:$0xff]
        %v7004 = vld [vmem:[#allocation3 + $0xb2] sm:$0xff]
        %v7005 = vld [vmem:[#allocation3 + $0xc2] sm:$0xff]
        %v7006 = vld [vmem:[#allocation3 + $0xca] sm:$0xff]
        %v7007 = vld [vmem:[#allocation3 + $0xda] sm:$0xff]
        %v7008 = vld [vmem:[#allocation3 + $0xe2] sm:$0xff]
        %v7009 = vld [vmem:[#allocation3 + $0xf2] sm:$0xff]
        %v7010 = vld [vmem:[#allocation3 + $0xfa] sm:$0xff]
        %v7011 = vld [vmem:[#allocation3 + $0x10a] sm:$0xff]
        %v7012 = vld [vmem:[#allocation3 + $0x112] sm:$0xff]
        %v7013 = vld [vmem:[#allocation3 + $0x122] sm:$0xff]
        %v7014 = vld [vmem:[#allocation3 + $0x12a] sm:$0xff]
        %v7015 = vld [vmem:[#allocation3 + $0x13a] sm:$0xff]
        %v7016 = vld [vmem:[#allocation3 + $0x142] sm:$0xff]
        %v7017 = vld [vmem:[#allocation3 + $0x152] sm:$0xff]
        %v7018 = vld [vmem:[#allocation3 + $0x15a] sm:$0xff]
        %v7019 = vld [vmem:[#allocation3 + $0x16a] sm:$0xff]
        %v7020 = vld [vmem:[#allocation3 + $0x172] sm:$0xff]
        %s7021 = scalar_lea.vmem %s3, 128
        %v7022 = vld [vmem:[%s7021] sm:$0xf]
        %v7023 = vld [vmem:[%s7021 + $0x4] sm:$0xf]
        %v7024 = vld [vmem:[%s7021 + $0x8] sm:$0xf]
        %v7025 = vld [vmem:[%s7021 + $0xc] sm:$0xf]
        %v7026 = vld [vmem:[%s7021 + $0x10] sm:$0xf]
        %v7027 = vld [vmem:[%s7021 + $0x14] sm:$0xf]
        %v7028 = vld [vmem:[%s7021 + $0x18] sm:$0xf]
        %v7029 = vld [vmem:[%s7021 + $0x1c] sm:$0xf]
        %v7030 = vld [vmem:[%s7021 + $0x20] sm:$0xf]
        %v7031 = vld [vmem:[%s7021 + $0x24] sm:$0xf]
        %v7032 = vld [vmem:[%s7021 + $0x28] sm:$0xf]
        %v7033 = vld [vmem:[%s7021 + $0x2c] sm:$0xf]
        %v7034 = vld [vmem:[%s7021 + $0x30] sm:$0xf]
        %v7035 = vld [vmem:[%s7021 + $0x34] sm:$0xf]
        %v7036 = vld [vmem:[%s7021 + $0x38] sm:$0xf]
        %v7037 = vld [vmem:[%s7021 + $0x3c] sm:$0xf]
        %v7038 = vpack.c.bf16 %v6990, %v6989
        %v7039 = vpack.c.bf16 %v6992, %v6991
        %v7040 = vpack.c.bf16 %v6994, %v6993
        %v7041 = vpack.c.bf16 %v6996, %v6995
        %v7042 = vpack.c.bf16 %v6998, %v6997
        %v7043 = vpack.c.bf16 %v7000, %v6999
        %v7044 = vpack.c.bf16 %v7002, %v7001
        %v7045 = vpack.c.bf16 %v7004, %v7003
        %v7046 = vpack.c.bf16 %v7006, %v7005
        %v7047 = vpack.c.bf16 %v7008, %v7007
        %v7048 = vpack.c.bf16 %v7010, %v7009
        %v7049 = vpack.c.bf16 %v7012, %v7011
        %v7050 = vpack.c.bf16 %v7014, %v7013
        %v7051 = vpack.c.bf16 %v7016, %v7015
        %v7052 = vpack.c.bf16 %v7018, %v7017
        %v7053 = vpack.c.bf16 %v7020, %v7019
        %v7070 = vunpack.c.l.b16 %v7022
        %v7071 = vunpack.c.l.b16 %v7023
        %v7072 = vunpack.c.l.b16 %v7024
        %v7073 = vunpack.c.l.b16 %v7025
        %v7074 = vunpack.c.l.b16 %v7026
        %v7075 = vunpack.c.l.b16 %v7027
        %v7076 = vunpack.c.l.b16 %v7028
        %v7077 = vunpack.c.l.b16 %v7029
        %v7078 = vunpack.c.l.b16 %v7030
        %v7079 = vunpack.c.l.b16 %v7031
        %v7080 = vunpack.c.l.b16 %v7032
        %v7081 = vunpack.c.l.b16 %v7033
        %v7082 = vunpack.c.l.b16 %v7034
        %v7083 = vunpack.c.l.b16 %v7035
        %v7084 = vunpack.c.l.b16 %v7036
        %v7085 = vunpack.c.l.b16 %v7037
        %v7086 = vpack.c.b16 %v7071, %v7070
        %v7087 = vpack.c.b16 %v7073, %v7072
        %v7088 = vpack.c.b16 %v7075, %v7074
        %v7089 = vpack.c.b16 %v7077, %v7076
        %v7090 = vpack.c.b16 %v7079, %v7078
        %v7091 = vpack.c.b16 %v7081, %v7080
        %v7092 = vpack.c.b16 %v7083, %v7082
        %v7093 = vpack.c.b16 %v7085, %v7084
        %7102 = vmatprep.subr.bf16.mxu0 0
        %7103 = vmatpush1.bf16.msra.mxu0 %v7086
        %7104 = vmatprep.subr.bf16.mxu0 0
        %7105 = vmatpush1.bf16.msra.mxu0 %v7087
        %7106 = vmatprep.subr.bf16.mxu0 0
        %7107 = vmatpush1.bf16.msra.mxu0 %v7088
        %7108 = vmatprep.subr.bf16.mxu0 0
        %7109 = vmatpush1.bf16.msra.mxu0 %v7089
        %7110 = vmatprep.subr.bf16.mxu0 0
        %7111 = vmatpush1.bf16.msra.mxu0 %v7090
        %7112 = vmatprep.subr.bf16.mxu0 0
        %7113 = vmatpush1.bf16.msra.mxu0 %v7091
        %7114 = vmatprep.subr.bf16.mxu0 0
        %7115 = vmatpush1.bf16.msra.mxu0 %v7092
        %7116 = vmatprep.subr.bf16.mxu0 0
        %7117 = vmatpush1.bf16.msra.mxu0 %v7093
        %7118 = vmatprep.subr.bf16.mxu0 0
        %7119 = vmatpush1.bf16.msra.mxu0 0
        %7120 = vmatprep.subr.bf16.mxu0 0
        %7121 = vmatpush1.bf16.msra.mxu0 0
        %7122 = vmatprep.subr.bf16.mxu0 0
        %7123 = vmatpush1.bf16.msra.mxu0 0
        %7124 = vmatprep.subr.bf16.mxu0 0
        %7125 = vmatpush1.bf16.msra.mxu0 0
        %7126 = vmatprep.subr.bf16.mxu0 0
        %7127 = vmatpush1.bf16.msra.mxu0 0
        %7128 = vmatprep.subr.bf16.mxu0 0
        %7129 = vmatpush1.bf16.msra.mxu0 0
        %7130 = vmatprep.subr.bf16.mxu0 0
        %7131 = vmatpush1.bf16.msra.mxu0 0
        %7132 = vmatprep.subr.bf16.mxu0 0
        %7133 = vmatpush1.bf16.msra.mxu0 0
        %7134 = vmatprep.mubr.bf16.mxu0 0
        %7135 = vmatmul.mubr.bf16.gmra.mrb[0].mxu0 %v7038
        %v7136 = vpop.f32.mrb[0].mxu0
        %v7137 = vadd.f32 0.0, %v7136
        %v7138 = vpop.f32.mrb[0].mxu0
        %v7139 = vpop.f32.mrb[0].mxu0
        %v7140 = vadd.f32 0.0, %v7139
        %v7141 = vpop.f32.mrb[0].mxu0
        %7142 = vmatprep.mubr.bf16.mxu0 0
        %7143 = vmatmul.mubr.bf16.gmra.mrb[0].mxu0 %v7039
        %v7144 = vpop.f32.mrb[0].mxu0
        %v7145 = vadd.f32 0.0, %v7144
        %v7146 = vpop.f32.mrb[0].mxu0
        %v7147 = vpop.f32.mrb[0].mxu0
        %v7148 = vadd.f32 0.0, %v7147
        %v7149 = vpop.f32.mrb[0].mxu0
        %7150 = vmatprep.mubr.bf16.mxu0 0
        %7151 = vmatmul.mubr.bf16.gmra.mrb[0].mxu0 %v7040
        %v7152 = vpop.f32.mrb[0].mxu0
        %v7153 = vadd.f32 0.0, %v7152
        %v7154 = vpop.f32.mrb[0].mxu0
        %v7155 = vpop.f32.mrb[0].mxu0
        %v7156 = vadd.f32 0.0, %v7155
        %v7157 = vpop.f32.mrb[0].mxu0
        %7158 = vmatprep.mubr.bf16.mxu0 0
        %7159 = vmatmul.mubr.bf16.gmra.mrb[0].mxu0 %v7041
        %v7160 = vpop.f32.mrb[0].mxu0
        %v7161 = vadd.f32 0.0, %v7160
        %v7162 = vpop.f32.mrb[0].mxu0
        %v7163 = vpop.f32.mrb[0].mxu0
        %v7164 = vadd.f32 0.0, %v7163
        %v7165 = vpop.f32.mrb[0].mxu0
        %7166 = vmatprep.mubr.bf16.mxu0 0
        %7167 = vmatmul.mubr.bf16.gmra.mrb[0].mxu0 %v7042
        %v7168 = vpop.f32.mrb[0].mxu0
        %v7169 = vadd.f32 0.0, %v7168
        %v7170 = vpop.f32.mrb[0].mxu0
        %v7171 = vpop.f32.mrb[0].mxu0
        %v7172 = vadd.f32 0.0, %v7171
        %v7173 = vpop.f32.mrb[0].mxu0
        %7174 = vmatprep.mubr.bf16.mxu0 0
        %7175 = vmatmul.mubr.bf16.gmra.mrb[0].mxu0 %v7043
        %v7176 = vpop.f32.mrb[0].mxu0
        %v7177 = vadd.f32 0.0, %v7176
        %v7178 = vpop.f32.mrb[0].mxu0
        %v7179 = vpop.f32.mrb[0].mxu0
        %v7180 = vadd.f32 0.0, %v7179
        %v7181 = vpop.f32.mrb[0].mxu0
        %7182 = vmatprep.mubr.bf16.mxu0 0
        %7183 = vmatmul.mubr.bf16.gmra.mrb[0].mxu0 %v7044
        %v7184 = vpop.f32.mrb[0].mxu0
        %v7185 = vadd.f32 0.0, %v7184
        %v7186 = vpop.f32.mrb[0].mxu0
        %v7187 = vpop.f32.mrb[0].mxu0
        %v7188 = vadd.f32 0.0, %v7187
        %v7189 = vpop.f32.mrb[0].mxu0
        %7190 = vmatprep.mubr.bf16.mxu0 0
        %7191 = vmatmul.mubr.bf16.gmra.mrb[0].mxu0 %v7045
        %v7192 = vpop.f32.mrb[0].mxu0
        %v7193 = vadd.f32 0.0, %v7192
        %v7194 = vpop.f32.mrb[0].mxu0
        %v7195 = vpop.f32.mrb[0].mxu0
        %v7196 = vadd.f32 0.0, %v7195
        %v7197 = vpop.f32.mrb[0].mxu0
        %7198 = vmatprep.mubr.bf16.mxu0 0
        %7199 = vmatmul.mubr.bf16.gmra.mrb[0].mxu0 %v7046
        %v7200 = vpop.f32.mrb[0].mxu0
        %v7201 = vadd.f32 0.0, %v7200
        %v7202 = vpop.f32.mrb[0].mxu0
        %v7203 = vpop.f32.mrb[0].mxu0
        %v7204 = vadd.f32 0.0, %v7203
        %v7205 = vpop.f32.mrb[0].mxu0
        %7206 = vmatprep.mubr.bf16.mxu0 0
        %7207 = vmatmul.mubr.bf16.gmra.mrb[0].mxu0 %v7047
        %v7208 = vpop.f32.mrb[0].mxu0
        %v7209 = vadd.f32 0.0, %v7208
        %v7210 = vpop.f32.mrb[0].mxu0
        %v7211 = vpop.f32.mrb[0].mxu0
        %v7212 = vadd.f32 0.0, %v7211
        %v7213 = vpop.f32.mrb[0].mxu0
        %7214 = vmatprep.mubr.bf16.mxu0 0
        %7215 = vmatmul.mubr.bf16.gmra.mrb[0].mxu0 %v7048
        %v7216 = vpop.f32.mrb[0].mxu0
        %v7217 = vadd.f32 0.0, %v7216
        %v7218 = vpop.f32.mrb[0].mxu0
        %v7219 = vpop.f32.mrb[0].mxu0
        %v7220 = vadd.f32 0.0, %v7219
        %v7221 = vpop.f32.mrb[0].mxu0
        %7222 = vmatprep.mubr.bf16.mxu0 0
        %7223 = vmatmul.mubr.bf16.gmra.mrb[0].mxu0 %v7049
        %v7224 = vpop.f32.mrb[0].mxu0
        %v7225 = vadd.f32 0.0, %v7224
        %v7226 = vpop.f32.mrb[0].mxu0
        %v7227 = vpop.f32.mrb[0].mxu0
        %v7228 = vadd.f32 0.0, %v7227
        %v7229 = vpop.f32.mrb[0].mxu0
        %7230 = vmatprep.mubr.bf16.mxu0 0
        %7231 = vmatmul.mubr.bf16.gmra.mrb[0].mxu0 %v7050
        %v7232 = vpop.f32.mrb[0].mxu0
        %v7233 = vadd.f32 0.0, %v7232
        %v7234 = vpop.f32.mrb[0].mxu0
        %v7235 = vpop.f32.mrb[0].mxu0
        %v7236 = vadd.f32 0.0, %v7235
        %v7237 = vpop.f32.mrb[0].mxu0
        %7238 = vmatprep.mubr.bf16.mxu0 0
        %7239 = vmatmul.mubr.bf16.gmra.mrb[0].mxu0 %v7051
        %v7240 = vpop.f32.mrb[0].mxu0
        %v7241 = vadd.f32 0.0, %v7240
        %v7242 = vpop.f32.mrb[0].mxu0
        %v7243 = vpop.f32.mrb[0].mxu0
        %v7244 = vadd.f32 0.0, %v7243
        %v7245 = vpop.f32.mrb[0].mxu0
        %7246 = vmatprep.mubr.bf16.mxu0 0
        %7247 = vmatmul.mubr.bf16.gmra.mrb[0].mxu0 %v7052
        %v7248 = vpop.f32.mrb[0].mxu0
        %v7249 = vadd.f32 0.0, %v7248
        %v7250 = vpop.f32.mrb[0].mxu0
        %v7251 = vpop.f32.mrb[0].mxu0
        %v7252 = vadd.f32 0.0, %v7251
        %v7253 = vpop.f32.mrb[0].mxu0
        %7254 = vmatprep.mubr.bf16.mxu0 0
        %7255 = vmatmul.mubr.bf16.gmra.mrb[0].mxu0 %v7053
        %v7256 = vpop.f32.mrb[0].mxu0
        %v7257 = vadd.f32 0.0, %v7256
        %v7258 = vpop.f32.mrb[0].mxu0
        %v7259 = vpop.f32.mrb[0].mxu0
        %v7260 = vadd.f32 0.0, %v7259
        %v7261 = vpop.f32.mrb[0].mxu0
        %7262 = vdwg.mxu0
        %v7263 = vadd.f32 %v6863, %v7137
        %v7264 = vadd.f32 %v6866, %v7140
        %v7265 = vadd.f32 %v6871, %v7145
        %v7266 = vadd.f32 %v6874, %v7148
        %v7267 = vadd.f32 %v6879, %v7153
        %v7268 = vadd.f32 %v6882, %v7156
        %v7269 = vadd.f32 %v6887, %v7161
        %v7270 = vadd.f32 %v6890, %v7164
        %v7271 = vadd.f32 %v6895, %v7169
        %v7272 = vadd.f32 %v6898, %v7172
        %v7273 = vadd.f32 %v6903, %v7177
        %v7274 = vadd.f32 %v6906, %v7180
        %v7275 = vadd.f32 %v6911, %v7185
        %v7276 = vadd.f32 %v6914, %v7188
        %v7277 = vadd.f32 %v6919, %v7193
        %v7278 = vadd.f32 %v6922, %v7196
        %v7279 = vadd.f32 %v6927, %v7201
        %v7280 = vadd.f32 %v6930, %v7204
        %v7281 = vadd.f32 %v6935, %v7209
        %v7282 = vadd.f32 %v6938, %v7212
        %v7283 = vadd.f32 %v6943, %v7217
        %v7284 = vadd.f32 %v6946, %v7220
        %v7285 = vadd.f32 %v6951, %v7225
        %v7286 = vadd.f32 %v6954, %v7228
        %v7287 = vadd.f32 %v6959, %v7233
        %v7288 = vadd.f32 %v6962, %v7236
        %v7289 = vadd.f32 %v6967, %v7241
        %v7290 = vadd.f32 %v6970, %v7244
        %v7291 = vadd.f32 %v6975, %v7249
        %v7292 = vadd.f32 %v6978, %v7252
        %v7293 = vadd.f32 %v6983, %v7257
        %v7294 = vadd.f32 %v6986, %v7260
        %v7295 = vld [vmem:[%s6409] sm:$0xff]
        %v7296 = vld [vmem:[%s6409 + $0x8] sm:$0xff]
        %v7297 = vld [vmem:[%s6409 + $0x18] sm:$0xff]
        %v7298 = vld [vmem:[%s6409 + $0x20] sm:$0xff]
        %v7299 = vld [vmem:[%s6409 + $0x30] sm:$0xff]
        %v7300 = vld [vmem:[%s6409 + $0x38] sm:$0xff]
        %v7301 = vld [vmem:[%s6409 + $0x48] sm:$0xff]
        %v7302 = vld [vmem:[%s6409 + $0x50] sm:$0xff]
        %v7303 = vld [vmem:[%s6409 + $0x60] sm:$0xff]
        %v7304 = vld [vmem:[%s6409 + $0x68] sm:$0xff]
        %v7305 = vld [vmem:[%s6409 + $0x78] sm:$0xff]
        %v7306 = vld [vmem:[%s6409 + $0x80] sm:$0xff]
        %v7307 = vld [vmem:[%s6409 + $0x90] sm:$0xff]
        %v7308 = vld [vmem:[%s6409 + $0x98] sm:$0xff]
        %v7309 = vld [vmem:[%s6409 + $0xa8] sm:$0xff]
        %v7310 = vld [vmem:[%s6409 + $0xb0] sm:$0xff]
        %v7311 = vld [vmem:[%s6409 + $0xc0] sm:$0xff]
        %v7312 = vld [vmem:[%s6409 + $0xc8] sm:$0xff]
        %v7313 = vld [vmem:[%s6409 + $0xd8] sm:$0xff]
        %v7314 = vld [vmem:[%s6409 + $0xe0] sm:$0xff]
        %v7315 = vld [vmem:[%s6409 + $0xf0] sm:$0xff]
        %v7316 = vld [vmem:[%s6409 + $0xf8] sm:$0xff]
        %v7317 = vld [vmem:[%s6409 + $0x108] sm:$0xff]
        %v7318 = vld [vmem:[%s6409 + $0x110] sm:$0xff]
        %v7319 = vld [vmem:[%s6409 + $0x120] sm:$0xff]
        %v7320 = vld [vmem:[%s6409 + $0x128] sm:$0xff]
        %v7321 = vld [vmem:[%s6409 + $0x138] sm:$0xff]
        %v7322 = vld [vmem:[%s6409 + $0x140] sm:$0xff]
        %v7323 = vld [vmem:[%s6409 + $0x150] sm:$0xff]
        %v7324 = vld [vmem:[%s6409 + $0x158] sm:$0xff]
        %v7325 = vld [vmem:[%s6409 + $0x168] sm:$0xff]
        %v7326 = vld [vmem:[%s6409 + $0x170] sm:$0xff]
        %s7327 = scalar_lea.vmem %s3, 192
        %v7328 = vld [vmem:[%s7327] sm:$0xf]
        %v7329 = vld [vmem:[%s7327 + $0x4] sm:$0xf]
        %v7330 = vld [vmem:[%s7327 + $0x8] sm:$0xf]
        %v7331 = vld [vmem:[%s7327 + $0xc] sm:$0xf]
        %v7332 = vld [vmem:[%s7327 + $0x10] sm:$0xf]
        %v7333 = vld [vmem:[%s7327 + $0x14] sm:$0xf]
        %v7334 = vld [vmem:[%s7327 + $0x18] sm:$0xf]
        %v7335 = vld [vmem:[%s7327 + $0x1c] sm:$0xf]
        %v7336 = vld [vmem:[%s7327 + $0x20] sm:$0xf]
        %v7337 = vld [vmem:[%s7327 + $0x24] sm:$0xf]
        %v7338 = vld [vmem:[%s7327 + $0x28] sm:$0xf]
        %v7339 = vld [vmem:[%s7327 + $0x2c] sm:$0xf]
        %v7340 = vld [vmem:[%s7327 + $0x30] sm:$0xf]
        %v7341 = vld [vmem:[%s7327 + $0x34] sm:$0xf]
        %v7342 = vld [vmem:[%s7327 + $0x38] sm:$0xf]
        %v7343 = vld [vmem:[%s7327 + $0x3c] sm:$0xf]
        %v7344 = vpack.c.bf16 %v7296, %v7295
        %v7345 = vpack.c.bf16 %v7298, %v7297
        %v7346 = vpack.c.bf16 %v7300, %v7299
        %v7347 = vpack.c.bf16 %v7302, %v7301
        %v7348 = vpack.c.bf16 %v7304, %v7303
        %v7349 = vpack.c.bf16 %v7306, %v7305
        %v7350 = vpack.c.bf16 %v7308, %v7307
        %v7351 = vpack.c.bf16 %v7310, %v7309
        %v7352 = vpack.c.bf16 %v7312, %v7311
        %v7353 = vpack.c.bf16 %v7314, %v7313
        %v7354 = vpack.c.bf16 %v7316, %v7315
        %v7355 = vpack.c.bf16 %v7318, %v7317
        %v7356 = vpack.c.bf16 %v7320, %v7319
        %v7357 = vpack.c.bf16 %v7322, %v7321
        %v7358 = vpack.c.bf16 %v7324, %v7323
        %v7359 = vpack.c.bf16 %v7326, %v7325
        %v7376 = vunpack.c.l.b16 %v7328
        %v7377 = vunpack.c.l.b16 %v7329
        %v7378 = vunpack.c.l.b16 %v7330
        %v7379 = vunpack.c.l.b16 %v7331
        %v7380 = vunpack.c.l.b16 %v7332
        %v7381 = vunpack.c.l.b16 %v7333
        %v7382 = vunpack.c.l.b16 %v7334
        %v7383 = vunpack.c.l.b16 %v7335
        %v7384 = vunpack.c.l.b16 %v7336
        %v7385 = vunpack.c.l.b16 %v7337
        %v7386 = vunpack.c.l.b16 %v7338
        %v7387 = vunpack.c.l.b16 %v7339
        %v7388 = vunpack.c.l.b16 %v7340
        %v7389 = vunpack.c.l.b16 %v7341
        %v7390 = vunpack.c.l.b16 %v7342
        %v7391 = vunpack.c.l.b16 %v7343
        %v7392 = vpack.c.b16 %v7377, %v7376
        %v7393 = vpack.c.b16 %v7379, %v7378
        %v7394 = vpack.c.b16 %v7381, %v7380
        %v7395 = vpack.c.b16 %v7383, %v7382
        %v7396 = vpack.c.b16 %v7385, %v7384
        %v7397 = vpack.c.b16 %v7387, %v7386
        %v7398 = vpack.c.b16 %v7389, %v7388
        %v7399 = vpack.c.b16 %v7391, %v7390
        %7408 = vmatprep.subr.bf16.mxu0 0
        %7409 = vmatpush1.bf16.msra.mxu0 %v7392
        %7410 = vmatprep.subr.bf16.mxu0 0
        %7411 = vmatpush1.bf16.msra.mxu0 %v7393
        %7412 = vmatprep.subr.bf16.mxu0 0
        %7413 = vmatpush1.bf16.msra.mxu0 %v7394
        %7414 = vmatprep.subr.bf16.mxu0 0
        %7415 = vmatpush1.bf16.msra.mxu0 %v7395
        %7416 = vmatprep.subr.bf16.mxu0 0
        %7417 = vmatpush1.bf16.msra.mxu0 %v7396
        %7418 = vmatprep.subr.bf16.mxu0 0
        %7419 = vmatpush1.bf16.msra.mxu0 %v7397
        %7420 = vmatprep.subr.bf16.mxu0 0
        %7421 = vmatpush1.bf16.msra.mxu0 %v7398
        %7422 = vmatprep.subr.bf16.mxu0 0
        %7423 = vmatpush1.bf16.msra.mxu0 %v7399
        %7424 = vmatprep.subr.bf16.mxu0 0
        %7425 = vmatpush1.bf16.msra.mxu0 0
        %7426 = vmatprep.subr.bf16.mxu0 0
        %7427 = vmatpush1.bf16.msra.mxu0 0
        %7428 = vmatprep.subr.bf16.mxu0 0
        %7429 = vmatpush1.bf16.msra.mxu0 0
        %7430 = vmatprep.subr.bf16.mxu0 0
        %7431 = vmatpush1.bf16.msra.mxu0 0
        %7432 = vmatprep.subr.bf16.mxu0 0
        %7433 = vmatpush1.bf16.msra.mxu0 0
        %7434 = vmatprep.subr.bf16.mxu0 0
        %7435 = vmatpush1.bf16.msra.mxu0 0
        %7436 = vmatprep.subr.bf16.mxu0 0
        %7437 = vmatpush1.bf16.msra.mxu0 0
        %7438 = vmatprep.subr.bf16.mxu0 0
        %7439 = vmatpush1.bf16.msra.mxu0 0
        %7440 = vmatprep.mubr.bf16.mxu0 0
        %7441 = vmatmul.mubr.bf16.gmra.mrb[0].mxu0 %v7344
        %v7442 = vpop.f32.mrb[0].mxu0
        %v7443 = vadd.f32 0.0, %v7442
        %v7444 = vpop.f32.mrb[0].mxu0
        %v7445 = vpop.f32.mrb[0].mxu0
        %v7446 = vadd.f32 0.0, %v7445
        %v7447 = vpop.f32.mrb[0].mxu0
        %7448 = vmatprep.mubr.bf16.mxu0 0
        %7449 = vmatmul.mubr.bf16.gmra.mrb[0].mxu0 %v7345
        %v7450 = vpop.f32.mrb[0].mxu0
        %v7451 = vadd.f32 0.0, %v7450
        %v7452 = vpop.f32.mrb[0].mxu0
        %v7453 = vpop.f32.mrb[0].mxu0
        %v7454 = vadd.f32 0.0, %v7453
        %v7455 = vpop.f32.mrb[0].mxu0
        %7456 = vmatprep.mubr.bf16.mxu0 0
        %7457 = vmatmul.mubr.bf16.gmra.mrb[0].mxu0 %v7346
        %v7458 = vpop.f32.mrb[0].mxu0
        %v7459 = vadd.f32 0.0, %v7458
        %v7460 = vpop.f32.mrb[0].mxu0
        %v7461 = vpop.f32.mrb[0].mxu0
        %v7462 = vadd.f32 0.0, %v7461
        %v7463 = vpop.f32.mrb[0].mxu0
        %7464 = vmatprep.mubr.bf16.mxu0 0
        %7465 = vmatmul.mubr.bf16.gmra.mrb[0].mxu0 %v7347
        %v7466 = vpop.f32.mrb[0].mxu0
        %v7467 = vadd.f32 0.0, %v7466
        %v7468 = vpop.f32.mrb[0].mxu0
        %v7469 = vpop.f32.mrb[0].mxu0
        %v7470 = vadd.f32 0.0, %v7469
        %v7471 = vpop.f32.mrb[0].mxu0
        %7472 = vmatprep.mubr.bf16.mxu0 0
        %7473 = vmatmul.mubr.bf16.gmra.mrb[0].mxu0 %v7348
        %v7474 = vpop.f32.mrb[0].mxu0
        %v7475 = vadd.f32 0.0, %v7474
        %v7476 = vpop.f32.mrb[0].mxu0
        %v7477 = vpop.f32.mrb[0].mxu0
        %v7478 = vadd.f32 0.0, %v7477
        %v7479 = vpop.f32.mrb[0].mxu0
        %7480 = vmatprep.mubr.bf16.mxu0 0
        %7481 = vmatmul.mubr.bf16.gmra.mrb[0].mxu0 %v7349
        %v7482 = vpop.f32.mrb[0].mxu0
        %v7483 = vadd.f32 0.0, %v7482
        %v7484 = vpop.f32.mrb[0].mxu0
        %v7485 = vpop.f32.mrb[0].mxu0
        %v7486 = vadd.f32 0.0, %v7485
        %v7487 = vpop.f32.mrb[0].mxu0
        %7488 = vmatprep.mubr.bf16.mxu0 0
        %7489 = vmatmul.mubr.bf16.gmra.mrb[0].mxu0 %v7350
        %v7490 = vpop.f32.mrb[0].mxu0
        %v7491 = vadd.f32 0.0, %v7490
        %v7492 = vpop.f32.mrb[0].mxu0
        %v7493 = vpop.f32.mrb[0].mxu0
        %v7494 = vadd.f32 0.0, %v7493
        %v7495 = vpop.f32.mrb[0].mxu0
        %7496 = vmatprep.mubr.bf16.mxu0 0
        %7497 = vmatmul.mubr.bf16.gmra.mrb[0].mxu0 %v7351
        %v7498 = vpop.f32.mrb[0].mxu0
        %v7499 = vadd.f32 0.0, %v7498
        %v7500 = vpop.f32.mrb[0].mxu0
        %v7501 = vpop.f32.mrb[0].mxu0
        %v7502 = vadd.f32 0.0, %v7501
        %v7503 = vpop.f32.mrb[0].mxu0
        %7504 = vmatprep.mubr.bf16.mxu0 0
        %7505 = vmatmul.mubr.bf16.gmra.mrb[0].mxu0 %v7352
        %v7506 = vpop.f32.mrb[0].mxu0
        %v7507 = vadd.f32 0.0, %v7506
        %v7508 = vpop.f32.mrb[0].mxu0
        %v7509 = vpop.f32.mrb[0].mxu0
        %v7510 = vadd.f32 0.0, %v7509
        %v7511 = vpop.f32.mrb[0].mxu0
        %7512 = vmatprep.mubr.bf16.mxu0 0
        %7513 = vmatmul.mubr.bf16.gmra.mrb[0].mxu0 %v7353
        %v7514 = vpop.f32.mrb[0].mxu0
        %v7515 = vadd.f32 0.0, %v7514
        %v7516 = vpop.f32.mrb[0].mxu0
        %v7517 = vpop.f32.mrb[0].mxu0
        %v7518 = vadd.f32 0.0, %v7517
        %v7519 = vpop.f32.mrb[0].mxu0
        %7520 = vmatprep.mubr.bf16.mxu0 0
        %7521 = vmatmul.mubr.bf16.gmra.mrb[0].mxu0 %v7354
        %v7522 = vpop.f32.mrb[0].mxu0
        %v7523 = vadd.f32 0.0, %v7522
        %v7524 = vpop.f32.mrb[0].mxu0
        %v7525 = vpop.f32.mrb[0].mxu0
        %v7526 = vadd.f32 0.0, %v7525
        %v7527 = vpop.f32.mrb[0].mxu0
        %7528 = vmatprep.mubr.bf16.mxu0 0
        %7529 = vmatmul.mubr.bf16.gmra.mrb[0].mxu0 %v7355
        %v7530 = vpop.f32.mrb[0].mxu0
        %v7531 = vadd.f32 0.0, %v7530
        %v7532 = vpop.f32.mrb[0].mxu0
        %v7533 = vpop.f32.mrb[0].mxu0
        %v7534 = vadd.f32 0.0, %v7533
        %v7535 = vpop.f32.mrb[0].mxu0
        %7536 = vmatprep.mubr.bf16.mxu0 0
        %7537 = vmatmul.mubr.bf16.gmra.mrb[0].mxu0 %v7356
        %v7538 = vpop.f32.mrb[0].mxu0
        %v7539 = vadd.f32 0.0, %v7538
        %v7540 = vpop.f32.mrb[0].mxu0
        %v7541 = vpop.f32.mrb[0].mxu0
        %v7542 = vadd.f32 0.0, %v7541
        %v7543 = vpop.f32.mrb[0].mxu0
        %7544 = vmatprep.mubr.bf16.mxu0 0
        %7545 = vmatmul.mubr.bf16.gmra.mrb[0].mxu0 %v7357
        %v7546 = vpop.f32.mrb[0].mxu0
        %v7547 = vadd.f32 0.0, %v7546
        %v7548 = vpop.f32.mrb[0].mxu0
        %v7549 = vpop.f32.mrb[0].mxu0
        %v7550 = vadd.f32 0.0, %v7549
        %v7551 = vpop.f32.mrb[0].mxu0
        %7552 = vmatprep.mubr.bf16.mxu0 0
        %7553 = vmatmul.mubr.bf16.gmra.mrb[0].mxu0 %v7358
        %v7554 = vpop.f32.mrb[0].mxu0
        %v7555 = vadd.f32 0.0, %v7554
        %v7556 = vpop.f32.mrb[0].mxu0
        %v7557 = vpop.f32.mrb[0].mxu0
        %v7558 = vadd.f32 0.0, %v7557
        %v7559 = vpop.f32.mrb[0].mxu0
        %7560 = vmatprep.mubr.bf16.mxu0 0
        %7561 = vmatmul.mubr.bf16.gmra.mrb[0].mxu0 %v7359
        %v7562 = vpop.f32.mrb[0].mxu0
        %v7563 = vadd.f32 0.0, %v7562
        %v7564 = vpop.f32.mrb[0].mxu0
        %v7565 = vpop.f32.mrb[0].mxu0
        %v7566 = vadd.f32 0.0, %v7565
        %v7567 = vpop.f32.mrb[0].mxu0
        %7568 = vdwg.mxu0
        %v7569 = vadd.f32 %v7263, %v7443
        %v7570 = vadd.f32 %v7264, %v7446
        %v7571 = vadd.f32 %v7265, %v7451
        %v7572 = vadd.f32 %v7266, %v7454
        %v7573 = vadd.f32 %v7267, %v7459
        %v7574 = vadd.f32 %v7268, %v7462
        %v7575 = vadd.f32 %v7269, %v7467
        %v7576 = vadd.f32 %v7270, %v7470
        %v7577 = vadd.f32 %v7271, %v7475
        %v7578 = vadd.f32 %v7272, %v7478
        %v7579 = vadd.f32 %v7273, %v7483
        %v7580 = vadd.f32 %v7274, %v7486
        %v7581 = vadd.f32 %v7275, %v7491
        %v7582 = vadd.f32 %v7276, %v7494
        %v7583 = vadd.f32 %v7277, %v7499
        %v7584 = vadd.f32 %v7278, %v7502
        %v7585 = vadd.f32 %v7279, %v7507
        %v7586 = vadd.f32 %v7280, %v7510
        %v7587 = vadd.f32 %v7281, %v7515
        %v7588 = vadd.f32 %v7282, %v7518
        %v7589 = vadd.f32 %v7283, %v7523
        %v7590 = vadd.f32 %v7284, %v7526
        %v7591 = vadd.f32 %v7285, %v7531
        %v7592 = vadd.f32 %v7286, %v7534
        %v7593 = vadd.f32 %v7287, %v7539
        %v7594 = vadd.f32 %v7288, %v7542
        %v7595 = vadd.f32 %v7289, %v7547
        %v7596 = vadd.f32 %v7290, %v7550
        %v7597 = vadd.f32 %v7291, %v7555
        %v7598 = vadd.f32 %v7292, %v7558
        %v7599 = vadd.f32 %v7293, %v7563
        %v7600 = vadd.f32 %v7294, %v7566
        %v7601 = vld [vmem:[%s6409 + $0x1] sm:$0xff]
        %v7602 = vld [vmem:[%s6409 + $0x9] sm:$0xff]
        %v7603 = vld [vmem:[%s6409 + $0x19] sm:$0xff]
        %v7604 = vld [vmem:[%s6409 + $0x21] sm:$0xff]
        %v7605 = vld [vmem:[%s6409 + $0x31] sm:$0xff]
        %v7606 = vld [vmem:[%s6409 + $0x39] sm:$0xff]
        %v7607 = vld [vmem:[%s6409 + $0x49] sm:$0xff]
        %v7608 = vld [vmem:[%s6409 + $0x51] sm:$0xff]
        %v7609 = vld [vmem:[%s6409 + $0x61] sm:$0xff]
        %v7610 = vld [vmem:[%s6409 + $0x69] sm:$0xff]
        %v7611 = vld [vmem:[%s6409 + $0x79] sm:$0xff]
        %v7612 = vld [vmem:[%s6409 + $0x81] sm:$0xff]
        %v7613 = vld [vmem:[%s6409 + $0x91] sm:$0xff]
        %v7614 = vld [vmem:[%s6409 + $0x99] sm:$0xff]
        %v7615 = vld [vmem:[%s6409 + $0xa9] sm:$0xff]
        %v7616 = vld [vmem:[%s6409 + $0xb1] sm:$0xff]
        %v7617 = vld [vmem:[%s6409 + $0xc1] sm:$0xff]
        %v7618 = vld [vmem:[%s6409 + $0xc9] sm:$0xff]
        %v7619 = vld [vmem:[%s6409 + $0xd9] sm:$0xff]
        %v7620 = vld [vmem:[%s6409 + $0xe1] sm:$0xff]
        %v7621 = vld [vmem:[%s6409 + $0xf1] sm:$0xff]
        %v7622 = vld [vmem:[%s6409 + $0xf9] sm:$0xff]
        %v7623 = vld [vmem:[%s6409 + $0x109] sm:$0xff]
        %v7624 = vld [vmem:[%s6409 + $0x111] sm:$0xff]
        %v7625 = vld [vmem:[%s6409 + $0x121] sm:$0xff]
        %v7626 = vld [vmem:[%s6409 + $0x129] sm:$0xff]
        %v7627 = vld [vmem:[%s6409 + $0x139] sm:$0xff]
        %v7628 = vld [vmem:[%s6409 + $0x141] sm:$0xff]
        %v7629 = vld [vmem:[%s6409 + $0x151] sm:$0xff]
        %v7630 = vld [vmem:[%s6409 + $0x159] sm:$0xff]
        %v7631 = vld [vmem:[%s6409 + $0x169] sm:$0xff]
        %v7632 = vld [vmem:[%s6409 + $0x171] sm:$0xff]
        %s7633 = scalar_lea.vmem %s3, 256
        %v7634 = vld [vmem:[%s7633] sm:$0xf]
        %v7635 = vld [vmem:[%s7633 + $0x4] sm:$0xf]
        %v7636 = vld [vmem:[%s7633 + $0x8] sm:$0xf]
        %v7637 = vld [vmem:[%s7633 + $0xc] sm:$0xf]
        %v7638 = vld [vmem:[%s7633 + $0x10] sm:$0xf]
        %v7639 = vld [vmem:[%s7633 + $0x14] sm:$0xf]
        %v7640 = vld [vmem:[%s7633 + $0x18] sm:$0xf]
        %v7641 = vld [vmem:[%s7633 + $0x1c] sm:$0xf]
        %v7642 = vld [vmem:[%s7633 + $0x20] sm:$0xf]
        %v7643 = vld [vmem:[%s7633 + $0x24] sm:$0xf]
        %v7644 = vld [vmem:[%s7633 + $0x28] sm:$0xf]
        %v7645 = vld [vmem:[%s7633 + $0x2c] sm:$0xf]
        %v7646 = vld [vmem:[%s7633 + $0x30] sm:$0xf]
        %v7647 = vld [vmem:[%s7633 + $0x34] sm:$0xf]
        %v7648 = vld [vmem:[%s7633 + $0x38] sm:$0xf]
        %v7649 = vld [vmem:[%s7633 + $0x3c] sm:$0xf]
        %v7650 = vpack.c.bf16 %v7602, %v7601
        %v7651 = vpack.c.bf16 %v7604, %v7603
        %v7652 = vpack.c.bf16 %v7606, %v7605
        %v7653 = vpack.c.bf16 %v7608, %v7607
        %v7654 = vpack.c.bf16 %v7610, %v7609
        %v7655 = vpack.c.bf16 %v7612, %v7611
        %v7656 = vpack.c.bf16 %v7614, %v7613
        %v7657 = vpack.c.bf16 %v7616, %v7615
        %v7658 = vpack.c.bf16 %v7618, %v7617
        %v7659 = vpack.c.bf16 %v7620, %v7619
        %v7660 = vpack.c.bf16 %v7622, %v7621
        %v7661 = vpack.c.bf16 %v7624, %v7623
        %v7662 = vpack.c.bf16 %v7626, %v7625
        %v7663 = vpack.c.bf16 %v7628, %v7627
        %v7664 = vpack.c.bf16 %v7630, %v7629
        %v7665 = vpack.c.bf16 %v7632, %v7631
        %v7682 = vunpack.c.l.b16 %v7634
        %v7683 = vunpack.c.l.b16 %v7635
        %v7684 = vunpack.c.l.b16 %v7636
        %v7685 = vunpack.c.l.b16 %v7637
        %v7686 = vunpack.c.l.b16 %v7638
        %v7687 = vunpack.c.l.b16 %v7639
        %v7688 = vunpack.c.l.b16 %v7640
        %v7689 = vunpack.c.l.b16 %v7641
        %v7690 = vunpack.c.l.b16 %v7642
        %v7691 = vunpack.c.l.b16 %v7643
        %v7692 = vunpack.c.l.b16 %v7644
        %v7693 = vunpack.c.l.b16 %v7645
        %v7694 = vunpack.c.l.b16 %v7646
        %v7695 = vunpack.c.l.b16 %v7647
        %v7696 = vunpack.c.l.b16 %v7648
        %v7697 = vunpack.c.l.b16 %v7649
        %v7698 = vpack.c.b16 %v7683, %v7682
        %v7699 = vpack.c.b16 %v7685, %v7684
        %v7700 = vpack.c.b16 %v7687, %v7686
        %v7701 = vpack.c.b16 %v7689, %v7688
        %v7702 = vpack.c.b16 %v7691, %v7690
        %v7703 = vpack.c.b16 %v7693, %v7692
        %v7704 = vpack.c.b16 %v7695, %v7694
        %v7705 = vpack.c.b16 %v7697, %v7696
        %7714 = vmatprep.subr.bf16.mxu0 0
        %7715 = vmatpush1.bf16.msra.mxu0 %v7698
        %7716 = vmatprep.subr.bf16.mxu0 0
        %7717 = vmatpush1.bf16.msra.mxu0 %v7699
        %7718 = vmatprep.subr.bf16.mxu0 0
        %7719 = vmatpush1.bf16.msra.mxu0 %v7700
        %7720 = vmatprep.subr.bf16.mxu0 0
        %7721 = vmatpush1.bf16.msra.mxu0 %v7701
        %7722 = vmatprep.subr.bf16.mxu0 0
        %7723 = vmatpush1.bf16.msra.mxu0 %v7702
        %7724 = vmatprep.subr.bf16.mxu0 0
        %7725 = vmatpush1.bf16.msra.mxu0 %v7703
        %7726 = vmatprep.subr.bf16.mxu0 0
        %7727 = vmatpush1.bf16.msra.mxu0 %v7704
        %7728 = vmatprep.subr.bf16.mxu0 0
        %7729 = vmatpush1.bf16.msra.mxu0 %v7705
        %7730 = vmatprep.subr.bf16.mxu0 0
        %7731 = vmatpush1.bf16.msra.mxu0 0
        %7732 = vmatprep.subr.bf16.mxu0 0
        %7733 = vmatpush1.bf16.msra.mxu0 0
        %7734 = vmatprep.subr.bf16.mxu0 0
        %7735 = vmatpush1.bf16.msra.mxu0 0
        %7736 = vmatprep.subr.bf16.mxu0 0
        %7737 = vmatpush1.bf16.msra.mxu0 0
        %7738 = vmatprep.subr.bf16.mxu0 0
        %7739 = vmatpush1.bf16.msra.mxu0 0
        %7740 = vmatprep.subr.bf16.mxu0 0
        %7741 = vmatpush1.bf16.msra.mxu0 0
        %7742 = vmatprep.subr.bf16.mxu0 0
        %7743 = vmatpush1.bf16.msra.mxu0 0
        %7744 = vmatprep.subr.bf16.mxu0 0
        %7745 = vmatpush1.bf16.msra.mxu0 0
        %7746 = vmatprep.mubr.bf16.mxu0 0
        %7747 = vmatmul.mubr.bf16.gmra.mrb[0].mxu0 %v7650
        %v7748 = vpop.f32.mrb[0].mxu0
        %v7749 = vadd.f32 0.0, %v7748
        %v7750 = vpop.f32.mrb[0].mxu0
        %v7751 = vpop.f32.mrb[0].mxu0
        %v7752 = vadd.f32 0.0, %v7751
        %v7753 = vpop.f32.mrb[0].mxu0
        %7754 = vmatprep.mubr.bf16.mxu0 0
        %7755 = vmatmul.mubr.bf16.gmra.mrb[0].mxu0 %v7651
        %v7756 = vpop.f32.mrb[0].mxu0
        %v7757 = vadd.f32 0.0, %v7756
        %v7758 = vpop.f32.mrb[0].mxu0
        %v7759 = vpop.f32.mrb[0].mxu0
        %v7760 = vadd.f32 0.0, %v7759
        %v7761 = vpop.f32.mrb[0].mxu0
        %7762 = vmatprep.mubr.bf16.mxu0 0
        %7763 = vmatmul.mubr.bf16.gmra.mrb[0].mxu0 %v7652
        %v7764 = vpop.f32.mrb[0].mxu0
        %v7765 = vadd.f32 0.0, %v7764
        %v7766 = vpop.f32.mrb[0].mxu0
        %v7767 = vpop.f32.mrb[0].mxu0
        %v7768 = vadd.f32 0.0, %v7767
        %v7769 = vpop.f32.mrb[0].mxu0
        %7770 = vmatprep.mubr.bf16.mxu0 0
        %7771 = vmatmul.mubr.bf16.gmra.mrb[0].mxu0 %v7653
        %v7772 = vpop.f32.mrb[0].mxu0
        %v7773 = vadd.f32 0.0, %v7772
        %v7774 = vpop.f32.mrb[0].mxu0
        %v7775 = vpop.f32.mrb[0].mxu0
        %v7776 = vadd.f32 0.0, %v7775
        %v7777 = vpop.f32.mrb[0].mxu0
        %7778 = vmatprep.mubr.bf16.mxu0 0
        %7779 = vmatmul.mubr.bf16.gmra.mrb[0].mxu0 %v7654
        %v7780 = vpop.f32.mrb[0].mxu0
        %v7781 = vadd.f32 0.0, %v7780
        %v7782 = vpop.f32.mrb[0].mxu0
        %v7783 = vpop.f32.mrb[0].mxu0
        %v7784 = vadd.f32 0.0, %v7783
        %v7785 = vpop.f32.mrb[0].mxu0
        %7786 = vmatprep.mubr.bf16.mxu0 0
        %7787 = vmatmul.mubr.bf16.gmra.mrb[0].mxu0 %v7655
        %v7788 = vpop.f32.mrb[0].mxu0
        %v7789 = vadd.f32 0.0, %v7788
        %v7790 = vpop.f32.mrb[0].mxu0
        %v7791 = vpop.f32.mrb[0].mxu0
        %v7792 = vadd.f32 0.0, %v7791
        %v7793 = vpop.f32.mrb[0].mxu0
        %7794 = vmatprep.mubr.bf16.mxu0 0
        %7795 = vmatmul.mubr.bf16.gmra.mrb[0].mxu0 %v7656
        %v7796 = vpop.f32.mrb[0].mxu0
        %v7797 = vadd.f32 0.0, %v7796
        %v7798 = vpop.f32.mrb[0].mxu0
        %v7799 = vpop.f32.mrb[0].mxu0
        %v7800 = vadd.f32 0.0, %v7799
        %v7801 = vpop.f32.mrb[0].mxu0
        %7802 = vmatprep.mubr.bf16.mxu0 0
        %7803 = vmatmul.mubr.bf16.gmra.mrb[0].mxu0 %v7657
        %v7804 = vpop.f32.mrb[0].mxu0
        %v7805 = vadd.f32 0.0, %v7804
        %v7806 = vpop.f32.mrb[0].mxu0
        %v7807 = vpop.f32.mrb[0].mxu0
        %v7808 = vadd.f32 0.0, %v7807
        %v7809 = vpop.f32.mrb[0].mxu0
        %7810 = vmatprep.mubr.bf16.mxu0 0
        %7811 = vmatmul.mubr.bf16.gmra.mrb[0].mxu0 %v7658
        %v7812 = vpop.f32.mrb[0].mxu0
        %v7813 = vadd.f32 0.0, %v7812
        %v7814 = vpop.f32.mrb[0].mxu0
        %v7815 = vpop.f32.mrb[0].mxu0
        %v7816 = vadd.f32 0.0, %v7815
        %v7817 = vpop.f32.mrb[0].mxu0
        %7818 = vmatprep.mubr.bf16.mxu0 0
        %7819 = vmatmul.mubr.bf16.gmra.mrb[0].mxu0 %v7659
        %v7820 = vpop.f32.mrb[0].mxu0
        %v7821 = vadd.f32 0.0, %v7820
        %v7822 = vpop.f32.mrb[0].mxu0
        %v7823 = vpop.f32.mrb[0].mxu0
        %v7824 = vadd.f32 0.0, %v7823
        %v7825 = vpop.f32.mrb[0].mxu0
        %7826 = vmatprep.mubr.bf16.mxu0 0
        %7827 = vmatmul.mubr.bf16.gmra.mrb[0].mxu0 %v7660
        %v7828 = vpop.f32.mrb[0].mxu0
        %v7829 = vadd.f32 0.0, %v7828
        %v7830 = vpop.f32.mrb[0].mxu0
        %v7831 = vpop.f32.mrb[0].mxu0
        %v7832 = vadd.f32 0.0, %v7831
        %v7833 = vpop.f32.mrb[0].mxu0
        %7834 = vmatprep.mubr.bf16.mxu0 0
        %7835 = vmatmul.mubr.bf16.gmra.mrb[0].mxu0 %v7661
        %v7836 = vpop.f32.mrb[0].mxu0
        %v7837 = vadd.f32 0.0, %v7836
        %v7838 = vpop.f32.mrb[0].mxu0
        %v7839 = vpop.f32.mrb[0].mxu0
        %v7840 = vadd.f32 0.0, %v7839
        %v7841 = vpop.f32.mrb[0].mxu0
        %7842 = vmatprep.mubr.bf16.mxu0 0
        %7843 = vmatmul.mubr.bf16.gmra.mrb[0].mxu0 %v7662
        %v7844 = vpop.f32.mrb[0].mxu0
        %v7845 = vadd.f32 0.0, %v7844
        %v7846 = vpop.f32.mrb[0].mxu0
        %v7847 = vpop.f32.mrb[0].mxu0
        %v7848 = vadd.f32 0.0, %v7847
        %v7849 = vpop.f32.mrb[0].mxu0
        %7850 = vmatprep.mubr.bf16.mxu0 0
        %7851 = vmatmul.mubr.bf16.gmra.mrb[0].mxu0 %v7663
        %v7852 = vpop.f32.mrb[0].mxu0
        %v7853 = vadd.f32 0.0, %v7852
        %v7854 = vpop.f32.mrb[0].mxu0
        %v7855 = vpop.f32.mrb[0].mxu0
        %v7856 = vadd.f32 0.0, %v7855
        %v7857 = vpop.f32.mrb[0].mxu0
        %7858 = vmatprep.mubr.bf16.mxu0 0
        %7859 = vmatmul.mubr.bf16.gmra.mrb[0].mxu0 %v7664
        %v7860 = vpop.f32.mrb[0].mxu0
        %v7861 = vadd.f32 0.0, %v7860
        %v7862 = vpop.f32.mrb[0].mxu0
        %v7863 = vpop.f32.mrb[0].mxu0
        %v7864 = vadd.f32 0.0, %v7863
        %v7865 = vpop.f32.mrb[0].mxu0
        %7866 = vmatprep.mubr.bf16.mxu0 0
        %7867 = vmatmul.mubr.bf16.gmra.mrb[0].mxu0 %v7665
        %v7868 = vpop.f32.mrb[0].mxu0
        %v7869 = vadd.f32 0.0, %v7868
        %v7870 = vpop.f32.mrb[0].mxu0
        %v7871 = vpop.f32.mrb[0].mxu0
        %v7872 = vadd.f32 0.0, %v7871
        %v7873 = vpop.f32.mrb[0].mxu0
        %7874 = vdwg.mxu0
        %v7875 = vadd.f32 %v7569, %v7749
        %v7876 = vadd.f32 %v7570, %v7752
        %v7877 = vadd.f32 %v7571, %v7757
        %v7878 = vadd.f32 %v7572, %v7760
        %v7879 = vadd.f32 %v7573, %v7765
        %v7880 = vadd.f32 %v7574, %v7768
        %v7881 = vadd.f32 %v7575, %v7773
        %v7882 = vadd.f32 %v7576, %v7776
        %v7883 = vadd.f32 %v7577, %v7781
        %v7884 = vadd.f32 %v7578, %v7784
        %v7885 = vadd.f32 %v7579, %v7789
        %v7886 = vadd.f32 %v7580, %v7792
        %v7887 = vadd.f32 %v7581, %v7797
        %v7888 = vadd.f32 %v7582, %v7800
        %v7889 = vadd.f32 %v7583, %v7805
        %v7890 = vadd.f32 %v7584, %v7808
        %v7891 = vadd.f32 %v7585, %v7813
        %v7892 = vadd.f32 %v7586, %v7816
        %v7893 = vadd.f32 %v7587, %v7821
        %v7894 = vadd.f32 %v7588, %v7824
        %v7895 = vadd.f32 %v7589, %v7829
        %v7896 = vadd.f32 %v7590, %v7832
        %v7897 = vadd.f32 %v7591, %v7837
        %v7898 = vadd.f32 %v7592, %v7840
        %v7899 = vadd.f32 %v7593, %v7845
        %v7900 = vadd.f32 %v7594, %v7848
        %v7901 = vadd.f32 %v7595, %v7853
        %v7902 = vadd.f32 %v7596, %v7856
        %v7903 = vadd.f32 %v7597, %v7861
        %v7904 = vadd.f32 %v7598, %v7864
        %v7905 = vadd.f32 %v7599, %v7869
        %v7906 = vadd.f32 %v7600, %v7872
        %v7907 = vld [vmem:[%s6409 + $0x2] sm:$0xff]
        %v7908 = vld [vmem:[%s6409 + $0xa] sm:$0xff]
        %v7909 = vld [vmem:[%s6409 + $0x1a] sm:$0xff]
        %v7910 = vld [vmem:[%s6409 + $0x22] sm:$0xff]
        %v7911 = vld [vmem:[%s6409 + $0x32] sm:$0xff]
        %v7912 = vld [vmem:[%s6409 + $0x3a] sm:$0xff]
        %v7913 = vld [vmem:[%s6409 + $0x4a] sm:$0xff]
        %v7914 = vld [vmem:[%s6409 + $0x52] sm:$0xff]
        %v7915 = vld [vmem:[%s6409 + $0x62] sm:$0xff]
        %v7916 = vld [vmem:[%s6409 + $0x6a] sm:$0xff]
        %v7917 = vld [vmem:[%s6409 + $0x7a] sm:$0xff]
        %v7918 = vld [vmem:[%s6409 + $0x82] sm:$0xff]
        %v7919 = vld [vmem:[%s6409 + $0x92] sm:$0xff]
        %v7920 = vld [vmem:[%s6409 + $0x9a] sm:$0xff]
        %v7921 = vld [vmem:[%s6409 + $0xaa] sm:$0xff]
        %v7922 = vld [vmem:[%s6409 + $0xb2] sm:$0xff]
        %v7923 = vld [vmem:[%s6409 + $0xc2] sm:$0xff]
        %v7924 = vld [vmem:[%s6409 + $0xca] sm:$0xff]
        %v7925 = vld [vmem:[%s6409 + $0xda] sm:$0xff]
        %v7926 = vld [vmem:[%s6409 + $0xe2] sm:$0xff]
        %v7927 = vld [vmem:[%s6409 + $0xf2] sm:$0xff]
        %v7928 = vld [vmem:[%s6409 + $0xfa] sm:$0xff]
        %v7929 = vld [vmem:[%s6409 + $0x10a] sm:$0xff]
        %v7930 = vld [vmem:[%s6409 + $0x112] sm:$0xff]
        %v7931 = vld [vmem:[%s6409 + $0x122] sm:$0xff]
        %v7932 = vld [vmem:[%s6409 + $0x12a] sm:$0xff]
        %v7933 = vld [vmem:[%s6409 + $0x13a] sm:$0xff]
        %v7934 = vld [vmem:[%s6409 + $0x142] sm:$0xff]
        %v7935 = vld [vmem:[%s6409 + $0x152] sm:$0xff]
        %v7936 = vld [vmem:[%s6409 + $0x15a] sm:$0xff]
        %v7937 = vld [vmem:[%s6409 + $0x16a] sm:$0xff]
        %v7938 = vld [vmem:[%s6409 + $0x172] sm:$0xff]
        %s7939 = scalar_lea.vmem %s3, 320
        %v7940 = vld [vmem:[%s7939] sm:$0xf]
        %v7941 = vld [vmem:[%s7939 + $0x4] sm:$0xf]
        %v7942 = vld [vmem:[%s7939 + $0x8] sm:$0xf]
        %v7943 = vld [vmem:[%s7939 + $0xc] sm:$0xf]
        %v7944 = vld [vmem:[%s7939 + $0x10] sm:$0xf]
        %v7945 = vld [vmem:[%s7939 + $0x14] sm:$0xf]
        %v7946 = vld [vmem:[%s7939 + $0x18] sm:$0xf]
        %v7947 = vld [vmem:[%s7939 + $0x1c] sm:$0xf]
        %v7948 = vld [vmem:[%s7939 + $0x20] sm:$0xf]
        %v7949 = vld [vmem:[%s7939 + $0x24] sm:$0xf]
        %v7950 = vld [vmem:[%s7939 + $0x28] sm:$0xf]
        %v7951 = vld [vmem:[%s7939 + $0x2c] sm:$0xf]
        %v7952 = vld [vmem:[%s7939 + $0x30] sm:$0xf]
        %v7953 = vld [vmem:[%s7939 + $0x34] sm:$0xf]
        %v7954 = vld [vmem:[%s7939 + $0x38] sm:$0xf]
        %v7955 = vld [vmem:[%s7939 + $0x3c] sm:$0xf]
        %v7956 = vpack.c.bf16 %v7908, %v7907
        %v7957 = vpack.c.bf16 %v7910, %v7909
        %v7958 = vpack.c.bf16 %v7912, %v7911
        %v7959 = vpack.c.bf16 %v7914, %v7913
        %v7960 = vpack.c.bf16 %v7916, %v7915
        %v7961 = vpack.c.bf16 %v7918, %v7917
        %v7962 = vpack.c.bf16 %v7920, %v7919
        %v7963 = vpack.c.bf16 %v7922, %v7921
        %v7964 = vpack.c.bf16 %v7924, %v7923
        %v7965 = vpack.c.bf16 %v7926, %v7925
        %v7966 = vpack.c.bf16 %v7928, %v7927
        %v7967 = vpack.c.bf16 %v7930, %v7929
        %v7968 = vpack.c.bf16 %v7932, %v7931
        %v7969 = vpack.c.bf16 %v7934, %v7933
        %v7970 = vpack.c.bf16 %v7936, %v7935
        %v7971 = vpack.c.bf16 %v7938, %v7937
        %v7988 = vunpack.c.l.b16 %v7940
        %v7989 = vunpack.c.l.b16 %v7941
        %v7990 = vunpack.c.l.b16 %v7942
        %v7991 = vunpack.c.l.b16 %v7943
        %v7992 = vunpack.c.l.b16 %v7944
        %v7993 = vunpack.c.l.b16 %v7945
        %v7994 = vunpack.c.l.b16 %v7946
        %v7995 = vunpack.c.l.b16 %v7947
        %v7996 = vunpack.c.l.b16 %v7948
        %v7997 = vunpack.c.l.b16 %v7949
        %v7998 = vunpack.c.l.b16 %v7950
        %v7999 = vunpack.c.l.b16 %v7951
        %v8000 = vunpack.c.l.b16 %v7952
        %v8001 = vunpack.c.l.b16 %v7953
        %v8002 = vunpack.c.l.b16 %v7954
        %v8003 = vunpack.c.l.b16 %v7955
        %v8004 = vpack.c.b16 %v7989, %v7988
        %v8005 = vpack.c.b16 %v7991, %v7990
        %v8006 = vpack.c.b16 %v7993, %v7992
        %v8007 = vpack.c.b16 %v7995, %v7994
        %v8008 = vpack.c.b16 %v7997, %v7996
        %v8009 = vpack.c.b16 %v7999, %v7998
        %v8010 = vpack.c.b16 %v8001, %v8000
        %v8011 = vpack.c.b16 %v8003, %v8002
        %8020 = vmatprep.subr.bf16.mxu0 0
        %8021 = vmatpush1.bf16.msra.mxu0 %v8004
        %8022 = vmatprep.subr.bf16.mxu0 0
        %8023 = vmatpush1.bf16.msra.mxu0 %v8005
        %8024 = vmatprep.subr.bf16.mxu0 0
        %8025 = vmatpush1.bf16.msra.mxu0 %v8006
        %8026 = vmatprep.subr.bf16.mxu0 0
        %8027 = vmatpush1.bf16.msra.mxu0 %v8007
        %8028 = vmatprep.subr.bf16.mxu0 0
        %8029 = vmatpush1.bf16.msra.mxu0 %v8008
        %8030 = vmatprep.subr.bf16.mxu0 0
        %8031 = vmatpush1.bf16.msra.mxu0 %v8009
        %8032 = vmatprep.subr.bf16.mxu0 0
        %8033 = vmatpush1.bf16.msra.mxu0 %v8010
        %8034 = vmatprep.subr.bf16.mxu0 0
        %8035 = vmatpush1.bf16.msra.mxu0 %v8011
        %8036 = vmatprep.subr.bf16.mxu0 0
        %8037 = vmatpush1.bf16.msra.mxu0 0
        %8038 = vmatprep.subr.bf16.mxu0 0
        %8039 = vmatpush1.bf16.msra.mxu0 0
        %8040 = vmatprep.subr.bf16.mxu0 0
        %8041 = vmatpush1.bf16.msra.mxu0 0
        %8042 = vmatprep.subr.bf16.mxu0 0
        %8043 = vmatpush1.bf16.msra.mxu0 0
        %8044 = vmatprep.subr.bf16.mxu0 0
        %8045 = vmatpush1.bf16.msra.mxu0 0
        %8046 = vmatprep.subr.bf16.mxu0 0
        %8047 = vmatpush1.bf16.msra.mxu0 0
        %8048 = vmatprep.subr.bf16.mxu0 0
        %8049 = vmatpush1.bf16.msra.mxu0 0
        %8050 = vmatprep.subr.bf16.mxu0 0
        %8051 = vmatpush1.bf16.msra.mxu0 0
        %8052 = vmatprep.mubr.bf16.mxu0 0
        %8053 = vmatmul.mubr.bf16.gmra.mrb[0].mxu0 %v7956
        %v8054 = vpop.f32.mrb[0].mxu0
        %v8055 = vadd.f32 0.0, %v8054
        %v8056 = vpop.f32.mrb[0].mxu0
        %v8057 = vpop.f32.mrb[0].mxu0
        %v8058 = vadd.f32 0.0, %v8057
        %v8059 = vpop.f32.mrb[0].mxu0
        %8060 = vmatprep.mubr.bf16.mxu0 0
        %8061 = vmatmul.mubr.bf16.gmra.mrb[0].mxu0 %v7957
        %v8062 = vpop.f32.mrb[0].mxu0
        %v8063 = vadd.f32 0.0, %v8062
        %v8064 = vpop.f32.mrb[0].mxu0
        %v8065 = vpop.f32.mrb[0].mxu0
        %v8066 = vadd.f32 0.0, %v8065
        %v8067 = vpop.f32.mrb[0].mxu0
        %8068 = vmatprep.mubr.bf16.mxu0 0
        %8069 = vmatmul.mubr.bf16.gmra.mrb[0].mxu0 %v7958
        %v8070 = vpop.f32.mrb[0].mxu0
        %v8071 = vadd.f32 0.0, %v8070
        %v8072 = vpop.f32.mrb[0].mxu0
        %v8073 = vpop.f32.mrb[0].mxu0
        %v8074 = vadd.f32 0.0, %v8073
        %v8075 = vpop.f32.mrb[0].mxu0
        %8076 = vmatprep.mubr.bf16.mxu0 0
        %8077 = vmatmul.mubr.bf16.gmra.mrb[0].mxu0 %v7959
        %v8078 = vpop.f32.mrb[0].mxu0
        %v8079 = vadd.f32 0.0, %v8078
        %v8080 = vpop.f32.mrb[0].mxu0
        %v8081 = vpop.f32.mrb[0].mxu0
        %v8082 = vadd.f32 0.0, %v8081
        %v8083 = vpop.f32.mrb[0].mxu0
        %8084 = vmatprep.mubr.bf16.mxu0 0
        %8085 = vmatmul.mubr.bf16.gmra.mrb[0].mxu0 %v7960
        %v8086 = vpop.f32.mrb[0].mxu0
        %v8087 = vadd.f32 0.0, %v8086
        %v8088 = vpop.f32.mrb[0].mxu0
        %v8089 = vpop.f32.mrb[0].mxu0
        %v8090 = vadd.f32 0.0, %v8089
        %v8091 = vpop.f32.mrb[0].mxu0
        %8092 = vmatprep.mubr.bf16.mxu0 0
        %8093 = vmatmul.mubr.bf16.gmra.mrb[0].mxu0 %v7961
        %v8094 = vpop.f32.mrb[0].mxu0
        %v8095 = vadd.f32 0.0, %v8094
        %v8096 = vpop.f32.mrb[0].mxu0
        %v8097 = vpop.f32.mrb[0].mxu0
        %v8098 = vadd.f32 0.0, %v8097
        %v8099 = vpop.f32.mrb[0].mxu0
        %8100 = vmatprep.mubr.bf16.mxu0 0
        %8101 = vmatmul.mubr.bf16.gmra.mrb[0].mxu0 %v7962
        %v8102 = vpop.f32.mrb[0].mxu0
        %v8103 = vadd.f32 0.0, %v8102
        %v8104 = vpop.f32.mrb[0].mxu0
        %v8105 = vpop.f32.mrb[0].mxu0
        %v8106 = vadd.f32 0.0, %v8105
        %v8107 = vpop.f32.mrb[0].mxu0
        %8108 = vmatprep.mubr.bf16.mxu0 0
        %8109 = vmatmul.mubr.bf16.gmra.mrb[0].mxu0 %v7963
        %v8110 = vpop.f32.mrb[0].mxu0
        %v8111 = vadd.f32 0.0, %v8110
        %v8112 = vpop.f32.mrb[0].mxu0
        %v8113 = vpop.f32.mrb[0].mxu0
        %v8114 = vadd.f32 0.0, %v8113
        %v8115 = vpop.f32.mrb[0].mxu0
        %8116 = vmatprep.mubr.bf16.mxu0 0
        %8117 = vmatmul.mubr.bf16.gmra.mrb[0].mxu0 %v7964
        %v8118 = vpop.f32.mrb[0].mxu0
        %v8119 = vadd.f32 0.0, %v8118
        %v8120 = vpop.f32.mrb[0].mxu0
        %v8121 = vpop.f32.mrb[0].mxu0
        %v8122 = vadd.f32 0.0, %v8121
        %v8123 = vpop.f32.mrb[0].mxu0
        %8124 = vmatprep.mubr.bf16.mxu0 0
        %8125 = vmatmul.mubr.bf16.gmra.mrb[0].mxu0 %v7965
        %v8126 = vpop.f32.mrb[0].mxu0
        %v8127 = vadd.f32 0.0, %v8126
        %v8128 = vpop.f32.mrb[0].mxu0
        %v8129 = vpop.f32.mrb[0].mxu0
        %v8130 = vadd.f32 0.0, %v8129
        %v8131 = vpop.f32.mrb[0].mxu0
        %8132 = vmatprep.mubr.bf16.mxu0 0
        %8133 = vmatmul.mubr.bf16.gmra.mrb[0].mxu0 %v7966
        %v8134 = vpop.f32.mrb[0].mxu0
        %v8135 = vadd.f32 0.0, %v8134
        %v8136 = vpop.f32.mrb[0].mxu0
        %v8137 = vpop.f32.mrb[0].mxu0
        %v8138 = vadd.f32 0.0, %v8137
        %v8139 = vpop.f32.mrb[0].mxu0
        %8140 = vmatprep.mubr.bf16.mxu0 0
        %8141 = vmatmul.mubr.bf16.gmra.mrb[0].mxu0 %v7967
        %v8142 = vpop.f32.mrb[0].mxu0
        %v8143 = vadd.f32 0.0, %v8142
        %v8144 = vpop.f32.mrb[0].mxu0
        %v8145 = vpop.f32.mrb[0].mxu0
        %v8146 = vadd.f32 0.0, %v8145
        %v8147 = vpop.f32.mrb[0].mxu0
        %8148 = vmatprep.mubr.bf16.mxu0 0
        %8149 = vmatmul.mubr.bf16.gmra.mrb[0].mxu0 %v7968
        %v8150 = vpop.f32.mrb[0].mxu0
        %v8151 = vadd.f32 0.0, %v8150
        %v8152 = vpop.f32.mrb[0].mxu0
        %v8153 = vpop.f32.mrb[0].mxu0
        %v8154 = vadd.f32 0.0, %v8153
        %v8155 = vpop.f32.mrb[0].mxu0
        %8156 = vmatprep.mubr.bf16.mxu0 0
        %8157 = vmatmul.mubr.bf16.gmra.mrb[0].mxu0 %v7969
        %v8158 = vpop.f32.mrb[0].mxu0
        %v8159 = vadd.f32 0.0, %v8158
        %v8160 = vpop.f32.mrb[0].mxu0
        %v8161 = vpop.f32.mrb[0].mxu0
        %v8162 = vadd.f32 0.0, %v8161
        %v8163 = vpop.f32.mrb[0].mxu0
        %8164 = vmatprep.mubr.bf16.mxu0 0
        %8165 = vmatmul.mubr.bf16.gmra.mrb[0].mxu0 %v7970
        %v8166 = vpop.f32.mrb[0].mxu0
        %v8167 = vadd.f32 0.0, %v8166
        %v8168 = vpop.f32.mrb[0].mxu0
        %v8169 = vpop.f32.mrb[0].mxu0
        %v8170 = vadd.f32 0.0, %v8169
        %v8171 = vpop.f32.mrb[0].mxu0
        %8172 = vmatprep.mubr.bf16.mxu0 0
        %8173 = vmatmul.mubr.bf16.gmra.mrb[0].mxu0 %v7971
        %v8174 = vpop.f32.mrb[0].mxu0
        %v8175 = vadd.f32 0.0, %v8174
        %v8176 = vpop.f32.mrb[0].mxu0
        %v8177 = vpop.f32.mrb[0].mxu0
        %v8178 = vadd.f32 0.0, %v8177
        %v8179 = vpop.f32.mrb[0].mxu0
        %8180 = vdwg.mxu0
        %v8181 = vadd.f32 %v7875, %v8055
        %v8182 = vadd.f32 %v7876, %v8058
        %v8183 = vadd.f32 %v7877, %v8063
        %v8184 = vadd.f32 %v7878, %v8066
        %v8185 = vadd.f32 %v7879, %v8071
        %v8186 = vadd.f32 %v7880, %v8074
        %v8187 = vadd.f32 %v7881, %v8079
        %v8188 = vadd.f32 %v7882, %v8082
        %v8189 = vadd.f32 %v7883, %v8087
        %v8190 = vadd.f32 %v7884, %v8090
        %v8191 = vadd.f32 %v7885, %v8095
        %v8192 = vadd.f32 %v7886, %v8098
        %v8193 = vadd.f32 %v7887, %v8103
        %v8194 = vadd.f32 %v7888, %v8106
        %v8195 = vadd.f32 %v7889, %v8111
        %v8196 = vadd.f32 %v7890, %v8114
        %v8197 = vadd.f32 %v7891, %v8119
        %v8198 = vadd.f32 %v7892, %v8122
        %v8199 = vadd.f32 %v7893, %v8127
        %v8200 = vadd.f32 %v7894, %v8130
        %v8201 = vadd.f32 %v7895, %v8135
        %v8202 = vadd.f32 %v7896, %v8138
        %v8203 = vadd.f32 %v7897, %v8143
        %v8204 = vadd.f32 %v7898, %v8146
        %v8205 = vadd.f32 %v7899, %v8151
        %v8206 = vadd.f32 %v7900, %v8154
        %v8207 = vadd.f32 %v7901, %v8159
        %v8208 = vadd.f32 %v7902, %v8162
        %v8209 = vadd.f32 %v7903, %v8167
        %v8210 = vadd.f32 %v7904, %v8170
        %v8211 = vadd.f32 %v7905, %v8175
        %v8212 = vadd.f32 %v7906, %v8178
        %s8213 = scalar_lea.vmem [#allocation3], 48
        %v8214 = vld [vmem:[%s8213] sm:$0xff]
        %v8215 = vld [vmem:[%s8213 + $0x8] sm:$0xff]
        %v8216 = vld [vmem:[%s8213 + $0x18] sm:$0xff]
        %v8217 = vld [vmem:[%s8213 + $0x20] sm:$0xff]
        %v8218 = vld [vmem:[%s8213 + $0x30] sm:$0xff]
        %v8219 = vld [vmem:[%s8213 + $0x38] sm:$0xff]
        %v8220 = vld [vmem:[%s8213 + $0x48] sm:$0xff]
        %v8221 = vld [vmem:[%s8213 + $0x50] sm:$0xff]
        %v8222 = vld [vmem:[%s8213 + $0x60] sm:$0xff]
        %v8223 = vld [vmem:[%s8213 + $0x68] sm:$0xff]
        %v8224 = vld [vmem:[%s8213 + $0x78] sm:$0xff]
        %v8225 = vld [vmem:[%s8213 + $0x80] sm:$0xff]
        %v8226 = vld [vmem:[%s8213 + $0x90] sm:$0xff]
        %v8227 = vld [vmem:[%s8213 + $0x98] sm:$0xff]
        %v8228 = vld [vmem:[%s8213 + $0xa8] sm:$0xff]
        %v8229 = vld [vmem:[%s8213 + $0xb0] sm:$0xff]
        %v8230 = vld [vmem:[%s8213 + $0xc0] sm:$0xff]
        %v8231 = vld [vmem:[%s8213 + $0xc8] sm:$0xff]
        %v8232 = vld [vmem:[%s8213 + $0xd8] sm:$0xff]
        %v8233 = vld [vmem:[%s8213 + $0xe0] sm:$0xff]
        %v8234 = vld [vmem:[%s8213 + $0xf0] sm:$0xff]
        %v8235 = vld [vmem:[%s8213 + $0xf8] sm:$0xff]
        %v8236 = vld [vmem:[%s8213 + $0x108] sm:$0xff]
        %v8237 = vld [vmem:[%s8213 + $0x110] sm:$0xff]
        %v8238 = vld [vmem:[%s8213 + $0x120] sm:$0xff]
        %v8239 = vld [vmem:[%s8213 + $0x128] sm:$0xff]
        %v8240 = vld [vmem:[%s8213 + $0x138] sm:$0xff]
        %v8241 = vld [vmem:[%s8213 + $0x140] sm:$0xff]
        %v8242 = vld [vmem:[%s8213 + $0x150] sm:$0xff]
        %v8243 = vld [vmem:[%s8213 + $0x158] sm:$0xff]
        %v8244 = vld [vmem:[%s8213 + $0x168] sm:$0xff]
        %v8245 = vld [vmem:[%s8213 + $0x170] sm:$0xff]
        %s8246 = scalar_lea.vmem %s3, 384
        %v8247 = vld [vmem:[%s8246] sm:$0xf]
        %v8248 = vld [vmem:[%s8246 + $0x4] sm:$0xf]
        %v8249 = vld [vmem:[%s8246 + $0x8] sm:$0xf]
        %v8250 = vld [vmem:[%s8246 + $0xc] sm:$0xf]
        %v8251 = vld [vmem:[%s8246 + $0x10] sm:$0xf]
        %v8252 = vld [vmem:[%s8246 + $0x14] sm:$0xf]
        %v8253 = vld [vmem:[%s8246 + $0x18] sm:$0xf]
        %v8254 = vld [vmem:[%s8246 + $0x1c] sm:$0xf]
        %v8255 = vld [vmem:[%s8246 + $0x20] sm:$0xf]
        %v8256 = vld [vmem:[%s8246 + $0x24] sm:$0xf]
        %v8257 = vld [vmem:[%s8246 + $0x28] sm:$0xf]
        %v8258 = vld [vmem:[%s8246 + $0x2c] sm:$0xf]
        %v8259 = vld [vmem:[%s8246 + $0x30] sm:$0xf]
        %v8260 = vld [vmem:[%s8246 + $0x34] sm:$0xf]
        %v8261 = vld [vmem:[%s8246 + $0x38] sm:$0xf]
        %v8262 = vld [vmem:[%s8246 + $0x3c] sm:$0xf]
        %v8263 = vpack.c.bf16 %v8215, %v8214
        %v8264 = vpack.c.bf16 %v8217, %v8216
        %v8265 = vpack.c.bf16 %v8219, %v8218
        %v8266 = vpack.c.bf16 %v8221, %v8220
        %v8267 = vpack.c.bf16 %v8223, %v8222
        %v8268 = vpack.c.bf16 %v8225, %v8224
        %v8269 = vpack.c.bf16 %v8227, %v8226
        %v8270 = vpack.c.bf16 %v8229, %v8228
        %v8271 = vpack.c.bf16 %v8231, %v8230
        %v8272 = vpack.c.bf16 %v8233, %v8232
        %v8273 = vpack.c.bf16 %v8235, %v8234
        %v8274 = vpack.c.bf16 %v8237, %v8236
        %v8275 = vpack.c.bf16 %v8239, %v8238
        %v8276 = vpack.c.bf16 %v8241, %v8240
        %v8277 = vpack.c.bf16 %v8243, %v8242
        %v8278 = vpack.c.bf16 %v8245, %v8244
        %v8295 = vunpack.c.l.b16 %v8247
        %v8296 = vunpack.c.l.b16 %v8248
        %v8297 = vunpack.c.l.b16 %v8249
        %v8298 = vunpack.c.l.b16 %v8250
        %v8299 = vunpack.c.l.b16 %v8251
        %v8300 = vunpack.c.l.b16 %v8252
        %v8301 = vunpack.c.l.b16 %v8253
        %v8302 = vunpack.c.l.b16 %v8254
        %v8303 = vunpack.c.l.b16 %v8255
        %v8304 = vunpack.c.l.b16 %v8256
        %v8305 = vunpack.c.l.b16 %v8257
        %v8306 = vunpack.c.l.b16 %v8258
        %v8307 = vunpack.c.l.b16 %v8259
        %v8308 = vunpack.c.l.b16 %v8260
        %v8309 = vunpack.c.l.b16 %v8261
        %v8310 = vunpack.c.l.b16 %v8262
        %v8311 = vpack.c.b16 %v8296, %v8295
        %v8312 = vpack.c.b16 %v8298, %v8297
        %v8313 = vpack.c.b16 %v8300, %v8299
        %v8314 = vpack.c.b16 %v8302, %v8301
        %v8315 = vpack.c.b16 %v8304, %v8303
        %v8316 = vpack.c.b16 %v8306, %v8305
        %v8317 = vpack.c.b16 %v8308, %v8307
        %v8318 = vpack.c.b16 %v8310, %v8309
        %8327 = vmatprep.subr.bf16.mxu0 0
        %8328 = vmatpush1.bf16.msra.mxu0 %v8311
        %8329 = vmatprep.subr.bf16.mxu0 0
        %8330 = vmatpush1.bf16.msra.mxu0 %v8312
        %8331 = vmatprep.subr.bf16.mxu0 0
        %8332 = vmatpush1.bf16.msra.mxu0 %v8313
        %8333 = vmatprep.subr.bf16.mxu0 0
        %8334 = vmatpush1.bf16.msra.mxu0 %v8314
        %8335 = vmatprep.subr.bf16.mxu0 0
        %8336 = vmatpush1.bf16.msra.mxu0 %v8315
        %8337 = vmatprep.subr.bf16.mxu0 0
        %8338 = vmatpush1.bf16.msra.mxu0 %v8316
        %8339 = vmatprep.subr.bf16.mxu0 0
        %8340 = vmatpush1.bf16.msra.mxu0 %v8317
        %8341 = vmatprep.subr.bf16.mxu0 0
        %8342 = vmatpush1.bf16.msra.mxu0 %v8318
        %8343 = vmatprep.subr.bf16.mxu0 0
        %8344 = vmatpush1.bf16.msra.mxu0 0
        %8345 = vmatprep.subr.bf16.mxu0 0
        %8346 = vmatpush1.bf16.msra.mxu0 0
        %8347 = vmatprep.subr.bf16.mxu0 0
        %8348 = vmatpush1.bf16.msra.mxu0 0
        %8349 = vmatprep.subr.bf16.mxu0 0
        %8350 = vmatpush1.bf16.msra.mxu0 0
        %8351 = vmatprep.subr.bf16.mxu0 0
        %8352 = vmatpush1.bf16.msra.mxu0 0
        %8353 = vmatprep.subr.bf16.mxu0 0
        %8354 = vmatpush1.bf16.msra.mxu0 0
        %8355 = vmatprep.subr.bf16.mxu0 0
        %8356 = vmatpush1.bf16.msra.mxu0 0
        %8357 = vmatprep.subr.bf16.mxu0 0
        %8358 = vmatpush1.bf16.msra.mxu0 0
        %8359 = vmatprep.mubr.bf16.mxu0 0
        %8360 = vmatmul.mubr.bf16.gmra.mrb[0].mxu0 %v8263
        %v8361 = vpop.f32.mrb[0].mxu0
        %v8362 = vadd.f32 0.0, %v8361
        %v8363 = vpop.f32.mrb[0].mxu0
        %v8364 = vpop.f32.mrb[0].mxu0
        %v8365 = vadd.f32 0.0, %v8364
        %v8366 = vpop.f32.mrb[0].mxu0
        %8367 = vmatprep.mubr.bf16.mxu0 0
        %8368 = vmatmul.mubr.bf16.gmra.mrb[0].mxu0 %v8264
        %v8369 = vpop.f32.mrb[0].mxu0
        %v8370 = vadd.f32 0.0, %v8369
        %v8371 = vpop.f32.mrb[0].mxu0
        %v8372 = vpop.f32.mrb[0].mxu0
        %v8373 = vadd.f32 0.0, %v8372
        %v8374 = vpop.f32.mrb[0].mxu0
        %8375 = vmatprep.mubr.bf16.mxu0 0
        %8376 = vmatmul.mubr.bf16.gmra.mrb[0].mxu0 %v8265
        %v8377 = vpop.f32.mrb[0].mxu0
        %v8378 = vadd.f32 0.0, %v8377
        %v8379 = vpop.f32.mrb[0].mxu0
        %v8380 = vpop.f32.mrb[0].mxu0
        %v8381 = vadd.f32 0.0, %v8380
        %v8382 = vpop.f32.mrb[0].mxu0
        %8383 = vmatprep.mubr.bf16.mxu0 0
        %8384 = vmatmul.mubr.bf16.gmra.mrb[0].mxu0 %v8266
        %v8385 = vpop.f32.mrb[0].mxu0
        %v8386 = vadd.f32 0.0, %v8385
        %v8387 = vpop.f32.mrb[0].mxu0
        %v8388 = vpop.f32.mrb[0].mxu0
        %v8389 = vadd.f32 0.0, %v8388
        %v8390 = vpop.f32.mrb[0].mxu0
        %8391 = vmatprep.mubr.bf16.mxu0 0
        %8392 = vmatmul.mubr.bf16.gmra.mrb[0].mxu0 %v8267
        %v8393 = vpop.f32.mrb[0].mxu0
        %v8394 = vadd.f32 0.0, %v8393
        %v8395 = vpop.f32.mrb[0].mxu0
        %v8396 = vpop.f32.mrb[0].mxu0
        %v8397 = vadd.f32 0.0, %v8396
        %v8398 = vpop.f32.mrb[0].mxu0
        %8399 = vmatprep.mubr.bf16.mxu0 0
        %8400 = vmatmul.mubr.bf16.gmra.mrb[0].mxu0 %v8268
        %v8401 = vpop.f32.mrb[0].mxu0
        %v8402 = vadd.f32 0.0, %v8401
        %v8403 = vpop.f32.mrb[0].mxu0
        %v8404 = vpop.f32.mrb[0].mxu0
        %v8405 = vadd.f32 0.0, %v8404
        %v8406 = vpop.f32.mrb[0].mxu0
        %8407 = vmatprep.mubr.bf16.mxu0 0
        %8408 = vmatmul.mubr.bf16.gmra.mrb[0].mxu0 %v8269
        %v8409 = vpop.f32.mrb[0].mxu0
        %v8410 = vadd.f32 0.0, %v8409
        %v8411 = vpop.f32.mrb[0].mxu0
        %v8412 = vpop.f32.mrb[0].mxu0
        %v8413 = vadd.f32 0.0, %v8412
        %v8414 = vpop.f32.mrb[0].mxu0
        %8415 = vmatprep.mubr.bf16.mxu0 0
        %8416 = vmatmul.mubr.bf16.gmra.mrb[0].mxu0 %v8270
        %v8417 = vpop.f32.mrb[0].mxu0
        %v8418 = vadd.f32 0.0, %v8417
        %v8419 = vpop.f32.mrb[0].mxu0
        %v8420 = vpop.f32.mrb[0].mxu0
        %v8421 = vadd.f32 0.0, %v8420
        %v8422 = vpop.f32.mrb[0].mxu0
        %8423 = vmatprep.mubr.bf16.mxu0 0
        %8424 = vmatmul.mubr.bf16.gmra.mrb[0].mxu0 %v8271
        %v8425 = vpop.f32.mrb[0].mxu0
        %v8426 = vadd.f32 0.0, %v8425
        %v8427 = vpop.f32.mrb[0].mxu0
        %v8428 = vpop.f32.mrb[0].mxu0
        %v8429 = vadd.f32 0.0, %v8428
        %v8430 = vpop.f32.mrb[0].mxu0
        %8431 = vmatprep.mubr.bf16.mxu0 0
        %8432 = vmatmul.mubr.bf16.gmra.mrb[0].mxu0 %v8272
        %v8433 = vpop.f32.mrb[0].mxu0
        %v8434 = vadd.f32 0.0, %v8433
        %v8435 = vpop.f32.mrb[0].mxu0
        %v8436 = vpop.f32.mrb[0].mxu0
        %v8437 = vadd.f32 0.0, %v8436
        %v8438 = vpop.f32.mrb[0].mxu0
        %8439 = vmatprep.mubr.bf16.mxu0 0
        %8440 = vmatmul.mubr.bf16.gmra.mrb[0].mxu0 %v8273
        %v8441 = vpop.f32.mrb[0].mxu0
        %v8442 = vadd.f32 0.0, %v8441
        %v8443 = vpop.f32.mrb[0].mxu0
        %v8444 = vpop.f32.mrb[0].mxu0
        %v8445 = vadd.f32 0.0, %v8444
        %v8446 = vpop.f32.mrb[0].mxu0
        %8447 = vmatprep.mubr.bf16.mxu0 0
        %8448 = vmatmul.mubr.bf16.gmra.mrb[0].mxu0 %v8274
        %v8449 = vpop.f32.mrb[0].mxu0
        %v8450 = vadd.f32 0.0, %v8449
        %v8451 = vpop.f32.mrb[0].mxu0
        %v8452 = vpop.f32.mrb[0].mxu0
        %v8453 = vadd.f32 0.0, %v8452
        %v8454 = vpop.f32.mrb[0].mxu0
        %8455 = vmatprep.mubr.bf16.mxu0 0
        %8456 = vmatmul.mubr.bf16.gmra.mrb[0].mxu0 %v8275
        %v8457 = vpop.f32.mrb[0].mxu0
        %v8458 = vadd.f32 0.0, %v8457
        %v8459 = vpop.f32.mrb[0].mxu0
        %v8460 = vpop.f32.mrb[0].mxu0
        %v8461 = vadd.f32 0.0, %v8460
        %v8462 = vpop.f32.mrb[0].mxu0
        %8463 = vmatprep.mubr.bf16.mxu0 0
        %8464 = vmatmul.mubr.bf16.gmra.mrb[0].mxu0 %v8276
        %v8465 = vpop.f32.mrb[0].mxu0
        %v8466 = vadd.f32 0.0, %v8465
        %v8467 = vpop.f32.mrb[0].mxu0
        %v8468 = vpop.f32.mrb[0].mxu0
        %v8469 = vadd.f32 0.0, %v8468
        %v8470 = vpop.f32.mrb[0].mxu0
        %8471 = vmatprep.mubr.bf16.mxu0 0
        %8472 = vmatmul.mubr.bf16.gmra.mrb[0].mxu0 %v8277
        %v8473 = vpop.f32.mrb[0].mxu0
        %v8474 = vadd.f32 0.0, %v8473
        %v8475 = vpop.f32.mrb[0].mxu0
        %v8476 = vpop.f32.mrb[0].mxu0
        %v8477 = vadd.f32 0.0, %v8476
        %v8478 = vpop.f32.mrb[0].mxu0
        %8479 = vmatprep.mubr.bf16.mxu0 0
        %8480 = vmatmul.mubr.bf16.gmra.mrb[0].mxu0 %v8278
        %v8481 = vpop.f32.mrb[0].mxu0
        %v8482 = vadd.f32 0.0, %v8481
        %v8483 = vpop.f32.mrb[0].mxu0
        %v8484 = vpop.f32.mrb[0].mxu0
        %v8485 = vadd.f32 0.0, %v8484
        %v8486 = vpop.f32.mrb[0].mxu0
        %8487 = vdwg.mxu0
        %v8488 = vadd.f32 %v8181, %v8362
        %v8489 = vadd.f32 %v8182, %v8365
        %v8490 = vadd.f32 %v8183, %v8370
        %v8491 = vadd.f32 %v8184, %v8373
        %v8492 = vadd.f32 %v8185, %v8378
        %v8493 = vadd.f32 %v8186, %v8381
        %v8494 = vadd.f32 %v8187, %v8386
        %v8495 = vadd.f32 %v8188, %v8389
        %v8496 = vadd.f32 %v8189, %v8394
        %v8497 = vadd.f32 %v8190, %v8397
        %v8498 = vadd.f32 %v8191, %v8402
        %v8499 = vadd.f32 %v8192, %v8405
        %v8500 = vadd.f32 %v8193, %v8410
        %v8501 = vadd.f32 %v8194, %v8413
        %v8502 = vadd.f32 %v8195, %v8418
        %v8503 = vadd.f32 %v8196, %v8421
        %v8504 = vadd.f32 %v8197, %v8426
        %v8505 = vadd.f32 %v8198, %v8429
        %v8506 = vadd.f32 %v8199, %v8434
        %v8507 = vadd.f32 %v8200, %v8437
        %v8508 = vadd.f32 %v8201, %v8442
        %v8509 = vadd.f32 %v8202, %v8445
        %v8510 = vadd.f32 %v8203, %v8450
        %v8511 = vadd.f32 %v8204, %v8453
        %v8512 = vadd.f32 %v8205, %v8458
        %v8513 = vadd.f32 %v8206, %v8461
        %v8514 = vadd.f32 %v8207, %v8466
        %v8515 = vadd.f32 %v8208, %v8469
        %v8516 = vadd.f32 %v8209, %v8474
        %v8517 = vadd.f32 %v8210, %v8477
        %v8518 = vadd.f32 %v8211, %v8482
        %v8519 = vadd.f32 %v8212, %v8485
        %v8520 = vld [vmem:[%s8213 + $0x1] sm:$0xff]
        %v8521 = vld [vmem:[%s8213 + $0x9] sm:$0xff]
        %v8522 = vld [vmem:[%s8213 + $0x19] sm:$0xff]
        %v8523 = vld [vmem:[%s8213 + $0x21] sm:$0xff]
        %v8524 = vld [vmem:[%s8213 + $0x31] sm:$0xff]
        %v8525 = vld [vmem:[%s8213 + $0x39] sm:$0xff]
        %v8526 = vld [vmem:[%s8213 + $0x49] sm:$0xff]
        %v8527 = vld [vmem:[%s8213 + $0x51] sm:$0xff]
        %v8528 = vld [vmem:[%s8213 + $0x61] sm:$0xff]
        %v8529 = vld [vmem:[%s8213 + $0x69] sm:$0xff]
        %v8530 = vld [vmem:[%s8213 + $0x79] sm:$0xff]
        %v8531 = vld [vmem:[%s8213 + $0x81] sm:$0xff]
        %v8532 = vld [vmem:[%s8213 + $0x91] sm:$0xff]
        %v8533 = vld [vmem:[%s8213 + $0x99] sm:$0xff]
        %v8534 = vld [vmem:[%s8213 + $0xa9] sm:$0xff]
        %v8535 = vld [vmem:[%s8213 + $0xb1] sm:$0xff]
        %v8536 = vld [vmem:[%s8213 + $0xc1] sm:$0xff]
        %v8537 = vld [vmem:[%s8213 + $0xc9] sm:$0xff]
        %v8538 = vld [vmem:[%s8213 + $0xd9] sm:$0xff]
        %v8539 = vld [vmem:[%s8213 + $0xe1] sm:$0xff]
        %v8540 = vld [vmem:[%s8213 + $0xf1] sm:$0xff]
        %v8541 = vld [vmem:[%s8213 + $0xf9] sm:$0xff]
        %v8542 = vld [vmem:[%s8213 + $0x109] sm:$0xff]
        %v8543 = vld [vmem:[%s8213 + $0x111] sm:$0xff]
        %v8544 = vld [vmem:[%s8213 + $0x121] sm:$0xff]
        %v8545 = vld [vmem:[%s8213 + $0x129] sm:$0xff]
        %v8546 = vld [vmem:[%s8213 + $0x139] sm:$0xff]
        %v8547 = vld [vmem:[%s8213 + $0x141] sm:$0xff]
        %v8548 = vld [vmem:[%s8213 + $0x151] sm:$0xff]
        %v8549 = vld [vmem:[%s8213 + $0x159] sm:$0xff]
        %v8550 = vld [vmem:[%s8213 + $0x169] sm:$0xff]
        %v8551 = vld [vmem:[%s8213 + $0x171] sm:$0xff]
        %s8552 = scalar_lea.vmem %s3, 448
        %v8553 = vld [vmem:[%s8552] sm:$0xf]
        %v8554 = vld [vmem:[%s8552 + $0x4] sm:$0xf]
        %v8555 = vld [vmem:[%s8552 + $0x8] sm:$0xf]
        %v8556 = vld [vmem:[%s8552 + $0xc] sm:$0xf]
        %v8557 = vld [vmem:[%s8552 + $0x10] sm:$0xf]
        %v8558 = vld [vmem:[%s8552 + $0x14] sm:$0xf]
        %v8559 = vld [vmem:[%s8552 + $0x18] sm:$0xf]
        %v8560 = vld [vmem:[%s8552 + $0x1c] sm:$0xf]
        %v8561 = vld [vmem:[%s8552 + $0x20] sm:$0xf]
        %v8562 = vld [vmem:[%s8552 + $0x24] sm:$0xf]
        %v8563 = vld [vmem:[%s8552 + $0x28] sm:$0xf]
        %v8564 = vld [vmem:[%s8552 + $0x2c] sm:$0xf]
        %v8565 = vld [vmem:[%s8552 + $0x30] sm:$0xf]
        %v8566 = vld [vmem:[%s8552 + $0x34] sm:$0xf]
        %v8567 = vld [vmem:[%s8552 + $0x38] sm:$0xf]
        %v8568 = vld [vmem:[%s8552 + $0x3c] sm:$0xf]
        %v8569 = vpack.c.bf16 %v8521, %v8520
        %v8570 = vpack.c.bf16 %v8523, %v8522
        %v8571 = vpack.c.bf16 %v8525, %v8524
        %v8572 = vpack.c.bf16 %v8527, %v8526
        %v8573 = vpack.c.bf16 %v8529, %v8528
        %v8574 = vpack.c.bf16 %v8531, %v8530
        %v8575 = vpack.c.bf16 %v8533, %v8532
        %v8576 = vpack.c.bf16 %v8535, %v8534
        %v8577 = vpack.c.bf16 %v8537, %v8536
        %v8578 = vpack.c.bf16 %v8539, %v8538
        %v8579 = vpack.c.bf16 %v8541, %v8540
        %v8580 = vpack.c.bf16 %v8543, %v8542
        %v8581 = vpack.c.bf16 %v8545, %v8544
        %v8582 = vpack.c.bf16 %v8547, %v8546
        %v8583 = vpack.c.bf16 %v8549, %v8548
        %v8584 = vpack.c.bf16 %v8551, %v8550
        %v8601 = vunpack.c.l.b16 %v8553
        %v8602 = vunpack.c.l.b16 %v8554
        %v8603 = vunpack.c.l.b16 %v8555
        %v8604 = vunpack.c.l.b16 %v8556
        %v8605 = vunpack.c.l.b16 %v8557
        %v8606 = vunpack.c.l.b16 %v8558
        %v8607 = vunpack.c.l.b16 %v8559
        %v8608 = vunpack.c.l.b16 %v8560
        %v8609 = vunpack.c.l.b16 %v8561
        %v8610 = vunpack.c.l.b16 %v8562
        %v8611 = vunpack.c.l.b16 %v8563
        %v8612 = vunpack.c.l.b16 %v8564
        %v8613 = vunpack.c.l.b16 %v8565
        %v8614 = vunpack.c.l.b16 %v8566
        %v8615 = vunpack.c.l.b16 %v8567
        %v8616 = vunpack.c.l.b16 %v8568
        %v8617 = vpack.c.b16 %v8602, %v8601
        %v8618 = vpack.c.b16 %v8604, %v8603
        %v8619 = vpack.c.b16 %v8606, %v8605
        %v8620 = vpack.c.b16 %v8608, %v8607
        %v8621 = vpack.c.b16 %v8610, %v8609
        %v8622 = vpack.c.b16 %v8612, %v8611
        %v8623 = vpack.c.b16 %v8614, %v8613
        %v8624 = vpack.c.b16 %v8616, %v8615
        %8633 = vmatprep.subr.bf16.mxu0 0
        %8634 = vmatpush1.bf16.msra.mxu0 %v8617
        %8635 = vmatprep.subr.bf16.mxu0 0
        %8636 = vmatpush1.bf16.msra.mxu0 %v8618
        %8637 = vmatprep.subr.bf16.mxu0 0
        %8638 = vmatpush1.bf16.msra.mxu0 %v8619
        %8639 = vmatprep.subr.bf16.mxu0 0
        %8640 = vmatpush1.bf16.msra.mxu0 %v8620
        %8641 = vmatprep.subr.bf16.mxu0 0
        %8642 = vmatpush1.bf16.msra.mxu0 %v8621
        %8643 = vmatprep.subr.bf16.mxu0 0
        %8644 = vmatpush1.bf16.msra.mxu0 %v8622
        %8645 = vmatprep.subr.bf16.mxu0 0
        %8646 = vmatpush1.bf16.msra.mxu0 %v8623
        %8647 = vmatprep.subr.bf16.mxu0 0
        %8648 = vmatpush1.bf16.msra.mxu0 %v8624
        %8649 = vmatprep.subr.bf16.mxu0 0
        %8650 = vmatpush1.bf16.msra.mxu0 0
        %8651 = vmatprep.subr.bf16.mxu0 0
        %8652 = vmatpush1.bf16.msra.mxu0 0
        %8653 = vmatprep.subr.bf16.mxu0 0
        %8654 = vmatpush1.bf16.msra.mxu0 0
        %8655 = vmatprep.subr.bf16.mxu0 0
        %8656 = vmatpush1.bf16.msra.mxu0 0
        %8657 = vmatprep.subr.bf16.mxu0 0
        %8658 = vmatpush1.bf16.msra.mxu0 0
        %8659 = vmatprep.subr.bf16.mxu0 0
        %8660 = vmatpush1.bf16.msra.mxu0 0
        %8661 = vmatprep.subr.bf16.mxu0 0
        %8662 = vmatpush1.bf16.msra.mxu0 0
        %8663 = vmatprep.subr.bf16.mxu0 0
        %8664 = vmatpush1.bf16.msra.mxu0 0
        %8665 = vmatprep.mubr.bf16.mxu0 0
        %8666 = vmatmul.mubr.bf16.gmra.mrb[0].mxu0 %v8569
        %v8667 = vpop.f32.mrb[0].mxu0
        %v8668 = vadd.f32 0.0, %v8667
        %v8669 = vpop.f32.mrb[0].mxu0
        %v8670 = vpop.f32.mrb[0].mxu0
        %v8671 = vadd.f32 0.0, %v8670
        %v8672 = vpop.f32.mrb[0].mxu0
        %8673 = vmatprep.mubr.bf16.mxu0 0
        %8674 = vmatmul.mubr.bf16.gmra.mrb[0].mxu0 %v8570
        %v8675 = vpop.f32.mrb[0].mxu0
        %v8676 = vadd.f32 0.0, %v8675
        %v8677 = vpop.f32.mrb[0].mxu0
        %v8678 = vpop.f32.mrb[0].mxu0
        %v8679 = vadd.f32 0.0, %v8678
        %v8680 = vpop.f32.mrb[0].mxu0
        %8681 = vmatprep.mubr.bf16.mxu0 0
        %8682 = vmatmul.mubr.bf16.gmra.mrb[0].mxu0 %v8571
        %v8683 = vpop.f32.mrb[0].mxu0
        %v8684 = vadd.f32 0.0, %v8683
        %v8685 = vpop.f32.mrb[0].mxu0
        %v8686 = vpop.f32.mrb[0].mxu0
        %v8687 = vadd.f32 0.0, %v8686
        %v8688 = vpop.f32.mrb[0].mxu0
        %8689 = vmatprep.mubr.bf16.mxu0 0
        %8690 = vmatmul.mubr.bf16.gmra.mrb[0].mxu0 %v8572
        %v8691 = vpop.f32.mrb[0].mxu0
        %v8692 = vadd.f32 0.0, %v8691
        %v8693 = vpop.f32.mrb[0].mxu0
        %v8694 = vpop.f32.mrb[0].mxu0
        %v8695 = vadd.f32 0.0, %v8694
        %v8696 = vpop.f32.mrb[0].mxu0
        %8697 = vmatprep.mubr.bf16.mxu0 0
        %8698 = vmatmul.mubr.bf16.gmra.mrb[0].mxu0 %v8573
        %v8699 = vpop.f32.mrb[0].mxu0
        %v8700 = vadd.f32 0.0, %v8699
        %v8701 = vpop.f32.mrb[0].mxu0
        %v8702 = vpop.f32.mrb[0].mxu0
        %v8703 = vadd.f32 0.0, %v8702
        %v8704 = vpop.f32.mrb[0].mxu0
        %8705 = vmatprep.mubr.bf16.mxu0 0
        %8706 = vmatmul.mubr.bf16.gmra.mrb[0].mxu0 %v8574
        %v8707 = vpop.f32.mrb[0].mxu0
        %v8708 = vadd.f32 0.0, %v8707
        %v8709 = vpop.f32.mrb[0].mxu0
        %v8710 = vpop.f32.mrb[0].mxu0
        %v8711 = vadd.f32 0.0, %v8710
        %v8712 = vpop.f32.mrb[0].mxu0
        %8713 = vmatprep.mubr.bf16.mxu0 0
        %8714 = vmatmul.mubr.bf16.gmra.mrb[0].mxu0 %v8575
        %v8715 = vpop.f32.mrb[0].mxu0
        %v8716 = vadd.f32 0.0, %v8715
        %v8717 = vpop.f32.mrb[0].mxu0
        %v8718 = vpop.f32.mrb[0].mxu0
        %v8719 = vadd.f32 0.0, %v8718
        %v8720 = vpop.f32.mrb[0].mxu0
        %8721 = vmatprep.mubr.bf16.mxu0 0
        %8722 = vmatmul.mubr.bf16.gmra.mrb[0].mxu0 %v8576
        %v8723 = vpop.f32.mrb[0].mxu0
        %v8724 = vadd.f32 0.0, %v8723
        %v8725 = vpop.f32.mrb[0].mxu0
        %v8726 = vpop.f32.mrb[0].mxu0
        %v8727 = vadd.f32 0.0, %v8726
        %v8728 = vpop.f32.mrb[0].mxu0
        %8729 = vmatprep.mubr.bf16.mxu0 0
        %8730 = vmatmul.mubr.bf16.gmra.mrb[0].mxu0 %v8577
        %v8731 = vpop.f32.mrb[0].mxu0
        %v8732 = vadd.f32 0.0, %v8731
        %v8733 = vpop.f32.mrb[0].mxu0
        %v8734 = vpop.f32.mrb[0].mxu0
        %v8735 = vadd.f32 0.0, %v8734
        %v8736 = vpop.f32.mrb[0].mxu0
        %8737 = vmatprep.mubr.bf16.mxu0 0
        %8738 = vmatmul.mubr.bf16.gmra.mrb[0].mxu0 %v8578
        %v8739 = vpop.f32.mrb[0].mxu0
        %v8740 = vadd.f32 0.0, %v8739
        %v8741 = vpop.f32.mrb[0].mxu0
        %v8742 = vpop.f32.mrb[0].mxu0
        %v8743 = vadd.f32 0.0, %v8742
        %v8744 = vpop.f32.mrb[0].mxu0
        %8745 = vmatprep.mubr.bf16.mxu0 0
        %8746 = vmatmul.mubr.bf16.gmra.mrb[0].mxu0 %v8579
        %v8747 = vpop.f32.mrb[0].mxu0
        %v8748 = vadd.f32 0.0, %v8747
        %v8749 = vpop.f32.mrb[0].mxu0
        %v8750 = vpop.f32.mrb[0].mxu0
        %v8751 = vadd.f32 0.0, %v8750
        %v8752 = vpop.f32.mrb[0].mxu0
        %8753 = vmatprep.mubr.bf16.mxu0 0
        %8754 = vmatmul.mubr.bf16.gmra.mrb[0].mxu0 %v8580
        %v8755 = vpop.f32.mrb[0].mxu0
        %v8756 = vadd.f32 0.0, %v8755
        %v8757 = vpop.f32.mrb[0].mxu0
        %v8758 = vpop.f32.mrb[0].mxu0
        %v8759 = vadd.f32 0.0, %v8758
        %v8760 = vpop.f32.mrb[0].mxu0
        %8761 = vmatprep.mubr.bf16.mxu0 0
        %8762 = vmatmul.mubr.bf16.gmra.mrb[0].mxu0 %v8581
        %v8763 = vpop.f32.mrb[0].mxu0
        %v8764 = vadd.f32 0.0, %v8763
        %v8765 = vpop.f32.mrb[0].mxu0
        %v8766 = vpop.f32.mrb[0].mxu0
        %v8767 = vadd.f32 0.0, %v8766
        %v8768 = vpop.f32.mrb[0].mxu0
        %8769 = vmatprep.mubr.bf16.mxu0 0
        %8770 = vmatmul.mubr.bf16.gmra.mrb[0].mxu0 %v8582
        %v8771 = vpop.f32.mrb[0].mxu0
        %v8772 = vadd.f32 0.0, %v8771
        %v8773 = vpop.f32.mrb[0].mxu0
        %v8774 = vpop.f32.mrb[0].mxu0
        %v8775 = vadd.f32 0.0, %v8774
        %v8776 = vpop.f32.mrb[0].mxu0
        %8777 = vmatprep.mubr.bf16.mxu0 0
        %8778 = vmatmul.mubr.bf16.gmra.mrb[0].mxu0 %v8583
        %v8779 = vpop.f32.mrb[0].mxu0
        %v8780 = vadd.f32 0.0, %v8779
        %v8781 = vpop.f32.mrb[0].mxu0
        %v8782 = vpop.f32.mrb[0].mxu0
        %v8783 = vadd.f32 0.0, %v8782
        %v8784 = vpop.f32.mrb[0].mxu0
        %8785 = vmatprep.mubr.bf16.mxu0 0
        %8786 = vmatmul.mubr.bf16.gmra.mrb[0].mxu0 %v8584
        %v8787 = vpop.f32.mrb[0].mxu0
        %v8788 = vadd.f32 0.0, %v8787
        %v8789 = vpop.f32.mrb[0].mxu0
        %v8790 = vpop.f32.mrb[0].mxu0
        %v8791 = vadd.f32 0.0, %v8790
        %v8792 = vpop.f32.mrb[0].mxu0
        %8793 = vdwg.mxu0
        %v8794 = vadd.f32 %v8488, %v8668
        %v8795 = vadd.f32 %v8489, %v8671
        %v8796 = vadd.f32 %v8490, %v8676
        %v8797 = vadd.f32 %v8491, %v8679
        %v8798 = vadd.f32 %v8492, %v8684
        %v8799 = vadd.f32 %v8493, %v8687
        %v8800 = vadd.f32 %v8494, %v8692
        %v8801 = vadd.f32 %v8495, %v8695
        %v8802 = vadd.f32 %v8496, %v8700
        %v8803 = vadd.f32 %v8497, %v8703
        %v8804 = vadd.f32 %v8498, %v8708
        %v8805 = vadd.f32 %v8499, %v8711
        %v8806 = vadd.f32 %v8500, %v8716
        %v8807 = vadd.f32 %v8501, %v8719
        %v8808 = vadd.f32 %v8502, %v8724
        %v8809 = vadd.f32 %v8503, %v8727
        %v8810 = vadd.f32 %v8504, %v8732
        %v8811 = vadd.f32 %v8505, %v8735
        %v8812 = vadd.f32 %v8506, %v8740
        %v8813 = vadd.f32 %v8507, %v8743
        %v8814 = vadd.f32 %v8508, %v8748
        %v8815 = vadd.f32 %v8509, %v8751
        %v8816 = vadd.f32 %v8510, %v8756
        %v8817 = vadd.f32 %v8511, %v8759
        %v8818 = vadd.f32 %v8512, %v8764
        %v8819 = vadd.f32 %v8513, %v8767
        %v8820 = vadd.f32 %v8514, %v8772
        %v8821 = vadd.f32 %v8515, %v8775
        %v8822 = vadd.f32 %v8516, %v8780
        %v8823 = vadd.f32 %v8517, %v8783
        %v8824 = vadd.f32 %v8518, %v8788
        %v8825 = vadd.f32 %v8519, %v8791
        %v8826 = vld [vmem:[%s8213 + $0x2] sm:$0xff]
        %v8827 = vld [vmem:[%s8213 + $0xa] sm:$0xff]
        %v8828 = vld [vmem:[%s8213 + $0x1a] sm:$0xff]
        %v8829 = vld [vmem:[%s8213 + $0x22] sm:$0xff]
        %v8830 = vld [vmem:[%s8213 + $0x32] sm:$0xff]
        %v8831 = vld [vmem:[%s8213 + $0x3a] sm:$0xff]
        %v8832 = vld [vmem:[%s8213 + $0x4a] sm:$0xff]
        %v8833 = vld [vmem:[%s8213 + $0x52] sm:$0xff]
        %v8834 = vld [vmem:[%s8213 + $0x62] sm:$0xff]
        %v8835 = vld [vmem:[%s8213 + $0x6a] sm:$0xff]
        %v8836 = vld [vmem:[%s8213 + $0x7a] sm:$0xff]
        %v8837 = vld [vmem:[%s8213 + $0x82] sm:$0xff]
        %v8838 = vld [vmem:[%s8213 + $0x92] sm:$0xff]
        %v8839 = vld [vmem:[%s8213 + $0x9a] sm:$0xff]
        %v8840 = vld [vmem:[%s8213 + $0xaa] sm:$0xff]
        %v8841 = vld [vmem:[%s8213 + $0xb2] sm:$0xff]
        %v8842 = vld [vmem:[%s8213 + $0xc2] sm:$0xff]
        %v8843 = vld [vmem:[%s8213 + $0xca] sm:$0xff]
        %v8844 = vld [vmem:[%s8213 + $0xda] sm:$0xff]
        %v8845 = vld [vmem:[%s8213 + $0xe2] sm:$0xff]
        %v8846 = vld [vmem:[%s8213 + $0xf2] sm:$0xff]
        %v8847 = vld [vmem:[%s8213 + $0xfa] sm:$0xff]
        %v8848 = vld [vmem:[%s8213 + $0x10a] sm:$0xff]
        %v8849 = vld [vmem:[%s8213 + $0x112] sm:$0xff]
        %v8850 = vld [vmem:[%s8213 + $0x122] sm:$0xff]
        %v8851 = vld [vmem:[%s8213 + $0x12a] sm:$0xff]
        %v8852 = vld [vmem:[%s8213 + $0x13a] sm:$0xff]
        %v8853 = vld [vmem:[%s8213 + $0x142] sm:$0xff]
        %v8854 = vld [vmem:[%s8213 + $0x152] sm:$0xff]
        %v8855 = vld [vmem:[%s8213 + $0x15a] sm:$0xff]
        %v8856 = vld [vmem:[%s8213 + $0x16a] sm:$0xff]
        %v8857 = vld [vmem:[%s8213 + $0x172] sm:$0xff]
        %s8858 = scalar_lea.vmem %s3, 512
        %v8859 = vld [vmem:[%s8858] sm:$0xf]
        %v8860 = vld [vmem:[%s8858 + $0x4] sm:$0xf]
        %v8861 = vld [vmem:[%s8858 + $0x8] sm:$0xf]
        %v8862 = vld [vmem:[%s8858 + $0xc] sm:$0xf]
        %v8863 = vld [vmem:[%s8858 + $0x10] sm:$0xf]
        %v8864 = vld [vmem:[%s8858 + $0x14] sm:$0xf]
        %v8865 = vld [vmem:[%s8858 + $0x18] sm:$0xf]
        %v8866 = vld [vmem:[%s8858 + $0x1c] sm:$0xf]
        %v8867 = vld [vmem:[%s8858 + $0x20] sm:$0xf]
        %v8868 = vld [vmem:[%s8858 + $0x24] sm:$0xf]
        %v8869 = vld [vmem:[%s8858 + $0x28] sm:$0xf]
        %v8870 = vld [vmem:[%s8858 + $0x2c] sm:$0xf]
        %v8871 = vld [vmem:[%s8858 + $0x30] sm:$0xf]
        %v8872 = vld [vmem:[%s8858 + $0x34] sm:$0xf]
        %v8873 = vld [vmem:[%s8858 + $0x38] sm:$0xf]
        %v8874 = vld [vmem:[%s8858 + $0x3c] sm:$0xf]
        %v8875 = vpack.c.bf16 %v8827, %v8826
        %v8876 = vpack.c.bf16 %v8829, %v8828
        %v8877 = vpack.c.bf16 %v8831, %v8830
        %v8878 = vpack.c.bf16 %v8833, %v8832
        %v8879 = vpack.c.bf16 %v8835, %v8834
        %v8880 = vpack.c.bf16 %v8837, %v8836
        %v8881 = vpack.c.bf16 %v8839, %v8838
        %v8882 = vpack.c.bf16 %v8841, %v8840
        %v8883 = vpack.c.bf16 %v8843, %v8842
        %v8884 = vpack.c.bf16 %v8845, %v8844
        %v8885 = vpack.c.bf16 %v8847, %v8846
        %v8886 = vpack.c.bf16 %v8849, %v8848
        %v8887 = vpack.c.bf16 %v8851, %v8850
        %v8888 = vpack.c.bf16 %v8853, %v8852
        %v8889 = vpack.c.bf16 %v8855, %v8854
        %v8890 = vpack.c.bf16 %v8857, %v8856
        %v8907 = vunpack.c.l.b16 %v8859
        %v8908 = vunpack.c.l.b16 %v8860
        %v8909 = vunpack.c.l.b16 %v8861
        %v8910 = vunpack.c.l.b16 %v8862
        %v8911 = vunpack.c.l.b16 %v8863
        %v8912 = vunpack.c.l.b16 %v8864
        %v8913 = vunpack.c.l.b16 %v8865
        %v8914 = vunpack.c.l.b16 %v8866
        %v8915 = vunpack.c.l.b16 %v8867
        %v8916 = vunpack.c.l.b16 %v8868
        %v8917 = vunpack.c.l.b16 %v8869
        %v8918 = vunpack.c.l.b16 %v8870
        %v8919 = vunpack.c.l.b16 %v8871
        %v8920 = vunpack.c.l.b16 %v8872
        %v8921 = vunpack.c.l.b16 %v8873
        %v8922 = vunpack.c.l.b16 %v8874
        %v8923 = vpack.c.b16 %v8908, %v8907
        %v8924 = vpack.c.b16 %v8910, %v8909
        %v8925 = vpack.c.b16 %v8912, %v8911
        %v8926 = vpack.c.b16 %v8914, %v8913
        %v8927 = vpack.c.b16 %v8916, %v8915
        %v8928 = vpack.c.b16 %v8918, %v8917
        %v8929 = vpack.c.b16 %v8920, %v8919
        %v8930 = vpack.c.b16 %v8922, %v8921
        %8939 = vmatprep.subr.bf16.mxu0 0
        %8940 = vmatpush1.bf16.msra.mxu0 %v8923
        %8941 = vmatprep.subr.bf16.mxu0 0
        %8942 = vmatpush1.bf16.msra.mxu0 %v8924
        %8943 = vmatprep.subr.bf16.mxu0 0
        %8944 = vmatpush1.bf16.msra.mxu0 %v8925
        %8945 = vmatprep.subr.bf16.mxu0 0
        %8946 = vmatpush1.bf16.msra.mxu0 %v8926
        %8947 = vmatprep.subr.bf16.mxu0 0
        %8948 = vmatpush1.bf16.msra.mxu0 %v8927
        %8949 = vmatprep.subr.bf16.mxu0 0
        %8950 = vmatpush1.bf16.msra.mxu0 %v8928
        %8951 = vmatprep.subr.bf16.mxu0 0
        %8952 = vmatpush1.bf16.msra.mxu0 %v8929
        %8953 = vmatprep.subr.bf16.mxu0 0
        %8954 = vmatpush1.bf16.msra.mxu0 %v8930
        %8955 = vmatprep.subr.bf16.mxu0 0
        %8956 = vmatpush1.bf16.msra.mxu0 0
        %8957 = vmatprep.subr.bf16.mxu0 0
        %8958 = vmatpush1.bf16.msra.mxu0 0
        %8959 = vmatprep.subr.bf16.mxu0 0
        %8960 = vmatpush1.bf16.msra.mxu0 0
        %8961 = vmatprep.subr.bf16.mxu0 0
        %8962 = vmatpush1.bf16.msra.mxu0 0
        %8963 = vmatprep.subr.bf16.mxu0 0
        %8964 = vmatpush1.bf16.msra.mxu0 0
        %8965 = vmatprep.subr.bf16.mxu0 0
        %8966 = vmatpush1.bf16.msra.mxu0 0
        %8967 = vmatprep.subr.bf16.mxu0 0
        %8968 = vmatpush1.bf16.msra.mxu0 0
        %8969 = vmatprep.subr.bf16.mxu0 0
        %8970 = vmatpush1.bf16.msra.mxu0 0
        %8971 = vmatprep.mubr.bf16.mxu0 0
        %8972 = vmatmul.mubr.bf16.gmra.mrb[0].mxu0 %v8875
        %v8973 = vpop.f32.mrb[0].mxu0
        %v8974 = vadd.f32 0.0, %v8973
        %v8975 = vpop.f32.mrb[0].mxu0
        %v8976 = vpop.f32.mrb[0].mxu0
        %v8977 = vadd.f32 0.0, %v8976
        %v8978 = vpop.f32.mrb[0].mxu0
        %8979 = vmatprep.mubr.bf16.mxu0 0
        %8980 = vmatmul.mubr.bf16.gmra.mrb[0].mxu0 %v8876
        %v8981 = vpop.f32.mrb[0].mxu0
        %v8982 = vadd.f32 0.0, %v8981
        %v8983 = vpop.f32.mrb[0].mxu0
        %v8984 = vpop.f32.mrb[0].mxu0
        %v8985 = vadd.f32 0.0, %v8984
        %v8986 = vpop.f32.mrb[0].mxu0
        %8987 = vmatprep.mubr.bf16.mxu0 0
        %8988 = vmatmul.mubr.bf16.gmra.mrb[0].mxu0 %v8877
        %v8989 = vpop.f32.mrb[0].mxu0
        %v8990 = vadd.f32 0.0, %v8989
        %v8991 = vpop.f32.mrb[0].mxu0
        %v8992 = vpop.f32.mrb[0].mxu0
        %v8993 = vadd.f32 0.0, %v8992
        %v8994 = vpop.f32.mrb[0].mxu0
        %8995 = vmatprep.mubr.bf16.mxu0 0
        %8996 = vmatmul.mubr.bf16.gmra.mrb[0].mxu0 %v8878
        %v8997 = vpop.f32.mrb[0].mxu0
        %v8998 = vadd.f32 0.0, %v8997
        %v8999 = vpop.f32.mrb[0].mxu0
        %v9000 = vpop.f32.mrb[0].mxu0
        %v9001 = vadd.f32 0.0, %v9000
        %v9002 = vpop.f32.mrb[0].mxu0
        %9003 = vmatprep.mubr.bf16.mxu0 0
        %9004 = vmatmul.mubr.bf16.gmra.mrb[0].mxu0 %v8879
        %v9005 = vpop.f32.mrb[0].mxu0
        %v9006 = vadd.f32 0.0, %v9005
        %v9007 = vpop.f32.mrb[0].mxu0
        %v9008 = vpop.f32.mrb[0].mxu0
        %v9009 = vadd.f32 0.0, %v9008
        %v9010 = vpop.f32.mrb[0].mxu0
        %9011 = vmatprep.mubr.bf16.mxu0 0
        %9012 = vmatmul.mubr.bf16.gmra.mrb[0].mxu0 %v8880
        %v9013 = vpop.f32.mrb[0].mxu0
        %v9014 = vadd.f32 0.0, %v9013
        %v9015 = vpop.f32.mrb[0].mxu0
        %v9016 = vpop.f32.mrb[0].mxu0
        %v9017 = vadd.f32 0.0, %v9016
        %v9018 = vpop.f32.mrb[0].mxu0
        %9019 = vmatprep.mubr.bf16.mxu0 0
        %9020 = vmatmul.mubr.bf16.gmra.mrb[0].mxu0 %v8881
        %v9021 = vpop.f32.mrb[0].mxu0
        %v9022 = vadd.f32 0.0, %v9021
        %v9023 = vpop.f32.mrb[0].mxu0
        %v9024 = vpop.f32.mrb[0].mxu0
        %v9025 = vadd.f32 0.0, %v9024
        %v9026 = vpop.f32.mrb[0].mxu0
        %9027 = vmatprep.mubr.bf16.mxu0 0
        %9028 = vmatmul.mubr.bf16.gmra.mrb[0].mxu0 %v8882
        %v9029 = vpop.f32.mrb[0].mxu0
        %v9030 = vadd.f32 0.0, %v9029
        %v9031 = vpop.f32.mrb[0].mxu0
        %v9032 = vpop.f32.mrb[0].mxu0
        %v9033 = vadd.f32 0.0, %v9032
        %v9034 = vpop.f32.mrb[0].mxu0
        %9035 = vmatprep.mubr.bf16.mxu0 0
        %9036 = vmatmul.mubr.bf16.gmra.mrb[0].mxu0 %v8883
        %v9037 = vpop.f32.mrb[0].mxu0
        %v9038 = vadd.f32 0.0, %v9037
        %v9039 = vpop.f32.mrb[0].mxu0
        %v9040 = vpop.f32.mrb[0].mxu0
        %v9041 = vadd.f32 0.0, %v9040
        %v9042 = vpop.f32.mrb[0].mxu0
        %9043 = vmatprep.mubr.bf16.mxu0 0
        %9044 = vmatmul.mubr.bf16.gmra.mrb[0].mxu0 %v8884
        %v9045 = vpop.f32.mrb[0].mxu0
        %v9046 = vadd.f32 0.0, %v9045
        %v9047 = vpop.f32.mrb[0].mxu0
        %v9048 = vpop.f32.mrb[0].mxu0
        %v9049 = vadd.f32 0.0, %v9048
        %v9050 = vpop.f32.mrb[0].mxu0
        %9051 = vmatprep.mubr.bf16.mxu0 0
        %9052 = vmatmul.mubr.bf16.gmra.mrb[0].mxu0 %v8885
        %v9053 = vpop.f32.mrb[0].mxu0
        %v9054 = vadd.f32 0.0, %v9053
        %v9055 = vpop.f32.mrb[0].mxu0
        %v9056 = vpop.f32.mrb[0].mxu0
        %v9057 = vadd.f32 0.0, %v9056
        %v9058 = vpop.f32.mrb[0].mxu0
        %9059 = vmatprep.mubr.bf16.mxu0 0
        %9060 = vmatmul.mubr.bf16.gmra.mrb[0].mxu0 %v8886
        %v9061 = vpop.f32.mrb[0].mxu0
        %v9062 = vadd.f32 0.0, %v9061
        %v9063 = vpop.f32.mrb[0].mxu0
        %v9064 = vpop.f32.mrb[0].mxu0
        %v9065 = vadd.f32 0.0, %v9064
        %v9066 = vpop.f32.mrb[0].mxu0
        %9067 = vmatprep.mubr.bf16.mxu0 0
        %9068 = vmatmul.mubr.bf16.gmra.mrb[0].mxu0 %v8887
        %v9069 = vpop.f32.mrb[0].mxu0
        %v9070 = vadd.f32 0.0, %v9069
        %v9071 = vpop.f32.mrb[0].mxu0
        %v9072 = vpop.f32.mrb[0].mxu0
        %v9073 = vadd.f32 0.0, %v9072
        %v9074 = vpop.f32.mrb[0].mxu0
        %9075 = vmatprep.mubr.bf16.mxu0 0
        %9076 = vmatmul.mubr.bf16.gmra.mrb[0].mxu0 %v8888
        %v9077 = vpop.f32.mrb[0].mxu0
        %v9078 = vadd.f32 0.0, %v9077
        %v9079 = vpop.f32.mrb[0].mxu0
        %v9080 = vpop.f32.mrb[0].mxu0
        %v9081 = vadd.f32 0.0, %v9080
        %v9082 = vpop.f32.mrb[0].mxu0
        %9083 = vmatprep.mubr.bf16.mxu0 0
        %9084 = vmatmul.mubr.bf16.gmra.mrb[0].mxu0 %v8889
        %v9085 = vpop.f32.mrb[0].mxu0
        %v9086 = vadd.f32 0.0, %v9085
        %v9087 = vpop.f32.mrb[0].mxu0
        %v9088 = vpop.f32.mrb[0].mxu0
        %v9089 = vadd.f32 0.0, %v9088
        %v9090 = vpop.f32.mrb[0].mxu0
        %9091 = vmatprep.mubr.bf16.mxu0 0
        %9092 = vmatmul.mubr.bf16.gmra.mrb[0].mxu0 %v8890
        %v9093 = vpop.f32.mrb[0].mxu0
        %v9094 = vadd.f32 0.0, %v9093
        %v9095 = vpop.f32.mrb[0].mxu0
        %v9096 = vpop.f32.mrb[0].mxu0
        %v9097 = vadd.f32 0.0, %v9096
        %v9098 = vpop.f32.mrb[0].mxu0
        %9099 = vdwg.mxu0
        %v9100 = vadd.f32 %v8794, %v8974
        %v9101 = vadd.f32 %v8795, %v8977
        %v9102 = vadd.f32 %v8796, %v8982
        %v9103 = vadd.f32 %v8797, %v8985
        %v9104 = vadd.f32 %v8798, %v8990
        %v9105 = vadd.f32 %v8799, %v8993
        %v9106 = vadd.f32 %v8800, %v8998
        %v9107 = vadd.f32 %v8801, %v9001
        %v9108 = vadd.f32 %v8802, %v9006
        %v9109 = vadd.f32 %v8803, %v9009
        %v9110 = vadd.f32 %v8804, %v9014
        %v9111 = vadd.f32 %v8805, %v9017
        %v9112 = vadd.f32 %v8806, %v9022
        %v9113 = vadd.f32 %v8807, %v9025
        %v9114 = vadd.f32 %v8808, %v9030
        %v9115 = vadd.f32 %v8809, %v9033
        %v9116 = vadd.f32 %v8810, %v9038
        %v9117 = vadd.f32 %v8811, %v9041
        %v9118 = vadd.f32 %v8812, %v9046
        %v9119 = vadd.f32 %v8813, %v9049
        %v9120 = vadd.f32 %v8814, %v9054
        %v9121 = vadd.f32 %v8815, %v9057
        %v9122 = vadd.f32 %v8816, %v9062
        %v9123 = vadd.f32 %v8817, %v9065
        %v9124 = vadd.f32 %v8818, %v9070
        %v9125 = vadd.f32 %v8819, %v9073
        %v9126 = vadd.f32 %v8820, %v9078
        %v9127 = vadd.f32 %v8821, %v9081
        %v9128 = vadd.f32 %v8822, %v9086
        %v9129 = vadd.f32 %v8823, %v9089
        %v9130 = vadd.f32 %v8824, %v9094
        %v9131 = vadd.f32 %v8825, %v9097
        %v9132 = vsel %vm2923, %v9100, 0.0
        %v9133 = vsel %vm2923, %v9101, 0.0
        %v9134 = vadd.f32 %v9132, %v9133
        %v9135 = vsel %vm2923, %v9102, 0.0
        %v9136 = vadd.f32 %v9134, %v9135
        %v9137 = vsel %vm2923, %v9103, 0.0
        %v9138 = vadd.f32 %v9136, %v9137
        %v9139 = vsel %vm2923, %v9104, 0.0
        %v9140 = vadd.f32 %v9138, %v9139
        %v9141 = vsel %vm2923, %v9105, 0.0
        %v9142 = vadd.f32 %v9140, %v9141
        %v9143 = vsel %vm2923, %v9106, 0.0
        %v9144 = vadd.f32 %v9142, %v9143
        %v9145 = vsel %vm2923, %v9107, 0.0
        %v9146 = vadd.f32 %v9144, %v9145
        %v9147 = vsel %vm2923, %v9108, 0.0
        %v9148 = vadd.f32 %v9146, %v9147
        %v9149 = vsel %vm2923, %v9109, 0.0
        %v9150 = vadd.f32 %v9148, %v9149
        %v9151 = vsel %vm2923, %v9110, 0.0
        %v9152 = vadd.f32 %v9150, %v9151
        %v9153 = vsel %vm2923, %v9111, 0.0
        %v9154 = vadd.f32 %v9152, %v9153
        %v9155 = vsel %vm2923, %v9112, 0.0
        %v9156 = vadd.f32 %v9154, %v9155
        %v9157 = vsel %vm2923, %v9113, 0.0
        %v9158 = vadd.f32 %v9156, %v9157
        %v9159 = vsel %vm2923, %v9114, 0.0
        %v9160 = vadd.f32 %v9158, %v9159
        %v9161 = vsel %vm2923, %v9115, 0.0
        %v9162 = vadd.f32 %v9160, %v9161
        %v9163 = vsel %vm2923, %v9116, 0.0
        %v9164 = vadd.f32 %v9162, %v9163
        %v9165 = vsel %vm2923, %v9117, 0.0
        %v9166 = vadd.f32 %v9164, %v9165
        %v9167 = vsel %vm2923, %v9118, 0.0
        %v9168 = vadd.f32 %v9166, %v9167
        %v9169 = vsel %vm2923, %v9119, 0.0
        %v9170 = vadd.f32 %v9168, %v9169
        %v9171 = vsel %vm2923, %v9120, 0.0
        %v9172 = vadd.f32 %v9170, %v9171
        %v9173 = vsel %vm2923, %v9121, 0.0
        %v9174 = vadd.f32 %v9172, %v9173
        %v9175 = vsel %vm2923, %v9122, 0.0
        %v9176 = vadd.f32 %v9174, %v9175
        %v9177 = vsel %vm2923, %v9123, 0.0
        %v9178 = vadd.f32 %v9176, %v9177
        %v9179 = vsel %vm2923, %v9124, 0.0
        %v9180 = vadd.f32 %v9178, %v9179
        %v9181 = vsel %vm2923, %v9125, 0.0
        %v9182 = vadd.f32 %v9180, %v9181
        %v9183 = vsel %vm2923, %v9126, 0.0
        %v9184 = vadd.f32 %v9182, %v9183
        %v9185 = vsel %vm2923, %v9127, 0.0
        %v9186 = vadd.f32 %v9184, %v9185
        %v9187 = vsel %vm2923, %v9128, 0.0
        %v9188 = vadd.f32 %v9186, %v9187
        %v9189 = vsel %vm2923, %v9129, 0.0
        %v9190 = vadd.f32 %v9188, %v9189
        %v9191 = vsel %vm2923, %v9130, 0.0
        %v9192 = vadd.f32 %v9190, %v9191
        %v9193 = vsel %vm2923, %v9131, 0.0
        %v9194 = vadd.f32 %v9192, %v9193
        %v9195 = vrot.slane %v9194, 4
        %v9196 = vadd.f32 %v9194, %v9195
        %v9197 = vrot.slane %v9196, 2
        %v9198 = vadd.f32 %v9196, %v9197
        %v9199 = vrot.slane %v9198, 1
        %v9200 = vadd.f32 %v9198, %v9199
        %v9201 = vmul.f32 %v9200, %v2993
        %v9202 = vsub.f32 %v9100, %v9201
        %v9203 = vsub.f32 %v9101, %v9201
        %v9204 = vsub.f32 %v9102, %v9201
        %v9205 = vsub.f32 %v9103, %v9201
        %v9206 = vsub.f32 %v9104, %v9201
        %v9207 = vsub.f32 %v9105, %v9201
        %v9208 = vsub.f32 %v9106, %v9201
        %v9209 = vsub.f32 %v9107, %v9201
        %v9210 = vsub.f32 %v9108, %v9201
        %v9211 = vsub.f32 %v9109, %v9201
        %v9212 = vsub.f32 %v9110, %v9201
        %v9213 = vsub.f32 %v9111, %v9201
        %v9214 = vsub.f32 %v9112, %v9201
        %v9215 = vsub.f32 %v9113, %v9201
        %v9216 = vsub.f32 %v9114, %v9201
        %v9217 = vsub.f32 %v9115, %v9201
        %v9218 = vsub.f32 %v9116, %v9201
        %v9219 = vsub.f32 %v9117, %v9201
        %v9220 = vsub.f32 %v9118, %v9201
        %v9221 = vsub.f32 %v9119, %v9201
        %v9222 = vsub.f32 %v9120, %v9201
        %v9223 = vsub.f32 %v9121, %v9201
        %v9224 = vsub.f32 %v9122, %v9201
        %v9225 = vsub.f32 %v9123, %v9201
        %v9226 = vsub.f32 %v9124, %v9201
        %v9227 = vsub.f32 %v9125, %v9201
        %v9228 = vsub.f32 %v9126, %v9201
        %v9229 = vsub.f32 %v9127, %v9201
        %v9230 = vsub.f32 %v9128, %v9201
        %v9231 = vsub.f32 %v9129, %v9201
        %v9232 = vsub.f32 %v9130, %v9201
        %v9233 = vsub.f32 %v9131, %v9201
        %v9234 = vmul.f32 %v9202, %v9202
        %v9235 = vmul.f32 %v9203, %v9203
        %v9236 = vmul.f32 %v9204, %v9204
        %v9237 = vmul.f32 %v9205, %v9205
        %v9238 = vmul.f32 %v9206, %v9206
        %v9239 = vmul.f32 %v9207, %v9207
        %v9240 = vmul.f32 %v9208, %v9208
        %v9241 = vmul.f32 %v9209, %v9209
        %v9242 = vmul.f32 %v9210, %v9210
        %v9243 = vmul.f32 %v9211, %v9211
        %v9244 = vmul.f32 %v9212, %v9212
        %v9245 = vmul.f32 %v9213, %v9213
        %v9246 = vmul.f32 %v9214, %v9214
        %v9247 = vmul.f32 %v9215, %v9215
        %v9248 = vmul.f32 %v9216, %v9216
        %v9249 = vmul.f32 %v9217, %v9217
        %v9250 = vmul.f32 %v9218, %v9218
        %v9251 = vmul.f32 %v9219, %v9219
        %v9252 = vmul.f32 %v9220, %v9220
        %v9253 = vmul.f32 %v9221, %v9221
        %v9254 = vmul.f32 %v9222, %v9222
        %v9255 = vmul.f32 %v9223, %v9223
        %v9256 = vmul.f32 %v9224, %v9224
        %v9257 = vmul.f32 %v9225, %v9225
        %v9258 = vmul.f32 %v9226, %v9226
        %v9259 = vmul.f32 %v9227, %v9227
        %v9260 = vmul.f32 %v9228, %v9228
        %v9261 = vmul.f32 %v9229, %v9229
        %v9262 = vmul.f32 %v9230, %v9230
        %v9263 = vmul.f32 %v9231, %v9231
        %v9264 = vmul.f32 %v9232, %v9232
        %v9265 = vmul.f32 %v9233, %v9233
        %v9266 = vsel %vm2923, %v9234, 0.0
        %v9267 = vsel %vm2923, %v9235, 0.0
        %v9268 = vadd.f32 %v9266, %v9267
        %v9269 = vsel %vm2923, %v9236, 0.0
        %v9270 = vadd.f32 %v9268, %v9269
        %v9271 = vsel %vm2923, %v9237, 0.0
        %v9272 = vadd.f32 %v9270, %v9271
        %v9273 = vsel %vm2923, %v9238, 0.0
        %v9274 = vadd.f32 %v9272, %v9273
        %v9275 = vsel %vm2923, %v9239, 0.0
        %v9276 = vadd.f32 %v9274, %v9275
        %v9277 = vsel %vm2923, %v9240, 0.0
        %v9278 = vadd.f32 %v9276, %v9277
        %v9279 = vsel %vm2923, %v9241, 0.0
        %v9280 = vadd.f32 %v9278, %v9279
        %v9281 = vsel %vm2923, %v9242, 0.0
        %v9282 = vadd.f32 %v9280, %v9281
        %v9283 = vsel %vm2923, %v9243, 0.0
        %v9284 = vadd.f32 %v9282, %v9283
        %v9285 = vsel %vm2923, %v9244, 0.0
        %v9286 = vadd.f32 %v9284, %v9285
        %v9287 = vsel %vm2923, %v9245, 0.0
        %v9288 = vadd.f32 %v9286, %v9287
        %v9289 = vsel %vm2923, %v9246, 0.0
        %v9290 = vadd.f32 %v9288, %v9289
        %v9291 = vsel %vm2923, %v9247, 0.0
        %v9292 = vadd.f32 %v9290, %v9291
        %v9293 = vsel %vm2923, %v9248, 0.0
        %v9294 = vadd.f32 %v9292, %v9293
        %v9295 = vsel %vm2923, %v9249, 0.0
        %v9296 = vadd.f32 %v9294, %v9295
        %v9297 = vsel %vm2923, %v9250, 0.0
        %v9298 = vadd.f32 %v9296, %v9297
        %v9299 = vsel %vm2923, %v9251, 0.0
        %v9300 = vadd.f32 %v9298, %v9299
        %v9301 = vsel %vm2923, %v9252, 0.0
        %v9302 = vadd.f32 %v9300, %v9301
        %v9303 = vsel %vm2923, %v9253, 0.0
        %v9304 = vadd.f32 %v9302, %v9303
        %v9305 = vsel %vm2923, %v9254, 0.0
        %v9306 = vadd.f32 %v9304, %v9305
        %v9307 = vsel %vm2923, %v9255, 0.0
        %v9308 = vadd.f32 %v9306, %v9307
        %v9309 = vsel %vm2923, %v9256, 0.0
        %v9310 = vadd.f32 %v9308, %v9309
        %v9311 = vsel %vm2923, %v9257, 0.0
        %v9312 = vadd.f32 %v9310, %v9311
        %v9313 = vsel %vm2923, %v9258, 0.0
        %v9314 = vadd.f32 %v9312, %v9313
        %v9315 = vsel %vm2923, %v9259, 0.0
        %v9316 = vadd.f32 %v9314, %v9315
        %v9317 = vsel %vm2923, %v9260, 0.0
        %v9318 = vadd.f32 %v9316, %v9317
        %v9319 = vsel %vm2923, %v9261, 0.0
        %v9320 = vadd.f32 %v9318, %v9319
        %v9321 = vsel %vm2923, %v9262, 0.0
        %v9322 = vadd.f32 %v9320, %v9321
        %v9323 = vsel %vm2923, %v9263, 0.0
        %v9324 = vadd.f32 %v9322, %v9323
        %v9325 = vsel %vm2923, %v9264, 0.0
        %v9326 = vadd.f32 %v9324, %v9325
        %v9327 = vsel %vm2923, %v9265, 0.0
        %v9328 = vadd.f32 %v9326, %v9327
        %v9329 = vrot.slane %v9328, 4
        %v9330 = vadd.f32 %v9328, %v9329
        %v9331 = vrot.slane %v9330, 2
        %v9332 = vadd.f32 %v9330, %v9331
        %v9333 = vrot.slane %v9332, 1
        %v9334 = vadd.f32 %v9332, %v9333
        %v9335 = vmul.f32 %v9334, %v2993
        %v9336 = vadd.f32 %v9335, 1e-05
        %v9337 = vrsqrt.pop %v9336
        %v9338 = vmul.f32 %v9202, %v9337
        %v9339 = vmul.f32 %v9203, %v9337
        %v9340 = vmul.f32 %v9204, %v9337
        %v9341 = vmul.f32 %v9205, %v9337
        %v9342 = vmul.f32 %v9206, %v9337
        %v9343 = vmul.f32 %v9207, %v9337
        %v9344 = vmul.f32 %v9208, %v9337
        %v9345 = vmul.f32 %v9209, %v9337
        %v9346 = vmul.f32 %v9210, %v9337
        %v9347 = vmul.f32 %v9211, %v9337
        %v9348 = vmul.f32 %v9212, %v9337
        %v9349 = vmul.f32 %v9213, %v9337
        %v9350 = vmul.f32 %v9214, %v9337
        %v9351 = vmul.f32 %v9215, %v9337
        %v9352 = vmul.f32 %v9216, %v9337
        %v9353 = vmul.f32 %v9217, %v9337
        %v9354 = vmul.f32 %v9218, %v9337
        %v9355 = vmul.f32 %v9219, %v9337
        %v9356 = vmul.f32 %v9220, %v9337
        %v9357 = vmul.f32 %v9221, %v9337
        %v9358 = vmul.f32 %v9222, %v9337
        %v9359 = vmul.f32 %v9223, %v9337
        %v9360 = vmul.f32 %v9224, %v9337
        %v9361 = vmul.f32 %v9225, %v9337
        %v9362 = vmul.f32 %v9226, %v9337
        %v9363 = vmul.f32 %v9227, %v9337
        %v9364 = vmul.f32 %v9228, %v9337
        %v9365 = vmul.f32 %v9229, %v9337
        %v9366 = vmul.f32 %v9230, %v9337
        %v9367 = vmul.f32 %v9231, %v9337
        %v9368 = vmul.f32 %v9232, %v9337
        %v9369 = vmul.f32 %v9233, %v9337
        %v9370 = vmax.f32 %v9338, 0.0
        %v9371 = vmax.f32 %v9339, 0.0
        %v9372 = vmax.f32 %v9340, 0.0
        %v9373 = vmax.f32 %v9341, 0.0
        %v9374 = vmax.f32 %v9342, 0.0
        %v9375 = vmax.f32 %v9343, 0.0
        %v9376 = vmax.f32 %v9344, 0.0
        %v9377 = vmax.f32 %v9345, 0.0
        %v9378 = vmax.f32 %v9346, 0.0
        %v9379 = vmax.f32 %v9347, 0.0
        %v9380 = vmax.f32 %v9348, 0.0
        %v9381 = vmax.f32 %v9349, 0.0
        %v9382 = vmax.f32 %v9350, 0.0
        %v9383 = vmax.f32 %v9351, 0.0
        %v9384 = vmax.f32 %v9352, 0.0
        %v9385 = vmax.f32 %v9353, 0.0
        %v9386 = vmax.f32 %v9354, 0.0
        %v9387 = vmax.f32 %v9355, 0.0
        %v9388 = vmax.f32 %v9356, 0.0
        %v9389 = vmax.f32 %v9357, 0.0
        %v9390 = vmax.f32 %v9358, 0.0
        %v9391 = vmax.f32 %v9359, 0.0
        %v9392 = vmax.f32 %v9360, 0.0
        %v9393 = vmax.f32 %v9361, 0.0
        %v9394 = vmax.f32 %v9362, 0.0
        %v9395 = vmax.f32 %v9363, 0.0
        %v9396 = vmax.f32 %v9364, 0.0
        %v9397 = vmax.f32 %v9365, 0.0
        %v9398 = vmax.f32 %v9366, 0.0
        %v9399 = vmax.f32 %v9367, 0.0
        %v9400 = vmax.f32 %v9368, 0.0
        %v9401 = vmax.f32 %v9369, 0.0
        %v9402 = vld [vmem:[%s4] sm:$0xff]
        %v9404 = vsel %vm2923, %v9402, 0
        %v9407 = vsel %vm2923, %v9370, 0
        %v9410 = vsel %vm2923, %v9371, 0
        %v9413 = vsel %vm2923, %v9372, 0
        %v9416 = vsel %vm2923, %v9373, 0
        %v9419 = vsel %vm2923, %v9374, 0
        %v9422 = vsel %vm2923, %v9375, 0
        %v9425 = vsel %vm2923, %v9376, 0
        %v9428 = vsel %vm2923, %v9377, 0
        %v9431 = vsel %vm2923, %v9378, 0
        %v9434 = vsel %vm2923, %v9379, 0
        %v9437 = vsel %vm2923, %v9380, 0
        %v9440 = vsel %vm2923, %v9381, 0
        %v9443 = vsel %vm2923, %v9382, 0
        %v9446 = vsel %vm2923, %v9383, 0
        %v9449 = vsel %vm2923, %v9384, 0
        %v9452 = vsel %vm2923, %v9385, 0
        %v9455 = vsel %vm2923, %v9386, 0
        %v9458 = vsel %vm2923, %v9387, 0
        %v9461 = vsel %vm2923, %v9388, 0
        %v9464 = vsel %vm2923, %v9389, 0
        %v9467 = vsel %vm2923, %v9390, 0
        %v9470 = vsel %vm2923, %v9391, 0
        %v9473 = vsel %vm2923, %v9392, 0
        %v9476 = vsel %vm2923, %v9393, 0
        %v9479 = vsel %vm2923, %v9394, 0
        %v9482 = vsel %vm2923, %v9395, 0
        %v9485 = vsel %vm2923, %v9396, 0
        %v9488 = vsel %vm2923, %v9397, 0
        %v9491 = vsel %vm2923, %v9398, 0
        %v9494 = vsel %vm2923, %v9399, 0
        %v9497 = vsel %vm2923, %v9400, 0
        %v9500 = vsel %vm2923, %v9401, 0
        %9502 = vmatprep.subr.mxu0 0.0
        %9503 = vmatpush1.xpose.msra.mxu0 %v9407
        %9504 = vmatprep.subr.mxu0 0.0
        %9505 = vmatpush1.xpose.msra.mxu0 %v9410
        %9506 = vmatprep.subr.mxu0 0.0
        %9507 = vmatpush1.xpose.msra.mxu0 %v9413
        %9508 = vmatprep.subr.mxu0 0.0
        %9509 = vmatpush1.xpose.msra.mxu0 %v9416
        %9510 = vmatprep.subr.mxu0 0.0
        %9511 = vmatpush1.xpose.msra.mxu0 %v9419
        %9512 = vmatprep.subr.mxu0 0.0
        %9513 = vmatpush1.xpose.msra.mxu0 %v9422
        %9514 = vmatprep.subr.mxu0 0.0
        %9515 = vmatpush1.xpose.msra.mxu0 %v9425
        %9516 = vmatprep.subr.mxu0 0.0
        %9517 = vmatpush1.xpose.msra.mxu0 %v9428
        %9518 = vmatprep.subr.mxu0 0.0
        %9519 = vmatpush1.xpose.msra.mxu0 %v9431
        %9520 = vmatprep.subr.mxu0 0.0
        %9521 = vmatpush1.xpose.msra.mxu0 %v9434
        %9522 = vmatprep.subr.mxu0 0.0
        %9523 = vmatpush1.xpose.msra.mxu0 %v9437
        %9524 = vmatprep.subr.mxu0 0.0
        %9525 = vmatpush1.xpose.msra.mxu0 %v9440
        %9526 = vmatprep.subr.mxu0 0.0
        %9527 = vmatpush1.xpose.msra.mxu0 %v9443
        %9528 = vmatprep.subr.mxu0 0.0
        %9529 = vmatpush1.xpose.msra.mxu0 %v9446
        %9530 = vmatprep.subr.mxu0 0.0
        %9531 = vmatpush1.xpose.msra.mxu0 %v9449
        %9532 = vmatprep.subr.mxu0 0.0
        %9533 = vmatpush1.xpose.msra.mxu0 %v9452
        %9534 = vmatprep.subr.mxu0 0.0
        %9535 = vmatpush1.xpose.msra.mxu0 %v9455
        %9536 = vmatprep.subr.mxu0 0.0
        %9537 = vmatpush1.xpose.msra.mxu0 %v9458
        %9538 = vmatprep.subr.mxu0 0.0
        %9539 = vmatpush1.xpose.msra.mxu0 %v9461
        %9540 = vmatprep.subr.mxu0 0.0
        %9541 = vmatpush1.xpose.msra.mxu0 %v9464
        %9542 = vmatprep.subr.mxu0 0.0
        %9543 = vmatpush1.xpose.msra.mxu0 %v9467
        %9544 = vmatprep.subr.mxu0 0.0
        %9545 = vmatpush1.xpose.msra.mxu0 %v9470
        %9546 = vmatprep.subr.mxu0 0.0
        %9547 = vmatpush1.xpose.msra.mxu0 %v9473
        %9548 = vmatprep.subr.mxu0 0.0
        %9549 = vmatpush1.xpose.msra.mxu0 %v9476
        %9550 = vmatprep.subr.mxu0 0.0
        %9551 = vmatpush1.xpose.msra.mxu0 %v9479
        %9552 = vmatprep.subr.mxu0 0.0
        %9553 = vmatpush1.xpose.msra.mxu0 %v9482
        %9554 = vmatprep.subr.mxu0 0.0
        %9555 = vmatpush1.xpose.msra.mxu0 %v9485
        %9556 = vmatprep.subr.mxu0 0.0
        %9557 = vmatpush1.xpose.msra.mxu0 %v9488
        %9558 = vmatprep.subr.mxu0 0.0
        %9559 = vmatpush1.xpose.msra.mxu0 %v9491
        %9560 = vmatprep.subr.mxu0 0.0
        %9561 = vmatpush1.xpose.msra.mxu0 %v9494
        %9562 = vmatprep.subr.mxu0 0.0
        %9563 = vmatpush1.xpose.msra.mxu0 %v9497
        %9564 = vmatprep.subr.mxu0 0.0
        %9565 = vmatpush1.xpose.msra.mxu0 %v9500
        %9566 = vmatprep.mubr.f32.mxu0 0.0
        %9567 = vmatmul.mubr.f32.gmra.mrb[0].mxu0 %v9404
        %v9568 = vpop.f32.mrb[0].mxu0
        %v9569 = vadd.f32 0.0, %v9568
        %v9570 = vpop.f32.mrb[0].mxu0
        %v9571 = vadd.f32 0.0, %v9570
        %9572 = vdwg.mxu0
        %s9573 = sld [smem:[#allocation4]]
        %v9574 = vstv %s9573
        %v9575 = vadd.f32 %v9569, %v9574
        %v9576 = vadd.f32 %v9571, %v9574
        %v9577 = vxor.u32 %v9575, 2147483648
        %v9578 = vxor.u32 %v9576, 2147483648
        %v9579 = vmul.f32 %v9577, 1.442695
        %v9580 = vpow.pop %v9579
        %v9581 = vmul.f32 %v9578, 1.442695
        %v9582 = vpow.pop %v9581
        %v9583 = vadd.f32 %v9580, 1.0
        %v9584 = vadd.f32 %v9582, 1.0
        %v9585 = vrcp.pop %v9583
        %v9586 = vmul.f32 1.0, %v9585
        %v9587 = vrcp.pop %v9584
        %v9588 = vmul.f32 1.0, %v9587
        %v9591 = vcombine.low %v9586, %v9588
        %v9593 = vunpack.c.l.s4 1966171168
        %v9594 = vunpack.c.0.s8 %v9593
        %v9595 = vlaneseq
        %v9596 = vshrl.u32 %v9595, 7
        %v9597 = vsub.s32 %v9594, %v9596
        %v9598 = vrot.slane %v9591, %v9597
        %v9600 = vunpack.c.l.s4 1966171168
        %v9601 = vunpack.c.0.s8 %v9600
        %v9602 = vlaneseq
        %v9603 = vshrl.u32 %v9602, 7
        %v9604 = vsub.s32 %v9601, %v9603
        %v9605 = vrot.slane %v9598, %v9604
        %v9607 = vlaneseq
        %vm9608 = vcmp.ge.s32.totalorder %v9607, 0
        %vm9609 = vcmp.lt.s32.totalorder %v9607, 256
        %vm9610 = vmand %vm9608, %vm9609
        %9611 = vst.msk [vmem:[%s288] sm:$0x3] %vm9610, %v9605
        %s9612 = sand.u32 %s162, 1
        %s9613 = scalar_lea.sflag [#allocation6], %s9612
        %s9614 = sand.u32 %s162, 1
        %s9615 = smul.addr %s9614, 256
        %s9616 = scalar_lea.vmem [#allocation5], %s9615
        %p9617 = scmp.lt.s32.totalorder %s23, 1
        %s9618 = scalar_select %p9617, %s23, 1
        %s9619 = smul.addr %s9618, 2
        %s9620 = scalar_lea.vmem %s7, %s9619
        // Predicated region
        $region45: #{catalyst_segmentation.1} parent=43 // pred_check
          %p9621 = pneg %p172
        $region46: #{catalyst_segmentation.1} parent=43 // pred_check_branch
          %9623 = sbr.rel (%p9621) target = $region48
        $region47: #{catalyst_segmentation.1} parent=43 // pred_region
          %s9625 = ssub.s32 4096, 4096
          %9626 = vsyncadd %s9613, %s9625
          %s9627 = smul.addr %s23, 32
          %s9628 = smul.addr %s9627, 128
          %s9629 = scalar_lea.hbm %s6, %s9628
          %s9630 = sshll.u32 %s9616, 4
          %s9631 = int_to_ptr.vmem [resolvable:$true] %s9630
          %9636 = dma.vmem_to_hbm [thread:$0]  %s9631, 4096, %s9629, %s9613, 128, 128, 8
        $region48: #{catalyst_segmentation.1} parent=43 // pred_fallthru
          _
        // Predicated region
        $region49: #{catalyst_segmentation.1} parent=43 // pred_check
          %p9637 = pneg %p198
        $region50: #{catalyst_segmentation.1} parent=43 // pred_check_branch
          %9639 = sbr.rel (%p9637) target = $region52
        $region51: #{catalyst_segmentation.1} parent=43 // pred_region
          _
        $region52: #{catalyst_segmentation.1} parent=43 // pred_fallthru
          _
      $region44: #{catalyst_segmentation.1} parent=5 // pred_fallthru
        _
      %p9640 = scmp.le.s32.totalorder 2, %s18
      // Predicated region
      $region53: #{catalyst_segmentation.1} parent=5 // pred_check
        %p9641 = pneg %p9640
      $region54: #{catalyst_segmentation.1} parent=5 // pred_check_branch
        %9643 = sbr.rel (%p9641) target = $region56
      $region55: #{catalyst_segmentation.1} parent=5 // pred_region
        %s9644 = ssub.s32 %s18, 2
        // Predicated region
        $region57: #{catalyst_segmentation.1} parent=55 // pred_check
          %p9645 = pneg %p178
        $region58: #{catalyst_segmentation.1} parent=55 // pred_check_branch
          %9647 = sbr.rel (%p9645) target = $region60
        $region59: #{catalyst_segmentation.1} parent=55 // pred_region
          %s9648 = sand.u32 %s163, 1
          %s9649 = scalar_lea.sflag [#allocation6], %s9648
          %s9650 = sand.u32 %s163, 1
          %s9651 = smul.addr %s9650, 256
          %s9652 = scalar_lea.vmem [#allocation5], %s9651
          %9653 = dma.done %s9649, 4096
        $region60: #{catalyst_segmentation.1} parent=55 // pred_fallthru
          _
        // Predicated region
        $region61: #{catalyst_segmentation.1} parent=55 // pred_check
          %p9654 = pneg %p204
        $region62: #{catalyst_segmentation.1} parent=55 // pred_check_branch
          %9656 = sbr.rel (%p9654) target = $region64
        $region63: #{catalyst_segmentation.1} parent=55 // pred_region
          %p9657 = scmp.lt.s32.totalorder %s24, 1
          %s9658 = scalar_select %p9657, %s24, 1
          %s9659 = smul.addr %s9658, 2
          %s9660 = scalar_lea.vmem %s7, %s9659
        $region64: #{catalyst_segmentation.1} parent=55 // pred_fallthru
          _
      $region56: #{catalyst_segmentation.1} parent=5 // pred_fallthru
        _
    $region6: #{catalyst_segmentation.1} parent=1 // loop_footer
      %s22 = sadd.s32 1, %s18
    $region7: #{catalyst_segmentation.1} parent=1 // loop_footer_branch
      %17 = sbr.rel target = $region3
    $region8: #{catalyst_segmentation.1} parent=1 // loop_exit
      _
    %9661 = vsyncpa [#allocation6], 1
    %s9662 = scalar_lea.sflag [#allocation6], 1
    %9663 = vsyncpa %s9662, 1

</llo_original>
